<compile_context>
chip_gen: v7x
topology: tpu7x:2x2x1
jax: 0.10.0
libtpu: 0.0.40
codegen_flags: <defaults>
</compile_context>

<pallas_src>
import functools

import jax
import jax.numpy as jnp
from jax.experimental import pallas as pl
from jax.experimental.pallas import tpu as pltpu

_TILE = 8  # sublane tile for the greedy loop


def _nms_kernel(boxes_ref, keep_ref, sup_ref, *, thresh):
    # boxes_ref: (1, 6, K) f32, coordinate-major (lanes = boxes, score-sorted descending)
    # keep_ref : (1, 1, K) int32 output (1 = kept)
    # sup_ref  : (K, K) f32 scratch -- thresholded, strictly-upper-triangular suppress mask
    cols = boxes_ref[0].astype(jnp.float32)                       # (6, K)
    K = cols.shape[1]

    sub_idx = jax.lax.broadcasted_iota(jnp.int32, (K, K), 0)
    lane_idx = jax.lax.broadcasted_iota(jnp.int32, (K, K), 1)
    diag = sub_idx == lane_idx

    def to_col(row):                                              # (1, K) -> (K, 1)
        # transpose-free lane->sublane move: mask the diagonal, reduce over lanes (one-time).
        return jnp.sum(jnp.where(diag, row, 0.0), axis=1, keepdims=True)

    # Pairwise intersection volume + per-box volumes (coords 0..2 = mins, 3..5 = maxs).
    inter = jnp.ones((K, K), jnp.float32)
    vol_c = jnp.ones((K, 1), jnp.float32)
    vol_r = jnp.ones((1, K), jnp.float32)
    for d in range(3):
        lo_r = cols[d:d + 1, :]                                   # (1, K)
        hi_r = cols[d + 3:d + 4, :]                               # (1, K)
        lo_c = to_col(lo_r)                                       # (K, 1)
        hi_c = to_col(hi_r)                                       # (K, 1)
        inter = inter * jnp.maximum(
            jnp.minimum(hi_c, hi_r) - jnp.maximum(lo_c, lo_r), 0.0)
        vol_c = vol_c * jnp.maximum(hi_c - lo_c, 0.0)
        vol_r = vol_r * jnp.maximum(hi_r - lo_r, 0.0)

    union = vol_c + vol_r - inter                                 # (K, K)
    # suppress[i, j] = 1  <=>  box i would suppress the lower-scored box j (j > i).
    # (inter > thresh * union) replaces the K*K IoU divisions with one multiply.
    sup_ref[...] = jnp.where(
        jnp.logical_and(inter > thresh * union, lane_idx > sub_idx), 1.0, 0.0)

    # Greedy pass over score-sorted boxes: tiled by _TILE rows, inner steps unrolled,
    # minimal loop body (one masked-max extract + pure-VPU update).
    row_lanes = jax.lax.broadcasted_iota(jnp.int32, (1, K), 1)    # (1, K)
    n_tiles = K // _TILE

    def tile_body(t, keep):
        i0 = pl.multiple_of(t * _TILE, _TILE)
        s_tile = sup_ref[pl.ds(i0, _TILE), :]                     # (_TILE, K): 1 load / tile
        for l in range(_TILE):                                    # python-unrolled
            # gate: is box (i0 + l) still kept?  (single masked-max extract)
            keep_i = jnp.max(jnp.where(row_lanes == i0 + l, keep, 0.0))
            # drop every later box this (still-kept) box suppresses.
            keep = keep * (1.0 - keep_i * s_tile[l:l + 1, :])
        return keep

    keep = jax.lax.fori_loop(
        0, n_tiles, tile_body, jnp.ones((1, K), jnp.float32),
        unroll=True if n_tiles <= 32 else 4)

    keep_ref[0] = (keep > 0.5).astype(jnp.int32)


def nms_pallas(sorted_boxes, thresh):
    """sorted_boxes: (B, K, 6) f32, score-sorted descending. Returns (B, K) int32 keep mask."""
    B, K, D = sorted_boxes.shape
    assert D == 6
    assert K % _TILE == 0, "num_keep_pre_nms must be a multiple of 8 (128-multiple preferred)"
    assert K * K * 4 <= 16 * 1024 * 1024, "dense K*K suppress scratch too large for VMEM"

    boxes_cols = jnp.transpose(sorted_boxes.astype(jnp.float32), (0, 2, 1))   # (B, 6, K)
    kernel = functools.partial(_nms_kernel, thresh=float(thresh))
    keep = pl.pallas_call(
        kernel,
        out_shape=jax.ShapeDtypeStruct((B, 1, K), jnp.int32),
        grid_spec=pltpu.PrefetchScalarGridSpec(
            num_scalar_prefetch=0,
            grid=(B,),
            in_specs=[pl.BlockSpec((1, 6, K), lambda b: (b, 0, 0))],
            out_specs=pl.BlockSpec((1, 1, K), lambda b: (b, 0, 0)),
            scratch_shapes=[pltpu.VMEM((K, K), jnp.float32)],
        ),
        # NOTE: on v7x, pltpu.CORE_PARALLEL on this batch axis would shard B over both
        # TensorCores; "parallel" is kept for portable compilation across v5e/v6e/v7x.
        compiler_params=pltpu.CompilerParams(
            dimension_semantics=("parallel",)),
    )(boxes_cols)
    return keep[:, 0, :]                                          # (B, K) int32 0/1


class ProposalSelector:
    def __init__(self, num_keep_pre_nms, num_keep_post_nms, thresh_nms):
        self.num_keep_pre_nms = num_keep_pre_nms
        self.num_keep_post_nms = num_keep_post_nms
        self.thresh_nms = thresh_nms

    def __call__(self, rpn_score, rpn_bbox):
        B, N = rpn_score.shape
        K = self.num_keep_pre_nms if self.num_keep_pre_nms > 0 else N
        K = min(K, N)                         # guard: num_keep_pre_nms may exceed proposals
        P = self.num_keep_post_nms

        # (1) top-k scores, sorted descending  (glue)
        topk_scores, topk_idx = jax.lax.top_k(rpn_score, K)                      # (B, K)

        # (2) gather the corresponding boxes  (glue)
        sorted_boxes = jnp.take_along_axis(rpn_bbox, topk_idx[:, :, None], axis=1)  # (B, K, 6)

        # (3) greedy NMS  (Pallas kernel)
        keep_i32 = nms_pallas(sorted_boxes, self.thresh_nms)                     # (B, K) int32
        keep = keep_i32 > 0

        # (4) compact kept entries, take first P (padded fixed-size outputs + valid mask)
        order = jnp.argsort(1 - keep_i32, axis=1, stable=True)   # kept first, score order
        sel = order[:, :P]                                       # (B, P)
        valid = jnp.take_along_axis(keep, sel, axis=1)           # (B, P) bool
        out_scores = jnp.take_along_axis(topk_scores, sel, axis=1)               # (B, P)
        out_index = jnp.take_along_axis(topk_idx, sel, axis=1)                   # (B, P)
        out_bbox = jnp.take_along_axis(sorted_boxes, sel[:, :, None], axis=1)    # (B, P, 6)
        return out_scores, out_bbox, out_index, valid


if __name__ == "__main__":
    key = jax.random.PRNGKey(0)
    B, N = 2, 256
    num_keep_pre_nms, num_keep_post_nms, thresh_nms = 128, 32, 0.3

    k_score, k_ctr, k_sz = jax.random.split(key, 3)
    rpn_score = jax.random.normal(k_score, (B, N), dtype=jnp.float32)
    centers = jax.random.uniform(k_ctr, (B, N, 3), minval=0.0, maxval=10.0)
    sizes = jax.random.uniform(k_sz, (B, N, 3), minval=0.5, maxval=3.0)
    rpn_bbox = jnp.concatenate([centers - 0.5 * sizes, centers + 0.5 * sizes], axis=-1)  # (B,N,6)

    selector = ProposalSelector(num_keep_pre_nms, num_keep_post_nms, thresh_nms)
    scores, bboxes, indices, valid = jax.block_until_ready(
        jax.jit(selector.__call__)(rpn_score, rpn_bbox))

    assert scores.shape == (B, num_keep_post_nms)
    assert bboxes.shape == (B, num_keep_post_nms, 6)
    assert indices.shape == (B, num_keep_post_nms)
    assert valid.shape == (B, num_keep_post_nms)
    print("KERNEL_OK")
</pallas_src>

<mosaic_0001>
module attributes {stable_mosaic.version = 11 : i64} {
  func.func @_nms_kernel(%arg0: i32, %arg1: memref<1x6x128xf32, #tpu.memory_space<vmem>>, %arg2: memref<1x1x128xi32, #tpu.memory_space<vmem>>, %arg3: memref<128x128xf32, #tpu.memory_space<vmem>>) attributes {dimension_semantics = [#tpu.dimension_semantics<parallel>], iteration_bounds = array<i64: 2>, scalar_prefetch = 0 : i64, scratch_operands = 1 : i64, tpu.core_type = #tpu.core_type<tc>, window_params = [{transform_indices = @transform_0, window_bounds = array<i64: 1, 6, 128>}, {transform_indices = @transform_1, window_bounds = array<i64: 1, 1, 128>}]} {
    %c0 = arith.constant 0 : index
    %c0_0 = arith.constant 0 : index
    %c0_1 = arith.constant 0 : index
    %0 = vector.load %arg1[%c0, %c0_0, %c0_1] : memref<1x6x128xf32, #tpu.memory_space<vmem>>, vector<1x6x128xf32>
    %1 = vector.shape_cast %0 : vector<1x6x128xf32> to vector<6x128xf32>
    %2 = tpu.iota {dimensions = array<i32: 0>} : vector<128x128xi32>
    %3 = tpu.iota {dimensions = array<i32: 1>} : vector<128x128xi32>
    %4 = arith.cmpi eq, %2, %3 : vector<128x128xi32>
    %cst = arith.constant 1.000000e+00 : f32
    %5 = vector.broadcast %cst : f32 to vector<128x128xf32>
    %cst_2 = arith.constant 1.000000e+00 : f32
    %6 = vector.broadcast %cst_2 : f32 to vector<128x1xf32>
    %cst_3 = arith.constant 1.000000e+00 : f32
    %7 = vector.broadcast %cst_3 : f32 to vector<1x128xf32>
    %8 = vector.extract_strided_slice %1 {offsets = [0, 0], sizes = [1, 128], strides = [1, 1]} : vector<6x128xf32> to vector<1x128xf32>
    %9 = vector.extract_strided_slice %1 {offsets = [3, 0], sizes = [1, 128], strides = [1, 1]} : vector<6x128xf32> to vector<1x128xf32>
    %cst_4 = arith.constant 0.000000e+00 : f32
    %10 = vector.shape_cast %8 : vector<1x128xf32> to vector<1x128xf32>
    %11 = vector.broadcast %10 : vector<1x128xf32> to vector<128x128xf32>
    %12 = vector.broadcast %cst_4 : f32 to vector<128x128xf32>
    %13 = arith.select %4, %11, %12 : vector<128x128xi1>, vector<128x128xf32>
    %cst_5 = arith.constant dense<0.000000e+00> : vector<128xf32>
    %14 = vector.multi_reduction <add>, %13, %cst_5 [1] : vector<128x128xf32> to vector<128xf32>
    %15 = vector.shape_cast %14 : vector<128xf32> to vector<128x1xf32>
    %cst_6 = arith.constant 0.000000e+00 : f32
    %16 = vector.shape_cast %9 : vector<1x128xf32> to vector<1x128xf32>
    %17 = vector.broadcast %16 : vector<1x128xf32> to vector<128x128xf32>
    %18 = vector.broadcast %cst_6 : f32 to vector<128x128xf32>
    %19 = arith.select %4, %17, %18 : vector<128x128xi1>, vector<128x128xf32>
    %cst_7 = arith.constant dense<0.000000e+00> : vector<128xf32>
    %20 = vector.multi_reduction <add>, %19, %cst_7 [1] : vector<128x128xf32> to vector<128xf32>
    %21 = vector.shape_cast %20 : vector<128xf32> to vector<128x1xf32>
    %22 = vector.broadcast %21 : vector<128x1xf32> to vector<128x128xf32>
    %23 = vector.broadcast %9 : vector<1x128xf32> to vector<128x128xf32>
    %24 = arith.minimumf %22, %23 : vector<128x128xf32>
    %25 = vector.broadcast %15 : vector<128x1xf32> to vector<128x128xf32>
    %26 = vector.broadcast %8 : vector<1x128xf32> to vector<128x128xf32>
    %27 = arith.maximumf %25, %26 : vector<128x128xf32>
    %28 = arith.subf %24, %27 : vector<128x128xf32>
    %cst_8 = arith.constant 0.000000e+00 : f32
    %29 = vector.broadcast %cst_8 : f32 to vector<128x128xf32>
    %30 = arith.maximumf %28, %29 : vector<128x128xf32>
    %31 = arith.mulf %5, %30 : vector<128x128xf32>
    %32 = arith.subf %21, %15 : vector<128x1xf32>
    %cst_9 = arith.constant 0.000000e+00 : f32
    %33 = vector.broadcast %cst_9 : f32 to vector<128x1xf32>
    %34 = arith.maximumf %32, %33 : vector<128x1xf32>
    %35 = arith.mulf %6, %34 : vector<128x1xf32>
    %36 = arith.subf %9, %8 : vector<1x128xf32>
    %cst_10 = arith.constant 0.000000e+00 : f32
    %37 = vector.broadcast %cst_10 : f32 to vector<1x128xf32>
    %38 = arith.maximumf %36, %37 : vector<1x128xf32>
    %39 = arith.mulf %7, %38 : vector<1x128xf32>
    %40 = vector.extract_strided_slice %1 {offsets = [1, 0], sizes = [1, 128], strides = [1, 1]} : vector<6x128xf32> to vector<1x128xf32>
    %41 = vector.extract_strided_slice %1 {offsets = [4, 0], sizes = [1, 128], strides = [1, 1]} : vector<6x128xf32> to vector<1x128xf32>
    %cst_11 = arith.constant 0.000000e+00 : f32
    %42 = vector.shape_cast %40 : vector<1x128xf32> to vector<1x128xf32>
    %43 = vector.broadcast %42 : vector<1x128xf32> to vector<128x128xf32>
    %44 = vector.broadcast %cst_11 : f32 to vector<128x128xf32>
    %45 = arith.select %4, %43, %44 : vector<128x128xi1>, vector<128x128xf32>
    %cst_12 = arith.constant dense<0.000000e+00> : vector<128xf32>
    %46 = vector.multi_reduction <add>, %45, %cst_12 [1] : vector<128x128xf32> to vector<128xf32>
    %47 = vector.shape_cast %46 : vector<128xf32> to vector<128x1xf32>
    %cst_13 = arith.constant 0.000000e+00 : f32
    %48 = vector.shape_cast %41 : vector<1x128xf32> to vector<1x128xf32>
    %49 = vector.broadcast %48 : vector<1x128xf32> to vector<128x128xf32>
    %50 = vector.broadcast %cst_13 : f32 to vector<128x128xf32>
    %51 = arith.select %4, %49, %50 : vector<128x128xi1>, vector<128x128xf32>
    %cst_14 = arith.constant dense<0.000000e+00> : vector<128xf32>
    %52 = vector.multi_reduction <add>, %51, %cst_14 [1] : vector<128x128xf32> to vector<128xf32>
    %53 = vector.shape_cast %52 : vector<128xf32> to vector<128x1xf32>
    %54 = vector.broadcast %53 : vector<128x1xf32> to vector<128x128xf32>
    %55 = vector.broadcast %41 : vector<1x128xf32> to vector<128x128xf32>
    %56 = arith.minimumf %54, %55 : vector<128x128xf32>
    %57 = vector.broadcast %47 : vector<128x1xf32> to vector<128x128xf32>
    %58 = vector.broadcast %40 : vector<1x128xf32> to vector<128x128xf32>
    %59 = arith.maximumf %57, %58 : vector<128x128xf32>
    %60 = arith.subf %56, %59 : vector<128x128xf32>
    %cst_15 = arith.constant 0.000000e+00 : f32
    %61 = vector.broadcast %cst_15 : f32 to vector<128x128xf32>
    %62 = arith.maximumf %60, %61 : vector<128x128xf32>
    %63 = arith.mulf %31, %62 : vector<128x128xf32>
    %64 = arith.subf %53, %47 : vector<128x1xf32>
    %cst_16 = arith.constant 0.000000e+00 : f32
    %65 = vector.broadcast %cst_16 : f32 to vector<128x1xf32>
    %66 = arith.maximumf %64, %65 : vector<128x1xf32>
    %67 = arith.mulf %35, %66 : vector<128x1xf32>
    %68 = arith.subf %41, %40 : vector<1x128xf32>
    %cst_17 = arith.constant 0.000000e+00 : f32
    %69 = vector.broadcast %cst_17 : f32 to vector<1x128xf32>
    %70 = arith.maximumf %68, %69 : vector<1x128xf32>
    %71 = arith.mulf %39, %70 : vector<1x128xf32>
    %72 = vector.extract_strided_slice %1 {offsets = [2, 0], sizes = [1, 128], strides = [1, 1]} : vector<6x128xf32> to vector<1x128xf32>
    %73 = vector.extract_strided_slice %1 {offsets = [5, 0], sizes = [1, 128], strides = [1, 1]} : vector<6x128xf32> to vector<1x128xf32>
    %cst_18 = arith.constant 0.000000e+00 : f32
    %74 = vector.shape_cast %72 : vector<1x128xf32> to vector<1x128xf32>
    %75 = vector.broadcast %74 : vector<1x128xf32> to vector<128x128xf32>
    %76 = vector.broadcast %cst_18 : f32 to vector<128x128xf32>
    %77 = arith.select %4, %75, %76 : vector<128x128xi1>, vector<128x128xf32>
    %cst_19 = arith.constant dense<0.000000e+00> : vector<128xf32>
    %78 = vector.multi_reduction <add>, %77, %cst_19 [1] : vector<128x128xf32> to vector<128xf32>
    %79 = vector.shape_cast %78 : vector<128xf32> to vector<128x1xf32>
    %cst_20 = arith.constant 0.000000e+00 : f32
    %80 = vector.shape_cast %73 : vector<1x128xf32> to vector<1x128xf32>
    %81 = vector.broadcast %80 : vector<1x128xf32> to vector<128x128xf32>
    %82 = vector.broadcast %cst_20 : f32 to vector<128x128xf32>
    %83 = arith.select %4, %81, %82 : vector<128x128xi1>, vector<128x128xf32>
    %cst_21 = arith.constant dense<0.000000e+00> : vector<128xf32>
    %84 = vector.multi_reduction <add>, %83, %cst_21 [1] : vector<128x128xf32> to vector<128xf32>
    %85 = vector.shape_cast %84 : vector<128xf32> to vector<128x1xf32>
    %86 = vector.broadcast %85 : vector<128x1xf32> to vector<128x128xf32>
    %87 = vector.broadcast %73 : vector<1x128xf32> to vector<128x128xf32>
    %88 = arith.minimumf %86, %87 : vector<128x128xf32>
    %89 = vector.broadcast %79 : vector<128x1xf32> to vector<128x128xf32>
    %90 = vector.broadcast %72 : vector<1x128xf32> to vector<128x128xf32>
    %91 = arith.maximumf %89, %90 : vector<128x128xf32>
    %92 = arith.subf %88, %91 : vector<128x128xf32>
    %cst_22 = arith.constant 0.000000e+00 : f32
    %93 = vector.broadcast %cst_22 : f32 to vector<128x128xf32>
    %94 = arith.maximumf %92, %93 : vector<128x128xf32>
    %95 = arith.mulf %63, %94 : vector<128x128xf32>
    %96 = arith.subf %85, %79 : vector<128x1xf32>
    %cst_23 = arith.constant 0.000000e+00 : f32
    %97 = vector.broadcast %cst_23 : f32 to vector<128x1xf32>
    %98 = arith.maximumf %96, %97 : vector<128x1xf32>
    %99 = arith.mulf %67, %98 : vector<128x1xf32>
    %100 = arith.subf %73, %72 : vector<1x128xf32>
    %cst_24 = arith.constant 0.000000e+00 : f32
    %101 = vector.broadcast %cst_24 : f32 to vector<1x128xf32>
    %102 = arith.maximumf %100, %101 : vector<1x128xf32>
    %103 = arith.mulf %71, %102 : vector<1x128xf32>
    %104 = vector.broadcast %99 : vector<128x1xf32> to vector<128x128xf32>
    %105 = vector.broadcast %103 : vector<1x128xf32> to vector<128x128xf32>
    %106 = arith.addf %104, %105 : vector<128x128xf32>
    %107 = arith.subf %106, %95 : vector<128x128xf32>
    %cst_25 = arith.constant 3.000000e-01 : f32
    %108 = vector.broadcast %cst_25 : f32 to vector<128x128xf32>
    %109 = arith.mulf %108, %107 : vector<128x128xf32>
    %110 = arith.cmpf ogt, %95, %109 : vector<128x128xf32>
    %111 = arith.cmpi sgt, %3, %2 : vector<128x128xi32>
    %112 = arith.andi %110, %111 : vector<128x128xi1>
    %cst_26 = arith.constant 1.000000e+00 : f32
    %cst_27 = arith.constant 0.000000e+00 : f32
    %113 = vector.broadcast %cst_26 : f32 to vector<128x128xf32>
    %114 = vector.broadcast %cst_27 : f32 to vector<128x128xf32>
    %115 = arith.select %112, %113, %114 : vector<128x128xi1>, vector<128x128xf32>
    %c0_28 = arith.constant 0 : index
    %c0_29 = arith.constant 0 : index
    %116 = vector.load %arg3[%c0_28, %c0_29] : memref<128x128xf32, #tpu.memory_space<vmem>>, vector<128x128xf32>
    tpu.vector_store %arg3[%c0_28, %c0_29], %115 {strides = array<i32>} : memref<128x128xf32, #tpu.memory_space<vmem>>, vector<128x128xf32>,
    %117 = tpu.iota {dimensions = array<i32: 1>} : vector<1x128xi32>
    %cst_30 = arith.constant 1.000000e+00 : f32
    %118 = vector.broadcast %cst_30 : f32 to vector<1x128xf32>
    %c0_i32 = arith.constant 0 : i32
    %c8_i32 = arith.constant 8 : i32
    %119 = arith.muli %c0_i32, %c8_i32 : i32
    %120 = tpu.assume_multiple %119, 8 : i32
    %121 = arith.index_cast %120 : i32 to index
    %c0_31 = arith.constant 0 : index
    %122 = vector.load %arg3[%121, %c0_31] : memref<128x128xf32, #tpu.memory_space<vmem>>, vector<8x128xf32>
    %c0_i32_32 = arith.constant 0 : i32
    %123 = arith.addi %120, %c0_i32_32 : i32
    %124 = vector.broadcast %123 : i32 to vector<1x128xi32>
    %125 = arith.cmpi eq, %117, %124 : vector<1x128xi32>
    %cst_33 = arith.constant 0.000000e+00 : f32
    %126 = vector.broadcast %cst_33 : f32 to vector<1x128xf32>
    %127 = arith.select %125, %118, %126 : vector<1x128xi1>, vector<1x128xf32>
    %128 = vector.shape_cast %127 : vector<1x128xf32> to vector<1x1x128xf32>
    %cst_34 = arith.constant dense<0xFF800000> : vector<1xf32>
    %129 = vector.multi_reduction <maximumf>, %128, %cst_34 [1, 2] : vector<1x1x128xf32> to vector<1xf32>
    %130 = vector.shape_cast %129 : vector<1xf32> to vector<1x1x1xf32>
    %131 = vector.extract %130[0, 0, 0] : f32 from vector<1x1x1xf32>
    %132 = vector.extract_strided_slice %122 {offsets = [0, 0], sizes = [1, 128], strides = [1, 1]} : vector<8x128xf32> to vector<1x128xf32>
    %133 = vector.broadcast %131 : f32 to vector<1x128xf32>
    %134 = arith.mulf %133, %132 : vector<1x128xf32>
    %cst_35 = arith.constant 1.000000e+00 : f32
    %135 = vector.broadcast %cst_35 : f32 to vector<1x128xf32>
    %136 = arith.subf %135, %134 : vector<1x128xf32>
    %137 = arith.mulf %118, %136 : vector<1x128xf32>
    %c1_i32 = arith.constant 1 : i32
    %138 = arith.addi %120, %c1_i32 : i32
    %139 = vector.broadcast %138 : i32 to vector<1x128xi32>
    %140 = arith.cmpi eq, %117, %139 : vector<1x128xi32>
    %cst_36 = arith.constant 0.000000e+00 : f32
    %141 = vector.broadcast %cst_36 : f32 to vector<1x128xf32>
    %142 = arith.select %140, %137, %141 : vector<1x128xi1>, vector<1x128xf32>
    %143 = vector.shape_cast %142 : vector<1x128xf32> to vector<1x1x128xf32>
    %cst_37 = arith.constant dense<0xFF800000> : vector<1xf32>
    %144 = vector.multi_reduction <maximumf>, %143, %cst_37 [1, 2] : vector<1x1x128xf32> to vector<1xf32>
    %145 = vector.shape_cast %144 : vector<1xf32> to vector<1x1x1xf32>
    %146 = vector.extract %145[0, 0, 0] : f32 from vector<1x1x1xf32>
    %147 = vector.extract_strided_slice %122 {offsets = [1, 0], sizes = [1, 128], strides = [1, 1]} : vector<8x128xf32> to vector<1x128xf32>
    %148 = vector.broadcast %146 : f32 to vector<1x128xf32>
    %149 = arith.mulf %148, %147 : vector<1x128xf32>
    %cst_38 = arith.constant 1.000000e+00 : f32
    %150 = vector.broadcast %cst_38 : f32 to vector<1x128xf32>
    %151 = arith.subf %150, %149 : vector<1x128xf32>
    %152 = arith.mulf %137, %151 : vector<1x128xf32>
    %c2_i32 = arith.constant 2 : i32
    %153 = arith.addi %120, %c2_i32 : i32
    %154 = vector.broadcast %153 : i32 to vector<1x128xi32>
    %155 = arith.cmpi eq, %117, %154 : vector<1x128xi32>
    %cst_39 = arith.constant 0.000000e+00 : f32
    %156 = vector.broadcast %cst_39 : f32 to vector<1x128xf32>
    %157 = arith.select %155, %152, %156 : vector<1x128xi1>, vector<1x128xf32>
    %158 = vector.shape_cast %157 : vector<1x128xf32> to vector<1x1x128xf32>
    %cst_40 = arith.constant dense<0xFF800000> : vector<1xf32>
    %159 = vector.multi_reduction <maximumf>, %158, %cst_40 [1, 2] : vector<1x1x128xf32> to vector<1xf32>
    %160 = vector.shape_cast %159 : vector<1xf32> to vector<1x1x1xf32>
    %161 = vector.extract %160[0, 0, 0] : f32 from vector<1x1x1xf32>
    %162 = vector.extract_strided_slice %122 {offsets = [2, 0], sizes = [1, 128], strides = [1, 1]} : vector<8x128xf32> to vector<1x128xf32>
    %163 = vector.broadcast %161 : f32 to vector<1x128xf32>
    %164 = arith.mulf %163, %162 : vector<1x128xf32>
    %cst_41 = arith.constant 1.000000e+00 : f32
    %165 = vector.broadcast %cst_41 : f32 to vector<1x128xf32>
    %166 = arith.subf %165, %164 : vector<1x128xf32>
    %167 = arith.mulf %152, %166 : vector<1x128xf32>
    %c3_i32 = arith.constant 3 : i32
    %168 = arith.addi %120, %c3_i32 : i32
    %169 = vector.broadcast %168 : i32 to vector<1x128xi32>
    %170 = arith.cmpi eq, %117, %169 : vector<1x128xi32>
    %cst_42 = arith.constant 0.000000e+00 : f32
    %171 = vector.broadcast %cst_42 : f32 to vector<1x128xf32>
    %172 = arith.select %170, %167, %171 : vector<1x128xi1>, vector<1x128xf32>
    %173 = vector.shape_cast %172 : vector<1x128xf32> to vector<1x1x128xf32>
    %cst_43 = arith.constant dense<0xFF800000> : vector<1xf32>
    %174 = vector.multi_reduction <maximumf>, %173, %cst_43 [1, 2] : vector<1x1x128xf32> to vector<1xf32>
    %175 = vector.shape_cast %174 : vector<1xf32> to vector<1x1x1xf32>
    %176 = vector.extract %175[0, 0, 0] : f32 from vector<1x1x1xf32>
    %177 = vector.extract_strided_slice %122 {offsets = [3, 0], sizes = [1, 128], strides = [1, 1]} : vector<8x128xf32> to vector<1x128xf32>
    %178 = vector.broadcast %176 : f32 to vector<1x128xf32>
    %179 = arith.mulf %178, %177 : vector<1x128xf32>
    %cst_44 = arith.constant 1.000000e+00 : f32
    %180 = vector.broadcast %cst_44 : f32 to vector<1x128xf32>
    %181 = arith.subf %180, %179 : vector<1x128xf32>
    %182 = arith.mulf %167, %181 : vector<1x128xf32>
    %c4_i32 = arith.constant 4 : i32
    %183 = arith.addi %120, %c4_i32 : i32
    %184 = vector.broadcast %183 : i32 to vector<1x128xi32>
    %185 = arith.cmpi eq, %117, %184 : vector<1x128xi32>
    %cst_45 = arith.constant 0.000000e+00 : f32
    %186 = vector.broadcast %cst_45 : f32 to vector<1x128xf32>
    %187 = arith.select %185, %182, %186 : vector<1x128xi1>, vector<1x128xf32>
    %188 = vector.shape_cast %187 : vector<1x128xf32> to vector<1x1x128xf32>
    %cst_46 = arith.constant dense<0xFF800000> : vector<1xf32>
    %189 = vector.multi_reduction <maximumf>, %188, %cst_46 [1, 2] : vector<1x1x128xf32> to vector<1xf32>
    %190 = vector.shape_cast %189 : vector<1xf32> to vector<1x1x1xf32>
    %191 = vector.extract %190[0, 0, 0] : f32 from vector<1x1x1xf32>
    %192 = vector.extract_strided_slice %122 {offsets = [4, 0], sizes = [1, 128], strides = [1, 1]} : vector<8x128xf32> to vector<1x128xf32>
    %193 = vector.broadcast %191 : f32 to vector<1x128xf32>
    %194 = arith.mulf %193, %192 : vector<1x128xf32>
    %cst_47 = arith.constant 1.000000e+00 : f32
    %195 = vector.broadcast %cst_47 : f32 to vector<1x128xf32>
    %196 = arith.subf %195, %194 : vector<1x128xf32>
    %197 = arith.mulf %182, %196 : vector<1x128xf32>
    %c5_i32 = arith.constant 5 : i32
    %198 = arith.addi %120, %c5_i32 : i32
    %199 = vector.broadcast %198 : i32 to vector<1x128xi32>
    %200 = arith.cmpi eq, %117, %199 : vector<1x128xi32>
    %cst_48 = arith.constant 0.000000e+00 : f32
    %201 = vector.broadcast %cst_48 : f32 to vector<1x128xf32>
    %202 = arith.select %200, %197, %201 : vector<1x128xi1>, vector<1x128xf32>
    %203 = vector.shape_cast %202 : vector<1x128xf32> to vector<1x1x128xf32>
    %cst_49 = arith.constant dense<0xFF800000> : vector<1xf32>
    %204 = vector.multi_reduction <maximumf>, %203, %cst_49 [1, 2] : vector<1x1x128xf32> to vector<1xf32>
    %205 = vector.shape_cast %204 : vector<1xf32> to vector<1x1x1xf32>
    %206 = vector.extract %205[0, 0, 0] : f32 from vector<1x1x1xf32>
    %207 = vector.extract_strided_slice %122 {offsets = [5, 0], sizes = [1, 128], strides = [1, 1]} : vector<8x128xf32> to vector<1x128xf32>
    %208 = vector.broadcast %206 : f32 to vector<1x128xf32>
    %209 = arith.mulf %208, %207 : vector<1x128xf32>
    %cst_50 = arith.constant 1.000000e+00 : f32
    %210 = vector.broadcast %cst_50 : f32 to vector<1x128xf32>
    %211 = arith.subf %210, %209 : vector<1x128xf32>
    %212 = arith.mulf %197, %211 : vector<1x128xf32>
    %c6_i32 = arith.constant 6 : i32
    %213 = arith.addi %120, %c6_i32 : i32
    %214 = vector.broadcast %213 : i32 to vector<1x128xi32>
    %215 = arith.cmpi eq, %117, %214 : vector<1x128xi32>
    %cst_51 = arith.constant 0.000000e+00 : f32
    %216 = vector.broadcast %cst_51 : f32 to vector<1x128xf32>
    %217 = arith.select %215, %212, %216 : vector<1x128xi1>, vector<1x128xf32>
    %218 = vector.shape_cast %217 : vector<1x128xf32> to vector<1x1x128xf32>
    %cst_52 = arith.constant dense<0xFF800000> : vector<1xf32>
    %219 = vector.multi_reduction <maximumf>, %218, %cst_52 [1, 2] : vector<1x1x128xf32> to vector<1xf32>
    %220 = vector.shape_cast %219 : vector<1xf32> to vector<1x1x1xf32>
    %221 = vector.extract %220[0, 0, 0] : f32 from vector<1x1x1xf32>
    %222 = vector.extract_strided_slice %122 {offsets = [6, 0], sizes = [1, 128], strides = [1, 1]} : vector<8x128xf32> to vector<1x128xf32>
    %223 = vector.broadcast %221 : f32 to vector<1x128xf32>
    %224 = arith.mulf %223, %222 : vector<1x128xf32>
    %cst_53 = arith.constant 1.000000e+00 : f32
    %225 = vector.broadcast %cst_53 : f32 to vector<1x128xf32>
    %226 = arith.subf %225, %224 : vector<1x128xf32>
    %227 = arith.mulf %212, %226 : vector<1x128xf32>
    %c7_i32 = arith.constant 7 : i32
    %228 = arith.addi %120, %c7_i32 : i32
    %229 = vector.broadcast %228 : i32 to vector<1x128xi32>
    %230 = arith.cmpi eq, %117, %229 : vector<1x128xi32>
    %cst_54 = arith.constant 0.000000e+00 : f32
    %231 = vector.broadcast %cst_54 : f32 to vector<1x128xf32>
    %232 = arith.select %230, %227, %231 : vector<1x128xi1>, vector<1x128xf32>
    %233 = vector.shape_cast %232 : vector<1x128xf32> to vector<1x1x128xf32>
    %cst_55 = arith.constant dense<0xFF800000> : vector<1xf32>
    %234 = vector.multi_reduction <maximumf>, %233, %cst_55 [1, 2] : vector<1x1x128xf32> to vector<1xf32>
    %235 = vector.shape_cast %234 : vector<1xf32> to vector<1x1x1xf32>
    %236 = vector.extract %235[0, 0, 0] : f32 from vector<1x1x1xf32>
    %237 = vector.extract_strided_slice %122 {offsets = [7, 0], sizes = [1, 128], strides = [1, 1]} : vector<8x128xf32> to vector<1x128xf32>
    %238 = vector.broadcast %236 : f32 to vector<1x128xf32>
    %239 = arith.mulf %238, %237 : vector<1x128xf32>
    %cst_56 = arith.constant 1.000000e+00 : f32
    %240 = vector.broadcast %cst_56 : f32 to vector<1x128xf32>
    %241 = arith.subf %240, %239 : vector<1x128xf32>
    %242 = arith.mulf %227, %241 : vector<1x128xf32>
    %c1_i32_57 = arith.constant 1 : i32
    %c8_i32_58 = arith.constant 8 : i32
    %243 = arith.muli %c1_i32_57, %c8_i32_58 : i32
    %244 = tpu.assume_multiple %243, 8 : i32
    %245 = arith.index_cast %244 : i32 to index
    %c0_59 = arith.constant 0 : index
    %246 = vector.load %arg3[%245, %c0_59] : memref<128x128xf32, #tpu.memory_space<vmem>>, vector<8x128xf32>
    %c0_i32_60 = arith.constant 0 : i32
    %247 = arith.addi %244, %c0_i32_60 : i32
    %248 = vector.broadcast %247 : i32 to vector<1x128xi32>
    %249 = arith.cmpi eq, %117, %248 : vector<1x128xi32>
    %cst_61 = arith.constant 0.000000e+00 : f32
    %250 = vector.broadcast %cst_61 : f32 to vector<1x128xf32>
    %251 = arith.select %249, %242, %250 : vector<1x128xi1>, vector<1x128xf32>
    %252 = vector.shape_cast %251 : vector<1x128xf32> to vector<1x1x128xf32>
    %cst_62 = arith.constant dense<0xFF800000> : vector<1xf32>
    %253 = vector.multi_reduction <maximumf>, %252, %cst_62 [1, 2] : vector<1x1x128xf32> to vector<1xf32>
    %254 = vector.shape_cast %253 : vector<1xf32> to vector<1x1x1xf32>
    %255 = vector.extract %254[0, 0, 0] : f32 from vector<1x1x1xf32>
    %256 = vector.extract_strided_slice %246 {offsets = [0, 0], sizes = [1, 128], strides = [1, 1]} : vector<8x128xf32> to vector<1x128xf32>
    %257 = vector.broadcast %255 : f32 to vector<1x128xf32>
    %258 = arith.mulf %257, %256 : vector<1x128xf32>
    %cst_63 = arith.constant 1.000000e+00 : f32
    %259 = vector.broadcast %cst_63 : f32 to vector<1x128xf32>
    %260 = arith.subf %259, %258 : vector<1x128xf32>
    %261 = arith.mulf %242, %260 : vector<1x128xf32>
    %c1_i32_64 = arith.constant 1 : i32
    %262 = arith.addi %244, %c1_i32_64 : i32
    %263 = vector.broadcast %262 : i32 to vector<1x128xi32>
    %264 = arith.cmpi eq, %117, %263 : vector<1x128xi32>
    %cst_65 = arith.constant 0.000000e+00 : f32
    %265 = vector.broadcast %cst_65 : f32 to vector<1x128xf32>
    %266 = arith.select %264, %261, %265 : vector<1x128xi1>, vector<1x128xf32>
    %267 = vector.shape_cast %266 : vector<1x128xf32> to vector<1x1x128xf32>
    %cst_66 = arith.constant dense<0xFF800000> : vector<1xf32>
    %268 = vector.multi_reduction <maximumf>, %267, %cst_66 [1, 2] : vector<1x1x128xf32> to vector<1xf32>
    %269 = vector.shape_cast %268 : vector<1xf32> to vector<1x1x1xf32>
    %270 = vector.extract %269[0, 0, 0] : f32 from vector<1x1x1xf32>
    %271 = vector.extract_strided_slice %246 {offsets = [1, 0], sizes = [1, 128], strides = [1, 1]} : vector<8x128xf32> to vector<1x128xf32>
    %272 = vector.broadcast %270 : f32 to vector<1x128xf32>
    %273 = arith.mulf %272, %271 : vector<1x128xf32>
    %cst_67 = arith.constant 1.000000e+00 : f32
    %274 = vector.broadcast %cst_67 : f32 to vector<1x128xf32>
    %275 = arith.subf %274, %273 : vector<1x128xf32>
    %276 = arith.mulf %261, %275 : vector<1x128xf32>
    %c2_i32_68 = arith.constant 2 : i32
    %277 = arith.addi %244, %c2_i32_68 : i32
    %278 = vector.broadcast %277 : i32 to vector<1x128xi32>
    %279 = arith.cmpi eq, %117, %278 : vector<1x128xi32>
    %cst_69 = arith.constant 0.000000e+00 : f32
    %280 = vector.broadcast %cst_69 : f32 to vector<1x128xf32>
    %281 = arith.select %279, %276, %280 : vector<1x128xi1>, vector<1x128xf32>
    %282 = vector.shape_cast %281 : vector<1x128xf32> to vector<1x1x128xf32>
    %cst_70 = arith.constant dense<0xFF800000> : vector<1xf32>
    %283 = vector.multi_reduction <maximumf>, %282, %cst_70 [1, 2] : vector<1x1x128xf32> to vector<1xf32>
    %284 = vector.shape_cast %283 : vector<1xf32> to vector<1x1x1xf32>
    %285 = vector.extract %284[0, 0, 0] : f32 from vector<1x1x1xf32>
    %286 = vector.extract_strided_slice %246 {offsets = [2, 0], sizes = [1, 128], strides = [1, 1]} : vector<8x128xf32> to vector<1x128xf32>
    %287 = vector.broadcast %285 : f32 to vector<1x128xf32>
    %288 = arith.mulf %287, %286 : vector<1x128xf32>
    %cst_71 = arith.constant 1.000000e+00 : f32
    %289 = vector.broadcast %cst_71 : f32 to vector<1x128xf32>
    %290 = arith.subf %289, %288 : vector<1x128xf32>
    %291 = arith.mulf %276, %290 : vector<1x128xf32>
    %c3_i32_72 = arith.constant 3 : i32
    %292 = arith.addi %244, %c3_i32_72 : i32
    %293 = vector.broadcast %292 : i32 to vector<1x128xi32>
    %294 = arith.cmpi eq, %117, %293 : vector<1x128xi32>
    %cst_73 = arith.constant 0.000000e+00 : f32
    %295 = vector.broadcast %cst_73 : f32 to vector<1x128xf32>
    %296 = arith.select %294, %291, %295 : vector<1x128xi1>, vector<1x128xf32>
    %297 = vector.shape_cast %296 : vector<1x128xf32> to vector<1x1x128xf32>
    %cst_74 = arith.constant dense<0xFF800000> : vector<1xf32>
    %298 = vector.multi_reduction <maximumf>, %297, %cst_74 [1, 2] : vector<1x1x128xf32> to vector<1xf32>
    %299 = vector.shape_cast %298 : vector<1xf32> to vector<1x1x1xf32>
    %300 = vector.extract %299[0, 0, 0] : f32 from vector<1x1x1xf32>
    %301 = vector.extract_strided_slice %246 {offsets = [3, 0], sizes = [1, 128], strides = [1, 1]} : vector<8x128xf32> to vector<1x128xf32>
    %302 = vector.broadcast %300 : f32 to vector<1x128xf32>
    %303 = arith.mulf %302, %301 : vector<1x128xf32>
    %cst_75 = arith.constant 1.000000e+00 : f32
    %304 = vector.broadcast %cst_75 : f32 to vector<1x128xf32>
    %305 = arith.subf %304, %303 : vector<1x128xf32>
    %306 = arith.mulf %291, %305 : vector<1x128xf32>
    %c4_i32_76 = arith.constant 4 : i32
    %307 = arith.addi %244, %c4_i32_76 : i32
    %308 = vector.broadcast %307 : i32 to vector<1x128xi32>
    %309 = arith.cmpi eq, %117, %308 : vector<1x128xi32>
    %cst_77 = arith.constant 0.000000e+00 : f32
    %310 = vector.broadcast %cst_77 : f32 to vector<1x128xf32>
    %311 = arith.select %309, %306, %310 : vector<1x128xi1>, vector<1x128xf32>
    %312 = vector.shape_cast %311 : vector<1x128xf32> to vector<1x1x128xf32>
    %cst_78 = arith.constant dense<0xFF800000> : vector<1xf32>
    %313 = vector.multi_reduction <maximumf>, %312, %cst_78 [1, 2] : vector<1x1x128xf32> to vector<1xf32>
    %314 = vector.shape_cast %313 : vector<1xf32> to vector<1x1x1xf32>
    %315 = vector.extract %314[0, 0, 0] : f32 from vector<1x1x1xf32>
    %316 = vector.extract_strided_slice %246 {offsets = [4, 0], sizes = [1, 128], strides = [1, 1]} : vector<8x128xf32> to vector<1x128xf32>
    %317 = vector.broadcast %315 : f32 to vector<1x128xf32>
    %318 = arith.mulf %317, %316 : vector<1x128xf32>
    %cst_79 = arith.constant 1.000000e+00 : f32
    %319 = vector.broadcast %cst_79 : f32 to vector<1x128xf32>
    %320 = arith.subf %319, %318 : vector<1x128xf32>
    %321 = arith.mulf %306, %320 : vector<1x128xf32>
    %c5_i32_80 = arith.constant 5 : i32
    %322 = arith.addi %244, %c5_i32_80 : i32
    %323 = vector.broadcast %322 : i32 to vector<1x128xi32>
    %324 = arith.cmpi eq, %117, %323 : vector<1x128xi32>
    %cst_81 = arith.constant 0.000000e+00 : f32
    %325 = vector.broadcast %cst_81 : f32 to vector<1x128xf32>
    %326 = arith.select %324, %321, %325 : vector<1x128xi1>, vector<1x128xf32>
    %327 = vector.shape_cast %326 : vector<1x128xf32> to vector<1x1x128xf32>
    %cst_82 = arith.constant dense<0xFF800000> : vector<1xf32>
    %328 = vector.multi_reduction <maximumf>, %327, %cst_82 [1, 2] : vector<1x1x128xf32> to vector<1xf32>
    %329 = vector.shape_cast %328 : vector<1xf32> to vector<1x1x1xf32>
    %330 = vector.extract %329[0, 0, 0] : f32 from vector<1x1x1xf32>
    %331 = vector.extract_strided_slice %246 {offsets = [5, 0], sizes = [1, 128], strides = [1, 1]} : vector<8x128xf32> to vector<1x128xf32>
    %332 = vector.broadcast %330 : f32 to vector<1x128xf32>
    %333 = arith.mulf %332, %331 : vector<1x128xf32>
    %cst_83 = arith.constant 1.000000e+00 : f32
    %334 = vector.broadcast %cst_83 : f32 to vector<1x128xf32>
    %335 = arith.subf %334, %333 : vector<1x128xf32>
    %336 = arith.mulf %321, %335 : vector<1x128xf32>
    %c6_i32_84 = arith.constant 6 : i32
    %337 = arith.addi %244, %c6_i32_84 : i32
    %338 = vector.broadcast %337 : i32 to vector<1x128xi32>
    %339 = arith.cmpi eq, %117, %338 : vector<1x128xi32>
    %cst_85 = arith.constant 0.000000e+00 : f32
    %340 = vector.broadcast %cst_85 : f32 to vector<1x128xf32>
    %341 = arith.select %339, %336, %340 : vector<1x128xi1>, vector<1x128xf32>
    %342 = vector.shape_cast %341 : vector<1x128xf32> to vector<1x1x128xf32>
    %cst_86 = arith.constant dense<0xFF800000> : vector<1xf32>
    %343 = vector.multi_reduction <maximumf>, %342, %cst_86 [1, 2] : vector<1x1x128xf32> to vector<1xf32>
    %344 = vector.shape_cast %343 : vector<1xf32> to vector<1x1x1xf32>
    %345 = vector.extract %344[0, 0, 0] : f32 from vector<1x1x1xf32>
    %346 = vector.extract_strided_slice %246 {offsets = [6, 0], sizes = [1, 128], strides = [1, 1]} : vector<8x128xf32> to vector<1x128xf32>
    %347 = vector.broadcast %345 : f32 to vector<1x128xf32>
    %348 = arith.mulf %347, %346 : vector<1x128xf32>
    %cst_87 = arith.constant 1.000000e+00 : f32
    %349 = vector.broadcast %cst_87 : f32 to vector<1x128xf32>
    %350 = arith.subf %349, %348 : vector<1x128xf32>
    %351 = arith.mulf %336, %350 : vector<1x128xf32>
    %c7_i32_88 = arith.constant 7 : i32
    %352 = arith.addi %244, %c7_i32_88 : i32
    %353 = vector.broadcast %352 : i32 to vector<1x128xi32>
    %354 = arith.cmpi eq, %117, %353 : vector<1x128xi32>
    %cst_89 = arith.constant 0.000000e+00 : f32
    %355 = vector.broadcast %cst_89 : f32 to vector<1x128xf32>
    %356 = arith.select %354, %351, %355 : vector<1x128xi1>, vector<1x128xf32>
    %357 = vector.shape_cast %356 : vector<1x128xf32> to vector<1x1x128xf32>
    %cst_90 = arith.constant dense<0xFF800000> : vector<1xf32>
    %358 = vector.multi_reduction <maximumf>, %357, %cst_90 [1, 2] : vector<1x1x128xf32> to vector<1xf32>
    %359 = vector.shape_cast %358 : vector<1xf32> to vector<1x1x1xf32>
    %360 = vector.extract %359[0, 0, 0] : f32 from vector<1x1x1xf32>
    %361 = vector.extract_strided_slice %246 {offsets = [7, 0], sizes = [1, 128], strides = [1, 1]} : vector<8x128xf32> to vector<1x128xf32>
    %362 = vector.broadcast %360 : f32 to vector<1x128xf32>
    %363 = arith.mulf %362, %361 : vector<1x128xf32>
    %cst_91 = arith.constant 1.000000e+00 : f32
    %364 = vector.broadcast %cst_91 : f32 to vector<1x128xf32>
    %365 = arith.subf %364, %363 : vector<1x128xf32>
    %366 = arith.mulf %351, %365 : vector<1x128xf32>
    %c2_i32_92 = arith.constant 2 : i32
    %c8_i32_93 = arith.constant 8 : i32
    %367 = arith.muli %c2_i32_92, %c8_i32_93 : i32
    %368 = tpu.assume_multiple %367, 8 : i32
    %369 = arith.index_cast %368 : i32 to index
    %c0_94 = arith.constant 0 : index
    %370 = vector.load %arg3[%369, %c0_94] : memref<128x128xf32, #tpu.memory_space<vmem>>, vector<8x128xf32>
    %c0_i32_95 = arith.constant 0 : i32
    %371 = arith.addi %368, %c0_i32_95 : i32
    %372 = vector.broadcast %371 : i32 to vector<1x128xi32>
    %373 = arith.cmpi eq, %117, %372 : vector<1x128xi32>
    %cst_96 = arith.constant 0.000000e+00 : f32
    %374 = vector.broadcast %cst_96 : f32 to vector<1x128xf32>
    %375 = arith.select %373, %366, %374 : vector<1x128xi1>, vector<1x128xf32>
    %376 = vector.shape_cast %375 : vector<1x128xf32> to vector<1x1x128xf32>
    %cst_97 = arith.constant dense<0xFF800000> : vector<1xf32>
    %377 = vector.multi_reduction <maximumf>, %376, %cst_97 [1, 2] : vector<1x1x128xf32> to vector<1xf32>
    %378 = vector.shape_cast %377 : vector<1xf32> to vector<1x1x1xf32>
    %379 = vector.extract %378[0, 0, 0] : f32 from vector<1x1x1xf32>
    %380 = vector.extract_strided_slice %370 {offsets = [0, 0], sizes = [1, 128], strides = [1, 1]} : vector<8x128xf32> to vector<1x128xf32>
    %381 = vector.broadcast %379 : f32 to vector<1x128xf32>
    %382 = arith.mulf %381, %380 : vector<1x128xf32>
    %cst_98 = arith.constant 1.000000e+00 : f32
    %383 = vector.broadcast %cst_98 : f32 to vector<1x128xf32>
    %384 = arith.subf %383, %382 : vector<1x128xf32>
    %385 = arith.mulf %366, %384 : vector<1x128xf32>
    %c1_i32_99 = arith.constant 1 : i32
    %386 = arith.addi %368, %c1_i32_99 : i32
    %387 = vector.broadcast %386 : i32 to vector<1x128xi32>
    %388 = arith.cmpi eq, %117, %387 : vector<1x128xi32>
    %cst_100 = arith.constant 0.000000e+00 : f32
    %389 = vector.broadcast %cst_100 : f32 to vector<1x128xf32>
    %390 = arith.select %388, %385, %389 : vector<1x128xi1>, vector<1x128xf32>
    %391 = vector.shape_cast %390 : vector<1x128xf32> to vector<1x1x128xf32>
    %cst_101 = arith.constant dense<0xFF800000> : vector<1xf32>
    %392 = vector.multi_reduction <maximumf>, %391, %cst_101 [1, 2] : vector<1x1x128xf32> to vector<1xf32>
    %393 = vector.shape_cast %392 : vector<1xf32> to vector<1x1x1xf32>
    %394 = vector.extract %393[0, 0, 0] : f32 from vector<1x1x1xf32>
    %395 = vector.extract_strided_slice %370 {offsets = [1, 0], sizes = [1, 128], strides = [1, 1]} : vector<8x128xf32> to vector<1x128xf32>
    %396 = vector.broadcast %394 : f32 to vector<1x128xf32>
    %397 = arith.mulf %396, %395 : vector<1x128xf32>
    %cst_102 = arith.constant 1.000000e+00 : f32
    %398 = vector.broadcast %cst_102 : f32 to vector<1x128xf32>
    %399 = arith.subf %398, %397 : vector<1x128xf32>
    %400 = arith.mulf %385, %399 : vector<1x128xf32>
    %c2_i32_103 = arith.constant 2 : i32
    %401 = arith.addi %368, %c2_i32_103 : i32
    %402 = vector.broadcast %401 : i32 to vector<1x128xi32>
    %403 = arith.cmpi eq, %117, %402 : vector<1x128xi32>
    %cst_104 = arith.constant 0.000000e+00 : f32
    %404 = vector.broadcast %cst_104 : f32 to vector<1x128xf32>
    %405 = arith.select %403, %400, %404 : vector<1x128xi1>, vector<1x128xf32>
    %406 = vector.shape_cast %405 : vector<1x128xf32> to vector<1x1x128xf32>
    %cst_105 = arith.constant dense<0xFF800000> : vector<1xf32>
    %407 = vector.multi_reduction <maximumf>, %406, %cst_105 [1, 2] : vector<1x1x128xf32> to vector<1xf32>
    %408 = vector.shape_cast %407 : vector<1xf32> to vector<1x1x1xf32>
    %409 = vector.extract %408[0, 0, 0] : f32 from vector<1x1x1xf32>
    %410 = vector.extract_strided_slice %370 {offsets = [2, 0], sizes = [1, 128], strides = [1, 1]} : vector<8x128xf32> to vector<1x128xf32>
    %411 = vector.broadcast %409 : f32 to vector<1x128xf32>
    %412 = arith.mulf %411, %410 : vector<1x128xf32>
    %cst_106 = arith.constant 1.000000e+00 : f32
    %413 = vector.broadcast %cst_106 : f32 to vector<1x128xf32>
    %414 = arith.subf %413, %412 : vector<1x128xf32>
    %415 = arith.mulf %400, %414 : vector<1x128xf32>
    %c3_i32_107 = arith.constant 3 : i32
    %416 = arith.addi %368, %c3_i32_107 : i32
    %417 = vector.broadcast %416 : i32 to vector<1x128xi32>
    %418 = arith.cmpi eq, %117, %417 : vector<1x128xi32>
    %cst_108 = arith.constant 0.000000e+00 : f32
    %419 = vector.broadcast %cst_108 : f32 to vector<1x128xf32>
    %420 = arith.select %418, %415, %419 : vector<1x128xi1>, vector<1x128xf32>
    %421 = vector.shape_cast %420 : vector<1x128xf32> to vector<1x1x128xf32>
    %cst_109 = arith.constant dense<0xFF800000> : vector<1xf32>
    %422 = vector.multi_reduction <maximumf>, %421, %cst_109 [1, 2] : vector<1x1x128xf32> to vector<1xf32>
    %423 = vector.shape_cast %422 : vector<1xf32> to vector<1x1x1xf32>
    %424 = vector.extract %423[0, 0, 0] : f32 from vector<1x1x1xf32>
    %425 = vector.extract_strided_slice %370 {offsets = [3, 0], sizes = [1, 128], strides = [1, 1]} : vector<8x128xf32> to vector<1x128xf32>
    %426 = vector.broadcast %424 : f32 to vector<1x128xf32>
    %427 = arith.mulf %426, %425 : vector<1x128xf32>
    %cst_110 = arith.constant 1.000000e+00 : f32
    %428 = vector.broadcast %cst_110 : f32 to vector<1x128xf32>
    %429 = arith.subf %428, %427 : vector<1x128xf32>
    %430 = arith.mulf %415, %429 : vector<1x128xf32>
    %c4_i32_111 = arith.constant 4 : i32
    %431 = arith.addi %368, %c4_i32_111 : i32
    %432 = vector.broadcast %431 : i32 to vector<1x128xi32>
    %433 = arith.cmpi eq, %117, %432 : vector<1x128xi32>
    %cst_112 = arith.constant 0.000000e+00 : f32
    %434 = vector.broadcast %cst_112 : f32 to vector<1x128xf32>
    %435 = arith.select %433, %430, %434 : vector<1x128xi1>, vector<1x128xf32>
    %436 = vector.shape_cast %435 : vector<1x128xf32> to vector<1x1x128xf32>
    %cst_113 = arith.constant dense<0xFF800000> : vector<1xf32>
    %437 = vector.multi_reduction <maximumf>, %436, %cst_113 [1, 2] : vector<1x1x128xf32> to vector<1xf32>
    %438 = vector.shape_cast %437 : vector<1xf32> to vector<1x1x1xf32>
    %439 = vector.extract %438[0, 0, 0] : f32 from vector<1x1x1xf32>
    %440 = vector.extract_strided_slice %370 {offsets = [4, 0], sizes = [1, 128], strides = [1, 1]} : vector<8x128xf32> to vector<1x128xf32>
    %441 = vector.broadcast %439 : f32 to vector<1x128xf32>
    %442 = arith.mulf %441, %440 : vector<1x128xf32>
    %cst_114 = arith.constant 1.000000e+00 : f32
    %443 = vector.broadcast %cst_114 : f32 to vector<1x128xf32>
    %444 = arith.subf %443, %442 : vector<1x128xf32>
    %445 = arith.mulf %430, %444 : vector<1x128xf32>
    %c5_i32_115 = arith.constant 5 : i32
    %446 = arith.addi %368, %c5_i32_115 : i32
    %447 = vector.broadcast %446 : i32 to vector<1x128xi32>
    %448 = arith.cmpi eq, %117, %447 : vector<1x128xi32>
    %cst_116 = arith.constant 0.000000e+00 : f32
    %449 = vector.broadcast %cst_116 : f32 to vector<1x128xf32>
    %450 = arith.select %448, %445, %449 : vector<1x128xi1>, vector<1x128xf32>
    %451 = vector.shape_cast %450 : vector<1x128xf32> to vector<1x1x128xf32>
    %cst_117 = arith.constant dense<0xFF800000> : vector<1xf32>
    %452 = vector.multi_reduction <maximumf>, %451, %cst_117 [1, 2] : vector<1x1x128xf32> to vector<1xf32>
    %453 = vector.shape_cast %452 : vector<1xf32> to vector<1x1x1xf32>
    %454 = vector.extract %453[0, 0, 0] : f32 from vector<1x1x1xf32>
    %455 = vector.extract_strided_slice %370 {offsets = [5, 0], sizes = [1, 128], strides = [1, 1]} : vector<8x128xf32> to vector<1x128xf32>
    %456 = vector.broadcast %454 : f32 to vector<1x128xf32>
    %457 = arith.mulf %456, %455 : vector<1x128xf32>
    %cst_118 = arith.constant 1.000000e+00 : f32
    %458 = vector.broadcast %cst_118 : f32 to vector<1x128xf32>
    %459 = arith.subf %458, %457 : vector<1x128xf32>
    %460 = arith.mulf %445, %459 : vector<1x128xf32>
    %c6_i32_119 = arith.constant 6 : i32
    %461 = arith.addi %368, %c6_i32_119 : i32
    %462 = vector.broadcast %461 : i32 to vector<1x128xi32>
    %463 = arith.cmpi eq, %117, %462 : vector<1x128xi32>
    %cst_120 = arith.constant 0.000000e+00 : f32
    %464 = vector.broadcast %cst_120 : f32 to vector<1x128xf32>
    %465 = arith.select %463, %460, %464 : vector<1x128xi1>, vector<1x128xf32>
    %466 = vector.shape_cast %465 : vector<1x128xf32> to vector<1x1x128xf32>
    %cst_121 = arith.constant dense<0xFF800000> : vector<1xf32>
    %467 = vector.multi_reduction <maximumf>, %466, %cst_121 [1, 2] : vector<1x1x128xf32> to vector<1xf32>
    %468 = vector.shape_cast %467 : vector<1xf32> to vector<1x1x1xf32>
    %469 = vector.extract %468[0, 0, 0] : f32 from vector<1x1x1xf32>
    %470 = vector.extract_strided_slice %370 {offsets = [6, 0], sizes = [1, 128], strides = [1, 1]} : vector<8x128xf32> to vector<1x128xf32>
    %471 = vector.broadcast %469 : f32 to vector<1x128xf32>
    %472 = arith.mulf %471, %470 : vector<1x128xf32>
    %cst_122 = arith.constant 1.000000e+00 : f32
    %473 = vector.broadcast %cst_122 : f32 to vector<1x128xf32>
    %474 = arith.subf %473, %472 : vector<1x128xf32>
    %475 = arith.mulf %460, %474 : vector<1x128xf32>
    %c7_i32_123 = arith.constant 7 : i32
    %476 = arith.addi %368, %c7_i32_123 : i32
    %477 = vector.broadcast %476 : i32 to vector<1x128xi32>
    %478 = arith.cmpi eq, %117, %477 : vector<1x128xi32>
    %cst_124 = arith.constant 0.000000e+00 : f32
    %479 = vector.broadcast %cst_124 : f32 to vector<1x128xf32>
    %480 = arith.select %478, %475, %479 : vector<1x128xi1>, vector<1x128xf32>
    %481 = vector.shape_cast %480 : vector<1x128xf32> to vector<1x1x128xf32>
    %cst_125 = arith.constant dense<0xFF800000> : vector<1xf32>
    %482 = vector.multi_reduction <maximumf>, %481, %cst_125 [1, 2] : vector<1x1x128xf32> to vector<1xf32>
    %483 = vector.shape_cast %482 : vector<1xf32> to vector<1x1x1xf32>
    %484 = vector.extract %483[0, 0, 0] : f32 from vector<1x1x1xf32>
    %485 = vector.extract_strided_slice %370 {offsets = [7, 0], sizes = [1, 128], strides = [1, 1]} : vector<8x128xf32> to vector<1x128xf32>
    %486 = vector.broadcast %484 : f32 to vector<1x128xf32>
    %487 = arith.mulf %486, %485 : vector<1x128xf32>
    %cst_126 = arith.constant 1.000000e+00 : f32
    %488 = vector.broadcast %cst_126 : f32 to vector<1x128xf32>
    %489 = arith.subf %488, %487 : vector<1x128xf32>
    %490 = arith.mulf %475, %489 : vector<1x128xf32>
    %c3_i32_127 = arith.constant 3 : i32
    %c8_i32_128 = arith.constant 8 : i32
    %491 = arith.muli %c3_i32_127, %c8_i32_128 : i32
    %492 = tpu.assume_multiple %491, 8 : i32
    %493 = arith.index_cast %492 : i32 to index
    %c0_129 = arith.constant 0 : index
    %494 = vector.load %arg3[%493, %c0_129] : memref<128x128xf32, #tpu.memory_space<vmem>>, vector<8x128xf32>
    %c0_i32_130 = arith.constant 0 : i32
    %495 = arith.addi %492, %c0_i32_130 : i32
    %496 = vector.broadcast %495 : i32 to vector<1x128xi32>
    %497 = arith.cmpi eq, %117, %496 : vector<1x128xi32>
    %cst_131 = arith.constant 0.000000e+00 : f32
    %498 = vector.broadcast %cst_131 : f32 to vector<1x128xf32>
    %499 = arith.select %497, %490, %498 : vector<1x128xi1>, vector<1x128xf32>
    %500 = vector.shape_cast %499 : vector<1x128xf32> to vector<1x1x128xf32>
    %cst_132 = arith.constant dense<0xFF800000> : vector<1xf32>
    %501 = vector.multi_reduction <maximumf>, %500, %cst_132 [1, 2] : vector<1x1x128xf32> to vector<1xf32>
    %502 = vector.shape_cast %501 : vector<1xf32> to vector<1x1x1xf32>
    %503 = vector.extract %502[0, 0, 0] : f32 from vector<1x1x1xf32>
    %504 = vector.extract_strided_slice %494 {offsets = [0, 0], sizes = [1, 128], strides = [1, 1]} : vector<8x128xf32> to vector<1x128xf32>
    %505 = vector.broadcast %503 : f32 to vector<1x128xf32>
    %506 = arith.mulf %505, %504 : vector<1x128xf32>
    %cst_133 = arith.constant 1.000000e+00 : f32
    %507 = vector.broadcast %cst_133 : f32 to vector<1x128xf32>
    %508 = arith.subf %507, %506 : vector<1x128xf32>
    %509 = arith.mulf %490, %508 : vector<1x128xf32>
    %c1_i32_134 = arith.constant 1 : i32
    %510 = arith.addi %492, %c1_i32_134 : i32
    %511 = vector.broadcast %510 : i32 to vector<1x128xi32>
    %512 = arith.cmpi eq, %117, %511 : vector<1x128xi32>
    %cst_135 = arith.constant 0.000000e+00 : f32
    %513 = vector.broadcast %cst_135 : f32 to vector<1x128xf32>
    %514 = arith.select %512, %509, %513 : vector<1x128xi1>, vector<1x128xf32>
    %515 = vector.shape_cast %514 : vector<1x128xf32> to vector<1x1x128xf32>
    %cst_136 = arith.constant dense<0xFF800000> : vector<1xf32>
    %516 = vector.multi_reduction <maximumf>, %515, %cst_136 [1, 2] : vector<1x1x128xf32> to vector<1xf32>
    %517 = vector.shape_cast %516 : vector<1xf32> to vector<1x1x1xf32>
    %518 = vector.extract %517[0, 0, 0] : f32 from vector<1x1x1xf32>
    %519 = vector.extract_strided_slice %494 {offsets = [1, 0], sizes = [1, 128], strides = [1, 1]} : vector<8x128xf32> to vector<1x128xf32>
    %520 = vector.broadcast %518 : f32 to vector<1x128xf32>
    %521 = arith.mulf %520, %519 : vector<1x128xf32>
    %cst_137 = arith.constant 1.000000e+00 : f32
    %522 = vector.broadcast %cst_137 : f32 to vector<1x128xf32>
    %523 = arith.subf %522, %521 : vector<1x128xf32>
    %524 = arith.mulf %509, %523 : vector<1x128xf32>
    %c2_i32_138 = arith.constant 2 : i32
    %525 = arith.addi %492, %c2_i32_138 : i32
    %526 = vector.broadcast %525 : i32 to vector<1x128xi32>
    %527 = arith.cmpi eq, %117, %526 : vector<1x128xi32>
    %cst_139 = arith.constant 0.000000e+00 : f32
    %528 = vector.broadcast %cst_139 : f32 to vector<1x128xf32>
    %529 = arith.select %527, %524, %528 : vector<1x128xi1>, vector<1x128xf32>
    %530 = vector.shape_cast %529 : vector<1x128xf32> to vector<1x1x128xf32>
    %cst_140 = arith.constant dense<0xFF800000> : vector<1xf32>
    %531 = vector.multi_reduction <maximumf>, %530, %cst_140 [1, 2] : vector<1x1x128xf32> to vector<1xf32>
    %532 = vector.shape_cast %531 : vector<1xf32> to vector<1x1x1xf32>
    %533 = vector.extract %532[0, 0, 0] : f32 from vector<1x1x1xf32>
    %534 = vector.extract_strided_slice %494 {offsets = [2, 0], sizes = [1, 128], strides = [1, 1]} : vector<8x128xf32> to vector<1x128xf32>
    %535 = vector.broadcast %533 : f32 to vector<1x128xf32>
    %536 = arith.mulf %535, %534 : vector<1x128xf32>
    %cst_141 = arith.constant 1.000000e+00 : f32
    %537 = vector.broadcast %cst_141 : f32 to vector<1x128xf32>
    %538 = arith.subf %537, %536 : vector<1x128xf32>
    %539 = arith.mulf %524, %538 : vector<1x128xf32>
    %c3_i32_142 = arith.constant 3 : i32
    %540 = arith.addi %492, %c3_i32_142 : i32
    %541 = vector.broadcast %540 : i32 to vector<1x128xi32>
    %542 = arith.cmpi eq, %117, %541 : vector<1x128xi32>
    %cst_143 = arith.constant 0.000000e+00 : f32
    %543 = vector.broadcast %cst_143 : f32 to vector<1x128xf32>
    %544 = arith.select %542, %539, %543 : vector<1x128xi1>, vector<1x128xf32>
    %545 = vector.shape_cast %544 : vector<1x128xf32> to vector<1x1x128xf32>
    %cst_144 = arith.constant dense<0xFF800000> : vector<1xf32>
    %546 = vector.multi_reduction <maximumf>, %545, %cst_144 [1, 2] : vector<1x1x128xf32> to vector<1xf32>
    %547 = vector.shape_cast %546 : vector<1xf32> to vector<1x1x1xf32>
    %548 = vector.extract %547[0, 0, 0] : f32 from vector<1x1x1xf32>
    %549 = vector.extract_strided_slice %494 {offsets = [3, 0], sizes = [1, 128], strides = [1, 1]} : vector<8x128xf32> to vector<1x128xf32>
    %550 = vector.broadcast %548 : f32 to vector<1x128xf32>
    %551 = arith.mulf %550, %549 : vector<1x128xf32>
    %cst_145 = arith.constant 1.000000e+00 : f32
    %552 = vector.broadcast %cst_145 : f32 to vector<1x128xf32>
    %553 = arith.subf %552, %551 : vector<1x128xf32>
    %554 = arith.mulf %539, %553 : vector<1x128xf32>
    %c4_i32_146 = arith.constant 4 : i32
    %555 = arith.addi %492, %c4_i32_146 : i32
    %556 = vector.broadcast %555 : i32 to vector<1x128xi32>
    %557 = arith.cmpi eq, %117, %556 : vector<1x128xi32>
    %cst_147 = arith.constant 0.000000e+00 : f32
    %558 = vector.broadcast %cst_147 : f32 to vector<1x128xf32>
    %559 = arith.select %557, %554, %558 : vector<1x128xi1>, vector<1x128xf32>
    %560 = vector.shape_cast %559 : vector<1x128xf32> to vector<1x1x128xf32>
    %cst_148 = arith.constant dense<0xFF800000> : vector<1xf32>
    %561 = vector.multi_reduction <maximumf>, %560, %cst_148 [1, 2] : vector<1x1x128xf32> to vector<1xf32>
    %562 = vector.shape_cast %561 : vector<1xf32> to vector<1x1x1xf32>
    %563 = vector.extract %562[0, 0, 0] : f32 from vector<1x1x1xf32>
    %564 = vector.extract_strided_slice %494 {offsets = [4, 0], sizes = [1, 128], strides = [1, 1]} : vector<8x128xf32> to vector<1x128xf32>
    %565 = vector.broadcast %563 : f32 to vector<1x128xf32>
    %566 = arith.mulf %565, %564 : vector<1x128xf32>
    %cst_149 = arith.constant 1.000000e+00 : f32
    %567 = vector.broadcast %cst_149 : f32 to vector<1x128xf32>
    %568 = arith.subf %567, %566 : vector<1x128xf32>
    %569 = arith.mulf %554, %568 : vector<1x128xf32>
    %c5_i32_150 = arith.constant 5 : i32
    %570 = arith.addi %492, %c5_i32_150 : i32
    %571 = vector.broadcast %570 : i32 to vector<1x128xi32>
    %572 = arith.cmpi eq, %117, %571 : vector<1x128xi32>
    %cst_151 = arith.constant 0.000000e+00 : f32
    %573 = vector.broadcast %cst_151 : f32 to vector<1x128xf32>
    %574 = arith.select %572, %569, %573 : vector<1x128xi1>, vector<1x128xf32>
    %575 = vector.shape_cast %574 : vector<1x128xf32> to vector<1x1x128xf32>
    %cst_152 = arith.constant dense<0xFF800000> : vector<1xf32>
    %576 = vector.multi_reduction <maximumf>, %575, %cst_152 [1, 2] : vector<1x1x128xf32> to vector<1xf32>
    %577 = vector.shape_cast %576 : vector<1xf32> to vector<1x1x1xf32>
    %578 = vector.extract %577[0, 0, 0] : f32 from vector<1x1x1xf32>
    %579 = vector.extract_strided_slice %494 {offsets = [5, 0], sizes = [1, 128], strides = [1, 1]} : vector<8x128xf32> to vector<1x128xf32>
    %580 = vector.broadcast %578 : f32 to vector<1x128xf32>
    %581 = arith.mulf %580, %579 : vector<1x128xf32>
    %cst_153 = arith.constant 1.000000e+00 : f32
    %582 = vector.broadcast %cst_153 : f32 to vector<1x128xf32>
    %583 = arith.subf %582, %581 : vector<1x128xf32>
    %584 = arith.mulf %569, %583 : vector<1x128xf32>
    %c6_i32_154 = arith.constant 6 : i32
    %585 = arith.addi %492, %c6_i32_154 : i32
    %586 = vector.broadcast %585 : i32 to vector<1x128xi32>
    %587 = arith.cmpi eq, %117, %586 : vector<1x128xi32>
    %cst_155 = arith.constant 0.000000e+00 : f32
    %588 = vector.broadcast %cst_155 : f32 to vector<1x128xf32>
    %589 = arith.select %587, %584, %588 : vector<1x128xi1>, vector<1x128xf32>
    %590 = vector.shape_cast %589 : vector<1x128xf32> to vector<1x1x128xf32>
    %cst_156 = arith.constant dense<0xFF800000> : vector<1xf32>
    %591 = vector.multi_reduction <maximumf>, %590, %cst_156 [1, 2] : vector<1x1x128xf32> to vector<1xf32>
    %592 = vector.shape_cast %591 : vector<1xf32> to vector<1x1x1xf32>
    %593 = vector.extract %592[0, 0, 0] : f32 from vector<1x1x1xf32>
    %594 = vector.extract_strided_slice %494 {offsets = [6, 0], sizes = [1, 128], strides = [1, 1]} : vector<8x128xf32> to vector<1x128xf32>
    %595 = vector.broadcast %593 : f32 to vector<1x128xf32>
    %596 = arith.mulf %595, %594 : vector<1x128xf32>
    %cst_157 = arith.constant 1.000000e+00 : f32
    %597 = vector.broadcast %cst_157 : f32 to vector<1x128xf32>
    %598 = arith.subf %597, %596 : vector<1x128xf32>
    %599 = arith.mulf %584, %598 : vector<1x128xf32>
    %c7_i32_158 = arith.constant 7 : i32
    %600 = arith.addi %492, %c7_i32_158 : i32
    %601 = vector.broadcast %600 : i32 to vector<1x128xi32>
    %602 = arith.cmpi eq, %117, %601 : vector<1x128xi32>
    %cst_159 = arith.constant 0.000000e+00 : f32
    %603 = vector.broadcast %cst_159 : f32 to vector<1x128xf32>
    %604 = arith.select %602, %599, %603 : vector<1x128xi1>, vector<1x128xf32>
    %605 = vector.shape_cast %604 : vector<1x128xf32> to vector<1x1x128xf32>
    %cst_160 = arith.constant dense<0xFF800000> : vector<1xf32>
    %606 = vector.multi_reduction <maximumf>, %605, %cst_160 [1, 2] : vector<1x1x128xf32> to vector<1xf32>
    %607 = vector.shape_cast %606 : vector<1xf32> to vector<1x1x1xf32>
    %608 = vector.extract %607[0, 0, 0] : f32 from vector<1x1x1xf32>
    %609 = vector.extract_strided_slice %494 {offsets = [7, 0], sizes = [1, 128], strides = [1, 1]} : vector<8x128xf32> to vector<1x128xf32>
    %610 = vector.broadcast %608 : f32 to vector<1x128xf32>
    %611 = arith.mulf %610, %609 : vector<1x128xf32>
    %cst_161 = arith.constant 1.000000e+00 : f32
    %612 = vector.broadcast %cst_161 : f32 to vector<1x128xf32>
    %613 = arith.subf %612, %611 : vector<1x128xf32>
    %614 = arith.mulf %599, %613 : vector<1x128xf32>
    %c4_i32_162 = arith.constant 4 : i32
    %c8_i32_163 = arith.constant 8 : i32
    %615 = arith.muli %c4_i32_162, %c8_i32_163 : i32
    %616 = tpu.assume_multiple %615, 8 : i32
    %617 = arith.index_cast %616 : i32 to index
    %c0_164 = arith.constant 0 : index
    %618 = vector.load %arg3[%617, %c0_164] : memref<128x128xf32, #tpu.memory_space<vmem>>, vector<8x128xf32>
    %c0_i32_165 = arith.constant 0 : i32
    %619 = arith.addi %616, %c0_i32_165 : i32
    %620 = vector.broadcast %619 : i32 to vector<1x128xi32>
    %621 = arith.cmpi eq, %117, %620 : vector<1x128xi32>
    %cst_166 = arith.constant 0.000000e+00 : f32
    %622 = vector.broadcast %cst_166 : f32 to vector<1x128xf32>
    %623 = arith.select %621, %614, %622 : vector<1x128xi1>, vector<1x128xf32>
    %624 = vector.shape_cast %623 : vector<1x128xf32> to vector<1x1x128xf32>
    %cst_167 = arith.constant dense<0xFF800000> : vector<1xf32>
    %625 = vector.multi_reduction <maximumf>, %624, %cst_167 [1, 2] : vector<1x1x128xf32> to vector<1xf32>
    %626 = vector.shape_cast %625 : vector<1xf32> to vector<1x1x1xf32>
    %627 = vector.extract %626[0, 0, 0] : f32 from vector<1x1x1xf32>
    %628 = vector.extract_strided_slice %618 {offsets = [0, 0], sizes = [1, 128], strides = [1, 1]} : vector<8x128xf32> to vector<1x128xf32>
    %629 = vector.broadcast %627 : f32 to vector<1x128xf32>
    %630 = arith.mulf %629, %628 : vector<1x128xf32>
    %cst_168 = arith.constant 1.000000e+00 : f32
    %631 = vector.broadcast %cst_168 : f32 to vector<1x128xf32>
    %632 = arith.subf %631, %630 : vector<1x128xf32>
    %633 = arith.mulf %614, %632 : vector<1x128xf32>
    %c1_i32_169 = arith.constant 1 : i32
    %634 = arith.addi %616, %c1_i32_169 : i32
    %635 = vector.broadcast %634 : i32 to vector<1x128xi32>
    %636 = arith.cmpi eq, %117, %635 : vector<1x128xi32>
    %cst_170 = arith.constant 0.000000e+00 : f32
    %637 = vector.broadcast %cst_170 : f32 to vector<1x128xf32>
    %638 = arith.select %636, %633, %637 : vector<1x128xi1>, vector<1x128xf32>
    %639 = vector.shape_cast %638 : vector<1x128xf32> to vector<1x1x128xf32>
    %cst_171 = arith.constant dense<0xFF800000> : vector<1xf32>
    %640 = vector.multi_reduction <maximumf>, %639, %cst_171 [1, 2] : vector<1x1x128xf32> to vector<1xf32>
    %641 = vector.shape_cast %640 : vector<1xf32> to vector<1x1x1xf32>
    %642 = vector.extract %641[0, 0, 0] : f32 from vector<1x1x1xf32>
    %643 = vector.extract_strided_slice %618 {offsets = [1, 0], sizes = [1, 128], strides = [1, 1]} : vector<8x128xf32> to vector<1x128xf32>
    %644 = vector.broadcast %642 : f32 to vector<1x128xf32>
    %645 = arith.mulf %644, %643 : vector<1x128xf32>
    %cst_172 = arith.constant 1.000000e+00 : f32
    %646 = vector.broadcast %cst_172 : f32 to vector<1x128xf32>
    %647 = arith.subf %646, %645 : vector<1x128xf32>
    %648 = arith.mulf %633, %647 : vector<1x128xf32>
    %c2_i32_173 = arith.constant 2 : i32
    %649 = arith.addi %616, %c2_i32_173 : i32
    %650 = vector.broadcast %649 : i32 to vector<1x128xi32>
    %651 = arith.cmpi eq, %117, %650 : vector<1x128xi32>
    %cst_174 = arith.constant 0.000000e+00 : f32
    %652 = vector.broadcast %cst_174 : f32 to vector<1x128xf32>
    %653 = arith.select %651, %648, %652 : vector<1x128xi1>, vector<1x128xf32>
    %654 = vector.shape_cast %653 : vector<1x128xf32> to vector<1x1x128xf32>
    %cst_175 = arith.constant dense<0xFF800000> : vector<1xf32>
    %655 = vector.multi_reduction <maximumf>, %654, %cst_175 [1, 2] : vector<1x1x128xf32> to vector<1xf32>
    %656 = vector.shape_cast %655 : vector<1xf32> to vector<1x1x1xf32>
    %657 = vector.extract %656[0, 0, 0] : f32 from vector<1x1x1xf32>
    %658 = vector.extract_strided_slice %618 {offsets = [2, 0], sizes = [1, 128], strides = [1, 1]} : vector<8x128xf32> to vector<1x128xf32>
    %659 = vector.broadcast %657 : f32 to vector<1x128xf32>
    %660 = arith.mulf %659, %658 : vector<1x128xf32>
    %cst_176 = arith.constant 1.000000e+00 : f32
    %661 = vector.broadcast %cst_176 : f32 to vector<1x128xf32>
    %662 = arith.subf %661, %660 : vector<1x128xf32>
    %663 = arith.mulf %648, %662 : vector<1x128xf32>
    %c3_i32_177 = arith.constant 3 : i32
    %664 = arith.addi %616, %c3_i32_177 : i32
    %665 = vector.broadcast %664 : i32 to vector<1x128xi32>
    %666 = arith.cmpi eq, %117, %665 : vector<1x128xi32>
    %cst_178 = arith.constant 0.000000e+00 : f32
    %667 = vector.broadcast %cst_178 : f32 to vector<1x128xf32>
    %668 = arith.select %666, %663, %667 : vector<1x128xi1>, vector<1x128xf32>
    %669 = vector.shape_cast %668 : vector<1x128xf32> to vector<1x1x128xf32>
    %cst_179 = arith.constant dense<0xFF800000> : vector<1xf32>
    %670 = vector.multi_reduction <maximumf>, %669, %cst_179 [1, 2] : vector<1x1x128xf32> to vector<1xf32>
    %671 = vector.shape_cast %670 : vector<1xf32> to vector<1x1x1xf32>
    %672 = vector.extract %671[0, 0, 0] : f32 from vector<1x1x1xf32>
    %673 = vector.extract_strided_slice %618 {offsets = [3, 0], sizes = [1, 128], strides = [1, 1]} : vector<8x128xf32> to vector<1x128xf32>
    %674 = vector.broadcast %672 : f32 to vector<1x128xf32>
    %675 = arith.mulf %674, %673 : vector<1x128xf32>
    %cst_180 = arith.constant 1.000000e+00 : f32
    %676 = vector.broadcast %cst_180 : f32 to vector<1x128xf32>
    %677 = arith.subf %676, %675 : vector<1x128xf32>
    %678 = arith.mulf %663, %677 : vector<1x128xf32>
    %c4_i32_181 = arith.constant 4 : i32
    %679 = arith.addi %616, %c4_i32_181 : i32
    %680 = vector.broadcast %679 : i32 to vector<1x128xi32>
    %681 = arith.cmpi eq, %117, %680 : vector<1x128xi32>
    %cst_182 = arith.constant 0.000000e+00 : f32
    %682 = vector.broadcast %cst_182 : f32 to vector<1x128xf32>
    %683 = arith.select %681, %678, %682 : vector<1x128xi1>, vector<1x128xf32>
    %684 = vector.shape_cast %683 : vector<1x128xf32> to vector<1x1x128xf32>
    %cst_183 = arith.constant dense<0xFF800000> : vector<1xf32>
    %685 = vector.multi_reduction <maximumf>, %684, %cst_183 [1, 2] : vector<1x1x128xf32> to vector<1xf32>
    %686 = vector.shape_cast %685 : vector<1xf32> to vector<1x1x1xf32>
    %687 = vector.extract %686[0, 0, 0] : f32 from vector<1x1x1xf32>
    %688 = vector.extract_strided_slice %618 {offsets = [4, 0], sizes = [1, 128], strides = [1, 1]} : vector<8x128xf32> to vector<1x128xf32>
    %689 = vector.broadcast %687 : f32 to vector<1x128xf32>
    %690 = arith.mulf %689, %688 : vector<1x128xf32>
    %cst_184 = arith.constant 1.000000e+00 : f32
    %691 = vector.broadcast %cst_184 : f32 to vector<1x128xf32>
    %692 = arith.subf %691, %690 : vector<1x128xf32>
    %693 = arith.mulf %678, %692 : vector<1x128xf32>
    %c5_i32_185 = arith.constant 5 : i32
    %694 = arith.addi %616, %c5_i32_185 : i32
    %695 = vector.broadcast %694 : i32 to vector<1x128xi32>
    %696 = arith.cmpi eq, %117, %695 : vector<1x128xi32>
    %cst_186 = arith.constant 0.000000e+00 : f32
    %697 = vector.broadcast %cst_186 : f32 to vector<1x128xf32>
    %698 = arith.select %696, %693, %697 : vector<1x128xi1>, vector<1x128xf32>
    %699 = vector.shape_cast %698 : vector<1x128xf32> to vector<1x1x128xf32>
    %cst_187 = arith.constant dense<0xFF800000> : vector<1xf32>
    %700 = vector.multi_reduction <maximumf>, %699, %cst_187 [1, 2] : vector<1x1x128xf32> to vector<1xf32>
    %701 = vector.shape_cast %700 : vector<1xf32> to vector<1x1x1xf32>
    %702 = vector.extract %701[0, 0, 0] : f32 from vector<1x1x1xf32>
    %703 = vector.extract_strided_slice %618 {offsets = [5, 0], sizes = [1, 128], strides = [1, 1]} : vector<8x128xf32> to vector<1x128xf32>
    %704 = vector.broadcast %702 : f32 to vector<1x128xf32>
    %705 = arith.mulf %704, %703 : vector<1x128xf32>
    %cst_188 = arith.constant 1.000000e+00 : f32
    %706 = vector.broadcast %cst_188 : f32 to vector<1x128xf32>
    %707 = arith.subf %706, %705 : vector<1x128xf32>
    %708 = arith.mulf %693, %707 : vector<1x128xf32>
    %c6_i32_189 = arith.constant 6 : i32
    %709 = arith.addi %616, %c6_i32_189 : i32
    %710 = vector.broadcast %709 : i32 to vector<1x128xi32>
    %711 = arith.cmpi eq, %117, %710 : vector<1x128xi32>
    %cst_190 = arith.constant 0.000000e+00 : f32
    %712 = vector.broadcast %cst_190 : f32 to vector<1x128xf32>
    %713 = arith.select %711, %708, %712 : vector<1x128xi1>, vector<1x128xf32>
    %714 = vector.shape_cast %713 : vector<1x128xf32> to vector<1x1x128xf32>
    %cst_191 = arith.constant dense<0xFF800000> : vector<1xf32>
    %715 = vector.multi_reduction <maximumf>, %714, %cst_191 [1, 2] : vector<1x1x128xf32> to vector<1xf32>
    %716 = vector.shape_cast %715 : vector<1xf32> to vector<1x1x1xf32>
    %717 = vector.extract %716[0, 0, 0] : f32 from vector<1x1x1xf32>
    %718 = vector.extract_strided_slice %618 {offsets = [6, 0], sizes = [1, 128], strides = [1, 1]} : vector<8x128xf32> to vector<1x128xf32>
    %719 = vector.broadcast %717 : f32 to vector<1x128xf32>
    %720 = arith.mulf %719, %718 : vector<1x128xf32>
    %cst_192 = arith.constant 1.000000e+00 : f32
    %721 = vector.broadcast %cst_192 : f32 to vector<1x128xf32>
    %722 = arith.subf %721, %720 : vector<1x128xf32>
    %723 = arith.mulf %708, %722 : vector<1x128xf32>
    %c7_i32_193 = arith.constant 7 : i32
    %724 = arith.addi %616, %c7_i32_193 : i32
    %725 = vector.broadcast %724 : i32 to vector<1x128xi32>
    %726 = arith.cmpi eq, %117, %725 : vector<1x128xi32>
    %cst_194 = arith.constant 0.000000e+00 : f32
    %727 = vector.broadcast %cst_194 : f32 to vector<1x128xf32>
    %728 = arith.select %726, %723, %727 : vector<1x128xi1>, vector<1x128xf32>
    %729 = vector.shape_cast %728 : vector<1x128xf32> to vector<1x1x128xf32>
    %cst_195 = arith.constant dense<0xFF800000> : vector<1xf32>
    %730 = vector.multi_reduction <maximumf>, %729, %cst_195 [1, 2] : vector<1x1x128xf32> to vector<1xf32>
    %731 = vector.shape_cast %730 : vector<1xf32> to vector<1x1x1xf32>
    %732 = vector.extract %731[0, 0, 0] : f32 from vector<1x1x1xf32>
    %733 = vector.extract_strided_slice %618 {offsets = [7, 0], sizes = [1, 128], strides = [1, 1]} : vector<8x128xf32> to vector<1x128xf32>
    %734 = vector.broadcast %732 : f32 to vector<1x128xf32>
    %735 = arith.mulf %734, %733 : vector<1x128xf32>
    %cst_196 = arith.constant 1.000000e+00 : f32
    %736 = vector.broadcast %cst_196 : f32 to vector<1x128xf32>
    %737 = arith.subf %736, %735 : vector<1x128xf32>
    %738 = arith.mulf %723, %737 : vector<1x128xf32>
    %c5_i32_197 = arith.constant 5 : i32
    %c8_i32_198 = arith.constant 8 : i32
    %739 = arith.muli %c5_i32_197, %c8_i32_198 : i32
    %740 = tpu.assume_multiple %739, 8 : i32
    %741 = arith.index_cast %740 : i32 to index
    %c0_199 = arith.constant 0 : index
    %742 = vector.load %arg3[%741, %c0_199] : memref<128x128xf32, #tpu.memory_space<vmem>>, vector<8x128xf32>
    %c0_i32_200 = arith.constant 0 : i32
    %743 = arith.addi %740, %c0_i32_200 : i32
    %744 = vector.broadcast %743 : i32 to vector<1x128xi32>
    %745 = arith.cmpi eq, %117, %744 : vector<1x128xi32>
    %cst_201 = arith.constant 0.000000e+00 : f32
    %746 = vector.broadcast %cst_201 : f32 to vector<1x128xf32>
    %747 = arith.select %745, %738, %746 : vector<1x128xi1>, vector<1x128xf32>
    %748 = vector.shape_cast %747 : vector<1x128xf32> to vector<1x1x128xf32>
    %cst_202 = arith.constant dense<0xFF800000> : vector<1xf32>
    %749 = vector.multi_reduction <maximumf>, %748, %cst_202 [1, 2] : vector<1x1x128xf32> to vector<1xf32>
    %750 = vector.shape_cast %749 : vector<1xf32> to vector<1x1x1xf32>
    %751 = vector.extract %750[0, 0, 0] : f32 from vector<1x1x1xf32>
    %752 = vector.extract_strided_slice %742 {offsets = [0, 0], sizes = [1, 128], strides = [1, 1]} : vector<8x128xf32> to vector<1x128xf32>
    %753 = vector.broadcast %751 : f32 to vector<1x128xf32>
    %754 = arith.mulf %753, %752 : vector<1x128xf32>
    %cst_203 = arith.constant 1.000000e+00 : f32
    %755 = vector.broadcast %cst_203 : f32 to vector<1x128xf32>
    %756 = arith.subf %755, %754 : vector<1x128xf32>
    %757 = arith.mulf %738, %756 : vector<1x128xf32>
    %c1_i32_204 = arith.constant 1 : i32
    %758 = arith.addi %740, %c1_i32_204 : i32
    %759 = vector.broadcast %758 : i32 to vector<1x128xi32>
    %760 = arith.cmpi eq, %117, %759 : vector<1x128xi32>
    %cst_205 = arith.constant 0.000000e+00 : f32
    %761 = vector.broadcast %cst_205 : f32 to vector<1x128xf32>
    %762 = arith.select %760, %757, %761 : vector<1x128xi1>, vector<1x128xf32>
    %763 = vector.shape_cast %762 : vector<1x128xf32> to vector<1x1x128xf32>
    %cst_206 = arith.constant dense<0xFF800000> : vector<1xf32>
    %764 = vector.multi_reduction <maximumf>, %763, %cst_206 [1, 2] : vector<1x1x128xf32> to vector<1xf32>
    %765 = vector.shape_cast %764 : vector<1xf32> to vector<1x1x1xf32>
    %766 = vector.extract %765[0, 0, 0] : f32 from vector<1x1x1xf32>
    %767 = vector.extract_strided_slice %742 {offsets = [1, 0], sizes = [1, 128], strides = [1, 1]} : vector<8x128xf32> to vector<1x128xf32>
    %768 = vector.broadcast %766 : f32 to vector<1x128xf32>
    %769 = arith.mulf %768, %767 : vector<1x128xf32>
    %cst_207 = arith.constant 1.000000e+00 : f32
    %770 = vector.broadcast %cst_207 : f32 to vector<1x128xf32>
    %771 = arith.subf %770, %769 : vector<1x128xf32>
    %772 = arith.mulf %757, %771 : vector<1x128xf32>
    %c2_i32_208 = arith.constant 2 : i32
    %773 = arith.addi %740, %c2_i32_208 : i32
    %774 = vector.broadcast %773 : i32 to vector<1x128xi32>
    %775 = arith.cmpi eq, %117, %774 : vector<1x128xi32>
    %cst_209 = arith.constant 0.000000e+00 : f32
    %776 = vector.broadcast %cst_209 : f32 to vector<1x128xf32>
    %777 = arith.select %775, %772, %776 : vector<1x128xi1>, vector<1x128xf32>
    %778 = vector.shape_cast %777 : vector<1x128xf32> to vector<1x1x128xf32>
    %cst_210 = arith.constant dense<0xFF800000> : vector<1xf32>
    %779 = vector.multi_reduction <maximumf>, %778, %cst_210 [1, 2] : vector<1x1x128xf32> to vector<1xf32>
    %780 = vector.shape_cast %779 : vector<1xf32> to vector<1x1x1xf32>
    %781 = vector.extract %780[0, 0, 0] : f32 from vector<1x1x1xf32>
    %782 = vector.extract_strided_slice %742 {offsets = [2, 0], sizes = [1, 128], strides = [1, 1]} : vector<8x128xf32> to vector<1x128xf32>
    %783 = vector.broadcast %781 : f32 to vector<1x128xf32>
    %784 = arith.mulf %783, %782 : vector<1x128xf32>
    %cst_211 = arith.constant 1.000000e+00 : f32
    %785 = vector.broadcast %cst_211 : f32 to vector<1x128xf32>
    %786 = arith.subf %785, %784 : vector<1x128xf32>
    %787 = arith.mulf %772, %786 : vector<1x128xf32>
    %c3_i32_212 = arith.constant 3 : i32
    %788 = arith.addi %740, %c3_i32_212 : i32
    %789 = vector.broadcast %788 : i32 to vector<1x128xi32>
    %790 = arith.cmpi eq, %117, %789 : vector<1x128xi32>
    %cst_213 = arith.constant 0.000000e+00 : f32
    %791 = vector.broadcast %cst_213 : f32 to vector<1x128xf32>
    %792 = arith.select %790, %787, %791 : vector<1x128xi1>, vector<1x128xf32>
    %793 = vector.shape_cast %792 : vector<1x128xf32> to vector<1x1x128xf32>
    %cst_214 = arith.constant dense<0xFF800000> : vector<1xf32>
    %794 = vector.multi_reduction <maximumf>, %793, %cst_214 [1, 2] : vector<1x1x128xf32> to vector<1xf32>
    %795 = vector.shape_cast %794 : vector<1xf32> to vector<1x1x1xf32>
    %796 = vector.extract %795[0, 0, 0] : f32 from vector<1x1x1xf32>
    %797 = vector.extract_strided_slice %742 {offsets = [3, 0], sizes = [1, 128], strides = [1, 1]} : vector<8x128xf32> to vector<1x128xf32>
    %798 = vector.broadcast %796 : f32 to vector<1x128xf32>
    %799 = arith.mulf %798, %797 : vector<1x128xf32>
    %cst_215 = arith.constant 1.000000e+00 : f32
    %800 = vector.broadcast %cst_215 : f32 to vector<1x128xf32>
    %801 = arith.subf %800, %799 : vector<1x128xf32>
    %802 = arith.mulf %787, %801 : vector<1x128xf32>
    %c4_i32_216 = arith.constant 4 : i32
    %803 = arith.addi %740, %c4_i32_216 : i32
    %804 = vector.broadcast %803 : i32 to vector<1x128xi32>
    %805 = arith.cmpi eq, %117, %804 : vector<1x128xi32>
    %cst_217 = arith.constant 0.000000e+00 : f32
    %806 = vector.broadcast %cst_217 : f32 to vector<1x128xf32>
    %807 = arith.select %805, %802, %806 : vector<1x128xi1>, vector<1x128xf32>
    %808 = vector.shape_cast %807 : vector<1x128xf32> to vector<1x1x128xf32>
    %cst_218 = arith.constant dense<0xFF800000> : vector<1xf32>
    %809 = vector.multi_reduction <maximumf>, %808, %cst_218 [1, 2] : vector<1x1x128xf32> to vector<1xf32>
    %810 = vector.shape_cast %809 : vector<1xf32> to vector<1x1x1xf32>
    %811 = vector.extract %810[0, 0, 0] : f32 from vector<1x1x1xf32>
    %812 = vector.extract_strided_slice %742 {offsets = [4, 0], sizes = [1, 128], strides = [1, 1]} : vector<8x128xf32> to vector<1x128xf32>
    %813 = vector.broadcast %811 : f32 to vector<1x128xf32>
    %814 = arith.mulf %813, %812 : vector<1x128xf32>
    %cst_219 = arith.constant 1.000000e+00 : f32
    %815 = vector.broadcast %cst_219 : f32 to vector<1x128xf32>
    %816 = arith.subf %815, %814 : vector<1x128xf32>
    %817 = arith.mulf %802, %816 : vector<1x128xf32>
    %c5_i32_220 = arith.constant 5 : i32
    %818 = arith.addi %740, %c5_i32_220 : i32
    %819 = vector.broadcast %818 : i32 to vector<1x128xi32>
    %820 = arith.cmpi eq, %117, %819 : vector<1x128xi32>
    %cst_221 = arith.constant 0.000000e+00 : f32
    %821 = vector.broadcast %cst_221 : f32 to vector<1x128xf32>
    %822 = arith.select %820, %817, %821 : vector<1x128xi1>, vector<1x128xf32>
    %823 = vector.shape_cast %822 : vector<1x128xf32> to vector<1x1x128xf32>
    %cst_222 = arith.constant dense<0xFF800000> : vector<1xf32>
    %824 = vector.multi_reduction <maximumf>, %823, %cst_222 [1, 2] : vector<1x1x128xf32> to vector<1xf32>
    %825 = vector.shape_cast %824 : vector<1xf32> to vector<1x1x1xf32>
    %826 = vector.extract %825[0, 0, 0] : f32 from vector<1x1x1xf32>
    %827 = vector.extract_strided_slice %742 {offsets = [5, 0], sizes = [1, 128], strides = [1, 1]} : vector<8x128xf32> to vector<1x128xf32>
    %828 = vector.broadcast %826 : f32 to vector<1x128xf32>
    %829 = arith.mulf %828, %827 : vector<1x128xf32>
    %cst_223 = arith.constant 1.000000e+00 : f32
    %830 = vector.broadcast %cst_223 : f32 to vector<1x128xf32>
    %831 = arith.subf %830, %829 : vector<1x128xf32>
    %832 = arith.mulf %817, %831 : vector<1x128xf32>
    %c6_i32_224 = arith.constant 6 : i32
    %833 = arith.addi %740, %c6_i32_224 : i32
    %834 = vector.broadcast %833 : i32 to vector<1x128xi32>
    %835 = arith.cmpi eq, %117, %834 : vector<1x128xi32>
    %cst_225 = arith.constant 0.000000e+00 : f32
    %836 = vector.broadcast %cst_225 : f32 to vector<1x128xf32>
    %837 = arith.select %835, %832, %836 : vector<1x128xi1>, vector<1x128xf32>
    %838 = vector.shape_cast %837 : vector<1x128xf32> to vector<1x1x128xf32>
    %cst_226 = arith.constant dense<0xFF800000> : vector<1xf32>
    %839 = vector.multi_reduction <maximumf>, %838, %cst_226 [1, 2] : vector<1x1x128xf32> to vector<1xf32>
    %840 = vector.shape_cast %839 : vector<1xf32> to vector<1x1x1xf32>
    %841 = vector.extract %840[0, 0, 0] : f32 from vector<1x1x1xf32>
    %842 = vector.extract_strided_slice %742 {offsets = [6, 0], sizes = [1, 128], strides = [1, 1]} : vector<8x128xf32> to vector<1x128xf32>
    %843 = vector.broadcast %841 : f32 to vector<1x128xf32>
    %844 = arith.mulf %843, %842 : vector<1x128xf32>
    %cst_227 = arith.constant 1.000000e+00 : f32
    %845 = vector.broadcast %cst_227 : f32 to vector<1x128xf32>
    %846 = arith.subf %845, %844 : vector<1x128xf32>
    %847 = arith.mulf %832, %846 : vector<1x128xf32>
    %c7_i32_228 = arith.constant 7 : i32
    %848 = arith.addi %740, %c7_i32_228 : i32
    %849 = vector.broadcast %848 : i32 to vector<1x128xi32>
    %850 = arith.cmpi eq, %117, %849 : vector<1x128xi32>
    %cst_229 = arith.constant 0.000000e+00 : f32
    %851 = vector.broadcast %cst_229 : f32 to vector<1x128xf32>
    %852 = arith.select %850, %847, %851 : vector<1x128xi1>, vector<1x128xf32>
    %853 = vector.shape_cast %852 : vector<1x128xf32> to vector<1x1x128xf32>
    %cst_230 = arith.constant dense<0xFF800000> : vector<1xf32>
    %854 = vector.multi_reduction <maximumf>, %853, %cst_230 [1, 2] : vector<1x1x128xf32> to vector<1xf32>
    %855 = vector.shape_cast %854 : vector<1xf32> to vector<1x1x1xf32>
    %856 = vector.extract %855[0, 0, 0] : f32 from vector<1x1x1xf32>
    %857 = vector.extract_strided_slice %742 {offsets = [7, 0], sizes = [1, 128], strides = [1, 1]} : vector<8x128xf32> to vector<1x128xf32>
    %858 = vector.broadcast %856 : f32 to vector<1x128xf32>
    %859 = arith.mulf %858, %857 : vector<1x128xf32>
    %cst_231 = arith.constant 1.000000e+00 : f32
    %860 = vector.broadcast %cst_231 : f32 to vector<1x128xf32>
    %861 = arith.subf %860, %859 : vector<1x128xf32>
    %862 = arith.mulf %847, %861 : vector<1x128xf32>
    %c6_i32_232 = arith.constant 6 : i32
    %c8_i32_233 = arith.constant 8 : i32
    %863 = arith.muli %c6_i32_232, %c8_i32_233 : i32
    %864 = tpu.assume_multiple %863, 8 : i32
    %865 = arith.index_cast %864 : i32 to index
    %c0_234 = arith.constant 0 : index
    %866 = vector.load %arg3[%865, %c0_234] : memref<128x128xf32, #tpu.memory_space<vmem>>, vector<8x128xf32>
    %c0_i32_235 = arith.constant 0 : i32
    %867 = arith.addi %864, %c0_i32_235 : i32
    %868 = vector.broadcast %867 : i32 to vector<1x128xi32>
    %869 = arith.cmpi eq, %117, %868 : vector<1x128xi32>
    %cst_236 = arith.constant 0.000000e+00 : f32
    %870 = vector.broadcast %cst_236 : f32 to vector<1x128xf32>
    %871 = arith.select %869, %862, %870 : vector<1x128xi1>, vector<1x128xf32>
    %872 = vector.shape_cast %871 : vector<1x128xf32> to vector<1x1x128xf32>
    %cst_237 = arith.constant dense<0xFF800000> : vector<1xf32>
    %873 = vector.multi_reduction <maximumf>, %872, %cst_237 [1, 2] : vector<1x1x128xf32> to vector<1xf32>
    %874 = vector.shape_cast %873 : vector<1xf32> to vector<1x1x1xf32>
    %875 = vector.extract %874[0, 0, 0] : f32 from vector<1x1x1xf32>
    %876 = vector.extract_strided_slice %866 {offsets = [0, 0], sizes = [1, 128], strides = [1, 1]} : vector<8x128xf32> to vector<1x128xf32>
    %877 = vector.broadcast %875 : f32 to vector<1x128xf32>
    %878 = arith.mulf %877, %876 : vector<1x128xf32>
    %cst_238 = arith.constant 1.000000e+00 : f32
    %879 = vector.broadcast %cst_238 : f32 to vector<1x128xf32>
    %880 = arith.subf %879, %878 : vector<1x128xf32>
    %881 = arith.mulf %862, %880 : vector<1x128xf32>
    %c1_i32_239 = arith.constant 1 : i32
    %882 = arith.addi %864, %c1_i32_239 : i32
    %883 = vector.broadcast %882 : i32 to vector<1x128xi32>
    %884 = arith.cmpi eq, %117, %883 : vector<1x128xi32>
    %cst_240 = arith.constant 0.000000e+00 : f32
    %885 = vector.broadcast %cst_240 : f32 to vector<1x128xf32>
    %886 = arith.select %884, %881, %885 : vector<1x128xi1>, vector<1x128xf32>
    %887 = vector.shape_cast %886 : vector<1x128xf32> to vector<1x1x128xf32>
    %cst_241 = arith.constant dense<0xFF800000> : vector<1xf32>
    %888 = vector.multi_reduction <maximumf>, %887, %cst_241 [1, 2] : vector<1x1x128xf32> to vector<1xf32>
    %889 = vector.shape_cast %888 : vector<1xf32> to vector<1x1x1xf32>
    %890 = vector.extract %889[0, 0, 0] : f32 from vector<1x1x1xf32>
    %891 = vector.extract_strided_slice %866 {offsets = [1, 0], sizes = [1, 128], strides = [1, 1]} : vector<8x128xf32> to vector<1x128xf32>
    %892 = vector.broadcast %890 : f32 to vector<1x128xf32>
    %893 = arith.mulf %892, %891 : vector<1x128xf32>
    %cst_242 = arith.constant 1.000000e+00 : f32
    %894 = vector.broadcast %cst_242 : f32 to vector<1x128xf32>
    %895 = arith.subf %894, %893 : vector<1x128xf32>
    %896 = arith.mulf %881, %895 : vector<1x128xf32>
    %c2_i32_243 = arith.constant 2 : i32
    %897 = arith.addi %864, %c2_i32_243 : i32
    %898 = vector.broadcast %897 : i32 to vector<1x128xi32>
    %899 = arith.cmpi eq, %117, %898 : vector<1x128xi32>
    %cst_244 = arith.constant 0.000000e+00 : f32
    %900 = vector.broadcast %cst_244 : f32 to vector<1x128xf32>
    %901 = arith.select %899, %896, %900 : vector<1x128xi1>, vector<1x128xf32>
    %902 = vector.shape_cast %901 : vector<1x128xf32> to vector<1x1x128xf32>
    %cst_245 = arith.constant dense<0xFF800000> : vector<1xf32>
    %903 = vector.multi_reduction <maximumf>, %902, %cst_245 [1, 2] : vector<1x1x128xf32> to vector<1xf32>
    %904 = vector.shape_cast %903 : vector<1xf32> to vector<1x1x1xf32>
    %905 = vector.extract %904[0, 0, 0] : f32 from vector<1x1x1xf32>
    %906 = vector.extract_strided_slice %866 {offsets = [2, 0], sizes = [1, 128], strides = [1, 1]} : vector<8x128xf32> to vector<1x128xf32>
    %907 = vector.broadcast %905 : f32 to vector<1x128xf32>
    %908 = arith.mulf %907, %906 : vector<1x128xf32>
    %cst_246 = arith.constant 1.000000e+00 : f32
    %909 = vector.broadcast %cst_246 : f32 to vector<1x128xf32>
    %910 = arith.subf %909, %908 : vector<1x128xf32>
    %911 = arith.mulf %896, %910 : vector<1x128xf32>
    %c3_i32_247 = arith.constant 3 : i32
    %912 = arith.addi %864, %c3_i32_247 : i32
    %913 = vector.broadcast %912 : i32 to vector<1x128xi32>
    %914 = arith.cmpi eq, %117, %913 : vector<1x128xi32>
    %cst_248 = arith.constant 0.000000e+00 : f32
    %915 = vector.broadcast %cst_248 : f32 to vector<1x128xf32>
    %916 = arith.select %914, %911, %915 : vector<1x128xi1>, vector<1x128xf32>
    %917 = vector.shape_cast %916 : vector<1x128xf32> to vector<1x1x128xf32>
    %cst_249 = arith.constant dense<0xFF800000> : vector<1xf32>
    %918 = vector.multi_reduction <maximumf>, %917, %cst_249 [1, 2] : vector<1x1x128xf32> to vector<1xf32>
    %919 = vector.shape_cast %918 : vector<1xf32> to vector<1x1x1xf32>
    %920 = vector.extract %919[0, 0, 0] : f32 from vector<1x1x1xf32>
    %921 = vector.extract_strided_slice %866 {offsets = [3, 0], sizes = [1, 128], strides = [1, 1]} : vector<8x128xf32> to vector<1x128xf32>
    %922 = vector.broadcast %920 : f32 to vector<1x128xf32>
    %923 = arith.mulf %922, %921 : vector<1x128xf32>
    %cst_250 = arith.constant 1.000000e+00 : f32
    %924 = vector.broadcast %cst_250 : f32 to vector<1x128xf32>
    %925 = arith.subf %924, %923 : vector<1x128xf32>
    %926 = arith.mulf %911, %925 : vector<1x128xf32>
    %c4_i32_251 = arith.constant 4 : i32
    %927 = arith.addi %864, %c4_i32_251 : i32
    %928 = vector.broadcast %927 : i32 to vector<1x128xi32>
    %929 = arith.cmpi eq, %117, %928 : vector<1x128xi32>
    %cst_252 = arith.constant 0.000000e+00 : f32
    %930 = vector.broadcast %cst_252 : f32 to vector<1x128xf32>
    %931 = arith.select %929, %926, %930 : vector<1x128xi1>, vector<1x128xf32>
    %932 = vector.shape_cast %931 : vector<1x128xf32> to vector<1x1x128xf32>
    %cst_253 = arith.constant dense<0xFF800000> : vector<1xf32>
    %933 = vector.multi_reduction <maximumf>, %932, %cst_253 [1, 2] : vector<1x1x128xf32> to vector<1xf32>
    %934 = vector.shape_cast %933 : vector<1xf32> to vector<1x1x1xf32>
    %935 = vector.extract %934[0, 0, 0] : f32 from vector<1x1x1xf32>
    %936 = vector.extract_strided_slice %866 {offsets = [4, 0], sizes = [1, 128], strides = [1, 1]} : vector<8x128xf32> to vector<1x128xf32>
    %937 = vector.broadcast %935 : f32 to vector<1x128xf32>
    %938 = arith.mulf %937, %936 : vector<1x128xf32>
    %cst_254 = arith.constant 1.000000e+00 : f32
    %939 = vector.broadcast %cst_254 : f32 to vector<1x128xf32>
    %940 = arith.subf %939, %938 : vector<1x128xf32>
    %941 = arith.mulf %926, %940 : vector<1x128xf32>
    %c5_i32_255 = arith.constant 5 : i32
    %942 = arith.addi %864, %c5_i32_255 : i32
    %943 = vector.broadcast %942 : i32 to vector<1x128xi32>
    %944 = arith.cmpi eq, %117, %943 : vector<1x128xi32>
    %cst_256 = arith.constant 0.000000e+00 : f32
    %945 = vector.broadcast %cst_256 : f32 to vector<1x128xf32>
    %946 = arith.select %944, %941, %945 : vector<1x128xi1>, vector<1x128xf32>
    %947 = vector.shape_cast %946 : vector<1x128xf32> to vector<1x1x128xf32>
    %cst_257 = arith.constant dense<0xFF800000> : vector<1xf32>
    %948 = vector.multi_reduction <maximumf>, %947, %cst_257 [1, 2] : vector<1x1x128xf32> to vector<1xf32>
    %949 = vector.shape_cast %948 : vector<1xf32> to vector<1x1x1xf32>
    %950 = vector.extract %949[0, 0, 0] : f32 from vector<1x1x1xf32>
    %951 = vector.extract_strided_slice %866 {offsets = [5, 0], sizes = [1, 128], strides = [1, 1]} : vector<8x128xf32> to vector<1x128xf32>
    %952 = vector.broadcast %950 : f32 to vector<1x128xf32>
    %953 = arith.mulf %952, %951 : vector<1x128xf32>
    %cst_258 = arith.constant 1.000000e+00 : f32
    %954 = vector.broadcast %cst_258 : f32 to vector<1x128xf32>
    %955 = arith.subf %954, %953 : vector<1x128xf32>
    %956 = arith.mulf %941, %955 : vector<1x128xf32>
    %c6_i32_259 = arith.constant 6 : i32
    %957 = arith.addi %864, %c6_i32_259 : i32
    %958 = vector.broadcast %957 : i32 to vector<1x128xi32>
    %959 = arith.cmpi eq, %117, %958 : vector<1x128xi32>
    %cst_260 = arith.constant 0.000000e+00 : f32
    %960 = vector.broadcast %cst_260 : f32 to vector<1x128xf32>
    %961 = arith.select %959, %956, %960 : vector<1x128xi1>, vector<1x128xf32>
    %962 = vector.shape_cast %961 : vector<1x128xf32> to vector<1x1x128xf32>
    %cst_261 = arith.constant dense<0xFF800000> : vector<1xf32>
    %963 = vector.multi_reduction <maximumf>, %962, %cst_261 [1, 2] : vector<1x1x128xf32> to vector<1xf32>
    %964 = vector.shape_cast %963 : vector<1xf32> to vector<1x1x1xf32>
    %965 = vector.extract %964[0, 0, 0] : f32 from vector<1x1x1xf32>
    %966 = vector.extract_strided_slice %866 {offsets = [6, 0], sizes = [1, 128], strides = [1, 1]} : vector<8x128xf32> to vector<1x128xf32>
    %967 = vector.broadcast %965 : f32 to vector<1x128xf32>
    %968 = arith.mulf %967, %966 : vector<1x128xf32>
    %cst_262 = arith.constant 1.000000e+00 : f32
    %969 = vector.broadcast %cst_262 : f32 to vector<1x128xf32>
    %970 = arith.subf %969, %968 : vector<1x128xf32>
    %971 = arith.mulf %956, %970 : vector<1x128xf32>
    %c7_i32_263 = arith.constant 7 : i32
    %972 = arith.addi %864, %c7_i32_263 : i32
    %973 = vector.broadcast %972 : i32 to vector<1x128xi32>
    %974 = arith.cmpi eq, %117, %973 : vector<1x128xi32>
    %cst_264 = arith.constant 0.000000e+00 : f32
    %975 = vector.broadcast %cst_264 : f32 to vector<1x128xf32>
    %976 = arith.select %974, %971, %975 : vector<1x128xi1>, vector<1x128xf32>
    %977 = vector.shape_cast %976 : vector<1x128xf32> to vector<1x1x128xf32>
    %cst_265 = arith.constant dense<0xFF800000> : vector<1xf32>
    %978 = vector.multi_reduction <maximumf>, %977, %cst_265 [1, 2] : vector<1x1x128xf32> to vector<1xf32>
    %979 = vector.shape_cast %978 : vector<1xf32> to vector<1x1x1xf32>
    %980 = vector.extract %979[0, 0, 0] : f32 from vector<1x1x1xf32>
    %981 = vector.extract_strided_slice %866 {offsets = [7, 0], sizes = [1, 128], strides = [1, 1]} : vector<8x128xf32> to vector<1x128xf32>
    %982 = vector.broadcast %980 : f32 to vector<1x128xf32>
    %983 = arith.mulf %982, %981 : vector<1x128xf32>
    %cst_266 = arith.constant 1.000000e+00 : f32
    %984 = vector.broadcast %cst_266 : f32 to vector<1x128xf32>
    %985 = arith.subf %984, %983 : vector<1x128xf32>
    %986 = arith.mulf %971, %985 : vector<1x128xf32>
    %c7_i32_267 = arith.constant 7 : i32
    %c8_i32_268 = arith.constant 8 : i32
    %987 = arith.muli %c7_i32_267, %c8_i32_268 : i32
    %988 = tpu.assume_multiple %987, 8 : i32
    %989 = arith.index_cast %988 : i32 to index
    %c0_269 = arith.constant 0 : index
    %990 = vector.load %arg3[%989, %c0_269] : memref<128x128xf32, #tpu.memory_space<vmem>>, vector<8x128xf32>
    %c0_i32_270 = arith.constant 0 : i32
    %991 = arith.addi %988, %c0_i32_270 : i32
    %992 = vector.broadcast %991 : i32 to vector<1x128xi32>
    %993 = arith.cmpi eq, %117, %992 : vector<1x128xi32>
    %cst_271 = arith.constant 0.000000e+00 : f32
    %994 = vector.broadcast %cst_271 : f32 to vector<1x128xf32>
    %995 = arith.select %993, %986, %994 : vector<1x128xi1>, vector<1x128xf32>
    %996 = vector.shape_cast %995 : vector<1x128xf32> to vector<1x1x128xf32>
    %cst_272 = arith.constant dense<0xFF800000> : vector<1xf32>
    %997 = vector.multi_reduction <maximumf>, %996, %cst_272 [1, 2] : vector<1x1x128xf32> to vector<1xf32>
    %998 = vector.shape_cast %997 : vector<1xf32> to vector<1x1x1xf32>
    %999 = vector.extract %998[0, 0, 0] : f32 from vector<1x1x1xf32>
    %1000 = vector.extract_strided_slice %990 {offsets = [0, 0], sizes = [1, 128], strides = [1, 1]} : vector<8x128xf32> to vector<1x128xf32>
    %1001 = vector.broadcast %999 : f32 to vector<1x128xf32>
    %1002 = arith.mulf %1001, %1000 : vector<1x128xf32>
    %cst_273 = arith.constant 1.000000e+00 : f32
    %1003 = vector.broadcast %cst_273 : f32 to vector<1x128xf32>
    %1004 = arith.subf %1003, %1002 : vector<1x128xf32>
    %1005 = arith.mulf %986, %1004 : vector<1x128xf32>
    %c1_i32_274 = arith.constant 1 : i32
    %1006 = arith.addi %988, %c1_i32_274 : i32
    %1007 = vector.broadcast %1006 : i32 to vector<1x128xi32>
    %1008 = arith.cmpi eq, %117, %1007 : vector<1x128xi32>
    %cst_275 = arith.constant 0.000000e+00 : f32
    %1009 = vector.broadcast %cst_275 : f32 to vector<1x128xf32>
    %1010 = arith.select %1008, %1005, %1009 : vector<1x128xi1>, vector<1x128xf32>
    %1011 = vector.shape_cast %1010 : vector<1x128xf32> to vector<1x1x128xf32>
    %cst_276 = arith.constant dense<0xFF800000> : vector<1xf32>
    %1012 = vector.multi_reduction <maximumf>, %1011, %cst_276 [1, 2] : vector<1x1x128xf32> to vector<1xf32>
    %1013 = vector.shape_cast %1012 : vector<1xf32> to vector<1x1x1xf32>
    %1014 = vector.extract %1013[0, 0, 0] : f32 from vector<1x1x1xf32>
    %1015 = vector.extract_strided_slice %990 {offsets = [1, 0], sizes = [1, 128], strides = [1, 1]} : vector<8x128xf32> to vector<1x128xf32>
    %1016 = vector.broadcast %1014 : f32 to vector<1x128xf32>
    %1017 = arith.mulf %1016, %1015 : vector<1x128xf32>
    %cst_277 = arith.constant 1.000000e+00 : f32
    %1018 = vector.broadcast %cst_277 : f32 to vector<1x128xf32>
    %1019 = arith.subf %1018, %1017 : vector<1x128xf32>
    %1020 = arith.mulf %1005, %1019 : vector<1x128xf32>
    %c2_i32_278 = arith.constant 2 : i32
    %1021 = arith.addi %988, %c2_i32_278 : i32
    %1022 = vector.broadcast %1021 : i32 to vector<1x128xi32>
    %1023 = arith.cmpi eq, %117, %1022 : vector<1x128xi32>
    %cst_279 = arith.constant 0.000000e+00 : f32
    %1024 = vector.broadcast %cst_279 : f32 to vector<1x128xf32>
    %1025 = arith.select %1023, %1020, %1024 : vector<1x128xi1>, vector<1x128xf32>
    %1026 = vector.shape_cast %1025 : vector<1x128xf32> to vector<1x1x128xf32>
    %cst_280 = arith.constant dense<0xFF800000> : vector<1xf32>
    %1027 = vector.multi_reduction <maximumf>, %1026, %cst_280 [1, 2] : vector<1x1x128xf32> to vector<1xf32>
    %1028 = vector.shape_cast %1027 : vector<1xf32> to vector<1x1x1xf32>
    %1029 = vector.extract %1028[0, 0, 0] : f32 from vector<1x1x1xf32>
    %1030 = vector.extract_strided_slice %990 {offsets = [2, 0], sizes = [1, 128], strides = [1, 1]} : vector<8x128xf32> to vector<1x128xf32>
    %1031 = vector.broadcast %1029 : f32 to vector<1x128xf32>
    %1032 = arith.mulf %1031, %1030 : vector<1x128xf32>
    %cst_281 = arith.constant 1.000000e+00 : f32
    %1033 = vector.broadcast %cst_281 : f32 to vector<1x128xf32>
    %1034 = arith.subf %1033, %1032 : vector<1x128xf32>
    %1035 = arith.mulf %1020, %1034 : vector<1x128xf32>
    %c3_i32_282 = arith.constant 3 : i32
    %1036 = arith.addi %988, %c3_i32_282 : i32
    %1037 = vector.broadcast %1036 : i32 to vector<1x128xi32>
    %1038 = arith.cmpi eq, %117, %1037 : vector<1x128xi32>
    %cst_283 = arith.constant 0.000000e+00 : f32
    %1039 = vector.broadcast %cst_283 : f32 to vector<1x128xf32>
    %1040 = arith.select %1038, %1035, %1039 : vector<1x128xi1>, vector<1x128xf32>
    %1041 = vector.shape_cast %1040 : vector<1x128xf32> to vector<1x1x128xf32>
    %cst_284 = arith.constant dense<0xFF800000> : vector<1xf32>
    %1042 = vector.multi_reduction <maximumf>, %1041, %cst_284 [1, 2] : vector<1x1x128xf32> to vector<1xf32>
    %1043 = vector.shape_cast %1042 : vector<1xf32> to vector<1x1x1xf32>
    %1044 = vector.extract %1043[0, 0, 0] : f32 from vector<1x1x1xf32>
    %1045 = vector.extract_strided_slice %990 {offsets = [3, 0], sizes = [1, 128], strides = [1, 1]} : vector<8x128xf32> to vector<1x128xf32>
    %1046 = vector.broadcast %1044 : f32 to vector<1x128xf32>
    %1047 = arith.mulf %1046, %1045 : vector<1x128xf32>
    %cst_285 = arith.constant 1.000000e+00 : f32
    %1048 = vector.broadcast %cst_285 : f32 to vector<1x128xf32>
    %1049 = arith.subf %1048, %1047 : vector<1x128xf32>
    %1050 = arith.mulf %1035, %1049 : vector<1x128xf32>
    %c4_i32_286 = arith.constant 4 : i32
    %1051 = arith.addi %988, %c4_i32_286 : i32
    %1052 = vector.broadcast %1051 : i32 to vector<1x128xi32>
    %1053 = arith.cmpi eq, %117, %1052 : vector<1x128xi32>
    %cst_287 = arith.constant 0.000000e+00 : f32
    %1054 = vector.broadcast %cst_287 : f32 to vector<1x128xf32>
    %1055 = arith.select %1053, %1050, %1054 : vector<1x128xi1>, vector<1x128xf32>
    %1056 = vector.shape_cast %1055 : vector<1x128xf32> to vector<1x1x128xf32>
    %cst_288 = arith.constant dense<0xFF800000> : vector<1xf32>
    %1057 = vector.multi_reduction <maximumf>, %1056, %cst_288 [1, 2] : vector<1x1x128xf32> to vector<1xf32>
    %1058 = vector.shape_cast %1057 : vector<1xf32> to vector<1x1x1xf32>
    %1059 = vector.extract %1058[0, 0, 0] : f32 from vector<1x1x1xf32>
    %1060 = vector.extract_strided_slice %990 {offsets = [4, 0], sizes = [1, 128], strides = [1, 1]} : vector<8x128xf32> to vector<1x128xf32>
    %1061 = vector.broadcast %1059 : f32 to vector<1x128xf32>
    %1062 = arith.mulf %1061, %1060 : vector<1x128xf32>
    %cst_289 = arith.constant 1.000000e+00 : f32
    %1063 = vector.broadcast %cst_289 : f32 to vector<1x128xf32>
    %1064 = arith.subf %1063, %1062 : vector<1x128xf32>
    %1065 = arith.mulf %1050, %1064 : vector<1x128xf32>
    %c5_i32_290 = arith.constant 5 : i32
    %1066 = arith.addi %988, %c5_i32_290 : i32
    %1067 = vector.broadcast %1066 : i32 to vector<1x128xi32>
    %1068 = arith.cmpi eq, %117, %1067 : vector<1x128xi32>
    %cst_291 = arith.constant 0.000000e+00 : f32
    %1069 = vector.broadcast %cst_291 : f32 to vector<1x128xf32>
    %1070 = arith.select %1068, %1065, %1069 : vector<1x128xi1>, vector<1x128xf32>
    %1071 = vector.shape_cast %1070 : vector<1x128xf32> to vector<1x1x128xf32>
    %cst_292 = arith.constant dense<0xFF800000> : vector<1xf32>
    %1072 = vector.multi_reduction <maximumf>, %1071, %cst_292 [1, 2] : vector<1x1x128xf32> to vector<1xf32>
    %1073 = vector.shape_cast %1072 : vector<1xf32> to vector<1x1x1xf32>
    %1074 = vector.extract %1073[0, 0, 0] : f32 from vector<1x1x1xf32>
    %1075 = vector.extract_strided_slice %990 {offsets = [5, 0], sizes = [1, 128], strides = [1, 1]} : vector<8x128xf32> to vector<1x128xf32>
    %1076 = vector.broadcast %1074 : f32 to vector<1x128xf32>
    %1077 = arith.mulf %1076, %1075 : vector<1x128xf32>
    %cst_293 = arith.constant 1.000000e+00 : f32
    %1078 = vector.broadcast %cst_293 : f32 to vector<1x128xf32>
    %1079 = arith.subf %1078, %1077 : vector<1x128xf32>
    %1080 = arith.mulf %1065, %1079 : vector<1x128xf32>
    %c6_i32_294 = arith.constant 6 : i32
    %1081 = arith.addi %988, %c6_i32_294 : i32
    %1082 = vector.broadcast %1081 : i32 to vector<1x128xi32>
    %1083 = arith.cmpi eq, %117, %1082 : vector<1x128xi32>
    %cst_295 = arith.constant 0.000000e+00 : f32
    %1084 = vector.broadcast %cst_295 : f32 to vector<1x128xf32>
    %1085 = arith.select %1083, %1080, %1084 : vector<1x128xi1>, vector<1x128xf32>
    %1086 = vector.shape_cast %1085 : vector<1x128xf32> to vector<1x1x128xf32>
    %cst_296 = arith.constant dense<0xFF800000> : vector<1xf32>
    %1087 = vector.multi_reduction <maximumf>, %1086, %cst_296 [1, 2] : vector<1x1x128xf32> to vector<1xf32>
    %1088 = vector.shape_cast %1087 : vector<1xf32> to vector<1x1x1xf32>
    %1089 = vector.extract %1088[0, 0, 0] : f32 from vector<1x1x1xf32>
    %1090 = vector.extract_strided_slice %990 {offsets = [6, 0], sizes = [1, 128], strides = [1, 1]} : vector<8x128xf32> to vector<1x128xf32>
    %1091 = vector.broadcast %1089 : f32 to vector<1x128xf32>
    %1092 = arith.mulf %1091, %1090 : vector<1x128xf32>
    %cst_297 = arith.constant 1.000000e+00 : f32
    %1093 = vector.broadcast %cst_297 : f32 to vector<1x128xf32>
    %1094 = arith.subf %1093, %1092 : vector<1x128xf32>
    %1095 = arith.mulf %1080, %1094 : vector<1x128xf32>
    %c7_i32_298 = arith.constant 7 : i32
    %1096 = arith.addi %988, %c7_i32_298 : i32
    %1097 = vector.broadcast %1096 : i32 to vector<1x128xi32>
    %1098 = arith.cmpi eq, %117, %1097 : vector<1x128xi32>
    %cst_299 = arith.constant 0.000000e+00 : f32
    %1099 = vector.broadcast %cst_299 : f32 to vector<1x128xf32>
    %1100 = arith.select %1098, %1095, %1099 : vector<1x128xi1>, vector<1x128xf32>
    %1101 = vector.shape_cast %1100 : vector<1x128xf32> to vector<1x1x128xf32>
    %cst_300 = arith.constant dense<0xFF800000> : vector<1xf32>
    %1102 = vector.multi_reduction <maximumf>, %1101, %cst_300 [1, 2] : vector<1x1x128xf32> to vector<1xf32>
    %1103 = vector.shape_cast %1102 : vector<1xf32> to vector<1x1x1xf32>
    %1104 = vector.extract %1103[0, 0, 0] : f32 from vector<1x1x1xf32>
    %1105 = vector.extract_strided_slice %990 {offsets = [7, 0], sizes = [1, 128], strides = [1, 1]} : vector<8x128xf32> to vector<1x128xf32>
    %1106 = vector.broadcast %1104 : f32 to vector<1x128xf32>
    %1107 = arith.mulf %1106, %1105 : vector<1x128xf32>
    %cst_301 = arith.constant 1.000000e+00 : f32
    %1108 = vector.broadcast %cst_301 : f32 to vector<1x128xf32>
    %1109 = arith.subf %1108, %1107 : vector<1x128xf32>
    %1110 = arith.mulf %1095, %1109 : vector<1x128xf32>
    %c8_i32_302 = arith.constant 8 : i32
    %c8_i32_303 = arith.constant 8 : i32
    %1111 = arith.muli %c8_i32_302, %c8_i32_303 : i32
    %1112 = tpu.assume_multiple %1111, 8 : i32
    %1113 = arith.index_cast %1112 : i32 to index
    %c0_304 = arith.constant 0 : index
    %1114 = vector.load %arg3[%1113, %c0_304] : memref<128x128xf32, #tpu.memory_space<vmem>>, vector<8x128xf32>
    %c0_i32_305 = arith.constant 0 : i32
    %1115 = arith.addi %1112, %c0_i32_305 : i32
    %1116 = vector.broadcast %1115 : i32 to vector<1x128xi32>
    %1117 = arith.cmpi eq, %117, %1116 : vector<1x128xi32>
    %cst_306 = arith.constant 0.000000e+00 : f32
    %1118 = vector.broadcast %cst_306 : f32 to vector<1x128xf32>
    %1119 = arith.select %1117, %1110, %1118 : vector<1x128xi1>, vector<1x128xf32>
    %1120 = vector.shape_cast %1119 : vector<1x128xf32> to vector<1x1x128xf32>
    %cst_307 = arith.constant dense<0xFF800000> : vector<1xf32>
    %1121 = vector.multi_reduction <maximumf>, %1120, %cst_307 [1, 2] : vector<1x1x128xf32> to vector<1xf32>
    %1122 = vector.shape_cast %1121 : vector<1xf32> to vector<1x1x1xf32>
    %1123 = vector.extract %1122[0, 0, 0] : f32 from vector<1x1x1xf32>
    %1124 = vector.extract_strided_slice %1114 {offsets = [0, 0], sizes = [1, 128], strides = [1, 1]} : vector<8x128xf32> to vector<1x128xf32>
    %1125 = vector.broadcast %1123 : f32 to vector<1x128xf32>
    %1126 = arith.mulf %1125, %1124 : vector<1x128xf32>
    %cst_308 = arith.constant 1.000000e+00 : f32
    %1127 = vector.broadcast %cst_308 : f32 to vector<1x128xf32>
    %1128 = arith.subf %1127, %1126 : vector<1x128xf32>
    %1129 = arith.mulf %1110, %1128 : vector<1x128xf32>
    %c1_i32_309 = arith.constant 1 : i32
    %1130 = arith.addi %1112, %c1_i32_309 : i32
    %1131 = vector.broadcast %1130 : i32 to vector<1x128xi32>
    %1132 = arith.cmpi eq, %117, %1131 : vector<1x128xi32>
    %cst_310 = arith.constant 0.000000e+00 : f32
    %1133 = vector.broadcast %cst_310 : f32 to vector<1x128xf32>
    %1134 = arith.select %1132, %1129, %1133 : vector<1x128xi1>, vector<1x128xf32>
    %1135 = vector.shape_cast %1134 : vector<1x128xf32> to vector<1x1x128xf32>
    %cst_311 = arith.constant dense<0xFF800000> : vector<1xf32>
    %1136 = vector.multi_reduction <maximumf>, %1135, %cst_311 [1, 2] : vector<1x1x128xf32> to vector<1xf32>
    %1137 = vector.shape_cast %1136 : vector<1xf32> to vector<1x1x1xf32>
    %1138 = vector.extract %1137[0, 0, 0] : f32 from vector<1x1x1xf32>
    %1139 = vector.extract_strided_slice %1114 {offsets = [1, 0], sizes = [1, 128], strides = [1, 1]} : vector<8x128xf32> to vector<1x128xf32>
    %1140 = vector.broadcast %1138 : f32 to vector<1x128xf32>
    %1141 = arith.mulf %1140, %1139 : vector<1x128xf32>
    %cst_312 = arith.constant 1.000000e+00 : f32
    %1142 = vector.broadcast %cst_312 : f32 to vector<1x128xf32>
    %1143 = arith.subf %1142, %1141 : vector<1x128xf32>
    %1144 = arith.mulf %1129, %1143 : vector<1x128xf32>
    %c2_i32_313 = arith.constant 2 : i32
    %1145 = arith.addi %1112, %c2_i32_313 : i32
    %1146 = vector.broadcast %1145 : i32 to vector<1x128xi32>
    %1147 = arith.cmpi eq, %117, %1146 : vector<1x128xi32>
    %cst_314 = arith.constant 0.000000e+00 : f32
    %1148 = vector.broadcast %cst_314 : f32 to vector<1x128xf32>
    %1149 = arith.select %1147, %1144, %1148 : vector<1x128xi1>, vector<1x128xf32>
    %1150 = vector.shape_cast %1149 : vector<1x128xf32> to vector<1x1x128xf32>
    %cst_315 = arith.constant dense<0xFF800000> : vector<1xf32>
    %1151 = vector.multi_reduction <maximumf>, %1150, %cst_315 [1, 2] : vector<1x1x128xf32> to vector<1xf32>
    %1152 = vector.shape_cast %1151 : vector<1xf32> to vector<1x1x1xf32>
    %1153 = vector.extract %1152[0, 0, 0] : f32 from vector<1x1x1xf32>
    %1154 = vector.extract_strided_slice %1114 {offsets = [2, 0], sizes = [1, 128], strides = [1, 1]} : vector<8x128xf32> to vector<1x128xf32>
    %1155 = vector.broadcast %1153 : f32 to vector<1x128xf32>
    %1156 = arith.mulf %1155, %1154 : vector<1x128xf32>
    %cst_316 = arith.constant 1.000000e+00 : f32
    %1157 = vector.broadcast %cst_316 : f32 to vector<1x128xf32>
    %1158 = arith.subf %1157, %1156 : vector<1x128xf32>
    %1159 = arith.mulf %1144, %1158 : vector<1x128xf32>
    %c3_i32_317 = arith.constant 3 : i32
    %1160 = arith.addi %1112, %c3_i32_317 : i32
    %1161 = vector.broadcast %1160 : i32 to vector<1x128xi32>
    %1162 = arith.cmpi eq, %117, %1161 : vector<1x128xi32>
    %cst_318 = arith.constant 0.000000e+00 : f32
    %1163 = vector.broadcast %cst_318 : f32 to vector<1x128xf32>
    %1164 = arith.select %1162, %1159, %1163 : vector<1x128xi1>, vector<1x128xf32>
    %1165 = vector.shape_cast %1164 : vector<1x128xf32> to vector<1x1x128xf32>
    %cst_319 = arith.constant dense<0xFF800000> : vector<1xf32>
    %1166 = vector.multi_reduction <maximumf>, %1165, %cst_319 [1, 2] : vector<1x1x128xf32> to vector<1xf32>
    %1167 = vector.shape_cast %1166 : vector<1xf32> to vector<1x1x1xf32>
    %1168 = vector.extract %1167[0, 0, 0] : f32 from vector<1x1x1xf32>
    %1169 = vector.extract_strided_slice %1114 {offsets = [3, 0], sizes = [1, 128], strides = [1, 1]} : vector<8x128xf32> to vector<1x128xf32>
    %1170 = vector.broadcast %1168 : f32 to vector<1x128xf32>
    %1171 = arith.mulf %1170, %1169 : vector<1x128xf32>
    %cst_320 = arith.constant 1.000000e+00 : f32
    %1172 = vector.broadcast %cst_320 : f32 to vector<1x128xf32>
    %1173 = arith.subf %1172, %1171 : vector<1x128xf32>
    %1174 = arith.mulf %1159, %1173 : vector<1x128xf32>
    %c4_i32_321 = arith.constant 4 : i32
    %1175 = arith.addi %1112, %c4_i32_321 : i32
    %1176 = vector.broadcast %1175 : i32 to vector<1x128xi32>
    %1177 = arith.cmpi eq, %117, %1176 : vector<1x128xi32>
    %cst_322 = arith.constant 0.000000e+00 : f32
    %1178 = vector.broadcast %cst_322 : f32 to vector<1x128xf32>
    %1179 = arith.select %1177, %1174, %1178 : vector<1x128xi1>, vector<1x128xf32>
    %1180 = vector.shape_cast %1179 : vector<1x128xf32> to vector<1x1x128xf32>
    %cst_323 = arith.constant dense<0xFF800000> : vector<1xf32>
    %1181 = vector.multi_reduction <maximumf>, %1180, %cst_323 [1, 2] : vector<1x1x128xf32> to vector<1xf32>
    %1182 = vector.shape_cast %1181 : vector<1xf32> to vector<1x1x1xf32>
    %1183 = vector.extract %1182[0, 0, 0] : f32 from vector<1x1x1xf32>
    %1184 = vector.extract_strided_slice %1114 {offsets = [4, 0], sizes = [1, 128], strides = [1, 1]} : vector<8x128xf32> to vector<1x128xf32>
    %1185 = vector.broadcast %1183 : f32 to vector<1x128xf32>
    %1186 = arith.mulf %1185, %1184 : vector<1x128xf32>
    %cst_324 = arith.constant 1.000000e+00 : f32
    %1187 = vector.broadcast %cst_324 : f32 to vector<1x128xf32>
    %1188 = arith.subf %1187, %1186 : vector<1x128xf32>
    %1189 = arith.mulf %1174, %1188 : vector<1x128xf32>
    %c5_i32_325 = arith.constant 5 : i32
    %1190 = arith.addi %1112, %c5_i32_325 : i32
    %1191 = vector.broadcast %1190 : i32 to vector<1x128xi32>
    %1192 = arith.cmpi eq, %117, %1191 : vector<1x128xi32>
    %cst_326 = arith.constant 0.000000e+00 : f32
    %1193 = vector.broadcast %cst_326 : f32 to vector<1x128xf32>
    %1194 = arith.select %1192, %1189, %1193 : vector<1x128xi1>, vector<1x128xf32>
    %1195 = vector.shape_cast %1194 : vector<1x128xf32> to vector<1x1x128xf32>
    %cst_327 = arith.constant dense<0xFF800000> : vector<1xf32>
    %1196 = vector.multi_reduction <maximumf>, %1195, %cst_327 [1, 2] : vector<1x1x128xf32> to vector<1xf32>
    %1197 = vector.shape_cast %1196 : vector<1xf32> to vector<1x1x1xf32>
    %1198 = vector.extract %1197[0, 0, 0] : f32 from vector<1x1x1xf32>
    %1199 = vector.extract_strided_slice %1114 {offsets = [5, 0], sizes = [1, 128], strides = [1, 1]} : vector<8x128xf32> to vector<1x128xf32>
    %1200 = vector.broadcast %1198 : f32 to vector<1x128xf32>
    %1201 = arith.mulf %1200, %1199 : vector<1x128xf32>
    %cst_328 = arith.constant 1.000000e+00 : f32
    %1202 = vector.broadcast %cst_328 : f32 to vector<1x128xf32>
    %1203 = arith.subf %1202, %1201 : vector<1x128xf32>
    %1204 = arith.mulf %1189, %1203 : vector<1x128xf32>
    %c6_i32_329 = arith.constant 6 : i32
    %1205 = arith.addi %1112, %c6_i32_329 : i32
    %1206 = vector.broadcast %1205 : i32 to vector<1x128xi32>
    %1207 = arith.cmpi eq, %117, %1206 : vector<1x128xi32>
    %cst_330 = arith.constant 0.000000e+00 : f32
    %1208 = vector.broadcast %cst_330 : f32 to vector<1x128xf32>
    %1209 = arith.select %1207, %1204, %1208 : vector<1x128xi1>, vector<1x128xf32>
    %1210 = vector.shape_cast %1209 : vector<1x128xf32> to vector<1x1x128xf32>
    %cst_331 = arith.constant dense<0xFF800000> : vector<1xf32>
    %1211 = vector.multi_reduction <maximumf>, %1210, %cst_331 [1, 2] : vector<1x1x128xf32> to vector<1xf32>
    %1212 = vector.shape_cast %1211 : vector<1xf32> to vector<1x1x1xf32>
    %1213 = vector.extract %1212[0, 0, 0] : f32 from vector<1x1x1xf32>
    %1214 = vector.extract_strided_slice %1114 {offsets = [6, 0], sizes = [1, 128], strides = [1, 1]} : vector<8x128xf32> to vector<1x128xf32>
    %1215 = vector.broadcast %1213 : f32 to vector<1x128xf32>
    %1216 = arith.mulf %1215, %1214 : vector<1x128xf32>
    %cst_332 = arith.constant 1.000000e+00 : f32
    %1217 = vector.broadcast %cst_332 : f32 to vector<1x128xf32>
    %1218 = arith.subf %1217, %1216 : vector<1x128xf32>
    %1219 = arith.mulf %1204, %1218 : vector<1x128xf32>
    %c7_i32_333 = arith.constant 7 : i32
    %1220 = arith.addi %1112, %c7_i32_333 : i32
    %1221 = vector.broadcast %1220 : i32 to vector<1x128xi32>
    %1222 = arith.cmpi eq, %117, %1221 : vector<1x128xi32>
    %cst_334 = arith.constant 0.000000e+00 : f32
    %1223 = vector.broadcast %cst_334 : f32 to vector<1x128xf32>
    %1224 = arith.select %1222, %1219, %1223 : vector<1x128xi1>, vector<1x128xf32>
    %1225 = vector.shape_cast %1224 : vector<1x128xf32> to vector<1x1x128xf32>
    %cst_335 = arith.constant dense<0xFF800000> : vector<1xf32>
    %1226 = vector.multi_reduction <maximumf>, %1225, %cst_335 [1, 2] : vector<1x1x128xf32> to vector<1xf32>
    %1227 = vector.shape_cast %1226 : vector<1xf32> to vector<1x1x1xf32>
    %1228 = vector.extract %1227[0, 0, 0] : f32 from vector<1x1x1xf32>
    %1229 = vector.extract_strided_slice %1114 {offsets = [7, 0], sizes = [1, 128], strides = [1, 1]} : vector<8x128xf32> to vector<1x128xf32>
    %1230 = vector.broadcast %1228 : f32 to vector<1x128xf32>
    %1231 = arith.mulf %1230, %1229 : vector<1x128xf32>
    %cst_336 = arith.constant 1.000000e+00 : f32
    %1232 = vector.broadcast %cst_336 : f32 to vector<1x128xf32>
    %1233 = arith.subf %1232, %1231 : vector<1x128xf32>
    %1234 = arith.mulf %1219, %1233 : vector<1x128xf32>
    %c9_i32 = arith.constant 9 : i32
    %c8_i32_337 = arith.constant 8 : i32
    %1235 = arith.muli %c9_i32, %c8_i32_337 : i32
    %1236 = tpu.assume_multiple %1235, 8 : i32
    %1237 = arith.index_cast %1236 : i32 to index
    %c0_338 = arith.constant 0 : index
    %1238 = vector.load %arg3[%1237, %c0_338] : memref<128x128xf32, #tpu.memory_space<vmem>>, vector<8x128xf32>
    %c0_i32_339 = arith.constant 0 : i32
    %1239 = arith.addi %1236, %c0_i32_339 : i32
    %1240 = vector.broadcast %1239 : i32 to vector<1x128xi32>
    %1241 = arith.cmpi eq, %117, %1240 : vector<1x128xi32>
    %cst_340 = arith.constant 0.000000e+00 : f32
    %1242 = vector.broadcast %cst_340 : f32 to vector<1x128xf32>
    %1243 = arith.select %1241, %1234, %1242 : vector<1x128xi1>, vector<1x128xf32>
    %1244 = vector.shape_cast %1243 : vector<1x128xf32> to vector<1x1x128xf32>
    %cst_341 = arith.constant dense<0xFF800000> : vector<1xf32>
    %1245 = vector.multi_reduction <maximumf>, %1244, %cst_341 [1, 2] : vector<1x1x128xf32> to vector<1xf32>
    %1246 = vector.shape_cast %1245 : vector<1xf32> to vector<1x1x1xf32>
    %1247 = vector.extract %1246[0, 0, 0] : f32 from vector<1x1x1xf32>
    %1248 = vector.extract_strided_slice %1238 {offsets = [0, 0], sizes = [1, 128], strides = [1, 1]} : vector<8x128xf32> to vector<1x128xf32>
    %1249 = vector.broadcast %1247 : f32 to vector<1x128xf32>
    %1250 = arith.mulf %1249, %1248 : vector<1x128xf32>
    %cst_342 = arith.constant 1.000000e+00 : f32
    %1251 = vector.broadcast %cst_342 : f32 to vector<1x128xf32>
    %1252 = arith.subf %1251, %1250 : vector<1x128xf32>
    %1253 = arith.mulf %1234, %1252 : vector<1x128xf32>
    %c1_i32_343 = arith.constant 1 : i32
    %1254 = arith.addi %1236, %c1_i32_343 : i32
    %1255 = vector.broadcast %1254 : i32 to vector<1x128xi32>
    %1256 = arith.cmpi eq, %117, %1255 : vector<1x128xi32>
    %cst_344 = arith.constant 0.000000e+00 : f32
    %1257 = vector.broadcast %cst_344 : f32 to vector<1x128xf32>
    %1258 = arith.select %1256, %1253, %1257 : vector<1x128xi1>, vector<1x128xf32>
    %1259 = vector.shape_cast %1258 : vector<1x128xf32> to vector<1x1x128xf32>
    %cst_345 = arith.constant dense<0xFF800000> : vector<1xf32>
    %1260 = vector.multi_reduction <maximumf>, %1259, %cst_345 [1, 2] : vector<1x1x128xf32> to vector<1xf32>
    %1261 = vector.shape_cast %1260 : vector<1xf32> to vector<1x1x1xf32>
    %1262 = vector.extract %1261[0, 0, 0] : f32 from vector<1x1x1xf32>
    %1263 = vector.extract_strided_slice %1238 {offsets = [1, 0], sizes = [1, 128], strides = [1, 1]} : vector<8x128xf32> to vector<1x128xf32>
    %1264 = vector.broadcast %1262 : f32 to vector<1x128xf32>
    %1265 = arith.mulf %1264, %1263 : vector<1x128xf32>
    %cst_346 = arith.constant 1.000000e+00 : f32
    %1266 = vector.broadcast %cst_346 : f32 to vector<1x128xf32>
    %1267 = arith.subf %1266, %1265 : vector<1x128xf32>
    %1268 = arith.mulf %1253, %1267 : vector<1x128xf32>
    %c2_i32_347 = arith.constant 2 : i32
    %1269 = arith.addi %1236, %c2_i32_347 : i32
    %1270 = vector.broadcast %1269 : i32 to vector<1x128xi32>
    %1271 = arith.cmpi eq, %117, %1270 : vector<1x128xi32>
    %cst_348 = arith.constant 0.000000e+00 : f32
    %1272 = vector.broadcast %cst_348 : f32 to vector<1x128xf32>
    %1273 = arith.select %1271, %1268, %1272 : vector<1x128xi1>, vector<1x128xf32>
    %1274 = vector.shape_cast %1273 : vector<1x128xf32> to vector<1x1x128xf32>
    %cst_349 = arith.constant dense<0xFF800000> : vector<1xf32>
    %1275 = vector.multi_reduction <maximumf>, %1274, %cst_349 [1, 2] : vector<1x1x128xf32> to vector<1xf32>
    %1276 = vector.shape_cast %1275 : vector<1xf32> to vector<1x1x1xf32>
    %1277 = vector.extract %1276[0, 0, 0] : f32 from vector<1x1x1xf32>
    %1278 = vector.extract_strided_slice %1238 {offsets = [2, 0], sizes = [1, 128], strides = [1, 1]} : vector<8x128xf32> to vector<1x128xf32>
    %1279 = vector.broadcast %1277 : f32 to vector<1x128xf32>
    %1280 = arith.mulf %1279, %1278 : vector<1x128xf32>
    %cst_350 = arith.constant 1.000000e+00 : f32
    %1281 = vector.broadcast %cst_350 : f32 to vector<1x128xf32>
    %1282 = arith.subf %1281, %1280 : vector<1x128xf32>
    %1283 = arith.mulf %1268, %1282 : vector<1x128xf32>
    %c3_i32_351 = arith.constant 3 : i32
    %1284 = arith.addi %1236, %c3_i32_351 : i32
    %1285 = vector.broadcast %1284 : i32 to vector<1x128xi32>
    %1286 = arith.cmpi eq, %117, %1285 : vector<1x128xi32>
    %cst_352 = arith.constant 0.000000e+00 : f32
    %1287 = vector.broadcast %cst_352 : f32 to vector<1x128xf32>
    %1288 = arith.select %1286, %1283, %1287 : vector<1x128xi1>, vector<1x128xf32>
    %1289 = vector.shape_cast %1288 : vector<1x128xf32> to vector<1x1x128xf32>
    %cst_353 = arith.constant dense<0xFF800000> : vector<1xf32>
    %1290 = vector.multi_reduction <maximumf>, %1289, %cst_353 [1, 2] : vector<1x1x128xf32> to vector<1xf32>
    %1291 = vector.shape_cast %1290 : vector<1xf32> to vector<1x1x1xf32>
    %1292 = vector.extract %1291[0, 0, 0] : f32 from vector<1x1x1xf32>
    %1293 = vector.extract_strided_slice %1238 {offsets = [3, 0], sizes = [1, 128], strides = [1, 1]} : vector<8x128xf32> to vector<1x128xf32>
    %1294 = vector.broadcast %1292 : f32 to vector<1x128xf32>
    %1295 = arith.mulf %1294, %1293 : vector<1x128xf32>
    %cst_354 = arith.constant 1.000000e+00 : f32
    %1296 = vector.broadcast %cst_354 : f32 to vector<1x128xf32>
    %1297 = arith.subf %1296, %1295 : vector<1x128xf32>
    %1298 = arith.mulf %1283, %1297 : vector<1x128xf32>
    %c4_i32_355 = arith.constant 4 : i32
    %1299 = arith.addi %1236, %c4_i32_355 : i32
    %1300 = vector.broadcast %1299 : i32 to vector<1x128xi32>
    %1301 = arith.cmpi eq, %117, %1300 : vector<1x128xi32>
    %cst_356 = arith.constant 0.000000e+00 : f32
    %1302 = vector.broadcast %cst_356 : f32 to vector<1x128xf32>
    %1303 = arith.select %1301, %1298, %1302 : vector<1x128xi1>, vector<1x128xf32>
    %1304 = vector.shape_cast %1303 : vector<1x128xf32> to vector<1x1x128xf32>
    %cst_357 = arith.constant dense<0xFF800000> : vector<1xf32>
    %1305 = vector.multi_reduction <maximumf>, %1304, %cst_357 [1, 2] : vector<1x1x128xf32> to vector<1xf32>
    %1306 = vector.shape_cast %1305 : vector<1xf32> to vector<1x1x1xf32>
    %1307 = vector.extract %1306[0, 0, 0] : f32 from vector<1x1x1xf32>
    %1308 = vector.extract_strided_slice %1238 {offsets = [4, 0], sizes = [1, 128], strides = [1, 1]} : vector<8x128xf32> to vector<1x128xf32>
    %1309 = vector.broadcast %1307 : f32 to vector<1x128xf32>
    %1310 = arith.mulf %1309, %1308 : vector<1x128xf32>
    %cst_358 = arith.constant 1.000000e+00 : f32
    %1311 = vector.broadcast %cst_358 : f32 to vector<1x128xf32>
    %1312 = arith.subf %1311, %1310 : vector<1x128xf32>
    %1313 = arith.mulf %1298, %1312 : vector<1x128xf32>
    %c5_i32_359 = arith.constant 5 : i32
    %1314 = arith.addi %1236, %c5_i32_359 : i32
    %1315 = vector.broadcast %1314 : i32 to vector<1x128xi32>
    %1316 = arith.cmpi eq, %117, %1315 : vector<1x128xi32>
    %cst_360 = arith.constant 0.000000e+00 : f32
    %1317 = vector.broadcast %cst_360 : f32 to vector<1x128xf32>
    %1318 = arith.select %1316, %1313, %1317 : vector<1x128xi1>, vector<1x128xf32>
    %1319 = vector.shape_cast %1318 : vector<1x128xf32> to vector<1x1x128xf32>
    %cst_361 = arith.constant dense<0xFF800000> : vector<1xf32>
    %1320 = vector.multi_reduction <maximumf>, %1319, %cst_361 [1, 2] : vector<1x1x128xf32> to vector<1xf32>
    %1321 = vector.shape_cast %1320 : vector<1xf32> to vector<1x1x1xf32>
    %1322 = vector.extract %1321[0, 0, 0] : f32 from vector<1x1x1xf32>
    %1323 = vector.extract_strided_slice %1238 {offsets = [5, 0], sizes = [1, 128], strides = [1, 1]} : vector<8x128xf32> to vector<1x128xf32>
    %1324 = vector.broadcast %1322 : f32 to vector<1x128xf32>
    %1325 = arith.mulf %1324, %1323 : vector<1x128xf32>
    %cst_362 = arith.constant 1.000000e+00 : f32
    %1326 = vector.broadcast %cst_362 : f32 to vector<1x128xf32>
    %1327 = arith.subf %1326, %1325 : vector<1x128xf32>
    %1328 = arith.mulf %1313, %1327 : vector<1x128xf32>
    %c6_i32_363 = arith.constant 6 : i32
    %1329 = arith.addi %1236, %c6_i32_363 : i32
    %1330 = vector.broadcast %1329 : i32 to vector<1x128xi32>
    %1331 = arith.cmpi eq, %117, %1330 : vector<1x128xi32>
    %cst_364 = arith.constant 0.000000e+00 : f32
    %1332 = vector.broadcast %cst_364 : f32 to vector<1x128xf32>
    %1333 = arith.select %1331, %1328, %1332 : vector<1x128xi1>, vector<1x128xf32>
    %1334 = vector.shape_cast %1333 : vector<1x128xf32> to vector<1x1x128xf32>
    %cst_365 = arith.constant dense<0xFF800000> : vector<1xf32>
    %1335 = vector.multi_reduction <maximumf>, %1334, %cst_365 [1, 2] : vector<1x1x128xf32> to vector<1xf32>
    %1336 = vector.shape_cast %1335 : vector<1xf32> to vector<1x1x1xf32>
    %1337 = vector.extract %1336[0, 0, 0] : f32 from vector<1x1x1xf32>
    %1338 = vector.extract_strided_slice %1238 {offsets = [6, 0], sizes = [1, 128], strides = [1, 1]} : vector<8x128xf32> to vector<1x128xf32>
    %1339 = vector.broadcast %1337 : f32 to vector<1x128xf32>
    %1340 = arith.mulf %1339, %1338 : vector<1x128xf32>
    %cst_366 = arith.constant 1.000000e+00 : f32
    %1341 = vector.broadcast %cst_366 : f32 to vector<1x128xf32>
    %1342 = arith.subf %1341, %1340 : vector<1x128xf32>
    %1343 = arith.mulf %1328, %1342 : vector<1x128xf32>
    %c7_i32_367 = arith.constant 7 : i32
    %1344 = arith.addi %1236, %c7_i32_367 : i32
    %1345 = vector.broadcast %1344 : i32 to vector<1x128xi32>
    %1346 = arith.cmpi eq, %117, %1345 : vector<1x128xi32>
    %cst_368 = arith.constant 0.000000e+00 : f32
    %1347 = vector.broadcast %cst_368 : f32 to vector<1x128xf32>
    %1348 = arith.select %1346, %1343, %1347 : vector<1x128xi1>, vector<1x128xf32>
    %1349 = vector.shape_cast %1348 : vector<1x128xf32> to vector<1x1x128xf32>
    %cst_369 = arith.constant dense<0xFF800000> : vector<1xf32>
    %1350 = vector.multi_reduction <maximumf>, %1349, %cst_369 [1, 2] : vector<1x1x128xf32> to vector<1xf32>
    %1351 = vector.shape_cast %1350 : vector<1xf32> to vector<1x1x1xf32>
    %1352 = vector.extract %1351[0, 0, 0] : f32 from vector<1x1x1xf32>
    %1353 = vector.extract_strided_slice %1238 {offsets = [7, 0], sizes = [1, 128], strides = [1, 1]} : vector<8x128xf32> to vector<1x128xf32>
    %1354 = vector.broadcast %1352 : f32 to vector<1x128xf32>
    %1355 = arith.mulf %1354, %1353 : vector<1x128xf32>
    %cst_370 = arith.constant 1.000000e+00 : f32
    %1356 = vector.broadcast %cst_370 : f32 to vector<1x128xf32>
    %1357 = arith.subf %1356, %1355 : vector<1x128xf32>
    %1358 = arith.mulf %1343, %1357 : vector<1x128xf32>
    %c10_i32 = arith.constant 10 : i32
    %c8_i32_371 = arith.constant 8 : i32
    %1359 = arith.muli %c10_i32, %c8_i32_371 : i32
    %1360 = tpu.assume_multiple %1359, 8 : i32
    %1361 = arith.index_cast %1360 : i32 to index
    %c0_372 = arith.constant 0 : index
    %1362 = vector.load %arg3[%1361, %c0_372] : memref<128x128xf32, #tpu.memory_space<vmem>>, vector<8x128xf32>
    %c0_i32_373 = arith.constant 0 : i32
    %1363 = arith.addi %1360, %c0_i32_373 : i32
    %1364 = vector.broadcast %1363 : i32 to vector<1x128xi32>
    %1365 = arith.cmpi eq, %117, %1364 : vector<1x128xi32>
    %cst_374 = arith.constant 0.000000e+00 : f32
    %1366 = vector.broadcast %cst_374 : f32 to vector<1x128xf32>
    %1367 = arith.select %1365, %1358, %1366 : vector<1x128xi1>, vector<1x128xf32>
    %1368 = vector.shape_cast %1367 : vector<1x128xf32> to vector<1x1x128xf32>
    %cst_375 = arith.constant dense<0xFF800000> : vector<1xf32>
    %1369 = vector.multi_reduction <maximumf>, %1368, %cst_375 [1, 2] : vector<1x1x128xf32> to vector<1xf32>
    %1370 = vector.shape_cast %1369 : vector<1xf32> to vector<1x1x1xf32>
    %1371 = vector.extract %1370[0, 0, 0] : f32 from vector<1x1x1xf32>
    %1372 = vector.extract_strided_slice %1362 {offsets = [0, 0], sizes = [1, 128], strides = [1, 1]} : vector<8x128xf32> to vector<1x128xf32>
    %1373 = vector.broadcast %1371 : f32 to vector<1x128xf32>
    %1374 = arith.mulf %1373, %1372 : vector<1x128xf32>
    %cst_376 = arith.constant 1.000000e+00 : f32
    %1375 = vector.broadcast %cst_376 : f32 to vector<1x128xf32>
    %1376 = arith.subf %1375, %1374 : vector<1x128xf32>
    %1377 = arith.mulf %1358, %1376 : vector<1x128xf32>
    %c1_i32_377 = arith.constant 1 : i32
    %1378 = arith.addi %1360, %c1_i32_377 : i32
    %1379 = vector.broadcast %1378 : i32 to vector<1x128xi32>
    %1380 = arith.cmpi eq, %117, %1379 : vector<1x128xi32>
    %cst_378 = arith.constant 0.000000e+00 : f32
    %1381 = vector.broadcast %cst_378 : f32 to vector<1x128xf32>
    %1382 = arith.select %1380, %1377, %1381 : vector<1x128xi1>, vector<1x128xf32>
    %1383 = vector.shape_cast %1382 : vector<1x128xf32> to vector<1x1x128xf32>
    %cst_379 = arith.constant dense<0xFF800000> : vector<1xf32>
    %1384 = vector.multi_reduction <maximumf>, %1383, %cst_379 [1, 2] : vector<1x1x128xf32> to vector<1xf32>
    %1385 = vector.shape_cast %1384 : vector<1xf32> to vector<1x1x1xf32>
    %1386 = vector.extract %1385[0, 0, 0] : f32 from vector<1x1x1xf32>
    %1387 = vector.extract_strided_slice %1362 {offsets = [1, 0], sizes = [1, 128], strides = [1, 1]} : vector<8x128xf32> to vector<1x128xf32>
    %1388 = vector.broadcast %1386 : f32 to vector<1x128xf32>
    %1389 = arith.mulf %1388, %1387 : vector<1x128xf32>
    %cst_380 = arith.constant 1.000000e+00 : f32
    %1390 = vector.broadcast %cst_380 : f32 to vector<1x128xf32>
    %1391 = arith.subf %1390, %1389 : vector<1x128xf32>
    %1392 = arith.mulf %1377, %1391 : vector<1x128xf32>
    %c2_i32_381 = arith.constant 2 : i32
    %1393 = arith.addi %1360, %c2_i32_381 : i32
    %1394 = vector.broadcast %1393 : i32 to vector<1x128xi32>
    %1395 = arith.cmpi eq, %117, %1394 : vector<1x128xi32>
    %cst_382 = arith.constant 0.000000e+00 : f32
    %1396 = vector.broadcast %cst_382 : f32 to vector<1x128xf32>
    %1397 = arith.select %1395, %1392, %1396 : vector<1x128xi1>, vector<1x128xf32>
    %1398 = vector.shape_cast %1397 : vector<1x128xf32> to vector<1x1x128xf32>
    %cst_383 = arith.constant dense<0xFF800000> : vector<1xf32>
    %1399 = vector.multi_reduction <maximumf>, %1398, %cst_383 [1, 2] : vector<1x1x128xf32> to vector<1xf32>
    %1400 = vector.shape_cast %1399 : vector<1xf32> to vector<1x1x1xf32>
    %1401 = vector.extract %1400[0, 0, 0] : f32 from vector<1x1x1xf32>
    %1402 = vector.extract_strided_slice %1362 {offsets = [2, 0], sizes = [1, 128], strides = [1, 1]} : vector<8x128xf32> to vector<1x128xf32>
    %1403 = vector.broadcast %1401 : f32 to vector<1x128xf32>
    %1404 = arith.mulf %1403, %1402 : vector<1x128xf32>
    %cst_384 = arith.constant 1.000000e+00 : f32
    %1405 = vector.broadcast %cst_384 : f32 to vector<1x128xf32>
    %1406 = arith.subf %1405, %1404 : vector<1x128xf32>
    %1407 = arith.mulf %1392, %1406 : vector<1x128xf32>
    %c3_i32_385 = arith.constant 3 : i32
    %1408 = arith.addi %1360, %c3_i32_385 : i32
    %1409 = vector.broadcast %1408 : i32 to vector<1x128xi32>
    %1410 = arith.cmpi eq, %117, %1409 : vector<1x128xi32>
    %cst_386 = arith.constant 0.000000e+00 : f32
    %1411 = vector.broadcast %cst_386 : f32 to vector<1x128xf32>
    %1412 = arith.select %1410, %1407, %1411 : vector<1x128xi1>, vector<1x128xf32>
    %1413 = vector.shape_cast %1412 : vector<1x128xf32> to vector<1x1x128xf32>
    %cst_387 = arith.constant dense<0xFF800000> : vector<1xf32>
    %1414 = vector.multi_reduction <maximumf>, %1413, %cst_387 [1, 2] : vector<1x1x128xf32> to vector<1xf32>
    %1415 = vector.shape_cast %1414 : vector<1xf32> to vector<1x1x1xf32>
    %1416 = vector.extract %1415[0, 0, 0] : f32 from vector<1x1x1xf32>
    %1417 = vector.extract_strided_slice %1362 {offsets = [3, 0], sizes = [1, 128], strides = [1, 1]} : vector<8x128xf32> to vector<1x128xf32>
    %1418 = vector.broadcast %1416 : f32 to vector<1x128xf32>
    %1419 = arith.mulf %1418, %1417 : vector<1x128xf32>
    %cst_388 = arith.constant 1.000000e+00 : f32
    %1420 = vector.broadcast %cst_388 : f32 to vector<1x128xf32>
    %1421 = arith.subf %1420, %1419 : vector<1x128xf32>
    %1422 = arith.mulf %1407, %1421 : vector<1x128xf32>
    %c4_i32_389 = arith.constant 4 : i32
    %1423 = arith.addi %1360, %c4_i32_389 : i32
    %1424 = vector.broadcast %1423 : i32 to vector<1x128xi32>
    %1425 = arith.cmpi eq, %117, %1424 : vector<1x128xi32>
    %cst_390 = arith.constant 0.000000e+00 : f32
    %1426 = vector.broadcast %cst_390 : f32 to vector<1x128xf32>
    %1427 = arith.select %1425, %1422, %1426 : vector<1x128xi1>, vector<1x128xf32>
    %1428 = vector.shape_cast %1427 : vector<1x128xf32> to vector<1x1x128xf32>
    %cst_391 = arith.constant dense<0xFF800000> : vector<1xf32>
    %1429 = vector.multi_reduction <maximumf>, %1428, %cst_391 [1, 2] : vector<1x1x128xf32> to vector<1xf32>
    %1430 = vector.shape_cast %1429 : vector<1xf32> to vector<1x1x1xf32>
    %1431 = vector.extract %1430[0, 0, 0] : f32 from vector<1x1x1xf32>
    %1432 = vector.extract_strided_slice %1362 {offsets = [4, 0], sizes = [1, 128], strides = [1, 1]} : vector<8x128xf32> to vector<1x128xf32>
    %1433 = vector.broadcast %1431 : f32 to vector<1x128xf32>
    %1434 = arith.mulf %1433, %1432 : vector<1x128xf32>
    %cst_392 = arith.constant 1.000000e+00 : f32
    %1435 = vector.broadcast %cst_392 : f32 to vector<1x128xf32>
    %1436 = arith.subf %1435, %1434 : vector<1x128xf32>
    %1437 = arith.mulf %1422, %1436 : vector<1x128xf32>
    %c5_i32_393 = arith.constant 5 : i32
    %1438 = arith.addi %1360, %c5_i32_393 : i32
    %1439 = vector.broadcast %1438 : i32 to vector<1x128xi32>
    %1440 = arith.cmpi eq, %117, %1439 : vector<1x128xi32>
    %cst_394 = arith.constant 0.000000e+00 : f32
    %1441 = vector.broadcast %cst_394 : f32 to vector<1x128xf32>
    %1442 = arith.select %1440, %1437, %1441 : vector<1x128xi1>, vector<1x128xf32>
    %1443 = vector.shape_cast %1442 : vector<1x128xf32> to vector<1x1x128xf32>
    %cst_395 = arith.constant dense<0xFF800000> : vector<1xf32>
    %1444 = vector.multi_reduction <maximumf>, %1443, %cst_395 [1, 2] : vector<1x1x128xf32> to vector<1xf32>
    %1445 = vector.shape_cast %1444 : vector<1xf32> to vector<1x1x1xf32>
    %1446 = vector.extract %1445[0, 0, 0] : f32 from vector<1x1x1xf32>
    %1447 = vector.extract_strided_slice %1362 {offsets = [5, 0], sizes = [1, 128], strides = [1, 1]} : vector<8x128xf32> to vector<1x128xf32>
    %1448 = vector.broadcast %1446 : f32 to vector<1x128xf32>
    %1449 = arith.mulf %1448, %1447 : vector<1x128xf32>
    %cst_396 = arith.constant 1.000000e+00 : f32
    %1450 = vector.broadcast %cst_396 : f32 to vector<1x128xf32>
    %1451 = arith.subf %1450, %1449 : vector<1x128xf32>
    %1452 = arith.mulf %1437, %1451 : vector<1x128xf32>
    %c6_i32_397 = arith.constant 6 : i32
    %1453 = arith.addi %1360, %c6_i32_397 : i32
    %1454 = vector.broadcast %1453 : i32 to vector<1x128xi32>
    %1455 = arith.cmpi eq, %117, %1454 : vector<1x128xi32>
    %cst_398 = arith.constant 0.000000e+00 : f32
    %1456 = vector.broadcast %cst_398 : f32 to vector<1x128xf32>
    %1457 = arith.select %1455, %1452, %1456 : vector<1x128xi1>, vector<1x128xf32>
    %1458 = vector.shape_cast %1457 : vector<1x128xf32> to vector<1x1x128xf32>
    %cst_399 = arith.constant dense<0xFF800000> : vector<1xf32>
    %1459 = vector.multi_reduction <maximumf>, %1458, %cst_399 [1, 2] : vector<1x1x128xf32> to vector<1xf32>
    %1460 = vector.shape_cast %1459 : vector<1xf32> to vector<1x1x1xf32>
    %1461 = vector.extract %1460[0, 0, 0] : f32 from vector<1x1x1xf32>
    %1462 = vector.extract_strided_slice %1362 {offsets = [6, 0], sizes = [1, 128], strides = [1, 1]} : vector<8x128xf32> to vector<1x128xf32>
    %1463 = vector.broadcast %1461 : f32 to vector<1x128xf32>
    %1464 = arith.mulf %1463, %1462 : vector<1x128xf32>
    %cst_400 = arith.constant 1.000000e+00 : f32
    %1465 = vector.broadcast %cst_400 : f32 to vector<1x128xf32>
    %1466 = arith.subf %1465, %1464 : vector<1x128xf32>
    %1467 = arith.mulf %1452, %1466 : vector<1x128xf32>
    %c7_i32_401 = arith.constant 7 : i32
    %1468 = arith.addi %1360, %c7_i32_401 : i32
    %1469 = vector.broadcast %1468 : i32 to vector<1x128xi32>
    %1470 = arith.cmpi eq, %117, %1469 : vector<1x128xi32>
    %cst_402 = arith.constant 0.000000e+00 : f32
    %1471 = vector.broadcast %cst_402 : f32 to vector<1x128xf32>
    %1472 = arith.select %1470, %1467, %1471 : vector<1x128xi1>, vector<1x128xf32>
    %1473 = vector.shape_cast %1472 : vector<1x128xf32> to vector<1x1x128xf32>
    %cst_403 = arith.constant dense<0xFF800000> : vector<1xf32>
    %1474 = vector.multi_reduction <maximumf>, %1473, %cst_403 [1, 2] : vector<1x1x128xf32> to vector<1xf32>
    %1475 = vector.shape_cast %1474 : vector<1xf32> to vector<1x1x1xf32>
    %1476 = vector.extract %1475[0, 0, 0] : f32 from vector<1x1x1xf32>
    %1477 = vector.extract_strided_slice %1362 {offsets = [7, 0], sizes = [1, 128], strides = [1, 1]} : vector<8x128xf32> to vector<1x128xf32>
    %1478 = vector.broadcast %1476 : f32 to vector<1x128xf32>
    %1479 = arith.mulf %1478, %1477 : vector<1x128xf32>
    %cst_404 = arith.constant 1.000000e+00 : f32
    %1480 = vector.broadcast %cst_404 : f32 to vector<1x128xf32>
    %1481 = arith.subf %1480, %1479 : vector<1x128xf32>
    %1482 = arith.mulf %1467, %1481 : vector<1x128xf32>
    %c11_i32 = arith.constant 11 : i32
    %c8_i32_405 = arith.constant 8 : i32
    %1483 = arith.muli %c11_i32, %c8_i32_405 : i32
    %1484 = tpu.assume_multiple %1483, 8 : i32
    %1485 = arith.index_cast %1484 : i32 to index
    %c0_406 = arith.constant 0 : index
    %1486 = vector.load %arg3[%1485, %c0_406] : memref<128x128xf32, #tpu.memory_space<vmem>>, vector<8x128xf32>
    %c0_i32_407 = arith.constant 0 : i32
    %1487 = arith.addi %1484, %c0_i32_407 : i32
    %1488 = vector.broadcast %1487 : i32 to vector<1x128xi32>
    %1489 = arith.cmpi eq, %117, %1488 : vector<1x128xi32>
    %cst_408 = arith.constant 0.000000e+00 : f32
    %1490 = vector.broadcast %cst_408 : f32 to vector<1x128xf32>
    %1491 = arith.select %1489, %1482, %1490 : vector<1x128xi1>, vector<1x128xf32>
    %1492 = vector.shape_cast %1491 : vector<1x128xf32> to vector<1x1x128xf32>
    %cst_409 = arith.constant dense<0xFF800000> : vector<1xf32>
    %1493 = vector.multi_reduction <maximumf>, %1492, %cst_409 [1, 2] : vector<1x1x128xf32> to vector<1xf32>
    %1494 = vector.shape_cast %1493 : vector<1xf32> to vector<1x1x1xf32>
    %1495 = vector.extract %1494[0, 0, 0] : f32 from vector<1x1x1xf32>
    %1496 = vector.extract_strided_slice %1486 {offsets = [0, 0], sizes = [1, 128], strides = [1, 1]} : vector<8x128xf32> to vector<1x128xf32>
    %1497 = vector.broadcast %1495 : f32 to vector<1x128xf32>
    %1498 = arith.mulf %1497, %1496 : vector<1x128xf32>
    %cst_410 = arith.constant 1.000000e+00 : f32
    %1499 = vector.broadcast %cst_410 : f32 to vector<1x128xf32>
    %1500 = arith.subf %1499, %1498 : vector<1x128xf32>
    %1501 = arith.mulf %1482, %1500 : vector<1x128xf32>
    %c1_i32_411 = arith.constant 1 : i32
    %1502 = arith.addi %1484, %c1_i32_411 : i32
    %1503 = vector.broadcast %1502 : i32 to vector<1x128xi32>
    %1504 = arith.cmpi eq, %117, %1503 : vector<1x128xi32>
    %cst_412 = arith.constant 0.000000e+00 : f32
    %1505 = vector.broadcast %cst_412 : f32 to vector<1x128xf32>
    %1506 = arith.select %1504, %1501, %1505 : vector<1x128xi1>, vector<1x128xf32>
    %1507 = vector.shape_cast %1506 : vector<1x128xf32> to vector<1x1x128xf32>
    %cst_413 = arith.constant dense<0xFF800000> : vector<1xf32>
    %1508 = vector.multi_reduction <maximumf>, %1507, %cst_413 [1, 2] : vector<1x1x128xf32> to vector<1xf32>
    %1509 = vector.shape_cast %1508 : vector<1xf32> to vector<1x1x1xf32>
    %1510 = vector.extract %1509[0, 0, 0] : f32 from vector<1x1x1xf32>
    %1511 = vector.extract_strided_slice %1486 {offsets = [1, 0], sizes = [1, 128], strides = [1, 1]} : vector<8x128xf32> to vector<1x128xf32>
    %1512 = vector.broadcast %1510 : f32 to vector<1x128xf32>
    %1513 = arith.mulf %1512, %1511 : vector<1x128xf32>
    %cst_414 = arith.constant 1.000000e+00 : f32
    %1514 = vector.broadcast %cst_414 : f32 to vector<1x128xf32>
    %1515 = arith.subf %1514, %1513 : vector<1x128xf32>
    %1516 = arith.mulf %1501, %1515 : vector<1x128xf32>
    %c2_i32_415 = arith.constant 2 : i32
    %1517 = arith.addi %1484, %c2_i32_415 : i32
    %1518 = vector.broadcast %1517 : i32 to vector<1x128xi32>
    %1519 = arith.cmpi eq, %117, %1518 : vector<1x128xi32>
    %cst_416 = arith.constant 0.000000e+00 : f32
    %1520 = vector.broadcast %cst_416 : f32 to vector<1x128xf32>
    %1521 = arith.select %1519, %1516, %1520 : vector<1x128xi1>, vector<1x128xf32>
    %1522 = vector.shape_cast %1521 : vector<1x128xf32> to vector<1x1x128xf32>
    %cst_417 = arith.constant dense<0xFF800000> : vector<1xf32>
    %1523 = vector.multi_reduction <maximumf>, %1522, %cst_417 [1, 2] : vector<1x1x128xf32> to vector<1xf32>
    %1524 = vector.shape_cast %1523 : vector<1xf32> to vector<1x1x1xf32>
    %1525 = vector.extract %1524[0, 0, 0] : f32 from vector<1x1x1xf32>
    %1526 = vector.extract_strided_slice %1486 {offsets = [2, 0], sizes = [1, 128], strides = [1, 1]} : vector<8x128xf32> to vector<1x128xf32>
    %1527 = vector.broadcast %1525 : f32 to vector<1x128xf32>
    %1528 = arith.mulf %1527, %1526 : vector<1x128xf32>
    %cst_418 = arith.constant 1.000000e+00 : f32
    %1529 = vector.broadcast %cst_418 : f32 to vector<1x128xf32>
    %1530 = arith.subf %1529, %1528 : vector<1x128xf32>
    %1531 = arith.mulf %1516, %1530 : vector<1x128xf32>
    %c3_i32_419 = arith.constant 3 : i32
    %1532 = arith.addi %1484, %c3_i32_419 : i32
    %1533 = vector.broadcast %1532 : i32 to vector<1x128xi32>
    %1534 = arith.cmpi eq, %117, %1533 : vector<1x128xi32>
    %cst_420 = arith.constant 0.000000e+00 : f32
    %1535 = vector.broadcast %cst_420 : f32 to vector<1x128xf32>
    %1536 = arith.select %1534, %1531, %1535 : vector<1x128xi1>, vector<1x128xf32>
    %1537 = vector.shape_cast %1536 : vector<1x128xf32> to vector<1x1x128xf32>
    %cst_421 = arith.constant dense<0xFF800000> : vector<1xf32>
    %1538 = vector.multi_reduction <maximumf>, %1537, %cst_421 [1, 2] : vector<1x1x128xf32> to vector<1xf32>
    %1539 = vector.shape_cast %1538 : vector<1xf32> to vector<1x1x1xf32>
    %1540 = vector.extract %1539[0, 0, 0] : f32 from vector<1x1x1xf32>
    %1541 = vector.extract_strided_slice %1486 {offsets = [3, 0], sizes = [1, 128], strides = [1, 1]} : vector<8x128xf32> to vector<1x128xf32>
    %1542 = vector.broadcast %1540 : f32 to vector<1x128xf32>
    %1543 = arith.mulf %1542, %1541 : vector<1x128xf32>
    %cst_422 = arith.constant 1.000000e+00 : f32
    %1544 = vector.broadcast %cst_422 : f32 to vector<1x128xf32>
    %1545 = arith.subf %1544, %1543 : vector<1x128xf32>
    %1546 = arith.mulf %1531, %1545 : vector<1x128xf32>
    %c4_i32_423 = arith.constant 4 : i32
    %1547 = arith.addi %1484, %c4_i32_423 : i32
    %1548 = vector.broadcast %1547 : i32 to vector<1x128xi32>
    %1549 = arith.cmpi eq, %117, %1548 : vector<1x128xi32>
    %cst_424 = arith.constant 0.000000e+00 : f32
    %1550 = vector.broadcast %cst_424 : f32 to vector<1x128xf32>
    %1551 = arith.select %1549, %1546, %1550 : vector<1x128xi1>, vector<1x128xf32>
    %1552 = vector.shape_cast %1551 : vector<1x128xf32> to vector<1x1x128xf32>
    %cst_425 = arith.constant dense<0xFF800000> : vector<1xf32>
    %1553 = vector.multi_reduction <maximumf>, %1552, %cst_425 [1, 2] : vector<1x1x128xf32> to vector<1xf32>
    %1554 = vector.shape_cast %1553 : vector<1xf32> to vector<1x1x1xf32>
    %1555 = vector.extract %1554[0, 0, 0] : f32 from vector<1x1x1xf32>
    %1556 = vector.extract_strided_slice %1486 {offsets = [4, 0], sizes = [1, 128], strides = [1, 1]} : vector<8x128xf32> to vector<1x128xf32>
    %1557 = vector.broadcast %1555 : f32 to vector<1x128xf32>
    %1558 = arith.mulf %1557, %1556 : vector<1x128xf32>
    %cst_426 = arith.constant 1.000000e+00 : f32
    %1559 = vector.broadcast %cst_426 : f32 to vector<1x128xf32>
    %1560 = arith.subf %1559, %1558 : vector<1x128xf32>
    %1561 = arith.mulf %1546, %1560 : vector<1x128xf32>
    %c5_i32_427 = arith.constant 5 : i32
    %1562 = arith.addi %1484, %c5_i32_427 : i32
    %1563 = vector.broadcast %1562 : i32 to vector<1x128xi32>
    %1564 = arith.cmpi eq, %117, %1563 : vector<1x128xi32>
    %cst_428 = arith.constant 0.000000e+00 : f32
    %1565 = vector.broadcast %cst_428 : f32 to vector<1x128xf32>
    %1566 = arith.select %1564, %1561, %1565 : vector<1x128xi1>, vector<1x128xf32>
    %1567 = vector.shape_cast %1566 : vector<1x128xf32> to vector<1x1x128xf32>
    %cst_429 = arith.constant dense<0xFF800000> : vector<1xf32>
    %1568 = vector.multi_reduction <maximumf>, %1567, %cst_429 [1, 2] : vector<1x1x128xf32> to vector<1xf32>
    %1569 = vector.shape_cast %1568 : vector<1xf32> to vector<1x1x1xf32>
    %1570 = vector.extract %1569[0, 0, 0] : f32 from vector<1x1x1xf32>
    %1571 = vector.extract_strided_slice %1486 {offsets = [5, 0], sizes = [1, 128], strides = [1, 1]} : vector<8x128xf32> to vector<1x128xf32>
    %1572 = vector.broadcast %1570 : f32 to vector<1x128xf32>
    %1573 = arith.mulf %1572, %1571 : vector<1x128xf32>
    %cst_430 = arith.constant 1.000000e+00 : f32
    %1574 = vector.broadcast %cst_430 : f32 to vector<1x128xf32>
    %1575 = arith.subf %1574, %1573 : vector<1x128xf32>
    %1576 = arith.mulf %1561, %1575 : vector<1x128xf32>
    %c6_i32_431 = arith.constant 6 : i32
    %1577 = arith.addi %1484, %c6_i32_431 : i32
    %1578 = vector.broadcast %1577 : i32 to vector<1x128xi32>
    %1579 = arith.cmpi eq, %117, %1578 : vector<1x128xi32>
    %cst_432 = arith.constant 0.000000e+00 : f32
    %1580 = vector.broadcast %cst_432 : f32 to vector<1x128xf32>
    %1581 = arith.select %1579, %1576, %1580 : vector<1x128xi1>, vector<1x128xf32>
    %1582 = vector.shape_cast %1581 : vector<1x128xf32> to vector<1x1x128xf32>
    %cst_433 = arith.constant dense<0xFF800000> : vector<1xf32>
    %1583 = vector.multi_reduction <maximumf>, %1582, %cst_433 [1, 2] : vector<1x1x128xf32> to vector<1xf32>
    %1584 = vector.shape_cast %1583 : vector<1xf32> to vector<1x1x1xf32>
    %1585 = vector.extract %1584[0, 0, 0] : f32 from vector<1x1x1xf32>
    %1586 = vector.extract_strided_slice %1486 {offsets = [6, 0], sizes = [1, 128], strides = [1, 1]} : vector<8x128xf32> to vector<1x128xf32>
    %1587 = vector.broadcast %1585 : f32 to vector<1x128xf32>
    %1588 = arith.mulf %1587, %1586 : vector<1x128xf32>
    %cst_434 = arith.constant 1.000000e+00 : f32
    %1589 = vector.broadcast %cst_434 : f32 to vector<1x128xf32>
    %1590 = arith.subf %1589, %1588 : vector<1x128xf32>
    %1591 = arith.mulf %1576, %1590 : vector<1x128xf32>
    %c7_i32_435 = arith.constant 7 : i32
    %1592 = arith.addi %1484, %c7_i32_435 : i32
    %1593 = vector.broadcast %1592 : i32 to vector<1x128xi32>
    %1594 = arith.cmpi eq, %117, %1593 : vector<1x128xi32>
    %cst_436 = arith.constant 0.000000e+00 : f32
    %1595 = vector.broadcast %cst_436 : f32 to vector<1x128xf32>
    %1596 = arith.select %1594, %1591, %1595 : vector<1x128xi1>, vector<1x128xf32>
    %1597 = vector.shape_cast %1596 : vector<1x128xf32> to vector<1x1x128xf32>
    %cst_437 = arith.constant dense<0xFF800000> : vector<1xf32>
    %1598 = vector.multi_reduction <maximumf>, %1597, %cst_437 [1, 2] : vector<1x1x128xf32> to vector<1xf32>
    %1599 = vector.shape_cast %1598 : vector<1xf32> to vector<1x1x1xf32>
    %1600 = vector.extract %1599[0, 0, 0] : f32 from vector<1x1x1xf32>
    %1601 = vector.extract_strided_slice %1486 {offsets = [7, 0], sizes = [1, 128], strides = [1, 1]} : vector<8x128xf32> to vector<1x128xf32>
    %1602 = vector.broadcast %1600 : f32 to vector<1x128xf32>
    %1603 = arith.mulf %1602, %1601 : vector<1x128xf32>
    %cst_438 = arith.constant 1.000000e+00 : f32
    %1604 = vector.broadcast %cst_438 : f32 to vector<1x128xf32>
    %1605 = arith.subf %1604, %1603 : vector<1x128xf32>
    %1606 = arith.mulf %1591, %1605 : vector<1x128xf32>
    %c12_i32 = arith.constant 12 : i32
    %c8_i32_439 = arith.constant 8 : i32
    %1607 = arith.muli %c12_i32, %c8_i32_439 : i32
    %1608 = tpu.assume_multiple %1607, 8 : i32
    %1609 = arith.index_cast %1608 : i32 to index
    %c0_440 = arith.constant 0 : index
    %1610 = vector.load %arg3[%1609, %c0_440] : memref<128x128xf32, #tpu.memory_space<vmem>>, vector<8x128xf32>
    %c0_i32_441 = arith.constant 0 : i32
    %1611 = arith.addi %1608, %c0_i32_441 : i32
    %1612 = vector.broadcast %1611 : i32 to vector<1x128xi32>
    %1613 = arith.cmpi eq, %117, %1612 : vector<1x128xi32>
    %cst_442 = arith.constant 0.000000e+00 : f32
    %1614 = vector.broadcast %cst_442 : f32 to vector<1x128xf32>
    %1615 = arith.select %1613, %1606, %1614 : vector<1x128xi1>, vector<1x128xf32>
    %1616 = vector.shape_cast %1615 : vector<1x128xf32> to vector<1x1x128xf32>
    %cst_443 = arith.constant dense<0xFF800000> : vector<1xf32>
    %1617 = vector.multi_reduction <maximumf>, %1616, %cst_443 [1, 2] : vector<1x1x128xf32> to vector<1xf32>
    %1618 = vector.shape_cast %1617 : vector<1xf32> to vector<1x1x1xf32>
    %1619 = vector.extract %1618[0, 0, 0] : f32 from vector<1x1x1xf32>
    %1620 = vector.extract_strided_slice %1610 {offsets = [0, 0], sizes = [1, 128], strides = [1, 1]} : vector<8x128xf32> to vector<1x128xf32>
    %1621 = vector.broadcast %1619 : f32 to vector<1x128xf32>
    %1622 = arith.mulf %1621, %1620 : vector<1x128xf32>
    %cst_444 = arith.constant 1.000000e+00 : f32
    %1623 = vector.broadcast %cst_444 : f32 to vector<1x128xf32>
    %1624 = arith.subf %1623, %1622 : vector<1x128xf32>
    %1625 = arith.mulf %1606, %1624 : vector<1x128xf32>
    %c1_i32_445 = arith.constant 1 : i32
    %1626 = arith.addi %1608, %c1_i32_445 : i32
    %1627 = vector.broadcast %1626 : i32 to vector<1x128xi32>
    %1628 = arith.cmpi eq, %117, %1627 : vector<1x128xi32>
    %cst_446 = arith.constant 0.000000e+00 : f32
    %1629 = vector.broadcast %cst_446 : f32 to vector<1x128xf32>
    %1630 = arith.select %1628, %1625, %1629 : vector<1x128xi1>, vector<1x128xf32>
    %1631 = vector.shape_cast %1630 : vector<1x128xf32> to vector<1x1x128xf32>
    %cst_447 = arith.constant dense<0xFF800000> : vector<1xf32>
    %1632 = vector.multi_reduction <maximumf>, %1631, %cst_447 [1, 2] : vector<1x1x128xf32> to vector<1xf32>
    %1633 = vector.shape_cast %1632 : vector<1xf32> to vector<1x1x1xf32>
    %1634 = vector.extract %1633[0, 0, 0] : f32 from vector<1x1x1xf32>
    %1635 = vector.extract_strided_slice %1610 {offsets = [1, 0], sizes = [1, 128], strides = [1, 1]} : vector<8x128xf32> to vector<1x128xf32>
    %1636 = vector.broadcast %1634 : f32 to vector<1x128xf32>
    %1637 = arith.mulf %1636, %1635 : vector<1x128xf32>
    %cst_448 = arith.constant 1.000000e+00 : f32
    %1638 = vector.broadcast %cst_448 : f32 to vector<1x128xf32>
    %1639 = arith.subf %1638, %1637 : vector<1x128xf32>
    %1640 = arith.mulf %1625, %1639 : vector<1x128xf32>
    %c2_i32_449 = arith.constant 2 : i32
    %1641 = arith.addi %1608, %c2_i32_449 : i32
    %1642 = vector.broadcast %1641 : i32 to vector<1x128xi32>
    %1643 = arith.cmpi eq, %117, %1642 : vector<1x128xi32>
    %cst_450 = arith.constant 0.000000e+00 : f32
    %1644 = vector.broadcast %cst_450 : f32 to vector<1x128xf32>
    %1645 = arith.select %1643, %1640, %1644 : vector<1x128xi1>, vector<1x128xf32>
    %1646 = vector.shape_cast %1645 : vector<1x128xf32> to vector<1x1x128xf32>
    %cst_451 = arith.constant dense<0xFF800000> : vector<1xf32>
    %1647 = vector.multi_reduction <maximumf>, %1646, %cst_451 [1, 2] : vector<1x1x128xf32> to vector<1xf32>
    %1648 = vector.shape_cast %1647 : vector<1xf32> to vector<1x1x1xf32>
    %1649 = vector.extract %1648[0, 0, 0] : f32 from vector<1x1x1xf32>
    %1650 = vector.extract_strided_slice %1610 {offsets = [2, 0], sizes = [1, 128], strides = [1, 1]} : vector<8x128xf32> to vector<1x128xf32>
    %1651 = vector.broadcast %1649 : f32 to vector<1x128xf32>
    %1652 = arith.mulf %1651, %1650 : vector<1x128xf32>
    %cst_452 = arith.constant 1.000000e+00 : f32
    %1653 = vector.broadcast %cst_452 : f32 to vector<1x128xf32>
    %1654 = arith.subf %1653, %1652 : vector<1x128xf32>
    %1655 = arith.mulf %1640, %1654 : vector<1x128xf32>
    %c3_i32_453 = arith.constant 3 : i32
    %1656 = arith.addi %1608, %c3_i32_453 : i32
    %1657 = vector.broadcast %1656 : i32 to vector<1x128xi32>
    %1658 = arith.cmpi eq, %117, %1657 : vector<1x128xi32>
    %cst_454 = arith.constant 0.000000e+00 : f32
    %1659 = vector.broadcast %cst_454 : f32 to vector<1x128xf32>
    %1660 = arith.select %1658, %1655, %1659 : vector<1x128xi1>, vector<1x128xf32>
    %1661 = vector.shape_cast %1660 : vector<1x128xf32> to vector<1x1x128xf32>
    %cst_455 = arith.constant dense<0xFF800000> : vector<1xf32>
    %1662 = vector.multi_reduction <maximumf>, %1661, %cst_455 [1, 2] : vector<1x1x128xf32> to vector<1xf32>
    %1663 = vector.shape_cast %1662 : vector<1xf32> to vector<1x1x1xf32>
    %1664 = vector.extract %1663[0, 0, 0] : f32 from vector<1x1x1xf32>
    %1665 = vector.extract_strided_slice %1610 {offsets = [3, 0], sizes = [1, 128], strides = [1, 1]} : vector<8x128xf32> to vector<1x128xf32>
    %1666 = vector.broadcast %1664 : f32 to vector<1x128xf32>
    %1667 = arith.mulf %1666, %1665 : vector<1x128xf32>
    %cst_456 = arith.constant 1.000000e+00 : f32
    %1668 = vector.broadcast %cst_456 : f32 to vector<1x128xf32>
    %1669 = arith.subf %1668, %1667 : vector<1x128xf32>
    %1670 = arith.mulf %1655, %1669 : vector<1x128xf32>
    %c4_i32_457 = arith.constant 4 : i32
    %1671 = arith.addi %1608, %c4_i32_457 : i32
    %1672 = vector.broadcast %1671 : i32 to vector<1x128xi32>
    %1673 = arith.cmpi eq, %117, %1672 : vector<1x128xi32>
    %cst_458 = arith.constant 0.000000e+00 : f32
    %1674 = vector.broadcast %cst_458 : f32 to vector<1x128xf32>
    %1675 = arith.select %1673, %1670, %1674 : vector<1x128xi1>, vector<1x128xf32>
    %1676 = vector.shape_cast %1675 : vector<1x128xf32> to vector<1x1x128xf32>
    %cst_459 = arith.constant dense<0xFF800000> : vector<1xf32>
    %1677 = vector.multi_reduction <maximumf>, %1676, %cst_459 [1, 2] : vector<1x1x128xf32> to vector<1xf32>
    %1678 = vector.shape_cast %1677 : vector<1xf32> to vector<1x1x1xf32>
    %1679 = vector.extract %1678[0, 0, 0] : f32 from vector<1x1x1xf32>
    %1680 = vector.extract_strided_slice %1610 {offsets = [4, 0], sizes = [1, 128], strides = [1, 1]} : vector<8x128xf32> to vector<1x128xf32>
    %1681 = vector.broadcast %1679 : f32 to vector<1x128xf32>
    %1682 = arith.mulf %1681, %1680 : vector<1x128xf32>
    %cst_460 = arith.constant 1.000000e+00 : f32
    %1683 = vector.broadcast %cst_460 : f32 to vector<1x128xf32>
    %1684 = arith.subf %1683, %1682 : vector<1x128xf32>
    %1685 = arith.mulf %1670, %1684 : vector<1x128xf32>
    %c5_i32_461 = arith.constant 5 : i32
    %1686 = arith.addi %1608, %c5_i32_461 : i32
    %1687 = vector.broadcast %1686 : i32 to vector<1x128xi32>
    %1688 = arith.cmpi eq, %117, %1687 : vector<1x128xi32>
    %cst_462 = arith.constant 0.000000e+00 : f32
    %1689 = vector.broadcast %cst_462 : f32 to vector<1x128xf32>
    %1690 = arith.select %1688, %1685, %1689 : vector<1x128xi1>, vector<1x128xf32>
    %1691 = vector.shape_cast %1690 : vector<1x128xf32> to vector<1x1x128xf32>
    %cst_463 = arith.constant dense<0xFF800000> : vector<1xf32>
    %1692 = vector.multi_reduction <maximumf>, %1691, %cst_463 [1, 2] : vector<1x1x128xf32> to vector<1xf32>
    %1693 = vector.shape_cast %1692 : vector<1xf32> to vector<1x1x1xf32>
    %1694 = vector.extract %1693[0, 0, 0] : f32 from vector<1x1x1xf32>
    %1695 = vector.extract_strided_slice %1610 {offsets = [5, 0], sizes = [1, 128], strides = [1, 1]} : vector<8x128xf32> to vector<1x128xf32>
    %1696 = vector.broadcast %1694 : f32 to vector<1x128xf32>
    %1697 = arith.mulf %1696, %1695 : vector<1x128xf32>
    %cst_464 = arith.constant 1.000000e+00 : f32
    %1698 = vector.broadcast %cst_464 : f32 to vector<1x128xf32>
    %1699 = arith.subf %1698, %1697 : vector<1x128xf32>
    %1700 = arith.mulf %1685, %1699 : vector<1x128xf32>
    %c6_i32_465 = arith.constant 6 : i32
    %1701 = arith.addi %1608, %c6_i32_465 : i32
    %1702 = vector.broadcast %1701 : i32 to vector<1x128xi32>
    %1703 = arith.cmpi eq, %117, %1702 : vector<1x128xi32>
    %cst_466 = arith.constant 0.000000e+00 : f32
    %1704 = vector.broadcast %cst_466 : f32 to vector<1x128xf32>
    %1705 = arith.select %1703, %1700, %1704 : vector<1x128xi1>, vector<1x128xf32>
    %1706 = vector.shape_cast %1705 : vector<1x128xf32> to vector<1x1x128xf32>
    %cst_467 = arith.constant dense<0xFF800000> : vector<1xf32>
    %1707 = vector.multi_reduction <maximumf>, %1706, %cst_467 [1, 2] : vector<1x1x128xf32> to vector<1xf32>
    %1708 = vector.shape_cast %1707 : vector<1xf32> to vector<1x1x1xf32>
    %1709 = vector.extract %1708[0, 0, 0] : f32 from vector<1x1x1xf32>
    %1710 = vector.extract_strided_slice %1610 {offsets = [6, 0], sizes = [1, 128], strides = [1, 1]} : vector<8x128xf32> to vector<1x128xf32>
    %1711 = vector.broadcast %1709 : f32 to vector<1x128xf32>
    %1712 = arith.mulf %1711, %1710 : vector<1x128xf32>
    %cst_468 = arith.constant 1.000000e+00 : f32
    %1713 = vector.broadcast %cst_468 : f32 to vector<1x128xf32>
    %1714 = arith.subf %1713, %1712 : vector<1x128xf32>
    %1715 = arith.mulf %1700, %1714 : vector<1x128xf32>
    %c7_i32_469 = arith.constant 7 : i32
    %1716 = arith.addi %1608, %c7_i32_469 : i32
    %1717 = vector.broadcast %1716 : i32 to vector<1x128xi32>
    %1718 = arith.cmpi eq, %117, %1717 : vector<1x128xi32>
    %cst_470 = arith.constant 0.000000e+00 : f32
    %1719 = vector.broadcast %cst_470 : f32 to vector<1x128xf32>
    %1720 = arith.select %1718, %1715, %1719 : vector<1x128xi1>, vector<1x128xf32>
    %1721 = vector.shape_cast %1720 : vector<1x128xf32> to vector<1x1x128xf32>
    %cst_471 = arith.constant dense<0xFF800000> : vector<1xf32>
    %1722 = vector.multi_reduction <maximumf>, %1721, %cst_471 [1, 2] : vector<1x1x128xf32> to vector<1xf32>
    %1723 = vector.shape_cast %1722 : vector<1xf32> to vector<1x1x1xf32>
    %1724 = vector.extract %1723[0, 0, 0] : f32 from vector<1x1x1xf32>
    %1725 = vector.extract_strided_slice %1610 {offsets = [7, 0], sizes = [1, 128], strides = [1, 1]} : vector<8x128xf32> to vector<1x128xf32>
    %1726 = vector.broadcast %1724 : f32 to vector<1x128xf32>
    %1727 = arith.mulf %1726, %1725 : vector<1x128xf32>
    %cst_472 = arith.constant 1.000000e+00 : f32
    %1728 = vector.broadcast %cst_472 : f32 to vector<1x128xf32>
    %1729 = arith.subf %1728, %1727 : vector<1x128xf32>
    %1730 = arith.mulf %1715, %1729 : vector<1x128xf32>
    %c13_i32 = arith.constant 13 : i32
    %c8_i32_473 = arith.constant 8 : i32
    %1731 = arith.muli %c13_i32, %c8_i32_473 : i32
    %1732 = tpu.assume_multiple %1731, 8 : i32
    %1733 = arith.index_cast %1732 : i32 to index
    %c0_474 = arith.constant 0 : index
    %1734 = vector.load %arg3[%1733, %c0_474] : memref<128x128xf32, #tpu.memory_space<vmem>>, vector<8x128xf32>
    %c0_i32_475 = arith.constant 0 : i32
    %1735 = arith.addi %1732, %c0_i32_475 : i32
    %1736 = vector.broadcast %1735 : i32 to vector<1x128xi32>
    %1737 = arith.cmpi eq, %117, %1736 : vector<1x128xi32>
    %cst_476 = arith.constant 0.000000e+00 : f32
    %1738 = vector.broadcast %cst_476 : f32 to vector<1x128xf32>
    %1739 = arith.select %1737, %1730, %1738 : vector<1x128xi1>, vector<1x128xf32>
    %1740 = vector.shape_cast %1739 : vector<1x128xf32> to vector<1x1x128xf32>
    %cst_477 = arith.constant dense<0xFF800000> : vector<1xf32>
    %1741 = vector.multi_reduction <maximumf>, %1740, %cst_477 [1, 2] : vector<1x1x128xf32> to vector<1xf32>
    %1742 = vector.shape_cast %1741 : vector<1xf32> to vector<1x1x1xf32>
    %1743 = vector.extract %1742[0, 0, 0] : f32 from vector<1x1x1xf32>
    %1744 = vector.extract_strided_slice %1734 {offsets = [0, 0], sizes = [1, 128], strides = [1, 1]} : vector<8x128xf32> to vector<1x128xf32>
    %1745 = vector.broadcast %1743 : f32 to vector<1x128xf32>
    %1746 = arith.mulf %1745, %1744 : vector<1x128xf32>
    %cst_478 = arith.constant 1.000000e+00 : f32
    %1747 = vector.broadcast %cst_478 : f32 to vector<1x128xf32>
    %1748 = arith.subf %1747, %1746 : vector<1x128xf32>
    %1749 = arith.mulf %1730, %1748 : vector<1x128xf32>
    %c1_i32_479 = arith.constant 1 : i32
    %1750 = arith.addi %1732, %c1_i32_479 : i32
    %1751 = vector.broadcast %1750 : i32 to vector<1x128xi32>
    %1752 = arith.cmpi eq, %117, %1751 : vector<1x128xi32>
    %cst_480 = arith.constant 0.000000e+00 : f32
    %1753 = vector.broadcast %cst_480 : f32 to vector<1x128xf32>
    %1754 = arith.select %1752, %1749, %1753 : vector<1x128xi1>, vector<1x128xf32>
    %1755 = vector.shape_cast %1754 : vector<1x128xf32> to vector<1x1x128xf32>
    %cst_481 = arith.constant dense<0xFF800000> : vector<1xf32>
    %1756 = vector.multi_reduction <maximumf>, %1755, %cst_481 [1, 2] : vector<1x1x128xf32> to vector<1xf32>
    %1757 = vector.shape_cast %1756 : vector<1xf32> to vector<1x1x1xf32>
    %1758 = vector.extract %1757[0, 0, 0] : f32 from vector<1x1x1xf32>
    %1759 = vector.extract_strided_slice %1734 {offsets = [1, 0], sizes = [1, 128], strides = [1, 1]} : vector<8x128xf32> to vector<1x128xf32>
    %1760 = vector.broadcast %1758 : f32 to vector<1x128xf32>
    %1761 = arith.mulf %1760, %1759 : vector<1x128xf32>
    %cst_482 = arith.constant 1.000000e+00 : f32
    %1762 = vector.broadcast %cst_482 : f32 to vector<1x128xf32>
    %1763 = arith.subf %1762, %1761 : vector<1x128xf32>
    %1764 = arith.mulf %1749, %1763 : vector<1x128xf32>
    %c2_i32_483 = arith.constant 2 : i32
    %1765 = arith.addi %1732, %c2_i32_483 : i32
    %1766 = vector.broadcast %1765 : i32 to vector<1x128xi32>
    %1767 = arith.cmpi eq, %117, %1766 : vector<1x128xi32>
    %cst_484 = arith.constant 0.000000e+00 : f32
    %1768 = vector.broadcast %cst_484 : f32 to vector<1x128xf32>
    %1769 = arith.select %1767, %1764, %1768 : vector<1x128xi1>, vector<1x128xf32>
    %1770 = vector.shape_cast %1769 : vector<1x128xf32> to vector<1x1x128xf32>
    %cst_485 = arith.constant dense<0xFF800000> : vector<1xf32>
    %1771 = vector.multi_reduction <maximumf>, %1770, %cst_485 [1, 2] : vector<1x1x128xf32> to vector<1xf32>
    %1772 = vector.shape_cast %1771 : vector<1xf32> to vector<1x1x1xf32>
    %1773 = vector.extract %1772[0, 0, 0] : f32 from vector<1x1x1xf32>
    %1774 = vector.extract_strided_slice %1734 {offsets = [2, 0], sizes = [1, 128], strides = [1, 1]} : vector<8x128xf32> to vector<1x128xf32>
    %1775 = vector.broadcast %1773 : f32 to vector<1x128xf32>
    %1776 = arith.mulf %1775, %1774 : vector<1x128xf32>
    %cst_486 = arith.constant 1.000000e+00 : f32
    %1777 = vector.broadcast %cst_486 : f32 to vector<1x128xf32>
    %1778 = arith.subf %1777, %1776 : vector<1x128xf32>
    %1779 = arith.mulf %1764, %1778 : vector<1x128xf32>
    %c3_i32_487 = arith.constant 3 : i32
    %1780 = arith.addi %1732, %c3_i32_487 : i32
    %1781 = vector.broadcast %1780 : i32 to vector<1x128xi32>
    %1782 = arith.cmpi eq, %117, %1781 : vector<1x128xi32>
    %cst_488 = arith.constant 0.000000e+00 : f32
    %1783 = vector.broadcast %cst_488 : f32 to vector<1x128xf32>
    %1784 = arith.select %1782, %1779, %1783 : vector<1x128xi1>, vector<1x128xf32>
    %1785 = vector.shape_cast %1784 : vector<1x128xf32> to vector<1x1x128xf32>
    %cst_489 = arith.constant dense<0xFF800000> : vector<1xf32>
    %1786 = vector.multi_reduction <maximumf>, %1785, %cst_489 [1, 2] : vector<1x1x128xf32> to vector<1xf32>
    %1787 = vector.shape_cast %1786 : vector<1xf32> to vector<1x1x1xf32>
    %1788 = vector.extract %1787[0, 0, 0] : f32 from vector<1x1x1xf32>
    %1789 = vector.extract_strided_slice %1734 {offsets = [3, 0], sizes = [1, 128], strides = [1, 1]} : vector<8x128xf32> to vector<1x128xf32>
    %1790 = vector.broadcast %1788 : f32 to vector<1x128xf32>
    %1791 = arith.mulf %1790, %1789 : vector<1x128xf32>
    %cst_490 = arith.constant 1.000000e+00 : f32
    %1792 = vector.broadcast %cst_490 : f32 to vector<1x128xf32>
    %1793 = arith.subf %1792, %1791 : vector<1x128xf32>
    %1794 = arith.mulf %1779, %1793 : vector<1x128xf32>
    %c4_i32_491 = arith.constant 4 : i32
    %1795 = arith.addi %1732, %c4_i32_491 : i32
    %1796 = vector.broadcast %1795 : i32 to vector<1x128xi32>
    %1797 = arith.cmpi eq, %117, %1796 : vector<1x128xi32>
    %cst_492 = arith.constant 0.000000e+00 : f32
    %1798 = vector.broadcast %cst_492 : f32 to vector<1x128xf32>
    %1799 = arith.select %1797, %1794, %1798 : vector<1x128xi1>, vector<1x128xf32>
    %1800 = vector.shape_cast %1799 : vector<1x128xf32> to vector<1x1x128xf32>
    %cst_493 = arith.constant dense<0xFF800000> : vector<1xf32>
    %1801 = vector.multi_reduction <maximumf>, %1800, %cst_493 [1, 2] : vector<1x1x128xf32> to vector<1xf32>
    %1802 = vector.shape_cast %1801 : vector<1xf32> to vector<1x1x1xf32>
    %1803 = vector.extract %1802[0, 0, 0] : f32 from vector<1x1x1xf32>
    %1804 = vector.extract_strided_slice %1734 {offsets = [4, 0], sizes = [1, 128], strides = [1, 1]} : vector<8x128xf32> to vector<1x128xf32>
    %1805 = vector.broadcast %1803 : f32 to vector<1x128xf32>
    %1806 = arith.mulf %1805, %1804 : vector<1x128xf32>
    %cst_494 = arith.constant 1.000000e+00 : f32
    %1807 = vector.broadcast %cst_494 : f32 to vector<1x128xf32>
    %1808 = arith.subf %1807, %1806 : vector<1x128xf32>
    %1809 = arith.mulf %1794, %1808 : vector<1x128xf32>
    %c5_i32_495 = arith.constant 5 : i32
    %1810 = arith.addi %1732, %c5_i32_495 : i32
    %1811 = vector.broadcast %1810 : i32 to vector<1x128xi32>
    %1812 = arith.cmpi eq, %117, %1811 : vector<1x128xi32>
    %cst_496 = arith.constant 0.000000e+00 : f32
    %1813 = vector.broadcast %cst_496 : f32 to vector<1x128xf32>
    %1814 = arith.select %1812, %1809, %1813 : vector<1x128xi1>, vector<1x128xf32>
    %1815 = vector.shape_cast %1814 : vector<1x128xf32> to vector<1x1x128xf32>
    %cst_497 = arith.constant dense<0xFF800000> : vector<1xf32>
    %1816 = vector.multi_reduction <maximumf>, %1815, %cst_497 [1, 2] : vector<1x1x128xf32> to vector<1xf32>
    %1817 = vector.shape_cast %1816 : vector<1xf32> to vector<1x1x1xf32>
    %1818 = vector.extract %1817[0, 0, 0] : f32 from vector<1x1x1xf32>
    %1819 = vector.extract_strided_slice %1734 {offsets = [5, 0], sizes = [1, 128], strides = [1, 1]} : vector<8x128xf32> to vector<1x128xf32>
    %1820 = vector.broadcast %1818 : f32 to vector<1x128xf32>
    %1821 = arith.mulf %1820, %1819 : vector<1x128xf32>
    %cst_498 = arith.constant 1.000000e+00 : f32
    %1822 = vector.broadcast %cst_498 : f32 to vector<1x128xf32>
    %1823 = arith.subf %1822, %1821 : vector<1x128xf32>
    %1824 = arith.mulf %1809, %1823 : vector<1x128xf32>
    %c6_i32_499 = arith.constant 6 : i32
    %1825 = arith.addi %1732, %c6_i32_499 : i32
    %1826 = vector.broadcast %1825 : i32 to vector<1x128xi32>
    %1827 = arith.cmpi eq, %117, %1826 : vector<1x128xi32>
    %cst_500 = arith.constant 0.000000e+00 : f32
    %1828 = vector.broadcast %cst_500 : f32 to vector<1x128xf32>
    %1829 = arith.select %1827, %1824, %1828 : vector<1x128xi1>, vector<1x128xf32>
    %1830 = vector.shape_cast %1829 : vector<1x128xf32> to vector<1x1x128xf32>
    %cst_501 = arith.constant dense<0xFF800000> : vector<1xf32>
    %1831 = vector.multi_reduction <maximumf>, %1830, %cst_501 [1, 2] : vector<1x1x128xf32> to vector<1xf32>
    %1832 = vector.shape_cast %1831 : vector<1xf32> to vector<1x1x1xf32>
    %1833 = vector.extract %1832[0, 0, 0] : f32 from vector<1x1x1xf32>
    %1834 = vector.extract_strided_slice %1734 {offsets = [6, 0], sizes = [1, 128], strides = [1, 1]} : vector<8x128xf32> to vector<1x128xf32>
    %1835 = vector.broadcast %1833 : f32 to vector<1x128xf32>
    %1836 = arith.mulf %1835, %1834 : vector<1x128xf32>
    %cst_502 = arith.constant 1.000000e+00 : f32
    %1837 = vector.broadcast %cst_502 : f32 to vector<1x128xf32>
    %1838 = arith.subf %1837, %1836 : vector<1x128xf32>
    %1839 = arith.mulf %1824, %1838 : vector<1x128xf32>
    %c7_i32_503 = arith.constant 7 : i32
    %1840 = arith.addi %1732, %c7_i32_503 : i32
    %1841 = vector.broadcast %1840 : i32 to vector<1x128xi32>
    %1842 = arith.cmpi eq, %117, %1841 : vector<1x128xi32>
    %cst_504 = arith.constant 0.000000e+00 : f32
    %1843 = vector.broadcast %cst_504 : f32 to vector<1x128xf32>
    %1844 = arith.select %1842, %1839, %1843 : vector<1x128xi1>, vector<1x128xf32>
    %1845 = vector.shape_cast %1844 : vector<1x128xf32> to vector<1x1x128xf32>
    %cst_505 = arith.constant dense<0xFF800000> : vector<1xf32>
    %1846 = vector.multi_reduction <maximumf>, %1845, %cst_505 [1, 2] : vector<1x1x128xf32> to vector<1xf32>
    %1847 = vector.shape_cast %1846 : vector<1xf32> to vector<1x1x1xf32>
    %1848 = vector.extract %1847[0, 0, 0] : f32 from vector<1x1x1xf32>
    %1849 = vector.extract_strided_slice %1734 {offsets = [7, 0], sizes = [1, 128], strides = [1, 1]} : vector<8x128xf32> to vector<1x128xf32>
    %1850 = vector.broadcast %1848 : f32 to vector<1x128xf32>
    %1851 = arith.mulf %1850, %1849 : vector<1x128xf32>
    %cst_506 = arith.constant 1.000000e+00 : f32
    %1852 = vector.broadcast %cst_506 : f32 to vector<1x128xf32>
    %1853 = arith.subf %1852, %1851 : vector<1x128xf32>
    %1854 = arith.mulf %1839, %1853 : vector<1x128xf32>
    %c14_i32 = arith.constant 14 : i32
    %c8_i32_507 = arith.constant 8 : i32
    %1855 = arith.muli %c14_i32, %c8_i32_507 : i32
    %1856 = tpu.assume_multiple %1855, 8 : i32
    %1857 = arith.index_cast %1856 : i32 to index
    %c0_508 = arith.constant 0 : index
    %1858 = vector.load %arg3[%1857, %c0_508] : memref<128x128xf32, #tpu.memory_space<vmem>>, vector<8x128xf32>
    %c0_i32_509 = arith.constant 0 : i32
    %1859 = arith.addi %1856, %c0_i32_509 : i32
    %1860 = vector.broadcast %1859 : i32 to vector<1x128xi32>
    %1861 = arith.cmpi eq, %117, %1860 : vector<1x128xi32>
    %cst_510 = arith.constant 0.000000e+00 : f32
    %1862 = vector.broadcast %cst_510 : f32 to vector<1x128xf32>
    %1863 = arith.select %1861, %1854, %1862 : vector<1x128xi1>, vector<1x128xf32>
    %1864 = vector.shape_cast %1863 : vector<1x128xf32> to vector<1x1x128xf32>
    %cst_511 = arith.constant dense<0xFF800000> : vector<1xf32>
    %1865 = vector.multi_reduction <maximumf>, %1864, %cst_511 [1, 2] : vector<1x1x128xf32> to vector<1xf32>
    %1866 = vector.shape_cast %1865 : vector<1xf32> to vector<1x1x1xf32>
    %1867 = vector.extract %1866[0, 0, 0] : f32 from vector<1x1x1xf32>
    %1868 = vector.extract_strided_slice %1858 {offsets = [0, 0], sizes = [1, 128], strides = [1, 1]} : vector<8x128xf32> to vector<1x128xf32>
    %1869 = vector.broadcast %1867 : f32 to vector<1x128xf32>
    %1870 = arith.mulf %1869, %1868 : vector<1x128xf32>
    %cst_512 = arith.constant 1.000000e+00 : f32
    %1871 = vector.broadcast %cst_512 : f32 to vector<1x128xf32>
    %1872 = arith.subf %1871, %1870 : vector<1x128xf32>
    %1873 = arith.mulf %1854, %1872 : vector<1x128xf32>
    %c1_i32_513 = arith.constant 1 : i32
    %1874 = arith.addi %1856, %c1_i32_513 : i32
    %1875 = vector.broadcast %1874 : i32 to vector<1x128xi32>
    %1876 = arith.cmpi eq, %117, %1875 : vector<1x128xi32>
    %cst_514 = arith.constant 0.000000e+00 : f32
    %1877 = vector.broadcast %cst_514 : f32 to vector<1x128xf32>
    %1878 = arith.select %1876, %1873, %1877 : vector<1x128xi1>, vector<1x128xf32>
    %1879 = vector.shape_cast %1878 : vector<1x128xf32> to vector<1x1x128xf32>
    %cst_515 = arith.constant dense<0xFF800000> : vector<1xf32>
    %1880 = vector.multi_reduction <maximumf>, %1879, %cst_515 [1, 2] : vector<1x1x128xf32> to vector<1xf32>
    %1881 = vector.shape_cast %1880 : vector<1xf32> to vector<1x1x1xf32>
    %1882 = vector.extract %1881[0, 0, 0] : f32 from vector<1x1x1xf32>
    %1883 = vector.extract_strided_slice %1858 {offsets = [1, 0], sizes = [1, 128], strides = [1, 1]} : vector<8x128xf32> to vector<1x128xf32>
    %1884 = vector.broadcast %1882 : f32 to vector<1x128xf32>
    %1885 = arith.mulf %1884, %1883 : vector<1x128xf32>
    %cst_516 = arith.constant 1.000000e+00 : f32
    %1886 = vector.broadcast %cst_516 : f32 to vector<1x128xf32>
    %1887 = arith.subf %1886, %1885 : vector<1x128xf32>
    %1888 = arith.mulf %1873, %1887 : vector<1x128xf32>
    %c2_i32_517 = arith.constant 2 : i32
    %1889 = arith.addi %1856, %c2_i32_517 : i32
    %1890 = vector.broadcast %1889 : i32 to vector<1x128xi32>
    %1891 = arith.cmpi eq, %117, %1890 : vector<1x128xi32>
    %cst_518 = arith.constant 0.000000e+00 : f32
    %1892 = vector.broadcast %cst_518 : f32 to vector<1x128xf32>
    %1893 = arith.select %1891, %1888, %1892 : vector<1x128xi1>, vector<1x128xf32>
    %1894 = vector.shape_cast %1893 : vector<1x128xf32> to vector<1x1x128xf32>
    %cst_519 = arith.constant dense<0xFF800000> : vector<1xf32>
    %1895 = vector.multi_reduction <maximumf>, %1894, %cst_519 [1, 2] : vector<1x1x128xf32> to vector<1xf32>
    %1896 = vector.shape_cast %1895 : vector<1xf32> to vector<1x1x1xf32>
    %1897 = vector.extract %1896[0, 0, 0] : f32 from vector<1x1x1xf32>
    %1898 = vector.extract_strided_slice %1858 {offsets = [2, 0], sizes = [1, 128], strides = [1, 1]} : vector<8x128xf32> to vector<1x128xf32>
    %1899 = vector.broadcast %1897 : f32 to vector<1x128xf32>
    %1900 = arith.mulf %1899, %1898 : vector<1x128xf32>
    %cst_520 = arith.constant 1.000000e+00 : f32
    %1901 = vector.broadcast %cst_520 : f32 to vector<1x128xf32>
    %1902 = arith.subf %1901, %1900 : vector<1x128xf32>
    %1903 = arith.mulf %1888, %1902 : vector<1x128xf32>
    %c3_i32_521 = arith.constant 3 : i32
    %1904 = arith.addi %1856, %c3_i32_521 : i32
    %1905 = vector.broadcast %1904 : i32 to vector<1x128xi32>
    %1906 = arith.cmpi eq, %117, %1905 : vector<1x128xi32>
    %cst_522 = arith.constant 0.000000e+00 : f32
    %1907 = vector.broadcast %cst_522 : f32 to vector<1x128xf32>
    %1908 = arith.select %1906, %1903, %1907 : vector<1x128xi1>, vector<1x128xf32>
    %1909 = vector.shape_cast %1908 : vector<1x128xf32> to vector<1x1x128xf32>
    %cst_523 = arith.constant dense<0xFF800000> : vector<1xf32>
    %1910 = vector.multi_reduction <maximumf>, %1909, %cst_523 [1, 2] : vector<1x1x128xf32> to vector<1xf32>
    %1911 = vector.shape_cast %1910 : vector<1xf32> to vector<1x1x1xf32>
    %1912 = vector.extract %1911[0, 0, 0] : f32 from vector<1x1x1xf32>
    %1913 = vector.extract_strided_slice %1858 {offsets = [3, 0], sizes = [1, 128], strides = [1, 1]} : vector<8x128xf32> to vector<1x128xf32>
    %1914 = vector.broadcast %1912 : f32 to vector<1x128xf32>
    %1915 = arith.mulf %1914, %1913 : vector<1x128xf32>
    %cst_524 = arith.constant 1.000000e+00 : f32
    %1916 = vector.broadcast %cst_524 : f32 to vector<1x128xf32>
    %1917 = arith.subf %1916, %1915 : vector<1x128xf32>
    %1918 = arith.mulf %1903, %1917 : vector<1x128xf32>
    %c4_i32_525 = arith.constant 4 : i32
    %1919 = arith.addi %1856, %c4_i32_525 : i32
    %1920 = vector.broadcast %1919 : i32 to vector<1x128xi32>
    %1921 = arith.cmpi eq, %117, %1920 : vector<1x128xi32>
    %cst_526 = arith.constant 0.000000e+00 : f32
    %1922 = vector.broadcast %cst_526 : f32 to vector<1x128xf32>
    %1923 = arith.select %1921, %1918, %1922 : vector<1x128xi1>, vector<1x128xf32>
    %1924 = vector.shape_cast %1923 : vector<1x128xf32> to vector<1x1x128xf32>
    %cst_527 = arith.constant dense<0xFF800000> : vector<1xf32>
    %1925 = vector.multi_reduction <maximumf>, %1924, %cst_527 [1, 2] : vector<1x1x128xf32> to vector<1xf32>
    %1926 = vector.shape_cast %1925 : vector<1xf32> to vector<1x1x1xf32>
    %1927 = vector.extract %1926[0, 0, 0] : f32 from vector<1x1x1xf32>
    %1928 = vector.extract_strided_slice %1858 {offsets = [4, 0], sizes = [1, 128], strides = [1, 1]} : vector<8x128xf32> to vector<1x128xf32>
    %1929 = vector.broadcast %1927 : f32 to vector<1x128xf32>
    %1930 = arith.mulf %1929, %1928 : vector<1x128xf32>
    %cst_528 = arith.constant 1.000000e+00 : f32
    %1931 = vector.broadcast %cst_528 : f32 to vector<1x128xf32>
    %1932 = arith.subf %1931, %1930 : vector<1x128xf32>
    %1933 = arith.mulf %1918, %1932 : vector<1x128xf32>
    %c5_i32_529 = arith.constant 5 : i32
    %1934 = arith.addi %1856, %c5_i32_529 : i32
    %1935 = vector.broadcast %1934 : i32 to vector<1x128xi32>
    %1936 = arith.cmpi eq, %117, %1935 : vector<1x128xi32>
    %cst_530 = arith.constant 0.000000e+00 : f32
    %1937 = vector.broadcast %cst_530 : f32 to vector<1x128xf32>
    %1938 = arith.select %1936, %1933, %1937 : vector<1x128xi1>, vector<1x128xf32>
    %1939 = vector.shape_cast %1938 : vector<1x128xf32> to vector<1x1x128xf32>
    %cst_531 = arith.constant dense<0xFF800000> : vector<1xf32>
    %1940 = vector.multi_reduction <maximumf>, %1939, %cst_531 [1, 2] : vector<1x1x128xf32> to vector<1xf32>
    %1941 = vector.shape_cast %1940 : vector<1xf32> to vector<1x1x1xf32>
    %1942 = vector.extract %1941[0, 0, 0] : f32 from vector<1x1x1xf32>
    %1943 = vector.extract_strided_slice %1858 {offsets = [5, 0], sizes = [1, 128], strides = [1, 1]} : vector<8x128xf32> to vector<1x128xf32>
    %1944 = vector.broadcast %1942 : f32 to vector<1x128xf32>
    %1945 = arith.mulf %1944, %1943 : vector<1x128xf32>
    %cst_532 = arith.constant 1.000000e+00 : f32
    %1946 = vector.broadcast %cst_532 : f32 to vector<1x128xf32>
    %1947 = arith.subf %1946, %1945 : vector<1x128xf32>
    %1948 = arith.mulf %1933, %1947 : vector<1x128xf32>
    %c6_i32_533 = arith.constant 6 : i32
    %1949 = arith.addi %1856, %c6_i32_533 : i32
    %1950 = vector.broadcast %1949 : i32 to vector<1x128xi32>
    %1951 = arith.cmpi eq, %117, %1950 : vector<1x128xi32>
    %cst_534 = arith.constant 0.000000e+00 : f32
    %1952 = vector.broadcast %cst_534 : f32 to vector<1x128xf32>
    %1953 = arith.select %1951, %1948, %1952 : vector<1x128xi1>, vector<1x128xf32>
    %1954 = vector.shape_cast %1953 : vector<1x128xf32> to vector<1x1x128xf32>
    %cst_535 = arith.constant dense<0xFF800000> : vector<1xf32>
    %1955 = vector.multi_reduction <maximumf>, %1954, %cst_535 [1, 2] : vector<1x1x128xf32> to vector<1xf32>
    %1956 = vector.shape_cast %1955 : vector<1xf32> to vector<1x1x1xf32>
    %1957 = vector.extract %1956[0, 0, 0] : f32 from vector<1x1x1xf32>
    %1958 = vector.extract_strided_slice %1858 {offsets = [6, 0], sizes = [1, 128], strides = [1, 1]} : vector<8x128xf32> to vector<1x128xf32>
    %1959 = vector.broadcast %1957 : f32 to vector<1x128xf32>
    %1960 = arith.mulf %1959, %1958 : vector<1x128xf32>
    %cst_536 = arith.constant 1.000000e+00 : f32
    %1961 = vector.broadcast %cst_536 : f32 to vector<1x128xf32>
    %1962 = arith.subf %1961, %1960 : vector<1x128xf32>
    %1963 = arith.mulf %1948, %1962 : vector<1x128xf32>
    %c7_i32_537 = arith.constant 7 : i32
    %1964 = arith.addi %1856, %c7_i32_537 : i32
    %1965 = vector.broadcast %1964 : i32 to vector<1x128xi32>
    %1966 = arith.cmpi eq, %117, %1965 : vector<1x128xi32>
    %cst_538 = arith.constant 0.000000e+00 : f32
    %1967 = vector.broadcast %cst_538 : f32 to vector<1x128xf32>
    %1968 = arith.select %1966, %1963, %1967 : vector<1x128xi1>, vector<1x128xf32>
    %1969 = vector.shape_cast %1968 : vector<1x128xf32> to vector<1x1x128xf32>
    %cst_539 = arith.constant dense<0xFF800000> : vector<1xf32>
    %1970 = vector.multi_reduction <maximumf>, %1969, %cst_539 [1, 2] : vector<1x1x128xf32> to vector<1xf32>
    %1971 = vector.shape_cast %1970 : vector<1xf32> to vector<1x1x1xf32>
    %1972 = vector.extract %1971[0, 0, 0] : f32 from vector<1x1x1xf32>
    %1973 = vector.extract_strided_slice %1858 {offsets = [7, 0], sizes = [1, 128], strides = [1, 1]} : vector<8x128xf32> to vector<1x128xf32>
    %1974 = vector.broadcast %1972 : f32 to vector<1x128xf32>
    %1975 = arith.mulf %1974, %1973 : vector<1x128xf32>
    %cst_540 = arith.constant 1.000000e+00 : f32
    %1976 = vector.broadcast %cst_540 : f32 to vector<1x128xf32>
    %1977 = arith.subf %1976, %1975 : vector<1x128xf32>
    %1978 = arith.mulf %1963, %1977 : vector<1x128xf32>
    %c15_i32 = arith.constant 15 : i32
    %c8_i32_541 = arith.constant 8 : i32
    %1979 = arith.muli %c15_i32, %c8_i32_541 : i32
    %1980 = tpu.assume_multiple %1979, 8 : i32
    %1981 = arith.index_cast %1980 : i32 to index
    %c0_542 = arith.constant 0 : index
    %1982 = vector.load %arg3[%1981, %c0_542] : memref<128x128xf32, #tpu.memory_space<vmem>>, vector<8x128xf32>
    %c0_i32_543 = arith.constant 0 : i32
    %1983 = arith.addi %1980, %c0_i32_543 : i32
    %1984 = vector.broadcast %1983 : i32 to vector<1x128xi32>
    %1985 = arith.cmpi eq, %117, %1984 : vector<1x128xi32>
    %cst_544 = arith.constant 0.000000e+00 : f32
    %1986 = vector.broadcast %cst_544 : f32 to vector<1x128xf32>
    %1987 = arith.select %1985, %1978, %1986 : vector<1x128xi1>, vector<1x128xf32>
    %1988 = vector.shape_cast %1987 : vector<1x128xf32> to vector<1x1x128xf32>
    %cst_545 = arith.constant dense<0xFF800000> : vector<1xf32>
    %1989 = vector.multi_reduction <maximumf>, %1988, %cst_545 [1, 2] : vector<1x1x128xf32> to vector<1xf32>
    %1990 = vector.shape_cast %1989 : vector<1xf32> to vector<1x1x1xf32>
    %1991 = vector.extract %1990[0, 0, 0] : f32 from vector<1x1x1xf32>
    %1992 = vector.extract_strided_slice %1982 {offsets = [0, 0], sizes = [1, 128], strides = [1, 1]} : vector<8x128xf32> to vector<1x128xf32>
    %1993 = vector.broadcast %1991 : f32 to vector<1x128xf32>
    %1994 = arith.mulf %1993, %1992 : vector<1x128xf32>
    %cst_546 = arith.constant 1.000000e+00 : f32
    %1995 = vector.broadcast %cst_546 : f32 to vector<1x128xf32>
    %1996 = arith.subf %1995, %1994 : vector<1x128xf32>
    %1997 = arith.mulf %1978, %1996 : vector<1x128xf32>
    %c1_i32_547 = arith.constant 1 : i32
    %1998 = arith.addi %1980, %c1_i32_547 : i32
    %1999 = vector.broadcast %1998 : i32 to vector<1x128xi32>
    %2000 = arith.cmpi eq, %117, %1999 : vector<1x128xi32>
    %cst_548 = arith.constant 0.000000e+00 : f32
    %2001 = vector.broadcast %cst_548 : f32 to vector<1x128xf32>
    %2002 = arith.select %2000, %1997, %2001 : vector<1x128xi1>, vector<1x128xf32>
    %2003 = vector.shape_cast %2002 : vector<1x128xf32> to vector<1x1x128xf32>
    %cst_549 = arith.constant dense<0xFF800000> : vector<1xf32>
    %2004 = vector.multi_reduction <maximumf>, %2003, %cst_549 [1, 2] : vector<1x1x128xf32> to vector<1xf32>
    %2005 = vector.shape_cast %2004 : vector<1xf32> to vector<1x1x1xf32>
    %2006 = vector.extract %2005[0, 0, 0] : f32 from vector<1x1x1xf32>
    %2007 = vector.extract_strided_slice %1982 {offsets = [1, 0], sizes = [1, 128], strides = [1, 1]} : vector<8x128xf32> to vector<1x128xf32>
    %2008 = vector.broadcast %2006 : f32 to vector<1x128xf32>
    %2009 = arith.mulf %2008, %2007 : vector<1x128xf32>
    %cst_550 = arith.constant 1.000000e+00 : f32
    %2010 = vector.broadcast %cst_550 : f32 to vector<1x128xf32>
    %2011 = arith.subf %2010, %2009 : vector<1x128xf32>
    %2012 = arith.mulf %1997, %2011 : vector<1x128xf32>
    %c2_i32_551 = arith.constant 2 : i32
    %2013 = arith.addi %1980, %c2_i32_551 : i32
    %2014 = vector.broadcast %2013 : i32 to vector<1x128xi32>
    %2015 = arith.cmpi eq, %117, %2014 : vector<1x128xi32>
    %cst_552 = arith.constant 0.000000e+00 : f32
    %2016 = vector.broadcast %cst_552 : f32 to vector<1x128xf32>
    %2017 = arith.select %2015, %2012, %2016 : vector<1x128xi1>, vector<1x128xf32>
    %2018 = vector.shape_cast %2017 : vector<1x128xf32> to vector<1x1x128xf32>
    %cst_553 = arith.constant dense<0xFF800000> : vector<1xf32>
    %2019 = vector.multi_reduction <maximumf>, %2018, %cst_553 [1, 2] : vector<1x1x128xf32> to vector<1xf32>
    %2020 = vector.shape_cast %2019 : vector<1xf32> to vector<1x1x1xf32>
    %2021 = vector.extract %2020[0, 0, 0] : f32 from vector<1x1x1xf32>
    %2022 = vector.extract_strided_slice %1982 {offsets = [2, 0], sizes = [1, 128], strides = [1, 1]} : vector<8x128xf32> to vector<1x128xf32>
    %2023 = vector.broadcast %2021 : f32 to vector<1x128xf32>
    %2024 = arith.mulf %2023, %2022 : vector<1x128xf32>
    %cst_554 = arith.constant 1.000000e+00 : f32
    %2025 = vector.broadcast %cst_554 : f32 to vector<1x128xf32>
    %2026 = arith.subf %2025, %2024 : vector<1x128xf32>
    %2027 = arith.mulf %2012, %2026 : vector<1x128xf32>
    %c3_i32_555 = arith.constant 3 : i32
    %2028 = arith.addi %1980, %c3_i32_555 : i32
    %2029 = vector.broadcast %2028 : i32 to vector<1x128xi32>
    %2030 = arith.cmpi eq, %117, %2029 : vector<1x128xi32>
    %cst_556 = arith.constant 0.000000e+00 : f32
    %2031 = vector.broadcast %cst_556 : f32 to vector<1x128xf32>
    %2032 = arith.select %2030, %2027, %2031 : vector<1x128xi1>, vector<1x128xf32>
    %2033 = vector.shape_cast %2032 : vector<1x128xf32> to vector<1x1x128xf32>
    %cst_557 = arith.constant dense<0xFF800000> : vector<1xf32>
    %2034 = vector.multi_reduction <maximumf>, %2033, %cst_557 [1, 2] : vector<1x1x128xf32> to vector<1xf32>
    %2035 = vector.shape_cast %2034 : vector<1xf32> to vector<1x1x1xf32>
    %2036 = vector.extract %2035[0, 0, 0] : f32 from vector<1x1x1xf32>
    %2037 = vector.extract_strided_slice %1982 {offsets = [3, 0], sizes = [1, 128], strides = [1, 1]} : vector<8x128xf32> to vector<1x128xf32>
    %2038 = vector.broadcast %2036 : f32 to vector<1x128xf32>
    %2039 = arith.mulf %2038, %2037 : vector<1x128xf32>
    %cst_558 = arith.constant 1.000000e+00 : f32
    %2040 = vector.broadcast %cst_558 : f32 to vector<1x128xf32>
    %2041 = arith.subf %2040, %2039 : vector<1x128xf32>
    %2042 = arith.mulf %2027, %2041 : vector<1x128xf32>
    %c4_i32_559 = arith.constant 4 : i32
    %2043 = arith.addi %1980, %c4_i32_559 : i32
    %2044 = vector.broadcast %2043 : i32 to vector<1x128xi32>
    %2045 = arith.cmpi eq, %117, %2044 : vector<1x128xi32>
    %cst_560 = arith.constant 0.000000e+00 : f32
    %2046 = vector.broadcast %cst_560 : f32 to vector<1x128xf32>
    %2047 = arith.select %2045, %2042, %2046 : vector<1x128xi1>, vector<1x128xf32>
    %2048 = vector.shape_cast %2047 : vector<1x128xf32> to vector<1x1x128xf32>
    %cst_561 = arith.constant dense<0xFF800000> : vector<1xf32>
    %2049 = vector.multi_reduction <maximumf>, %2048, %cst_561 [1, 2] : vector<1x1x128xf32> to vector<1xf32>
    %2050 = vector.shape_cast %2049 : vector<1xf32> to vector<1x1x1xf32>
    %2051 = vector.extract %2050[0, 0, 0] : f32 from vector<1x1x1xf32>
    %2052 = vector.extract_strided_slice %1982 {offsets = [4, 0], sizes = [1, 128], strides = [1, 1]} : vector<8x128xf32> to vector<1x128xf32>
    %2053 = vector.broadcast %2051 : f32 to vector<1x128xf32>
    %2054 = arith.mulf %2053, %2052 : vector<1x128xf32>
    %cst_562 = arith.constant 1.000000e+00 : f32
    %2055 = vector.broadcast %cst_562 : f32 to vector<1x128xf32>
    %2056 = arith.subf %2055, %2054 : vector<1x128xf32>
    %2057 = arith.mulf %2042, %2056 : vector<1x128xf32>
    %c5_i32_563 = arith.constant 5 : i32
    %2058 = arith.addi %1980, %c5_i32_563 : i32
    %2059 = vector.broadcast %2058 : i32 to vector<1x128xi32>
    %2060 = arith.cmpi eq, %117, %2059 : vector<1x128xi32>
    %cst_564 = arith.constant 0.000000e+00 : f32
    %2061 = vector.broadcast %cst_564 : f32 to vector<1x128xf32>
    %2062 = arith.select %2060, %2057, %2061 : vector<1x128xi1>, vector<1x128xf32>
    %2063 = vector.shape_cast %2062 : vector<1x128xf32> to vector<1x1x128xf32>
    %cst_565 = arith.constant dense<0xFF800000> : vector<1xf32>
    %2064 = vector.multi_reduction <maximumf>, %2063, %cst_565 [1, 2] : vector<1x1x128xf32> to vector<1xf32>
    %2065 = vector.shape_cast %2064 : vector<1xf32> to vector<1x1x1xf32>
    %2066 = vector.extract %2065[0, 0, 0] : f32 from vector<1x1x1xf32>
    %2067 = vector.extract_strided_slice %1982 {offsets = [5, 0], sizes = [1, 128], strides = [1, 1]} : vector<8x128xf32> to vector<1x128xf32>
    %2068 = vector.broadcast %2066 : f32 to vector<1x128xf32>
    %2069 = arith.mulf %2068, %2067 : vector<1x128xf32>
    %cst_566 = arith.constant 1.000000e+00 : f32
    %2070 = vector.broadcast %cst_566 : f32 to vector<1x128xf32>
    %2071 = arith.subf %2070, %2069 : vector<1x128xf32>
    %2072 = arith.mulf %2057, %2071 : vector<1x128xf32>
    %c6_i32_567 = arith.constant 6 : i32
    %2073 = arith.addi %1980, %c6_i32_567 : i32
    %2074 = vector.broadcast %2073 : i32 to vector<1x128xi32>
    %2075 = arith.cmpi eq, %117, %2074 : vector<1x128xi32>
    %cst_568 = arith.constant 0.000000e+00 : f32
    %2076 = vector.broadcast %cst_568 : f32 to vector<1x128xf32>
    %2077 = arith.select %2075, %2072, %2076 : vector<1x128xi1>, vector<1x128xf32>
    %2078 = vector.shape_cast %2077 : vector<1x128xf32> to vector<1x1x128xf32>
    %cst_569 = arith.constant dense<0xFF800000> : vector<1xf32>
    %2079 = vector.multi_reduction <maximumf>, %2078, %cst_569 [1, 2] : vector<1x1x128xf32> to vector<1xf32>
    %2080 = vector.shape_cast %2079 : vector<1xf32> to vector<1x1x1xf32>
    %2081 = vector.extract %2080[0, 0, 0] : f32 from vector<1x1x1xf32>
    %2082 = vector.extract_strided_slice %1982 {offsets = [6, 0], sizes = [1, 128], strides = [1, 1]} : vector<8x128xf32> to vector<1x128xf32>
    %2083 = vector.broadcast %2081 : f32 to vector<1x128xf32>
    %2084 = arith.mulf %2083, %2082 : vector<1x128xf32>
    %cst_570 = arith.constant 1.000000e+00 : f32
    %2085 = vector.broadcast %cst_570 : f32 to vector<1x128xf32>
    %2086 = arith.subf %2085, %2084 : vector<1x128xf32>
    %2087 = arith.mulf %2072, %2086 : vector<1x128xf32>
    %c7_i32_571 = arith.constant 7 : i32
    %2088 = arith.addi %1980, %c7_i32_571 : i32
    %2089 = vector.broadcast %2088 : i32 to vector<1x128xi32>
    %2090 = arith.cmpi eq, %117, %2089 : vector<1x128xi32>
    %cst_572 = arith.constant 0.000000e+00 : f32
    %2091 = vector.broadcast %cst_572 : f32 to vector<1x128xf32>
    %2092 = arith.select %2090, %2087, %2091 : vector<1x128xi1>, vector<1x128xf32>
    %2093 = vector.shape_cast %2092 : vector<1x128xf32> to vector<1x1x128xf32>
    %cst_573 = arith.constant dense<0xFF800000> : vector<1xf32>
    %2094 = vector.multi_reduction <maximumf>, %2093, %cst_573 [1, 2] : vector<1x1x128xf32> to vector<1xf32>
    %2095 = vector.shape_cast %2094 : vector<1xf32> to vector<1x1x1xf32>
    %2096 = vector.extract %2095[0, 0, 0] : f32 from vector<1x1x1xf32>
    %2097 = vector.extract_strided_slice %1982 {offsets = [7, 0], sizes = [1, 128], strides = [1, 1]} : vector<8x128xf32> to vector<1x128xf32>
    %2098 = vector.broadcast %2096 : f32 to vector<1x128xf32>
    %2099 = arith.mulf %2098, %2097 : vector<1x128xf32>
    %cst_574 = arith.constant 1.000000e+00 : f32
    %2100 = vector.broadcast %cst_574 : f32 to vector<1x128xf32>
    %2101 = arith.subf %2100, %2099 : vector<1x128xf32>
    %2102 = arith.mulf %2087, %2101 : vector<1x128xf32>
    %c16_i32 = arith.constant 16 : i32
    %cst_575 = arith.constant 5.000000e-01 : f32
    %2103 = vector.broadcast %cst_575 : f32 to vector<1x128xf32>
    %2104 = arith.cmpf ogt, %2102, %2103 : vector<1x128xf32>
    %2105 = arith.extui %2104 : vector<1x128xi1> to vector<1x128xi32>
    %c0_576 = arith.constant 0 : index
    %c0_577 = arith.constant 0 : index
    %c0_578 = arith.constant 0 : index
    %2106 = vector.load %arg2[%c0_576, %c0_577, %c0_578] : memref<1x1x128xi32, #tpu.memory_space<vmem>>, vector<1x1x128xi32>
    %2107 = vector.shape_cast %2106 : vector<1x1x128xi32> to vector<1x128xi32>
    %2108 = vector.shape_cast %2105 : vector<1x128xi32> to vector<1x1x128xi32>
    tpu.vector_store %arg2[%c0_576, %c0_577, %c0_578], %2108 {strides = array<i32>} : memref<1x1x128xi32, #tpu.memory_space<vmem>>, vector<1x1x128xi32>,
    return
  }
  func.func @transform_0(%arg0: i32) -> (i32, i32, i32) {
    %c0_i32 = arith.constant 0 : i32
    %c0_i32_0 = arith.constant 0 : i32
    %c0_i32_1 = arith.constant 0 : i32
    return %arg0, %c0_i32, %c0_i32_0 : i32, i32, i32
  }
  func.func @transform_1(%arg0: i32) -> (i32, i32, i32) {
    %c0_i32 = arith.constant 0 : i32
    %c0_i32_0 = arith.constant 0 : i32
    %c0_i32_1 = arith.constant 0 : i32
    return %arg0, %c0_i32, %c0_i32_0 : i32, i32, i32
  }
}

</mosaic_0001>

<llo_original>
// kernel: a_call__.1
$region0: #{a_call__.1}
  #allocation0 [shape = 'u32[]', space=smem, size = 0x4, offset = 0x4, fixed_abs, tag = 'smem constant byte address 0x4 - core index']
  #allocation1 [shape = 'u32[144,128]{1,0:T(1,128)}', space=vmem, size = 0x12000, scoped, tag = 'internal scratch']
  #allocation2 [shape = 'f32[128,128]{1,0:T(8,128)}', space=vmem, size = 0x10000, scoped, tag = 'scratch operand']
  %s0 = inlined_call_operand.vmem [shape: f32[2,6,128], index: 0, kind: input, shape index: {}]
  %s1 = inlined_call_operand.vmem [shape: s32[2,1,128], index: 1, kind: output, shape index: {}]
  %s2 = sld [smem:[#allocation0]]
  $region37: #{a_call__.1} parent=0
    _
  %s4 = ssub.s32 1, %s2
  %s5 = scalar_select 0, %s4, %s2
  loop: start=0, step=1, limit=4
  $region2: #{a_call__.1} parent=0 // loop_pre_header
    _
  $region3: #{a_call__.1} parent=0 // loop_header
    %s7 = sphi 0, %s11
    %p8 = scmp.ge.s32.totalorder %s7, 4
    %s17 = sphi 0, %s19
    %s20 = sphi 0, %s17
    %s21 = sphi 0, %s20
    %s37 = sphi 0, %s21
    %s43 = sphi 0, %s45
    %s46 = sphi 0, %s43
    %s47 = sphi 0, %s46
    %s63 = sphi 0, %s47
  $region4: #{a_call__.1} parent=0 // loop_header_branch
    %10 = sbr.rel (%p8) target = $region8
  $region5: #{a_call__.1} parent=0 // loop_body
    %s12 = ssub.s32 %s7, 1
    %s13 = ssub.s32 %s7, 2
    %s14 = sadd.s32 %s7, 1
    %s15 = ssub.s32 %s7, %s14
    %p16 = scmp.eq.s32.totalorder %s15, 0
    %s18 = sadd.s32 %s17, 1
    %s19 = scalar_select %p16, %s17, %s18
    %p22 = pneg %p16
    %p23 = scmp.eq.s32.totalorder %s7, 1
    %p24 = por %p22, %p23
    %p25 = scmp.ne.s32.totalorder %s17, %s20
    %p26 = scmp.eq.s32.totalorder %s7, 0
    %p27 = por %p25, %p26
    %p28 = scmp.ne.s32.totalorder %s17, %s20
    %p29 = scmp.eq.s32.totalorder %s12, 1
    %p30 = por %p28, %p29
    %p31 = scmp.ne.s32.totalorder %s20, %s21
    %p32 = scmp.eq.s32.totalorder %s12, 0
    %p33 = por %p31, %p32
    %p34 = scmp.ne.s32.totalorder %s20, %s21
    %p35 = scmp.eq.s32.totalorder %s13, 1
    %p36 = por %p34, %p35
    %p38 = scmp.ne.s32.totalorder %s21, %s37
    %p39 = scmp.eq.s32.totalorder %s13, 0
    %p40 = por %p38, %p39
    %s41 = ssub.s32 %s7, %s14
    %p42 = scmp.eq.s32.totalorder %s41, 0
    %s44 = sadd.s32 %s43, 1
    %s45 = scalar_select %p42, %s43, %s44
    %p48 = pneg %p42
    %p49 = scmp.eq.s32.totalorder %s7, 1
    %p50 = por %p48, %p49
    %p51 = scmp.ne.s32.totalorder %s43, %s46
    %p52 = scmp.eq.s32.totalorder %s7, 0
    %p53 = por %p51, %p52
    %p54 = scmp.ne.s32.totalorder %s43, %s46
    %p55 = scmp.eq.s32.totalorder %s12, 1
    %p56 = por %p54, %p55
    %p57 = scmp.ne.s32.totalorder %s46, %s47
    %p58 = scmp.eq.s32.totalorder %s12, 0
    %p59 = por %p57, %p58
    %p60 = scmp.ne.s32.totalorder %s46, %s47
    %p61 = scmp.eq.s32.totalorder %s13, 1
    %p62 = por %p60, %p61
    %p64 = scmp.ne.s32.totalorder %s47, %s63
    %p65 = scmp.eq.s32.totalorder %s13, 0
    %p66 = por %p64, %p65
    %p67 = scmp.le.s32.totalorder 1, %s7
    %p68 = scmp.lt.s32.totalorder %s7, 3
    %p69 = pnand %p67, %p68
    %p70 = pneg %p69
    // Predicated region
    $region9: #{a_call__.1} parent=5 // pred_check
      _
    $region10: #{a_call__.1} parent=5 // pred_check_branch
      %72 = sbr.rel (%p69) target = $region12
    $region11: #{a_call__.1} parent=5 // pred_region
      %s73 = ssub.s32 %s7, 1
    $region12: #{a_call__.1} parent=5 // pred_fallthru
      _
    %p74 = scmp.lt.s32.totalorder %s7, 2
    // Predicated region
    $region13: #{a_call__.1} parent=5 // pred_check
      %p75 = pneg %p74
    $region14: #{a_call__.1} parent=5 // pred_check_branch
      %77 = sbr.rel (%p75) target = $region16
    $region15: #{a_call__.1} parent=5 // pred_region
      // Predicated region
      $region17: #{a_call__.1} parent=15 // pred_check
        %p78 = pneg %p27
      $region18: #{a_call__.1} parent=15 // pred_check_branch
        %80 = sbr.rel (%p78) target = $region20
      $region19: #{a_call__.1} parent=15 // pred_region
        %p81 = scmp.lt.s32.totalorder %s7, 1
        %s82 = scalar_select %p81, %s7, 1
        %s83 = smul.addr %s82, 8
        %s84 = scalar_lea.vmem %s0, %s83
      $region20: #{a_call__.1} parent=15 // pred_fallthru
        _
    $region16: #{a_call__.1} parent=5 // pred_fallthru
      _
    %p85 = scmp.le.s32.totalorder 1, %s7
    %p86 = scmp.lt.s32.totalorder %s7, 3
    %p87 = pnand %p85, %p86
    %p88 = pneg %p87
    // Predicated region
    $region21: #{a_call__.1} parent=5 // pred_check
      _
    $region22: #{a_call__.1} parent=5 // pred_check_branch
      %90 = sbr.rel (%p87) target = $region24
    $region23: #{a_call__.1} parent=5 // pred_region
      %s91 = ssub.s32 %s7, 1
      %p92 = scmp.lt.s32.totalorder %s12, 1
      %s93 = scalar_select %p92, %s12, 1
      %s94 = smul.addr %s93, 8
      %s95 = scalar_lea.vmem %s0, %s94
      %p96 = pneg %p33
      %p97 = pneg %p30
      %p98 = pneg %p59
      %p99 = pneg %p56
      %p100 = scmp.lt.s32.totalorder %s12, 1
      %s101 = scalar_select %p100, %s12, 1
      %s102 = scalar_lea.vmem %s1, %s101
      %p103 = scmp.lt.s32.totalorder %s12, 1
      %s104 = scalar_select %p103, %s12, 1
      %s105 = smul.addr %s104, 8
      %s106 = scalar_lea.vmem %s0, %s105
      %p107 = scmp.lt.s32.totalorder %s12, 1
      %s108 = scalar_select %p107, %s12, 1
      %s109 = scalar_lea.vmem %s1, %s108
      %v110 = vld [vmem:[%s106] sm:$0x3f]
      %v111 = vlaneseq
      %v112 = vshrl.u32 %v111, 7
      %v113 = vadd.s32 %v112, 8
      %v114 = vadd.s32 %v112, 16
      %v115 = vadd.s32 %v112, 24
      %v116 = vadd.s32 %v112, 32
      %v117 = vadd.s32 %v112, 40
      %v118 = vadd.s32 %v112, 48
      %v119 = vadd.s32 %v112, 56
      %v120 = vadd.s32 %v112, 64
      %v121 = vadd.s32 %v112, 72
      %v122 = vadd.s32 %v112, 80
      %v123 = vadd.s32 %v112, 88
      %v124 = vadd.s32 %v112, 96
      %v125 = vadd.s32 %v112, 104
      %v126 = vadd.s32 %v112, 112
      %v127 = vadd.s32 %v112, 120
      %v128 = vlaneseq
      %v129 = vand.u32 %v128, 127
      %vm130 = vcmp.eq.s32.totalorder %v112, %v129
      %vm131 = vcmp.eq.s32.totalorder %v113, %v129
      %vm132 = vcmp.eq.s32.totalorder %v114, %v129
      %vm133 = vcmp.eq.s32.totalorder %v115, %v129
      %vm134 = vcmp.eq.s32.totalorder %v116, %v129
      %vm135 = vcmp.eq.s32.totalorder %v117, %v129
      %vm136 = vcmp.eq.s32.totalorder %v118, %v129
      %vm137 = vcmp.eq.s32.totalorder %v119, %v129
      %vm138 = vcmp.eq.s32.totalorder %v120, %v129
      %vm139 = vcmp.eq.s32.totalorder %v121, %v129
      %vm140 = vcmp.eq.s32.totalorder %v122, %v129
      %vm141 = vcmp.eq.s32.totalorder %v123, %v129
      %vm142 = vcmp.eq.s32.totalorder %v124, %v129
      %vm143 = vcmp.eq.s32.totalorder %v125, %v129
      %vm144 = vcmp.eq.s32.totalorder %v126, %v129
      %vm145 = vcmp.eq.s32.totalorder %v127, %v129
      %v146 = vlaneseq
      %v147 = vshrl.u32 %v146, 7
      %v148 = vsub.s32 0, %v147
      %v149 = vrot.slane %v110, %v148
      %v150 = vsel %vm130, %v149, 0.0
      %v151 = vsel %vm131, %v149, 0.0
      %v152 = vsel %vm132, %v149, 0.0
      %v153 = vsel %vm133, %v149, 0.0
      %v154 = vsel %vm134, %v149, 0.0
      %v155 = vsel %vm135, %v149, 0.0
      %v156 = vsel %vm136, %v149, 0.0
      %v157 = vsel %vm137, %v149, 0.0
      %v158 = vsel %vm138, %v149, 0.0
      %v159 = vsel %vm139, %v149, 0.0
      %v160 = vsel %vm140, %v149, 0.0
      %v161 = vsel %vm141, %v149, 0.0
      %v162 = vsel %vm142, %v149, 0.0
      %v163 = vsel %vm143, %v149, 0.0
      %v164 = vsel %vm144, %v149, 0.0
      %v165 = vsel %vm145, %v149, 0.0
      %166 = vadd.xlane.f32.xlu0 %v150
      %v167 = vpop.xlane.xlu0 %166
      %168 = vadd.xlane.f32.xlu0 %v151
      %v169 = vpop.xlane.xlu0 %168
      %170 = vadd.xlane.f32.xlu0 %v152
      %v171 = vpop.xlane.xlu0 %170
      %172 = vadd.xlane.f32.xlu0 %v153
      %v173 = vpop.xlane.xlu0 %172
      %174 = vadd.xlane.f32.xlu0 %v154
      %v175 = vpop.xlane.xlu0 %174
      %176 = vadd.xlane.f32.xlu0 %v155
      %v177 = vpop.xlane.xlu0 %176
      %178 = vadd.xlane.f32.xlu0 %v156
      %v179 = vpop.xlane.xlu0 %178
      %180 = vadd.xlane.f32.xlu0 %v157
      %v181 = vpop.xlane.xlu0 %180
      %182 = vadd.xlane.f32.xlu0 %v158
      %v183 = vpop.xlane.xlu0 %182
      %184 = vadd.xlane.f32.xlu0 %v159
      %v185 = vpop.xlane.xlu0 %184
      %186 = vadd.xlane.f32.xlu0 %v160
      %v187 = vpop.xlane.xlu0 %186
      %188 = vadd.xlane.f32.xlu0 %v161
      %v189 = vpop.xlane.xlu0 %188
      %190 = vadd.xlane.f32.xlu0 %v162
      %v191 = vpop.xlane.xlu0 %190
      %192 = vadd.xlane.f32.xlu0 %v163
      %v193 = vpop.xlane.xlu0 %192
      %194 = vadd.xlane.f32.xlu0 %v164
      %v195 = vpop.xlane.xlu0 %194
      %196 = vadd.xlane.f32.xlu0 %v165
      %v197 = vpop.xlane.xlu0 %196
      %v198 = vlaneseq
      %v199 = vshrl.u32 %v198, 7
      %v200 = vsub.s32 3, %v199
      %v201 = vrot.slane %v110, %v200
      %v202 = vsel %vm130, %v201, 0.0
      %v203 = vsel %vm131, %v201, 0.0
      %v204 = vsel %vm132, %v201, 0.0
      %v205 = vsel %vm133, %v201, 0.0
      %v206 = vsel %vm134, %v201, 0.0
      %v207 = vsel %vm135, %v201, 0.0
      %v208 = vsel %vm136, %v201, 0.0
      %v209 = vsel %vm137, %v201, 0.0
      %v210 = vsel %vm138, %v201, 0.0
      %v211 = vsel %vm139, %v201, 0.0
      %v212 = vsel %vm140, %v201, 0.0
      %v213 = vsel %vm141, %v201, 0.0
      %v214 = vsel %vm142, %v201, 0.0
      %v215 = vsel %vm143, %v201, 0.0
      %v216 = vsel %vm144, %v201, 0.0
      %v217 = vsel %vm145, %v201, 0.0
      %218 = vadd.xlane.f32.xlu0 %v202
      %v219 = vpop.xlane.xlu0 %218
      %220 = vadd.xlane.f32.xlu0 %v203
      %v221 = vpop.xlane.xlu0 %220
      %222 = vadd.xlane.f32.xlu0 %v204
      %v223 = vpop.xlane.xlu0 %222
      %224 = vadd.xlane.f32.xlu0 %v205
      %v225 = vpop.xlane.xlu0 %224
      %226 = vadd.xlane.f32.xlu0 %v206
      %v227 = vpop.xlane.xlu0 %226
      %228 = vadd.xlane.f32.xlu0 %v207
      %v229 = vpop.xlane.xlu0 %228
      %230 = vadd.xlane.f32.xlu0 %v208
      %v231 = vpop.xlane.xlu0 %230
      %232 = vadd.xlane.f32.xlu0 %v209
      %v233 = vpop.xlane.xlu0 %232
      %234 = vadd.xlane.f32.xlu0 %v210
      %v235 = vpop.xlane.xlu0 %234
      %236 = vadd.xlane.f32.xlu0 %v211
      %v237 = vpop.xlane.xlu0 %236
      %238 = vadd.xlane.f32.xlu0 %v212
      %v239 = vpop.xlane.xlu0 %238
      %240 = vadd.xlane.f32.xlu0 %v213
      %v241 = vpop.xlane.xlu0 %240
      %242 = vadd.xlane.f32.xlu0 %v214
      %v243 = vpop.xlane.xlu0 %242
      %244 = vadd.xlane.f32.xlu0 %v215
      %v245 = vpop.xlane.xlu0 %244
      %246 = vadd.xlane.f32.xlu0 %v216
      %v247 = vpop.xlane.xlu0 %246
      %248 = vadd.xlane.f32.xlu0 %v217
      %v249 = vpop.xlane.xlu0 %248
      %v250 = vmin.f32 %v219, %v201
      %v251 = vmin.f32 %v221, %v201
      %v252 = vmin.f32 %v223, %v201
      %v253 = vmin.f32 %v225, %v201
      %v254 = vmin.f32 %v227, %v201
      %v255 = vmin.f32 %v229, %v201
      %v256 = vmin.f32 %v231, %v201
      %v257 = vmin.f32 %v233, %v201
      %v258 = vmin.f32 %v235, %v201
      %v259 = vmin.f32 %v237, %v201
      %v260 = vmin.f32 %v239, %v201
      %v261 = vmin.f32 %v241, %v201
      %v262 = vmin.f32 %v243, %v201
      %v263 = vmin.f32 %v245, %v201
      %v264 = vmin.f32 %v247, %v201
      %v265 = vmin.f32 %v249, %v201
      %v266 = vmax.f32 %v167, %v149
      %v267 = vmax.f32 %v169, %v149
      %v268 = vmax.f32 %v171, %v149
      %v269 = vmax.f32 %v173, %v149
      %v270 = vmax.f32 %v175, %v149
      %v271 = vmax.f32 %v177, %v149
      %v272 = vmax.f32 %v179, %v149
      %v273 = vmax.f32 %v181, %v149
      %v274 = vmax.f32 %v183, %v149
      %v275 = vmax.f32 %v185, %v149
      %v276 = vmax.f32 %v187, %v149
      %v277 = vmax.f32 %v189, %v149
      %v278 = vmax.f32 %v191, %v149
      %v279 = vmax.f32 %v193, %v149
      %v280 = vmax.f32 %v195, %v149
      %v281 = vmax.f32 %v197, %v149
      %v282 = vsub.f32 %v250, %v266
      %v283 = vsub.f32 %v251, %v267
      %v284 = vsub.f32 %v252, %v268
      %v285 = vsub.f32 %v253, %v269
      %v286 = vsub.f32 %v254, %v270
      %v287 = vsub.f32 %v255, %v271
      %v288 = vsub.f32 %v256, %v272
      %v289 = vsub.f32 %v257, %v273
      %v290 = vsub.f32 %v258, %v274
      %v291 = vsub.f32 %v259, %v275
      %v292 = vsub.f32 %v260, %v276
      %v293 = vsub.f32 %v261, %v277
      %v294 = vsub.f32 %v262, %v278
      %v295 = vsub.f32 %v263, %v279
      %v296 = vsub.f32 %v264, %v280
      %v297 = vsub.f32 %v265, %v281
      %v298 = vmax.f32 %v282, 0.0
      %v299 = vmax.f32 %v283, 0.0
      %v300 = vmax.f32 %v284, 0.0
      %v301 = vmax.f32 %v285, 0.0
      %v302 = vmax.f32 %v286, 0.0
      %v303 = vmax.f32 %v287, 0.0
      %v304 = vmax.f32 %v288, 0.0
      %v305 = vmax.f32 %v289, 0.0
      %v306 = vmax.f32 %v290, 0.0
      %v307 = vmax.f32 %v291, 0.0
      %v308 = vmax.f32 %v292, 0.0
      %v309 = vmax.f32 %v293, 0.0
      %v310 = vmax.f32 %v294, 0.0
      %v311 = vmax.f32 %v295, 0.0
      %v312 = vmax.f32 %v296, 0.0
      %v313 = vmax.f32 %v297, 0.0
      %v314 = vsub.f32 %v219, %v167
      %v315 = vsub.f32 %v221, %v169
      %v316 = vsub.f32 %v223, %v171
      %v317 = vsub.f32 %v225, %v173
      %v318 = vsub.f32 %v227, %v175
      %v319 = vsub.f32 %v229, %v177
      %v320 = vsub.f32 %v231, %v179
      %v321 = vsub.f32 %v233, %v181
      %v322 = vsub.f32 %v235, %v183
      %v323 = vsub.f32 %v237, %v185
      %v324 = vsub.f32 %v239, %v187
      %v325 = vsub.f32 %v241, %v189
      %v326 = vsub.f32 %v243, %v191
      %v327 = vsub.f32 %v245, %v193
      %v328 = vsub.f32 %v247, %v195
      %v329 = vsub.f32 %v249, %v197
      %v330 = vmax.f32 %v314, 0.0
      %v331 = vmax.f32 %v315, 0.0
      %v332 = vmax.f32 %v316, 0.0
      %v333 = vmax.f32 %v317, 0.0
      %v334 = vmax.f32 %v318, 0.0
      %v335 = vmax.f32 %v319, 0.0
      %v336 = vmax.f32 %v320, 0.0
      %v337 = vmax.f32 %v321, 0.0
      %v338 = vmax.f32 %v322, 0.0
      %v339 = vmax.f32 %v323, 0.0
      %v340 = vmax.f32 %v324, 0.0
      %v341 = vmax.f32 %v325, 0.0
      %v342 = vmax.f32 %v326, 0.0
      %v343 = vmax.f32 %v327, 0.0
      %v344 = vmax.f32 %v328, 0.0
      %v345 = vmax.f32 %v329, 0.0
      %v347 = vrot.slane %v110, 5
      %v349 = vsub.f32 %v110, %v347
      %v350 = vmax.f32 %v349, 0.0
      %v351 = vlaneseq
      %v352 = vshrl.u32 %v351, 7
      %v353 = vsub.s32 1, %v352
      %v354 = vrot.slane %v110, %v353
      %v355 = vsel %vm130, %v354, 0.0
      %v356 = vsel %vm131, %v354, 0.0
      %v357 = vsel %vm132, %v354, 0.0
      %v358 = vsel %vm133, %v354, 0.0
      %v359 = vsel %vm134, %v354, 0.0
      %v360 = vsel %vm135, %v354, 0.0
      %v361 = vsel %vm136, %v354, 0.0
      %v362 = vsel %vm137, %v354, 0.0
      %v363 = vsel %vm138, %v354, 0.0
      %v364 = vsel %vm139, %v354, 0.0
      %v365 = vsel %vm140, %v354, 0.0
      %v366 = vsel %vm141, %v354, 0.0
      %v367 = vsel %vm142, %v354, 0.0
      %v368 = vsel %vm143, %v354, 0.0
      %v369 = vsel %vm144, %v354, 0.0
      %v370 = vsel %vm145, %v354, 0.0
      %371 = vadd.xlane.f32.xlu0 %v355
      %v372 = vpop.xlane.xlu0 %371
      %373 = vadd.xlane.f32.xlu0 %v356
      %v374 = vpop.xlane.xlu0 %373
      %375 = vadd.xlane.f32.xlu0 %v357
      %v376 = vpop.xlane.xlu0 %375
      %377 = vadd.xlane.f32.xlu0 %v358
      %v378 = vpop.xlane.xlu0 %377
      %379 = vadd.xlane.f32.xlu0 %v359
      %v380 = vpop.xlane.xlu0 %379
      %381 = vadd.xlane.f32.xlu0 %v360
      %v382 = vpop.xlane.xlu0 %381
      %383 = vadd.xlane.f32.xlu0 %v361
      %v384 = vpop.xlane.xlu0 %383
      %385 = vadd.xlane.f32.xlu0 %v362
      %v386 = vpop.xlane.xlu0 %385
      %387 = vadd.xlane.f32.xlu0 %v363
      %v388 = vpop.xlane.xlu0 %387
      %389 = vadd.xlane.f32.xlu0 %v364
      %v390 = vpop.xlane.xlu0 %389
      %391 = vadd.xlane.f32.xlu0 %v365
      %v392 = vpop.xlane.xlu0 %391
      %393 = vadd.xlane.f32.xlu0 %v366
      %v394 = vpop.xlane.xlu0 %393
      %395 = vadd.xlane.f32.xlu0 %v367
      %v396 = vpop.xlane.xlu0 %395
      %397 = vadd.xlane.f32.xlu0 %v368
      %v398 = vpop.xlane.xlu0 %397
      %399 = vadd.xlane.f32.xlu0 %v369
      %v400 = vpop.xlane.xlu0 %399
      %401 = vadd.xlane.f32.xlu0 %v370
      %v402 = vpop.xlane.xlu0 %401
      %v403 = vlaneseq
      %v404 = vshrl.u32 %v403, 7
      %v405 = vsub.s32 4, %v404
      %v406 = vrot.slane %v110, %v405
      %v407 = vsel %vm130, %v406, 0.0
      %v408 = vsel %vm131, %v406, 0.0
      %v409 = vsel %vm132, %v406, 0.0
      %v410 = vsel %vm133, %v406, 0.0
      %v411 = vsel %vm134, %v406, 0.0
      %v412 = vsel %vm135, %v406, 0.0
      %v413 = vsel %vm136, %v406, 0.0
      %v414 = vsel %vm137, %v406, 0.0
      %v415 = vsel %vm138, %v406, 0.0
      %v416 = vsel %vm139, %v406, 0.0
      %v417 = vsel %vm140, %v406, 0.0
      %v418 = vsel %vm141, %v406, 0.0
      %v419 = vsel %vm142, %v406, 0.0
      %v420 = vsel %vm143, %v406, 0.0
      %v421 = vsel %vm144, %v406, 0.0
      %v422 = vsel %vm145, %v406, 0.0
      %423 = vadd.xlane.f32.xlu0 %v407
      %v424 = vpop.xlane.xlu0 %423
      %425 = vadd.xlane.f32.xlu0 %v408
      %v426 = vpop.xlane.xlu0 %425
      %427 = vadd.xlane.f32.xlu0 %v409
      %v428 = vpop.xlane.xlu0 %427
      %429 = vadd.xlane.f32.xlu0 %v410
      %v430 = vpop.xlane.xlu0 %429
      %431 = vadd.xlane.f32.xlu0 %v411
      %v432 = vpop.xlane.xlu0 %431
      %433 = vadd.xlane.f32.xlu0 %v412
      %v434 = vpop.xlane.xlu0 %433
      %435 = vadd.xlane.f32.xlu0 %v413
      %v436 = vpop.xlane.xlu0 %435
      %437 = vadd.xlane.f32.xlu0 %v414
      %v438 = vpop.xlane.xlu0 %437
      %439 = vadd.xlane.f32.xlu0 %v415
      %v440 = vpop.xlane.xlu0 %439
      %441 = vadd.xlane.f32.xlu0 %v416
      %v442 = vpop.xlane.xlu0 %441
      %443 = vadd.xlane.f32.xlu0 %v417
      %v444 = vpop.xlane.xlu0 %443
      %445 = vadd.xlane.f32.xlu0 %v418
      %v446 = vpop.xlane.xlu0 %445
      %447 = vadd.xlane.f32.xlu0 %v419
      %v448 = vpop.xlane.xlu0 %447
      %449 = vadd.xlane.f32.xlu0 %v420
      %v450 = vpop.xlane.xlu0 %449
      %451 = vadd.xlane.f32.xlu0 %v421
      %v452 = vpop.xlane.xlu0 %451
      %453 = vadd.xlane.f32.xlu0 %v422
      %v454 = vpop.xlane.xlu0 %453
      %v455 = vmin.f32 %v424, %v406
      %v456 = vmin.f32 %v426, %v406
      %v457 = vmin.f32 %v428, %v406
      %v458 = vmin.f32 %v430, %v406
      %v459 = vmin.f32 %v432, %v406
      %v460 = vmin.f32 %v434, %v406
      %v461 = vmin.f32 %v436, %v406
      %v462 = vmin.f32 %v438, %v406
      %v463 = vmin.f32 %v440, %v406
      %v464 = vmin.f32 %v442, %v406
      %v465 = vmin.f32 %v444, %v406
      %v466 = vmin.f32 %v446, %v406
      %v467 = vmin.f32 %v448, %v406
      %v468 = vmin.f32 %v450, %v406
      %v469 = vmin.f32 %v452, %v406
      %v470 = vmin.f32 %v454, %v406
      %v471 = vmax.f32 %v372, %v354
      %v472 = vmax.f32 %v374, %v354
      %v473 = vmax.f32 %v376, %v354
      %v474 = vmax.f32 %v378, %v354
      %v475 = vmax.f32 %v380, %v354
      %v476 = vmax.f32 %v382, %v354
      %v477 = vmax.f32 %v384, %v354
      %v478 = vmax.f32 %v386, %v354
      %v479 = vmax.f32 %v388, %v354
      %v480 = vmax.f32 %v390, %v354
      %v481 = vmax.f32 %v392, %v354
      %v482 = vmax.f32 %v394, %v354
      %v483 = vmax.f32 %v396, %v354
      %v484 = vmax.f32 %v398, %v354
      %v485 = vmax.f32 %v400, %v354
      %v486 = vmax.f32 %v402, %v354
      %v487 = vsub.f32 %v455, %v471
      %v488 = vsub.f32 %v456, %v472
      %v489 = vsub.f32 %v457, %v473
      %v490 = vsub.f32 %v458, %v474
      %v491 = vsub.f32 %v459, %v475
      %v492 = vsub.f32 %v460, %v476
      %v493 = vsub.f32 %v461, %v477
      %v494 = vsub.f32 %v462, %v478
      %v495 = vsub.f32 %v463, %v479
      %v496 = vsub.f32 %v464, %v480
      %v497 = vsub.f32 %v465, %v481
      %v498 = vsub.f32 %v466, %v482
      %v499 = vsub.f32 %v467, %v483
      %v500 = vsub.f32 %v468, %v484
      %v501 = vsub.f32 %v469, %v485
      %v502 = vsub.f32 %v470, %v486
      %v503 = vmax.f32 %v487, 0.0
      %v504 = vmax.f32 %v488, 0.0
      %v505 = vmax.f32 %v489, 0.0
      %v506 = vmax.f32 %v490, 0.0
      %v507 = vmax.f32 %v491, 0.0
      %v508 = vmax.f32 %v492, 0.0
      %v509 = vmax.f32 %v493, 0.0
      %v510 = vmax.f32 %v494, 0.0
      %v511 = vmax.f32 %v495, 0.0
      %v512 = vmax.f32 %v496, 0.0
      %v513 = vmax.f32 %v497, 0.0
      %v514 = vmax.f32 %v498, 0.0
      %v515 = vmax.f32 %v499, 0.0
      %v516 = vmax.f32 %v500, 0.0
      %v517 = vmax.f32 %v501, 0.0
      %v518 = vmax.f32 %v502, 0.0
      %v519 = vmul.f32 %v298, %v503
      %v520 = vmul.f32 %v299, %v504
      %v521 = vmul.f32 %v300, %v505
      %v522 = vmul.f32 %v301, %v506
      %v523 = vmul.f32 %v302, %v507
      %v524 = vmul.f32 %v303, %v508
      %v525 = vmul.f32 %v304, %v509
      %v526 = vmul.f32 %v305, %v510
      %v527 = vmul.f32 %v306, %v511
      %v528 = vmul.f32 %v307, %v512
      %v529 = vmul.f32 %v308, %v513
      %v530 = vmul.f32 %v309, %v514
      %v531 = vmul.f32 %v310, %v515
      %v532 = vmul.f32 %v311, %v516
      %v533 = vmul.f32 %v312, %v517
      %v534 = vmul.f32 %v313, %v518
      %v535 = vsub.f32 %v424, %v372
      %v536 = vsub.f32 %v426, %v374
      %v537 = vsub.f32 %v428, %v376
      %v538 = vsub.f32 %v430, %v378
      %v539 = vsub.f32 %v432, %v380
      %v540 = vsub.f32 %v434, %v382
      %v541 = vsub.f32 %v436, %v384
      %v542 = vsub.f32 %v438, %v386
      %v543 = vsub.f32 %v440, %v388
      %v544 = vsub.f32 %v442, %v390
      %v545 = vsub.f32 %v444, %v392
      %v546 = vsub.f32 %v446, %v394
      %v547 = vsub.f32 %v448, %v396
      %v548 = vsub.f32 %v450, %v398
      %v549 = vsub.f32 %v452, %v400
      %v550 = vsub.f32 %v454, %v402
      %v551 = vmax.f32 %v535, 0.0
      %v552 = vmax.f32 %v536, 0.0
      %v553 = vmax.f32 %v537, 0.0
      %v554 = vmax.f32 %v538, 0.0
      %v555 = vmax.f32 %v539, 0.0
      %v556 = vmax.f32 %v540, 0.0
      %v557 = vmax.f32 %v541, 0.0
      %v558 = vmax.f32 %v542, 0.0
      %v559 = vmax.f32 %v543, 0.0
      %v560 = vmax.f32 %v544, 0.0
      %v561 = vmax.f32 %v545, 0.0
      %v562 = vmax.f32 %v546, 0.0
      %v563 = vmax.f32 %v547, 0.0
      %v564 = vmax.f32 %v548, 0.0
      %v565 = vmax.f32 %v549, 0.0
      %v566 = vmax.f32 %v550, 0.0
      %v567 = vmul.f32 %v330, %v551
      %v568 = vmul.f32 %v331, %v552
      %v569 = vmul.f32 %v332, %v553
      %v570 = vmul.f32 %v333, %v554
      %v571 = vmul.f32 %v334, %v555
      %v572 = vmul.f32 %v335, %v556
      %v573 = vmul.f32 %v336, %v557
      %v574 = vmul.f32 %v337, %v558
      %v575 = vmul.f32 %v338, %v559
      %v576 = vmul.f32 %v339, %v560
      %v577 = vmul.f32 %v340, %v561
      %v578 = vmul.f32 %v341, %v562
      %v579 = vmul.f32 %v342, %v563
      %v580 = vmul.f32 %v343, %v564
      %v581 = vmul.f32 %v344, %v565
      %v582 = vmul.f32 %v345, %v566
      %v584 = vrot.slane %v350, 1
      %v586 = vmul.f32 %v350, %v584
      %v587 = vlaneseq
      %v588 = vshrl.u32 %v587, 7
      %v589 = vsub.s32 2, %v588
      %v590 = vrot.slane %v110, %v589
      %v591 = vsel %vm130, %v590, 0.0
      %v592 = vsel %vm131, %v590, 0.0
      %v593 = vsel %vm132, %v590, 0.0
      %v594 = vsel %vm133, %v590, 0.0
      %v595 = vsel %vm134, %v590, 0.0
      %v596 = vsel %vm135, %v590, 0.0
      %v597 = vsel %vm136, %v590, 0.0
      %v598 = vsel %vm137, %v590, 0.0
      %v599 = vsel %vm138, %v590, 0.0
      %v600 = vsel %vm139, %v590, 0.0
      %v601 = vsel %vm140, %v590, 0.0
      %v602 = vsel %vm141, %v590, 0.0
      %v603 = vsel %vm142, %v590, 0.0
      %v604 = vsel %vm143, %v590, 0.0
      %v605 = vsel %vm144, %v590, 0.0
      %v606 = vsel %vm145, %v590, 0.0
      %607 = vadd.xlane.f32.xlu0 %v591
      %v608 = vpop.xlane.xlu0 %607
      %609 = vadd.xlane.f32.xlu0 %v592
      %v610 = vpop.xlane.xlu0 %609
      %611 = vadd.xlane.f32.xlu0 %v593
      %v612 = vpop.xlane.xlu0 %611
      %613 = vadd.xlane.f32.xlu0 %v594
      %v614 = vpop.xlane.xlu0 %613
      %615 = vadd.xlane.f32.xlu0 %v595
      %v616 = vpop.xlane.xlu0 %615
      %617 = vadd.xlane.f32.xlu0 %v596
      %v618 = vpop.xlane.xlu0 %617
      %619 = vadd.xlane.f32.xlu0 %v597
      %v620 = vpop.xlane.xlu0 %619
      %621 = vadd.xlane.f32.xlu0 %v598
      %v622 = vpop.xlane.xlu0 %621
      %623 = vadd.xlane.f32.xlu0 %v599
      %v624 = vpop.xlane.xlu0 %623
      %625 = vadd.xlane.f32.xlu0 %v600
      %v626 = vpop.xlane.xlu0 %625
      %627 = vadd.xlane.f32.xlu0 %v601
      %v628 = vpop.xlane.xlu0 %627
      %629 = vadd.xlane.f32.xlu0 %v602
      %v630 = vpop.xlane.xlu0 %629
      %631 = vadd.xlane.f32.xlu0 %v603
      %v632 = vpop.xlane.xlu0 %631
      %633 = vadd.xlane.f32.xlu0 %v604
      %v634 = vpop.xlane.xlu0 %633
      %635 = vadd.xlane.f32.xlu0 %v605
      %v636 = vpop.xlane.xlu0 %635
      %637 = vadd.xlane.f32.xlu0 %v606
      %v638 = vpop.xlane.xlu0 %637
      %v639 = vlaneseq
      %v640 = vshrl.u32 %v639, 7
      %v641 = vsub.s32 5, %v640
      %v642 = vrot.slane %v110, %v641
      %v643 = vsel %vm130, %v642, 0.0
      %v644 = vsel %vm131, %v642, 0.0
      %v645 = vsel %vm132, %v642, 0.0
      %v646 = vsel %vm133, %v642, 0.0
      %v647 = vsel %vm134, %v642, 0.0
      %v648 = vsel %vm135, %v642, 0.0
      %v649 = vsel %vm136, %v642, 0.0
      %v650 = vsel %vm137, %v642, 0.0
      %v651 = vsel %vm138, %v642, 0.0
      %v652 = vsel %vm139, %v642, 0.0
      %v653 = vsel %vm140, %v642, 0.0
      %v654 = vsel %vm141, %v642, 0.0
      %v655 = vsel %vm142, %v642, 0.0
      %v656 = vsel %vm143, %v642, 0.0
      %v657 = vsel %vm144, %v642, 0.0
      %v658 = vsel %vm145, %v642, 0.0
      %659 = vadd.xlane.f32.xlu0 %v643
      %v660 = vpop.xlane.xlu0 %659
      %661 = vadd.xlane.f32.xlu0 %v644
      %v662 = vpop.xlane.xlu0 %661
      %663 = vadd.xlane.f32.xlu0 %v645
      %v664 = vpop.xlane.xlu0 %663
      %665 = vadd.xlane.f32.xlu0 %v646
      %v666 = vpop.xlane.xlu0 %665
      %667 = vadd.xlane.f32.xlu0 %v647
      %v668 = vpop.xlane.xlu0 %667
      %669 = vadd.xlane.f32.xlu0 %v648
      %v670 = vpop.xlane.xlu0 %669
      %671 = vadd.xlane.f32.xlu0 %v649
      %v672 = vpop.xlane.xlu0 %671
      %673 = vadd.xlane.f32.xlu0 %v650
      %v674 = vpop.xlane.xlu0 %673
      %675 = vadd.xlane.f32.xlu0 %v651
      %v676 = vpop.xlane.xlu0 %675
      %677 = vadd.xlane.f32.xlu0 %v652
      %v678 = vpop.xlane.xlu0 %677
      %679 = vadd.xlane.f32.xlu0 %v653
      %v680 = vpop.xlane.xlu0 %679
      %681 = vadd.xlane.f32.xlu0 %v654
      %v682 = vpop.xlane.xlu0 %681
      %683 = vadd.xlane.f32.xlu0 %v655
      %v684 = vpop.xlane.xlu0 %683
      %685 = vadd.xlane.f32.xlu0 %v656
      %v686 = vpop.xlane.xlu0 %685
      %687 = vadd.xlane.f32.xlu0 %v657
      %v688 = vpop.xlane.xlu0 %687
      %689 = vadd.xlane.f32.xlu0 %v658
      %v690 = vpop.xlane.xlu0 %689
      %v691 = vmin.f32 %v660, %v642
      %v692 = vmin.f32 %v662, %v642
      %v693 = vmin.f32 %v664, %v642
      %v694 = vmin.f32 %v666, %v642
      %v695 = vmin.f32 %v668, %v642
      %v696 = vmin.f32 %v670, %v642
      %v697 = vmin.f32 %v672, %v642
      %v698 = vmin.f32 %v674, %v642
      %v699 = vmin.f32 %v676, %v642
      %v700 = vmin.f32 %v678, %v642
      %v701 = vmin.f32 %v680, %v642
      %v702 = vmin.f32 %v682, %v642
      %v703 = vmin.f32 %v684, %v642
      %v704 = vmin.f32 %v686, %v642
      %v705 = vmin.f32 %v688, %v642
      %v706 = vmin.f32 %v690, %v642
      %v707 = vmax.f32 %v608, %v590
      %v708 = vmax.f32 %v610, %v590
      %v709 = vmax.f32 %v612, %v590
      %v710 = vmax.f32 %v614, %v590
      %v711 = vmax.f32 %v616, %v590
      %v712 = vmax.f32 %v618, %v590
      %v713 = vmax.f32 %v620, %v590
      %v714 = vmax.f32 %v622, %v590
      %v715 = vmax.f32 %v624, %v590
      %v716 = vmax.f32 %v626, %v590
      %v717 = vmax.f32 %v628, %v590
      %v718 = vmax.f32 %v630, %v590
      %v719 = vmax.f32 %v632, %v590
      %v720 = vmax.f32 %v634, %v590
      %v721 = vmax.f32 %v636, %v590
      %v722 = vmax.f32 %v638, %v590
      %v723 = vsub.f32 %v691, %v707
      %v724 = vsub.f32 %v692, %v708
      %v725 = vsub.f32 %v693, %v709
      %v726 = vsub.f32 %v694, %v710
      %v727 = vsub.f32 %v695, %v711
      %v728 = vsub.f32 %v696, %v712
      %v729 = vsub.f32 %v697, %v713
      %v730 = vsub.f32 %v698, %v714
      %v731 = vsub.f32 %v699, %v715
      %v732 = vsub.f32 %v700, %v716
      %v733 = vsub.f32 %v701, %v717
      %v734 = vsub.f32 %v702, %v718
      %v735 = vsub.f32 %v703, %v719
      %v736 = vsub.f32 %v704, %v720
      %v737 = vsub.f32 %v705, %v721
      %v738 = vsub.f32 %v706, %v722
      %v739 = vmax.f32 %v723, 0.0
      %v740 = vmax.f32 %v724, 0.0
      %v741 = vmax.f32 %v725, 0.0
      %v742 = vmax.f32 %v726, 0.0
      %v743 = vmax.f32 %v727, 0.0
      %v744 = vmax.f32 %v728, 0.0
      %v745 = vmax.f32 %v729, 0.0
      %v746 = vmax.f32 %v730, 0.0
      %v747 = vmax.f32 %v731, 0.0
      %v748 = vmax.f32 %v732, 0.0
      %v749 = vmax.f32 %v733, 0.0
      %v750 = vmax.f32 %v734, 0.0
      %v751 = vmax.f32 %v735, 0.0
      %v752 = vmax.f32 %v736, 0.0
      %v753 = vmax.f32 %v737, 0.0
      %v754 = vmax.f32 %v738, 0.0
      %v755 = vmul.f32 %v519, %v739
      %v756 = vmul.f32 %v520, %v740
      %v757 = vmul.f32 %v521, %v741
      %v758 = vmul.f32 %v522, %v742
      %v759 = vmul.f32 %v523, %v743
      %v760 = vmul.f32 %v524, %v744
      %v761 = vmul.f32 %v525, %v745
      %v762 = vmul.f32 %v526, %v746
      %v763 = vmul.f32 %v527, %v747
      %v764 = vmul.f32 %v528, %v748
      %v765 = vmul.f32 %v529, %v749
      %v766 = vmul.f32 %v530, %v750
      %v767 = vmul.f32 %v531, %v751
      %v768 = vmul.f32 %v532, %v752
      %v769 = vmul.f32 %v533, %v753
      %v770 = vmul.f32 %v534, %v754
      %v771 = vsub.f32 %v660, %v608
      %v772 = vsub.f32 %v662, %v610
      %v773 = vsub.f32 %v664, %v612
      %v774 = vsub.f32 %v666, %v614
      %v775 = vsub.f32 %v668, %v616
      %v776 = vsub.f32 %v670, %v618
      %v777 = vsub.f32 %v672, %v620
      %v778 = vsub.f32 %v674, %v622
      %v779 = vsub.f32 %v676, %v624
      %v780 = vsub.f32 %v678, %v626
      %v781 = vsub.f32 %v680, %v628
      %v782 = vsub.f32 %v682, %v630
      %v783 = vsub.f32 %v684, %v632
      %v784 = vsub.f32 %v686, %v634
      %v785 = vsub.f32 %v688, %v636
      %v786 = vsub.f32 %v690, %v638
      %v787 = vmax.f32 %v771, 0.0
      %v788 = vmax.f32 %v772, 0.0
      %v789 = vmax.f32 %v773, 0.0
      %v790 = vmax.f32 %v774, 0.0
      %v791 = vmax.f32 %v775, 0.0
      %v792 = vmax.f32 %v776, 0.0
      %v793 = vmax.f32 %v777, 0.0
      %v794 = vmax.f32 %v778, 0.0
      %v795 = vmax.f32 %v779, 0.0
      %v796 = vmax.f32 %v780, 0.0
      %v797 = vmax.f32 %v781, 0.0
      %v798 = vmax.f32 %v782, 0.0
      %v799 = vmax.f32 %v783, 0.0
      %v800 = vmax.f32 %v784, 0.0
      %v801 = vmax.f32 %v785, 0.0
      %v802 = vmax.f32 %v786, 0.0
      %v803 = vmul.f32 %v567, %v787
      %v804 = vmul.f32 %v568, %v788
      %v805 = vmul.f32 %v569, %v789
      %v806 = vmul.f32 %v570, %v790
      %v807 = vmul.f32 %v571, %v791
      %v808 = vmul.f32 %v572, %v792
      %v809 = vmul.f32 %v573, %v793
      %v810 = vmul.f32 %v574, %v794
      %v811 = vmul.f32 %v575, %v795
      %v812 = vmul.f32 %v576, %v796
      %v813 = vmul.f32 %v577, %v797
      %v814 = vmul.f32 %v578, %v798
      %v815 = vmul.f32 %v579, %v799
      %v816 = vmul.f32 %v580, %v800
      %v817 = vmul.f32 %v581, %v801
      %v818 = vmul.f32 %v582, %v802
      %v819 = vrot.slane %v350, 2
      %v821 = vmul.f32 %v586, %v819
      %v822 = vlaneseq
      %v823 = vshrl.u32 %v822, 7
      %v824 = vsub.s32 3, %v823
      %v825 = vrot.slane %v821, %v824
      %v826 = vadd.f32 %v803, %v825
      %v827 = vadd.f32 %v804, %v825
      %v828 = vadd.f32 %v805, %v825
      %v829 = vadd.f32 %v806, %v825
      %v830 = vadd.f32 %v807, %v825
      %v831 = vadd.f32 %v808, %v825
      %v832 = vadd.f32 %v809, %v825
      %v833 = vadd.f32 %v810, %v825
      %v834 = vadd.f32 %v811, %v825
      %v835 = vadd.f32 %v812, %v825
      %v836 = vadd.f32 %v813, %v825
      %v837 = vadd.f32 %v814, %v825
      %v838 = vadd.f32 %v815, %v825
      %v839 = vadd.f32 %v816, %v825
      %v840 = vadd.f32 %v817, %v825
      %v841 = vadd.f32 %v818, %v825
      %v842 = vsub.f32 %v826, %v755
      %v843 = vsub.f32 %v827, %v756
      %v844 = vsub.f32 %v828, %v757
      %v845 = vsub.f32 %v829, %v758
      %v846 = vsub.f32 %v830, %v759
      %v847 = vsub.f32 %v831, %v760
      %v848 = vsub.f32 %v832, %v761
      %v849 = vsub.f32 %v833, %v762
      %v850 = vsub.f32 %v834, %v763
      %v851 = vsub.f32 %v835, %v764
      %v852 = vsub.f32 %v836, %v765
      %v853 = vsub.f32 %v837, %v766
      %v854 = vsub.f32 %v838, %v767
      %v855 = vsub.f32 %v839, %v768
      %v856 = vsub.f32 %v840, %v769
      %v857 = vsub.f32 %v841, %v770
      %v858 = vmul.f32 %v842, 0.3
      %v859 = vmul.f32 %v843, 0.3
      %v860 = vmul.f32 %v844, 0.3
      %v861 = vmul.f32 %v845, 0.3
      %v862 = vmul.f32 %v846, 0.3
      %v863 = vmul.f32 %v847, 0.3
      %v864 = vmul.f32 %v848, 0.3
      %v865 = vmul.f32 %v849, 0.3
      %v866 = vmul.f32 %v850, 0.3
      %v867 = vmul.f32 %v851, 0.3
      %v868 = vmul.f32 %v852, 0.3
      %v869 = vmul.f32 %v853, 0.3
      %v870 = vmul.f32 %v854, 0.3
      %v871 = vmul.f32 %v855, 0.3
      %v872 = vmul.f32 %v856, 0.3
      %v873 = vmul.f32 %v857, 0.3
      %vm874 = vcmp.gt.f32.partialorder %v755, %v858
      %vm875 = vcmp.gt.f32.partialorder %v756, %v859
      %vm876 = vcmp.gt.f32.partialorder %v757, %v860
      %vm877 = vcmp.gt.f32.partialorder %v758, %v861
      %vm878 = vcmp.gt.f32.partialorder %v759, %v862
      %vm879 = vcmp.gt.f32.partialorder %v760, %v863
      %vm880 = vcmp.gt.f32.partialorder %v761, %v864
      %vm881 = vcmp.gt.f32.partialorder %v762, %v865
      %vm882 = vcmp.gt.f32.partialorder %v763, %v866
      %vm883 = vcmp.gt.f32.partialorder %v764, %v867
      %vm884 = vcmp.gt.f32.partialorder %v765, %v868
      %vm885 = vcmp.gt.f32.partialorder %v766, %v869
      %vm886 = vcmp.gt.f32.partialorder %v767, %v870
      %vm887 = vcmp.gt.f32.partialorder %v768, %v871
      %vm888 = vcmp.gt.f32.partialorder %v769, %v872
      %vm889 = vcmp.gt.f32.partialorder %v770, %v873
      %vm890 = vcmp.gt.s32.totalorder %v129, %v112
      %vm891 = vcmp.gt.s32.totalorder %v129, %v113
      %vm892 = vcmp.gt.s32.totalorder %v129, %v114
      %vm893 = vcmp.gt.s32.totalorder %v129, %v115
      %vm894 = vcmp.gt.s32.totalorder %v129, %v116
      %vm895 = vcmp.gt.s32.totalorder %v129, %v117
      %vm896 = vcmp.gt.s32.totalorder %v129, %v118
      %vm897 = vcmp.gt.s32.totalorder %v129, %v119
      %vm898 = vcmp.gt.s32.totalorder %v129, %v120
      %vm899 = vcmp.gt.s32.totalorder %v129, %v121
      %vm900 = vcmp.gt.s32.totalorder %v129, %v122
      %vm901 = vcmp.gt.s32.totalorder %v129, %v123
      %vm902 = vcmp.gt.s32.totalorder %v129, %v124
      %vm903 = vcmp.gt.s32.totalorder %v129, %v125
      %vm904 = vcmp.gt.s32.totalorder %v129, %v126
      %vm905 = vcmp.gt.s32.totalorder %v129, %v127
      %vm906 = vmand %vm874, %vm890
      %vm907 = vmand %vm875, %vm891
      %vm908 = vmand %vm876, %vm892
      %vm909 = vmand %vm877, %vm893
      %vm910 = vmand %vm878, %vm894
      %vm911 = vmand %vm879, %vm895
      %vm912 = vmand %vm880, %vm896
      %vm913 = vmand %vm881, %vm897
      %vm914 = vmand %vm882, %vm898
      %vm915 = vmand %vm883, %vm899
      %vm916 = vmand %vm884, %vm900
      %vm917 = vmand %vm885, %vm901
      %vm918 = vmand %vm886, %vm902
      %vm919 = vmand %vm887, %vm903
      %vm920 = vmand %vm888, %vm904
      %vm921 = vmand %vm889, %vm905
      %v922 = vsel %vm906, 1.0, 0.0
      %v923 = vsel %vm907, 1.0, 0.0
      %v924 = vsel %vm908, 1.0, 0.0
      %v925 = vsel %vm909, 1.0, 0.0
      %v926 = vsel %vm910, 1.0, 0.0
      %v927 = vsel %vm911, 1.0, 0.0
      %v928 = vsel %vm912, 1.0, 0.0
      %v929 = vsel %vm913, 1.0, 0.0
      %v930 = vsel %vm914, 1.0, 0.0
      %v931 = vsel %vm915, 1.0, 0.0
      %v932 = vsel %vm916, 1.0, 0.0
      %v933 = vsel %vm917, 1.0, 0.0
      %v934 = vsel %vm918, 1.0, 0.0
      %v935 = vsel %vm919, 1.0, 0.0
      %v936 = vsel %vm920, 1.0, 0.0
      %v937 = vsel %vm921, 1.0, 0.0
      %938 = vst [vmem:[#allocation2] sm:$0xff] %v922
      %939 = vst [vmem:[#allocation2 + $0x8] sm:$0xff] %v923
      %940 = vst [vmem:[#allocation2 + $0x10] sm:$0xff] %v924
      %941 = vst [vmem:[#allocation2 + $0x18] sm:$0xff] %v925
      %942 = vst [vmem:[#allocation2 + $0x20] sm:$0xff] %v926
      %943 = vst [vmem:[#allocation2 + $0x28] sm:$0xff] %v927
      %944 = vst [vmem:[#allocation2 + $0x30] sm:$0xff] %v928
      %945 = vst [vmem:[#allocation2 + $0x38] sm:$0xff] %v929
      %946 = vst [vmem:[#allocation2 + $0x40] sm:$0xff] %v930
      %947 = vst [vmem:[#allocation2 + $0x48] sm:$0xff] %v931
      %948 = vst [vmem:[#allocation2 + $0x50] sm:$0xff] %v932
      %949 = vst [vmem:[#allocation2 + $0x58] sm:$0xff] %v933
      %950 = vst [vmem:[#allocation2 + $0x60] sm:$0xff] %v934
      %951 = vst [vmem:[#allocation2 + $0x68] sm:$0xff] %v935
      %952 = vst [vmem:[#allocation2 + $0x70] sm:$0xff] %v936
      %953 = vst [vmem:[#allocation2 + $0x78] sm:$0xff] %v937
      %v954 = vld [vmem:[#allocation2] sm:$0xff]
      %v955 = vstv 0
      %vm956 = vcmp.eq.s32.totalorder %v129, %v955
      %v957 = vsel %vm956, 1.0, 0.0
      %958 = vmax.xlane.f32.xlu0 %v957
      %v959 = vpop.xlane.xlu0 %958
      %s960 = vtos %v959
      %v961 = vstv %s960
      %v962 = vmul.f32 %v961, %v954
      %v963 = vsub.f32 1.0, %v962
      %s964 = sadd.s32 0, 1
      %v965 = vstv %s964
      %vm966 = vcmp.eq.s32.totalorder %v129, %v965
      %v967 = vsel %vm966, %v963, 0.0
      %vm968 = vcmask 1040384
      %v969 = vsel %vm968, %v967, -inf
      %970 = vmax.xlane.f32.xlu0 %v969
      %v971 = vpop.xlane.xlu0 %970
      %v972 = vrot.slane %v971, 4
      %v973 = vmax.f32 %v971, %v972
      %v974 = vrot.slane %v973, 2
      %v975 = vmax.f32 %v973, %v974
      %v976 = vrot.slane %v975, 1
      %v977 = vmax.f32 %v975, %v976
      %s978 = vtos %v977
      %v979 = vstv %s978
      %v980 = vmul.f32 %v979, %v954
      %v981 = vsub.f32 1.0, %v980
      %v983 = vrot.slane %v981, 1
      %v985 = vmul.f32 %v963, %v983
      %s986 = sadd.s32 0, 2
      %v987 = vstv %s986
      %vm988 = vcmp.eq.s32.totalorder %v129, %v987
      %v989 = vsel %vm988, %v985, 0.0
      %v990 = vsel %vm968, %v989, -inf
      %991 = vmax.xlane.f32.xlu0 %v990
      %v992 = vpop.xlane.xlu0 %991
      %v993 = vrot.slane %v992, 4
      %v994 = vmax.f32 %v992, %v993
      %v995 = vrot.slane %v994, 2
      %v996 = vmax.f32 %v994, %v995
      %v997 = vrot.slane %v996, 1
      %v998 = vmax.f32 %v996, %v997
      %s999 = vtos %v998
      %v1000 = vstv %s999
      %v1001 = vmul.f32 %v1000, %v954
      %v1002 = vsub.f32 1.0, %v1001
      %v1004 = vrot.slane %v1002, 2
      %v1006 = vmul.f32 %v985, %v1004
      %s1007 = sadd.s32 0, 3
      %v1008 = vstv %s1007
      %vm1009 = vcmp.eq.s32.totalorder %v129, %v1008
      %v1010 = vsel %vm1009, %v1006, 0.0
      %v1011 = vsel %vm968, %v1010, -inf
      %1012 = vmax.xlane.f32.xlu0 %v1011
      %v1013 = vpop.xlane.xlu0 %1012
      %v1014 = vrot.slane %v1013, 4
      %v1015 = vmax.f32 %v1013, %v1014
      %v1016 = vrot.slane %v1015, 2
      %v1017 = vmax.f32 %v1015, %v1016
      %v1018 = vrot.slane %v1017, 1
      %v1019 = vmax.f32 %v1017, %v1018
      %s1020 = vtos %v1019
      %v1021 = vstv %s1020
      %v1022 = vmul.f32 %v1021, %v954
      %v1023 = vsub.f32 1.0, %v1022
      %v1025 = vrot.slane %v1023, 3
      %v1027 = vmul.f32 %v1006, %v1025
      %s1028 = sadd.s32 0, 4
      %v1029 = vstv %s1028
      %vm1030 = vcmp.eq.s32.totalorder %v129, %v1029
      %v1031 = vsel %vm1030, %v1027, 0.0
      %v1032 = vsel %vm968, %v1031, -inf
      %1033 = vmax.xlane.f32.xlu0 %v1032
      %v1034 = vpop.xlane.xlu0 %1033
      %v1035 = vrot.slane %v1034, 4
      %v1036 = vmax.f32 %v1034, %v1035
      %v1037 = vrot.slane %v1036, 2
      %v1038 = vmax.f32 %v1036, %v1037
      %v1039 = vrot.slane %v1038, 1
      %v1040 = vmax.f32 %v1038, %v1039
      %s1041 = vtos %v1040
      %v1042 = vstv %s1041
      %v1043 = vmul.f32 %v1042, %v954
      %v1044 = vsub.f32 1.0, %v1043
      %v1046 = vrot.slane %v1044, 4
      %v1048 = vmul.f32 %v1027, %v1046
      %s1049 = sadd.s32 0, 5
      %v1050 = vstv %s1049
      %vm1051 = vcmp.eq.s32.totalorder %v129, %v1050
      %v1052 = vsel %vm1051, %v1048, 0.0
      %v1053 = vsel %vm968, %v1052, -inf
      %1054 = vmax.xlane.f32.xlu0 %v1053
      %v1055 = vpop.xlane.xlu0 %1054
      %v1056 = vrot.slane %v1055, 4
      %v1057 = vmax.f32 %v1055, %v1056
      %v1058 = vrot.slane %v1057, 2
      %v1059 = vmax.f32 %v1057, %v1058
      %v1060 = vrot.slane %v1059, 1
      %v1061 = vmax.f32 %v1059, %v1060
      %s1062 = vtos %v1061
      %v1063 = vstv %s1062
      %v1064 = vmul.f32 %v1063, %v954
      %v1065 = vsub.f32 1.0, %v1064
      %v1067 = vrot.slane %v1065, 5
      %v1069 = vmul.f32 %v1048, %v1067
      %s1070 = sadd.s32 0, 6
      %v1071 = vstv %s1070
      %vm1072 = vcmp.eq.s32.totalorder %v129, %v1071
      %v1073 = vsel %vm1072, %v1069, 0.0
      %v1074 = vsel %vm968, %v1073, -inf
      %1075 = vmax.xlane.f32.xlu0 %v1074
      %v1076 = vpop.xlane.xlu0 %1075
      %v1077 = vrot.slane %v1076, 4
      %v1078 = vmax.f32 %v1076, %v1077
      %v1079 = vrot.slane %v1078, 2
      %v1080 = vmax.f32 %v1078, %v1079
      %v1081 = vrot.slane %v1080, 1
      %v1082 = vmax.f32 %v1080, %v1081
      %s1083 = vtos %v1082
      %v1084 = vstv %s1083
      %v1085 = vmul.f32 %v1084, %v954
      %v1086 = vsub.f32 1.0, %v1085
      %v1088 = vrot.slane %v1086, 6
      %v1090 = vmul.f32 %v1069, %v1088
      %s1091 = sadd.s32 0, 7
      %v1092 = vstv %s1091
      %vm1093 = vcmp.eq.s32.totalorder %v129, %v1092
      %v1094 = vsel %vm1093, %v1090, 0.0
      %v1095 = vsel %vm968, %v1094, -inf
      %1096 = vmax.xlane.f32.xlu0 %v1095
      %v1097 = vpop.xlane.xlu0 %1096
      %v1098 = vrot.slane %v1097, 4
      %v1099 = vmax.f32 %v1097, %v1098
      %v1100 = vrot.slane %v1099, 2
      %v1101 = vmax.f32 %v1099, %v1100
      %v1102 = vrot.slane %v1101, 1
      %v1103 = vmax.f32 %v1101, %v1102
      %s1104 = vtos %v1103
      %v1105 = vstv %s1104
      %v1106 = vmul.f32 %v1105, %v954
      %v1107 = vsub.f32 1.0, %v1106
      %v1109 = vrot.slane %v1107, 7
      %v1111 = vmul.f32 %v1090, %v1109
      %s1112 = scalar_lea.vmem [#allocation2], 8
      %v1113 = vld [vmem:[%s1112] sm:$0xff]
      %v1114 = vstv 8
      %vm1115 = vcmp.eq.s32.totalorder %v129, %v1114
      %v1116 = vsel %vm1115, %v1111, 0.0
      %v1117 = vsel %vm968, %v1116, -inf
      %1118 = vmax.xlane.f32.xlu0 %v1117
      %v1119 = vpop.xlane.xlu0 %1118
      %v1120 = vrot.slane %v1119, 4
      %v1121 = vmax.f32 %v1119, %v1120
      %v1122 = vrot.slane %v1121, 2
      %v1123 = vmax.f32 %v1121, %v1122
      %v1124 = vrot.slane %v1123, 1
      %v1125 = vmax.f32 %v1123, %v1124
      %s1126 = vtos %v1125
      %v1127 = vstv %s1126
      %v1128 = vmul.f32 %v1127, %v1113
      %v1129 = vsub.f32 1.0, %v1128
      %v1130 = vmul.f32 %v1111, %v1129
      %s1131 = sadd.s32 8, 1
      %v1132 = vstv %s1131
      %vm1133 = vcmp.eq.s32.totalorder %v129, %v1132
      %v1134 = vsel %vm1133, %v1130, 0.0
      %v1135 = vsel %vm968, %v1134, -inf
      %1136 = vmax.xlane.f32.xlu0 %v1135
      %v1137 = vpop.xlane.xlu0 %1136
      %v1138 = vrot.slane %v1137, 4
      %v1139 = vmax.f32 %v1137, %v1138
      %v1140 = vrot.slane %v1139, 2
      %v1141 = vmax.f32 %v1139, %v1140
      %v1142 = vrot.slane %v1141, 1
      %v1143 = vmax.f32 %v1141, %v1142
      %s1144 = vtos %v1143
      %v1145 = vstv %s1144
      %v1146 = vmul.f32 %v1145, %v1113
      %v1147 = vsub.f32 1.0, %v1146
      %v1149 = vrot.slane %v1147, 1
      %v1151 = vmul.f32 %v1130, %v1149
      %s1152 = sadd.s32 8, 2
      %v1153 = vstv %s1152
      %vm1154 = vcmp.eq.s32.totalorder %v129, %v1153
      %v1155 = vsel %vm1154, %v1151, 0.0
      %v1156 = vsel %vm968, %v1155, -inf
      %1157 = vmax.xlane.f32.xlu0 %v1156
      %v1158 = vpop.xlane.xlu0 %1157
      %v1159 = vrot.slane %v1158, 4
      %v1160 = vmax.f32 %v1158, %v1159
      %v1161 = vrot.slane %v1160, 2
      %v1162 = vmax.f32 %v1160, %v1161
      %v1163 = vrot.slane %v1162, 1
      %v1164 = vmax.f32 %v1162, %v1163
      %s1165 = vtos %v1164
      %v1166 = vstv %s1165
      %v1167 = vmul.f32 %v1166, %v1113
      %v1168 = vsub.f32 1.0, %v1167
      %v1170 = vrot.slane %v1168, 2
      %v1172 = vmul.f32 %v1151, %v1170
      %s1173 = sadd.s32 8, 3
      %v1174 = vstv %s1173
      %vm1175 = vcmp.eq.s32.totalorder %v129, %v1174
      %v1176 = vsel %vm1175, %v1172, 0.0
      %v1177 = vsel %vm968, %v1176, -inf
      %1178 = vmax.xlane.f32.xlu0 %v1177
      %v1179 = vpop.xlane.xlu0 %1178
      %v1180 = vrot.slane %v1179, 4
      %v1181 = vmax.f32 %v1179, %v1180
      %v1182 = vrot.slane %v1181, 2
      %v1183 = vmax.f32 %v1181, %v1182
      %v1184 = vrot.slane %v1183, 1
      %v1185 = vmax.f32 %v1183, %v1184
      %s1186 = vtos %v1185
      %v1187 = vstv %s1186
      %v1188 = vmul.f32 %v1187, %v1113
      %v1189 = vsub.f32 1.0, %v1188
      %v1191 = vrot.slane %v1189, 3
      %v1193 = vmul.f32 %v1172, %v1191
      %s1194 = sadd.s32 8, 4
      %v1195 = vstv %s1194
      %vm1196 = vcmp.eq.s32.totalorder %v129, %v1195
      %v1197 = vsel %vm1196, %v1193, 0.0
      %v1198 = vsel %vm968, %v1197, -inf
      %1199 = vmax.xlane.f32.xlu0 %v1198
      %v1200 = vpop.xlane.xlu0 %1199
      %v1201 = vrot.slane %v1200, 4
      %v1202 = vmax.f32 %v1200, %v1201
      %v1203 = vrot.slane %v1202, 2
      %v1204 = vmax.f32 %v1202, %v1203
      %v1205 = vrot.slane %v1204, 1
      %v1206 = vmax.f32 %v1204, %v1205
      %s1207 = vtos %v1206
      %v1208 = vstv %s1207
      %v1209 = vmul.f32 %v1208, %v1113
      %v1210 = vsub.f32 1.0, %v1209
      %v1212 = vrot.slane %v1210, 4
      %v1214 = vmul.f32 %v1193, %v1212
      %s1215 = sadd.s32 8, 5
      %v1216 = vstv %s1215
      %vm1217 = vcmp.eq.s32.totalorder %v129, %v1216
      %v1218 = vsel %vm1217, %v1214, 0.0
      %v1219 = vsel %vm968, %v1218, -inf
      %1220 = vmax.xlane.f32.xlu0 %v1219
      %v1221 = vpop.xlane.xlu0 %1220
      %v1222 = vrot.slane %v1221, 4
      %v1223 = vmax.f32 %v1221, %v1222
      %v1224 = vrot.slane %v1223, 2
      %v1225 = vmax.f32 %v1223, %v1224
      %v1226 = vrot.slane %v1225, 1
      %v1227 = vmax.f32 %v1225, %v1226
      %s1228 = vtos %v1227
      %v1229 = vstv %s1228
      %v1230 = vmul.f32 %v1229, %v1113
      %v1231 = vsub.f32 1.0, %v1230
      %v1233 = vrot.slane %v1231, 5
      %v1235 = vmul.f32 %v1214, %v1233
      %s1236 = sadd.s32 8, 6
      %v1237 = vstv %s1236
      %vm1238 = vcmp.eq.s32.totalorder %v129, %v1237
      %v1239 = vsel %vm1238, %v1235, 0.0
      %v1240 = vsel %vm968, %v1239, -inf
      %1241 = vmax.xlane.f32.xlu0 %v1240
      %v1242 = vpop.xlane.xlu0 %1241
      %v1243 = vrot.slane %v1242, 4
      %v1244 = vmax.f32 %v1242, %v1243
      %v1245 = vrot.slane %v1244, 2
      %v1246 = vmax.f32 %v1244, %v1245
      %v1247 = vrot.slane %v1246, 1
      %v1248 = vmax.f32 %v1246, %v1247
      %s1249 = vtos %v1248
      %v1250 = vstv %s1249
      %v1251 = vmul.f32 %v1250, %v1113
      %v1252 = vsub.f32 1.0, %v1251
      %v1254 = vrot.slane %v1252, 6
      %v1256 = vmul.f32 %v1235, %v1254
      %s1257 = sadd.s32 8, 7
      %v1258 = vstv %s1257
      %vm1259 = vcmp.eq.s32.totalorder %v129, %v1258
      %v1260 = vsel %vm1259, %v1256, 0.0
      %v1261 = vsel %vm968, %v1260, -inf
      %1262 = vmax.xlane.f32.xlu0 %v1261
      %v1263 = vpop.xlane.xlu0 %1262
      %v1264 = vrot.slane %v1263, 4
      %v1265 = vmax.f32 %v1263, %v1264
      %v1266 = vrot.slane %v1265, 2
      %v1267 = vmax.f32 %v1265, %v1266
      %v1268 = vrot.slane %v1267, 1
      %v1269 = vmax.f32 %v1267, %v1268
      %s1270 = vtos %v1269
      %v1271 = vstv %s1270
      %v1272 = vmul.f32 %v1271, %v1113
      %v1273 = vsub.f32 1.0, %v1272
      %v1275 = vrot.slane %v1273, 7
      %v1277 = vmul.f32 %v1256, %v1275
      %s1278 = scalar_lea.vmem [#allocation2], 16
      %v1279 = vld [vmem:[%s1278] sm:$0xff]
      %v1280 = vstv 16
      %vm1281 = vcmp.eq.s32.totalorder %v129, %v1280
      %v1282 = vsel %vm1281, %v1277, 0.0
      %v1283 = vsel %vm968, %v1282, -inf
      %1284 = vmax.xlane.f32.xlu0 %v1283
      %v1285 = vpop.xlane.xlu0 %1284
      %v1286 = vrot.slane %v1285, 4
      %v1287 = vmax.f32 %v1285, %v1286
      %v1288 = vrot.slane %v1287, 2
      %v1289 = vmax.f32 %v1287, %v1288
      %v1290 = vrot.slane %v1289, 1
      %v1291 = vmax.f32 %v1289, %v1290
      %s1292 = vtos %v1291
      %v1293 = vstv %s1292
      %v1294 = vmul.f32 %v1293, %v1279
      %v1295 = vsub.f32 1.0, %v1294
      %v1296 = vmul.f32 %v1277, %v1295
      %s1297 = sadd.s32 16, 1
      %v1298 = vstv %s1297
      %vm1299 = vcmp.eq.s32.totalorder %v129, %v1298
      %v1300 = vsel %vm1299, %v1296, 0.0
      %v1301 = vsel %vm968, %v1300, -inf
      %1302 = vmax.xlane.f32.xlu0 %v1301
      %v1303 = vpop.xlane.xlu0 %1302
      %v1304 = vrot.slane %v1303, 4
      %v1305 = vmax.f32 %v1303, %v1304
      %v1306 = vrot.slane %v1305, 2
      %v1307 = vmax.f32 %v1305, %v1306
      %v1308 = vrot.slane %v1307, 1
      %v1309 = vmax.f32 %v1307, %v1308
      %s1310 = vtos %v1309
      %v1311 = vstv %s1310
      %v1312 = vmul.f32 %v1311, %v1279
      %v1313 = vsub.f32 1.0, %v1312
      %v1315 = vrot.slane %v1313, 1
      %v1317 = vmul.f32 %v1296, %v1315
      %s1318 = sadd.s32 16, 2
      %v1319 = vstv %s1318
      %vm1320 = vcmp.eq.s32.totalorder %v129, %v1319
      %v1321 = vsel %vm1320, %v1317, 0.0
      %v1322 = vsel %vm968, %v1321, -inf
      %1323 = vmax.xlane.f32.xlu0 %v1322
      %v1324 = vpop.xlane.xlu0 %1323
      %v1325 = vrot.slane %v1324, 4
      %v1326 = vmax.f32 %v1324, %v1325
      %v1327 = vrot.slane %v1326, 2
      %v1328 = vmax.f32 %v1326, %v1327
      %v1329 = vrot.slane %v1328, 1
      %v1330 = vmax.f32 %v1328, %v1329
      %s1331 = vtos %v1330
      %v1332 = vstv %s1331
      %v1333 = vmul.f32 %v1332, %v1279
      %v1334 = vsub.f32 1.0, %v1333
      %v1336 = vrot.slane %v1334, 2
      %v1338 = vmul.f32 %v1317, %v1336
      %s1339 = sadd.s32 16, 3
      %v1340 = vstv %s1339
      %vm1341 = vcmp.eq.s32.totalorder %v129, %v1340
      %v1342 = vsel %vm1341, %v1338, 0.0
      %v1343 = vsel %vm968, %v1342, -inf
      %1344 = vmax.xlane.f32.xlu0 %v1343
      %v1345 = vpop.xlane.xlu0 %1344
      %v1346 = vrot.slane %v1345, 4
      %v1347 = vmax.f32 %v1345, %v1346
      %v1348 = vrot.slane %v1347, 2
      %v1349 = vmax.f32 %v1347, %v1348
      %v1350 = vrot.slane %v1349, 1
      %v1351 = vmax.f32 %v1349, %v1350
      %s1352 = vtos %v1351
      %v1353 = vstv %s1352
      %v1354 = vmul.f32 %v1353, %v1279
      %v1355 = vsub.f32 1.0, %v1354
      %v1357 = vrot.slane %v1355, 3
      %v1359 = vmul.f32 %v1338, %v1357
      %s1360 = sadd.s32 16, 4
      %v1361 = vstv %s1360
      %vm1362 = vcmp.eq.s32.totalorder %v129, %v1361
      %v1363 = vsel %vm1362, %v1359, 0.0
      %v1364 = vsel %vm968, %v1363, -inf
      %1365 = vmax.xlane.f32.xlu0 %v1364
      %v1366 = vpop.xlane.xlu0 %1365
      %v1367 = vrot.slane %v1366, 4
      %v1368 = vmax.f32 %v1366, %v1367
      %v1369 = vrot.slane %v1368, 2
      %v1370 = vmax.f32 %v1368, %v1369
      %v1371 = vrot.slane %v1370, 1
      %v1372 = vmax.f32 %v1370, %v1371
      %s1373 = vtos %v1372
      %v1374 = vstv %s1373
      %v1375 = vmul.f32 %v1374, %v1279
      %v1376 = vsub.f32 1.0, %v1375
      %v1378 = vrot.slane %v1376, 4
      %v1380 = vmul.f32 %v1359, %v1378
      %s1381 = sadd.s32 16, 5
      %v1382 = vstv %s1381
      %vm1383 = vcmp.eq.s32.totalorder %v129, %v1382
      %v1384 = vsel %vm1383, %v1380, 0.0
      %v1385 = vsel %vm968, %v1384, -inf
      %1386 = vmax.xlane.f32.xlu0 %v1385
      %v1387 = vpop.xlane.xlu0 %1386
      %v1388 = vrot.slane %v1387, 4
      %v1389 = vmax.f32 %v1387, %v1388
      %v1390 = vrot.slane %v1389, 2
      %v1391 = vmax.f32 %v1389, %v1390
      %v1392 = vrot.slane %v1391, 1
      %v1393 = vmax.f32 %v1391, %v1392
      %s1394 = vtos %v1393
      %v1395 = vstv %s1394
      %v1396 = vmul.f32 %v1395, %v1279
      %v1397 = vsub.f32 1.0, %v1396
      %v1399 = vrot.slane %v1397, 5
      %v1401 = vmul.f32 %v1380, %v1399
      %s1402 = sadd.s32 16, 6
      %v1403 = vstv %s1402
      %vm1404 = vcmp.eq.s32.totalorder %v129, %v1403
      %v1405 = vsel %vm1404, %v1401, 0.0
      %v1406 = vsel %vm968, %v1405, -inf
      %1407 = vmax.xlane.f32.xlu0 %v1406
      %v1408 = vpop.xlane.xlu0 %1407
      %v1409 = vrot.slane %v1408, 4
      %v1410 = vmax.f32 %v1408, %v1409
      %v1411 = vrot.slane %v1410, 2
      %v1412 = vmax.f32 %v1410, %v1411
      %v1413 = vrot.slane %v1412, 1
      %v1414 = vmax.f32 %v1412, %v1413
      %s1415 = vtos %v1414
      %v1416 = vstv %s1415
      %v1417 = vmul.f32 %v1416, %v1279
      %v1418 = vsub.f32 1.0, %v1417
      %v1420 = vrot.slane %v1418, 6
      %v1422 = vmul.f32 %v1401, %v1420
      %s1423 = sadd.s32 16, 7
      %v1424 = vstv %s1423
      %vm1425 = vcmp.eq.s32.totalorder %v129, %v1424
      %v1426 = vsel %vm1425, %v1422, 0.0
      %v1427 = vsel %vm968, %v1426, -inf
      %1428 = vmax.xlane.f32.xlu0 %v1427
      %v1429 = vpop.xlane.xlu0 %1428
      %v1430 = vrot.slane %v1429, 4
      %v1431 = vmax.f32 %v1429, %v1430
      %v1432 = vrot.slane %v1431, 2
      %v1433 = vmax.f32 %v1431, %v1432
      %v1434 = vrot.slane %v1433, 1
      %v1435 = vmax.f32 %v1433, %v1434
      %s1436 = vtos %v1435
      %v1437 = vstv %s1436
      %v1438 = vmul.f32 %v1437, %v1279
      %v1439 = vsub.f32 1.0, %v1438
      %v1441 = vrot.slane %v1439, 7
      %v1443 = vmul.f32 %v1422, %v1441
      %s1444 = scalar_lea.vmem [#allocation2], 24
      %v1445 = vld [vmem:[%s1444] sm:$0xff]
      %v1446 = vstv 24
      %vm1447 = vcmp.eq.s32.totalorder %v129, %v1446
      %v1448 = vsel %vm1447, %v1443, 0.0
      %v1449 = vsel %vm968, %v1448, -inf
      %1450 = vmax.xlane.f32.xlu0 %v1449
      %v1451 = vpop.xlane.xlu0 %1450
      %v1452 = vrot.slane %v1451, 4
      %v1453 = vmax.f32 %v1451, %v1452
      %v1454 = vrot.slane %v1453, 2
      %v1455 = vmax.f32 %v1453, %v1454
      %v1456 = vrot.slane %v1455, 1
      %v1457 = vmax.f32 %v1455, %v1456
      %s1458 = vtos %v1457
      %v1459 = vstv %s1458
      %v1460 = vmul.f32 %v1459, %v1445
      %v1461 = vsub.f32 1.0, %v1460
      %v1462 = vmul.f32 %v1443, %v1461
      %s1463 = sadd.s32 24, 1
      %v1464 = vstv %s1463
      %vm1465 = vcmp.eq.s32.totalorder %v129, %v1464
      %v1466 = vsel %vm1465, %v1462, 0.0
      %v1467 = vsel %vm968, %v1466, -inf
      %1468 = vmax.xlane.f32.xlu0 %v1467
      %v1469 = vpop.xlane.xlu0 %1468
      %v1470 = vrot.slane %v1469, 4
      %v1471 = vmax.f32 %v1469, %v1470
      %v1472 = vrot.slane %v1471, 2
      %v1473 = vmax.f32 %v1471, %v1472
      %v1474 = vrot.slane %v1473, 1
      %v1475 = vmax.f32 %v1473, %v1474
      %s1476 = vtos %v1475
      %v1477 = vstv %s1476
      %v1478 = vmul.f32 %v1477, %v1445
      %v1479 = vsub.f32 1.0, %v1478
      %v1481 = vrot.slane %v1479, 1
      %v1483 = vmul.f32 %v1462, %v1481
      %s1484 = sadd.s32 24, 2
      %v1485 = vstv %s1484
      %vm1486 = vcmp.eq.s32.totalorder %v129, %v1485
      %v1487 = vsel %vm1486, %v1483, 0.0
      %v1488 = vsel %vm968, %v1487, -inf
      %1489 = vmax.xlane.f32.xlu0 %v1488
      %v1490 = vpop.xlane.xlu0 %1489
      %v1491 = vrot.slane %v1490, 4
      %v1492 = vmax.f32 %v1490, %v1491
      %v1493 = vrot.slane %v1492, 2
      %v1494 = vmax.f32 %v1492, %v1493
      %v1495 = vrot.slane %v1494, 1
      %v1496 = vmax.f32 %v1494, %v1495
      %s1497 = vtos %v1496
      %v1498 = vstv %s1497
      %v1499 = vmul.f32 %v1498, %v1445
      %v1500 = vsub.f32 1.0, %v1499
      %v1502 = vrot.slane %v1500, 2
      %v1504 = vmul.f32 %v1483, %v1502
      %s1505 = sadd.s32 24, 3
      %v1506 = vstv %s1505
      %vm1507 = vcmp.eq.s32.totalorder %v129, %v1506
      %v1508 = vsel %vm1507, %v1504, 0.0
      %v1509 = vsel %vm968, %v1508, -inf
      %1510 = vmax.xlane.f32.xlu0 %v1509
      %v1511 = vpop.xlane.xlu0 %1510
      %v1512 = vrot.slane %v1511, 4
      %v1513 = vmax.f32 %v1511, %v1512
      %v1514 = vrot.slane %v1513, 2
      %v1515 = vmax.f32 %v1513, %v1514
      %v1516 = vrot.slane %v1515, 1
      %v1517 = vmax.f32 %v1515, %v1516
      %s1518 = vtos %v1517
      %v1519 = vstv %s1518
      %v1520 = vmul.f32 %v1519, %v1445
      %v1521 = vsub.f32 1.0, %v1520
      %v1523 = vrot.slane %v1521, 3
      %v1525 = vmul.f32 %v1504, %v1523
      %s1526 = sadd.s32 24, 4
      %v1527 = vstv %s1526
      %vm1528 = vcmp.eq.s32.totalorder %v129, %v1527
      %v1529 = vsel %vm1528, %v1525, 0.0
      %v1530 = vsel %vm968, %v1529, -inf
      %1531 = vmax.xlane.f32.xlu0 %v1530
      %v1532 = vpop.xlane.xlu0 %1531
      %v1533 = vrot.slane %v1532, 4
      %v1534 = vmax.f32 %v1532, %v1533
      %v1535 = vrot.slane %v1534, 2
      %v1536 = vmax.f32 %v1534, %v1535
      %v1537 = vrot.slane %v1536, 1
      %v1538 = vmax.f32 %v1536, %v1537
      %s1539 = vtos %v1538
      %v1540 = vstv %s1539
      %v1541 = vmul.f32 %v1540, %v1445
      %v1542 = vsub.f32 1.0, %v1541
      %v1544 = vrot.slane %v1542, 4
      %v1546 = vmul.f32 %v1525, %v1544
      %s1547 = sadd.s32 24, 5
      %v1548 = vstv %s1547
      %vm1549 = vcmp.eq.s32.totalorder %v129, %v1548
      %v1550 = vsel %vm1549, %v1546, 0.0
      %v1551 = vsel %vm968, %v1550, -inf
      %1552 = vmax.xlane.f32.xlu0 %v1551
      %v1553 = vpop.xlane.xlu0 %1552
      %v1554 = vrot.slane %v1553, 4
      %v1555 = vmax.f32 %v1553, %v1554
      %v1556 = vrot.slane %v1555, 2
      %v1557 = vmax.f32 %v1555, %v1556
      %v1558 = vrot.slane %v1557, 1
      %v1559 = vmax.f32 %v1557, %v1558
      %s1560 = vtos %v1559
      %v1561 = vstv %s1560
      %v1562 = vmul.f32 %v1561, %v1445
      %v1563 = vsub.f32 1.0, %v1562
      %v1565 = vrot.slane %v1563, 5
      %v1567 = vmul.f32 %v1546, %v1565
      %s1568 = sadd.s32 24, 6
      %v1569 = vstv %s1568
      %vm1570 = vcmp.eq.s32.totalorder %v129, %v1569
      %v1571 = vsel %vm1570, %v1567, 0.0
      %v1572 = vsel %vm968, %v1571, -inf
      %1573 = vmax.xlane.f32.xlu0 %v1572
      %v1574 = vpop.xlane.xlu0 %1573
      %v1575 = vrot.slane %v1574, 4
      %v1576 = vmax.f32 %v1574, %v1575
      %v1577 = vrot.slane %v1576, 2
      %v1578 = vmax.f32 %v1576, %v1577
      %v1579 = vrot.slane %v1578, 1
      %v1580 = vmax.f32 %v1578, %v1579
      %s1581 = vtos %v1580
      %v1582 = vstv %s1581
      %v1583 = vmul.f32 %v1582, %v1445
      %v1584 = vsub.f32 1.0, %v1583
      %v1586 = vrot.slane %v1584, 6
      %v1588 = vmul.f32 %v1567, %v1586
      %s1589 = sadd.s32 24, 7
      %v1590 = vstv %s1589
      %vm1591 = vcmp.eq.s32.totalorder %v129, %v1590
      %v1592 = vsel %vm1591, %v1588, 0.0
      %v1593 = vsel %vm968, %v1592, -inf
      %1594 = vmax.xlane.f32.xlu0 %v1593
      %v1595 = vpop.xlane.xlu0 %1594
      %v1596 = vrot.slane %v1595, 4
      %v1597 = vmax.f32 %v1595, %v1596
      %v1598 = vrot.slane %v1597, 2
      %v1599 = vmax.f32 %v1597, %v1598
      %v1600 = vrot.slane %v1599, 1
      %v1601 = vmax.f32 %v1599, %v1600
      %s1602 = vtos %v1601
      %v1603 = vstv %s1602
      %v1604 = vmul.f32 %v1603, %v1445
      %v1605 = vsub.f32 1.0, %v1604
      %v1607 = vrot.slane %v1605, 7
      %v1609 = vmul.f32 %v1588, %v1607
      %s1610 = scalar_lea.vmem [#allocation2], 32
      %v1611 = vld [vmem:[%s1610] sm:$0xff]
      %v1612 = vstv 32
      %vm1613 = vcmp.eq.s32.totalorder %v129, %v1612
      %v1614 = vsel %vm1613, %v1609, 0.0
      %v1615 = vsel %vm968, %v1614, -inf
      %1616 = vmax.xlane.f32.xlu0 %v1615
      %v1617 = vpop.xlane.xlu0 %1616
      %v1618 = vrot.slane %v1617, 4
      %v1619 = vmax.f32 %v1617, %v1618
      %v1620 = vrot.slane %v1619, 2
      %v1621 = vmax.f32 %v1619, %v1620
      %v1622 = vrot.slane %v1621, 1
      %v1623 = vmax.f32 %v1621, %v1622
      %s1624 = vtos %v1623
      %v1625 = vstv %s1624
      %v1626 = vmul.f32 %v1625, %v1611
      %v1627 = vsub.f32 1.0, %v1626
      %v1628 = vmul.f32 %v1609, %v1627
      %s1629 = sadd.s32 32, 1
      %v1630 = vstv %s1629
      %vm1631 = vcmp.eq.s32.totalorder %v129, %v1630
      %v1632 = vsel %vm1631, %v1628, 0.0
      %v1633 = vsel %vm968, %v1632, -inf
      %1634 = vmax.xlane.f32.xlu0 %v1633
      %v1635 = vpop.xlane.xlu0 %1634
      %v1636 = vrot.slane %v1635, 4
      %v1637 = vmax.f32 %v1635, %v1636
      %v1638 = vrot.slane %v1637, 2
      %v1639 = vmax.f32 %v1637, %v1638
      %v1640 = vrot.slane %v1639, 1
      %v1641 = vmax.f32 %v1639, %v1640
      %s1642 = vtos %v1641
      %v1643 = vstv %s1642
      %v1644 = vmul.f32 %v1643, %v1611
      %v1645 = vsub.f32 1.0, %v1644
      %v1647 = vrot.slane %v1645, 1
      %v1649 = vmul.f32 %v1628, %v1647
      %s1650 = sadd.s32 32, 2
      %v1651 = vstv %s1650
      %vm1652 = vcmp.eq.s32.totalorder %v129, %v1651
      %v1653 = vsel %vm1652, %v1649, 0.0
      %v1654 = vsel %vm968, %v1653, -inf
      %1655 = vmax.xlane.f32.xlu0 %v1654
      %v1656 = vpop.xlane.xlu0 %1655
      %v1657 = vrot.slane %v1656, 4
      %v1658 = vmax.f32 %v1656, %v1657
      %v1659 = vrot.slane %v1658, 2
      %v1660 = vmax.f32 %v1658, %v1659
      %v1661 = vrot.slane %v1660, 1
      %v1662 = vmax.f32 %v1660, %v1661
      %s1663 = vtos %v1662
      %v1664 = vstv %s1663
      %v1665 = vmul.f32 %v1664, %v1611
      %v1666 = vsub.f32 1.0, %v1665
      %v1668 = vrot.slane %v1666, 2
      %v1670 = vmul.f32 %v1649, %v1668
      %s1671 = sadd.s32 32, 3
      %v1672 = vstv %s1671
      %vm1673 = vcmp.eq.s32.totalorder %v129, %v1672
      %v1674 = vsel %vm1673, %v1670, 0.0
      %v1675 = vsel %vm968, %v1674, -inf
      %1676 = vmax.xlane.f32.xlu0 %v1675
      %v1677 = vpop.xlane.xlu0 %1676
      %v1678 = vrot.slane %v1677, 4
      %v1679 = vmax.f32 %v1677, %v1678
      %v1680 = vrot.slane %v1679, 2
      %v1681 = vmax.f32 %v1679, %v1680
      %v1682 = vrot.slane %v1681, 1
      %v1683 = vmax.f32 %v1681, %v1682
      %s1684 = vtos %v1683
      %v1685 = vstv %s1684
      %v1686 = vmul.f32 %v1685, %v1611
      %v1687 = vsub.f32 1.0, %v1686
      %v1689 = vrot.slane %v1687, 3
      %v1691 = vmul.f32 %v1670, %v1689
      %s1692 = sadd.s32 32, 4
      %v1693 = vstv %s1692
      %vm1694 = vcmp.eq.s32.totalorder %v129, %v1693
      %v1695 = vsel %vm1694, %v1691, 0.0
      %v1696 = vsel %vm968, %v1695, -inf
      %1697 = vmax.xlane.f32.xlu0 %v1696
      %v1698 = vpop.xlane.xlu0 %1697
      %v1699 = vrot.slane %v1698, 4
      %v1700 = vmax.f32 %v1698, %v1699
      %v1701 = vrot.slane %v1700, 2
      %v1702 = vmax.f32 %v1700, %v1701
      %v1703 = vrot.slane %v1702, 1
      %v1704 = vmax.f32 %v1702, %v1703
      %s1705 = vtos %v1704
      %v1706 = vstv %s1705
      %v1707 = vmul.f32 %v1706, %v1611
      %v1708 = vsub.f32 1.0, %v1707
      %v1710 = vrot.slane %v1708, 4
      %v1712 = vmul.f32 %v1691, %v1710
      %s1713 = sadd.s32 32, 5
      %v1714 = vstv %s1713
      %vm1715 = vcmp.eq.s32.totalorder %v129, %v1714
      %v1716 = vsel %vm1715, %v1712, 0.0
      %v1717 = vsel %vm968, %v1716, -inf
      %1718 = vmax.xlane.f32.xlu0 %v1717
      %v1719 = vpop.xlane.xlu0 %1718
      %v1720 = vrot.slane %v1719, 4
      %v1721 = vmax.f32 %v1719, %v1720
      %v1722 = vrot.slane %v1721, 2
      %v1723 = vmax.f32 %v1721, %v1722
      %v1724 = vrot.slane %v1723, 1
      %v1725 = vmax.f32 %v1723, %v1724
      %s1726 = vtos %v1725
      %v1727 = vstv %s1726
      %v1728 = vmul.f32 %v1727, %v1611
      %v1729 = vsub.f32 1.0, %v1728
      %v1731 = vrot.slane %v1729, 5
      %v1733 = vmul.f32 %v1712, %v1731
      %s1734 = sadd.s32 32, 6
      %v1735 = vstv %s1734
      %vm1736 = vcmp.eq.s32.totalorder %v129, %v1735
      %v1737 = vsel %vm1736, %v1733, 0.0
      %v1738 = vsel %vm968, %v1737, -inf
      %1739 = vmax.xlane.f32.xlu0 %v1738
      %v1740 = vpop.xlane.xlu0 %1739
      %v1741 = vrot.slane %v1740, 4
      %v1742 = vmax.f32 %v1740, %v1741
      %v1743 = vrot.slane %v1742, 2
      %v1744 = vmax.f32 %v1742, %v1743
      %v1745 = vrot.slane %v1744, 1
      %v1746 = vmax.f32 %v1744, %v1745
      %s1747 = vtos %v1746
      %v1748 = vstv %s1747
      %v1749 = vmul.f32 %v1748, %v1611
      %v1750 = vsub.f32 1.0, %v1749
      %v1752 = vrot.slane %v1750, 6
      %v1754 = vmul.f32 %v1733, %v1752
      %s1755 = sadd.s32 32, 7
      %v1756 = vstv %s1755
      %vm1757 = vcmp.eq.s32.totalorder %v129, %v1756
      %v1758 = vsel %vm1757, %v1754, 0.0
      %v1759 = vsel %vm968, %v1758, -inf
      %1760 = vmax.xlane.f32.xlu0 %v1759
      %v1761 = vpop.xlane.xlu0 %1760
      %v1762 = vrot.slane %v1761, 4
      %v1763 = vmax.f32 %v1761, %v1762
      %v1764 = vrot.slane %v1763, 2
      %v1765 = vmax.f32 %v1763, %v1764
      %v1766 = vrot.slane %v1765, 1
      %v1767 = vmax.f32 %v1765, %v1766
      %s1768 = vtos %v1767
      %v1769 = vstv %s1768
      %v1770 = vmul.f32 %v1769, %v1611
      %v1771 = vsub.f32 1.0, %v1770
      %v1773 = vrot.slane %v1771, 7
      %v1775 = vmul.f32 %v1754, %v1773
      %s1776 = scalar_lea.vmem [#allocation2], 40
      %v1777 = vld [vmem:[%s1776] sm:$0xff]
      %v1778 = vstv 40
      %vm1779 = vcmp.eq.s32.totalorder %v129, %v1778
      %v1780 = vsel %vm1779, %v1775, 0.0
      %v1781 = vsel %vm968, %v1780, -inf
      %1782 = vmax.xlane.f32.xlu0 %v1781
      %v1783 = vpop.xlane.xlu0 %1782
      %v1784 = vrot.slane %v1783, 4
      %v1785 = vmax.f32 %v1783, %v1784
      %v1786 = vrot.slane %v1785, 2
      %v1787 = vmax.f32 %v1785, %v1786
      %v1788 = vrot.slane %v1787, 1
      %v1789 = vmax.f32 %v1787, %v1788
      %s1790 = vtos %v1789
      %v1791 = vstv %s1790
      %v1792 = vmul.f32 %v1791, %v1777
      %v1793 = vsub.f32 1.0, %v1792
      %v1794 = vmul.f32 %v1775, %v1793
      %s1795 = sadd.s32 40, 1
      %v1796 = vstv %s1795
      %vm1797 = vcmp.eq.s32.totalorder %v129, %v1796
      %v1798 = vsel %vm1797, %v1794, 0.0
      %v1799 = vsel %vm968, %v1798, -inf
      %1800 = vmax.xlane.f32.xlu0 %v1799
      %v1801 = vpop.xlane.xlu0 %1800
      %v1802 = vrot.slane %v1801, 4
      %v1803 = vmax.f32 %v1801, %v1802
      %v1804 = vrot.slane %v1803, 2
      %v1805 = vmax.f32 %v1803, %v1804
      %v1806 = vrot.slane %v1805, 1
      %v1807 = vmax.f32 %v1805, %v1806
      %s1808 = vtos %v1807
      %v1809 = vstv %s1808
      %v1810 = vmul.f32 %v1809, %v1777
      %v1811 = vsub.f32 1.0, %v1810
      %v1813 = vrot.slane %v1811, 1
      %v1815 = vmul.f32 %v1794, %v1813
      %s1816 = sadd.s32 40, 2
      %v1817 = vstv %s1816
      %vm1818 = vcmp.eq.s32.totalorder %v129, %v1817
      %v1819 = vsel %vm1818, %v1815, 0.0
      %v1820 = vsel %vm968, %v1819, -inf
      %1821 = vmax.xlane.f32.xlu0 %v1820
      %v1822 = vpop.xlane.xlu0 %1821
      %v1823 = vrot.slane %v1822, 4
      %v1824 = vmax.f32 %v1822, %v1823
      %v1825 = vrot.slane %v1824, 2
      %v1826 = vmax.f32 %v1824, %v1825
      %v1827 = vrot.slane %v1826, 1
      %v1828 = vmax.f32 %v1826, %v1827
      %s1829 = vtos %v1828
      %v1830 = vstv %s1829
      %v1831 = vmul.f32 %v1830, %v1777
      %v1832 = vsub.f32 1.0, %v1831
      %v1834 = vrot.slane %v1832, 2
      %v1836 = vmul.f32 %v1815, %v1834
      %s1837 = sadd.s32 40, 3
      %v1838 = vstv %s1837
      %vm1839 = vcmp.eq.s32.totalorder %v129, %v1838
      %v1840 = vsel %vm1839, %v1836, 0.0
      %v1841 = vsel %vm968, %v1840, -inf
      %1842 = vmax.xlane.f32.xlu0 %v1841
      %v1843 = vpop.xlane.xlu0 %1842
      %v1844 = vrot.slane %v1843, 4
      %v1845 = vmax.f32 %v1843, %v1844
      %v1846 = vrot.slane %v1845, 2
      %v1847 = vmax.f32 %v1845, %v1846
      %v1848 = vrot.slane %v1847, 1
      %v1849 = vmax.f32 %v1847, %v1848
      %s1850 = vtos %v1849
      %v1851 = vstv %s1850
      %v1852 = vmul.f32 %v1851, %v1777
      %v1853 = vsub.f32 1.0, %v1852
      %v1855 = vrot.slane %v1853, 3
      %v1857 = vmul.f32 %v1836, %v1855
      %s1858 = sadd.s32 40, 4
      %v1859 = vstv %s1858
      %vm1860 = vcmp.eq.s32.totalorder %v129, %v1859
      %v1861 = vsel %vm1860, %v1857, 0.0
      %v1862 = vsel %vm968, %v1861, -inf
      %1863 = vmax.xlane.f32.xlu0 %v1862
      %v1864 = vpop.xlane.xlu0 %1863
      %v1865 = vrot.slane %v1864, 4
      %v1866 = vmax.f32 %v1864, %v1865
      %v1867 = vrot.slane %v1866, 2
      %v1868 = vmax.f32 %v1866, %v1867
      %v1869 = vrot.slane %v1868, 1
      %v1870 = vmax.f32 %v1868, %v1869
      %s1871 = vtos %v1870
      %v1872 = vstv %s1871
      %v1873 = vmul.f32 %v1872, %v1777
      %v1874 = vsub.f32 1.0, %v1873
      %v1876 = vrot.slane %v1874, 4
      %v1878 = vmul.f32 %v1857, %v1876
      %s1879 = sadd.s32 40, 5
      %v1880 = vstv %s1879
      %vm1881 = vcmp.eq.s32.totalorder %v129, %v1880
      %v1882 = vsel %vm1881, %v1878, 0.0
      %v1883 = vsel %vm968, %v1882, -inf
      %1884 = vmax.xlane.f32.xlu0 %v1883
      %v1885 = vpop.xlane.xlu0 %1884
      %v1886 = vrot.slane %v1885, 4
      %v1887 = vmax.f32 %v1885, %v1886
      %v1888 = vrot.slane %v1887, 2
      %v1889 = vmax.f32 %v1887, %v1888
      %v1890 = vrot.slane %v1889, 1
      %v1891 = vmax.f32 %v1889, %v1890
      %s1892 = vtos %v1891
      %v1893 = vstv %s1892
      %v1894 = vmul.f32 %v1893, %v1777
      %v1895 = vsub.f32 1.0, %v1894
      %v1897 = vrot.slane %v1895, 5
      %v1899 = vmul.f32 %v1878, %v1897
      %s1900 = sadd.s32 40, 6
      %v1901 = vstv %s1900
      %vm1902 = vcmp.eq.s32.totalorder %v129, %v1901
      %v1903 = vsel %vm1902, %v1899, 0.0
      %v1904 = vsel %vm968, %v1903, -inf
      %1905 = vmax.xlane.f32.xlu0 %v1904
      %v1906 = vpop.xlane.xlu0 %1905
      %v1907 = vrot.slane %v1906, 4
      %v1908 = vmax.f32 %v1906, %v1907
      %v1909 = vrot.slane %v1908, 2
      %v1910 = vmax.f32 %v1908, %v1909
      %v1911 = vrot.slane %v1910, 1
      %v1912 = vmax.f32 %v1910, %v1911
      %s1913 = vtos %v1912
      %v1914 = vstv %s1913
      %v1915 = vmul.f32 %v1914, %v1777
      %v1916 = vsub.f32 1.0, %v1915
      %v1918 = vrot.slane %v1916, 6
      %v1920 = vmul.f32 %v1899, %v1918
      %s1921 = sadd.s32 40, 7
      %v1922 = vstv %s1921
      %vm1923 = vcmp.eq.s32.totalorder %v129, %v1922
      %v1924 = vsel %vm1923, %v1920, 0.0
      %v1925 = vsel %vm968, %v1924, -inf
      %1926 = vmax.xlane.f32.xlu0 %v1925
      %v1927 = vpop.xlane.xlu0 %1926
      %v1928 = vrot.slane %v1927, 4
      %v1929 = vmax.f32 %v1927, %v1928
      %v1930 = vrot.slane %v1929, 2
      %v1931 = vmax.f32 %v1929, %v1930
      %v1932 = vrot.slane %v1931, 1
      %v1933 = vmax.f32 %v1931, %v1932
      %s1934 = vtos %v1933
      %v1935 = vstv %s1934
      %v1936 = vmul.f32 %v1935, %v1777
      %v1937 = vsub.f32 1.0, %v1936
      %v1939 = vrot.slane %v1937, 7
      %v1941 = vmul.f32 %v1920, %v1939
      %s1942 = scalar_lea.vmem [#allocation2], 48
      %v1943 = vld [vmem:[%s1942] sm:$0xff]
      %v1944 = vstv 48
      %vm1945 = vcmp.eq.s32.totalorder %v129, %v1944
      %v1946 = vsel %vm1945, %v1941, 0.0
      %v1947 = vsel %vm968, %v1946, -inf
      %1948 = vmax.xlane.f32.xlu0 %v1947
      %v1949 = vpop.xlane.xlu0 %1948
      %v1950 = vrot.slane %v1949, 4
      %v1951 = vmax.f32 %v1949, %v1950
      %v1952 = vrot.slane %v1951, 2
      %v1953 = vmax.f32 %v1951, %v1952
      %v1954 = vrot.slane %v1953, 1
      %v1955 = vmax.f32 %v1953, %v1954
      %s1956 = vtos %v1955
      %v1957 = vstv %s1956
      %v1958 = vmul.f32 %v1957, %v1943
      %v1959 = vsub.f32 1.0, %v1958
      %v1960 = vmul.f32 %v1941, %v1959
      %s1961 = sadd.s32 48, 1
      %v1962 = vstv %s1961
      %vm1963 = vcmp.eq.s32.totalorder %v129, %v1962
      %v1964 = vsel %vm1963, %v1960, 0.0
      %v1965 = vsel %vm968, %v1964, -inf
      %1966 = vmax.xlane.f32.xlu0 %v1965
      %v1967 = vpop.xlane.xlu0 %1966
      %v1968 = vrot.slane %v1967, 4
      %v1969 = vmax.f32 %v1967, %v1968
      %v1970 = vrot.slane %v1969, 2
      %v1971 = vmax.f32 %v1969, %v1970
      %v1972 = vrot.slane %v1971, 1
      %v1973 = vmax.f32 %v1971, %v1972
      %s1974 = vtos %v1973
      %v1975 = vstv %s1974
      %v1976 = vmul.f32 %v1975, %v1943
      %v1977 = vsub.f32 1.0, %v1976
      %v1979 = vrot.slane %v1977, 1
      %v1981 = vmul.f32 %v1960, %v1979
      %s1982 = sadd.s32 48, 2
      %v1983 = vstv %s1982
      %vm1984 = vcmp.eq.s32.totalorder %v129, %v1983
      %v1985 = vsel %vm1984, %v1981, 0.0
      %v1986 = vsel %vm968, %v1985, -inf
      %1987 = vmax.xlane.f32.xlu0 %v1986
      %v1988 = vpop.xlane.xlu0 %1987
      %v1989 = vrot.slane %v1988, 4
      %v1990 = vmax.f32 %v1988, %v1989
      %v1991 = vrot.slane %v1990, 2
      %v1992 = vmax.f32 %v1990, %v1991
      %v1993 = vrot.slane %v1992, 1
      %v1994 = vmax.f32 %v1992, %v1993
      %s1995 = vtos %v1994
      %v1996 = vstv %s1995
      %v1997 = vmul.f32 %v1996, %v1943
      %v1998 = vsub.f32 1.0, %v1997
      %v2000 = vrot.slane %v1998, 2
      %v2002 = vmul.f32 %v1981, %v2000
      %s2003 = sadd.s32 48, 3
      %v2004 = vstv %s2003
      %vm2005 = vcmp.eq.s32.totalorder %v129, %v2004
      %v2006 = vsel %vm2005, %v2002, 0.0
      %v2007 = vsel %vm968, %v2006, -inf
      %2008 = vmax.xlane.f32.xlu0 %v2007
      %v2009 = vpop.xlane.xlu0 %2008
      %v2010 = vrot.slane %v2009, 4
      %v2011 = vmax.f32 %v2009, %v2010
      %v2012 = vrot.slane %v2011, 2
      %v2013 = vmax.f32 %v2011, %v2012
      %v2014 = vrot.slane %v2013, 1
      %v2015 = vmax.f32 %v2013, %v2014
      %s2016 = vtos %v2015
      %v2017 = vstv %s2016
      %v2018 = vmul.f32 %v2017, %v1943
      %v2019 = vsub.f32 1.0, %v2018
      %v2021 = vrot.slane %v2019, 3
      %v2023 = vmul.f32 %v2002, %v2021
      %s2024 = sadd.s32 48, 4
      %v2025 = vstv %s2024
      %vm2026 = vcmp.eq.s32.totalorder %v129, %v2025
      %v2027 = vsel %vm2026, %v2023, 0.0
      %v2028 = vsel %vm968, %v2027, -inf
      %2029 = vmax.xlane.f32.xlu0 %v2028
      %v2030 = vpop.xlane.xlu0 %2029
      %v2031 = vrot.slane %v2030, 4
      %v2032 = vmax.f32 %v2030, %v2031
      %v2033 = vrot.slane %v2032, 2
      %v2034 = vmax.f32 %v2032, %v2033
      %v2035 = vrot.slane %v2034, 1
      %v2036 = vmax.f32 %v2034, %v2035
      %s2037 = vtos %v2036
      %v2038 = vstv %s2037
      %v2039 = vmul.f32 %v2038, %v1943
      %v2040 = vsub.f32 1.0, %v2039
      %v2042 = vrot.slane %v2040, 4
      %v2044 = vmul.f32 %v2023, %v2042
      %s2045 = sadd.s32 48, 5
      %v2046 = vstv %s2045
      %vm2047 = vcmp.eq.s32.totalorder %v129, %v2046
      %v2048 = vsel %vm2047, %v2044, 0.0
      %v2049 = vsel %vm968, %v2048, -inf
      %2050 = vmax.xlane.f32.xlu0 %v2049
      %v2051 = vpop.xlane.xlu0 %2050
      %v2052 = vrot.slane %v2051, 4
      %v2053 = vmax.f32 %v2051, %v2052
      %v2054 = vrot.slane %v2053, 2
      %v2055 = vmax.f32 %v2053, %v2054
      %v2056 = vrot.slane %v2055, 1
      %v2057 = vmax.f32 %v2055, %v2056
      %s2058 = vtos %v2057
      %v2059 = vstv %s2058
      %v2060 = vmul.f32 %v2059, %v1943
      %v2061 = vsub.f32 1.0, %v2060
      %v2063 = vrot.slane %v2061, 5
      %v2065 = vmul.f32 %v2044, %v2063
      %s2066 = sadd.s32 48, 6
      %v2067 = vstv %s2066
      %vm2068 = vcmp.eq.s32.totalorder %v129, %v2067
      %v2069 = vsel %vm2068, %v2065, 0.0
      %v2070 = vsel %vm968, %v2069, -inf
      %2071 = vmax.xlane.f32.xlu0 %v2070
      %v2072 = vpop.xlane.xlu0 %2071
      %v2073 = vrot.slane %v2072, 4
      %v2074 = vmax.f32 %v2072, %v2073
      %v2075 = vrot.slane %v2074, 2
      %v2076 = vmax.f32 %v2074, %v2075
      %v2077 = vrot.slane %v2076, 1
      %v2078 = vmax.f32 %v2076, %v2077
      %s2079 = vtos %v2078
      %v2080 = vstv %s2079
      %v2081 = vmul.f32 %v2080, %v1943
      %v2082 = vsub.f32 1.0, %v2081
      %v2084 = vrot.slane %v2082, 6
      %v2086 = vmul.f32 %v2065, %v2084
      %s2087 = sadd.s32 48, 7
      %v2088 = vstv %s2087
      %vm2089 = vcmp.eq.s32.totalorder %v129, %v2088
      %v2090 = vsel %vm2089, %v2086, 0.0
      %v2091 = vsel %vm968, %v2090, -inf
      %2092 = vmax.xlane.f32.xlu0 %v2091
      %v2093 = vpop.xlane.xlu0 %2092
      %v2094 = vrot.slane %v2093, 4
      %v2095 = vmax.f32 %v2093, %v2094
      %v2096 = vrot.slane %v2095, 2
      %v2097 = vmax.f32 %v2095, %v2096
      %v2098 = vrot.slane %v2097, 1
      %v2099 = vmax.f32 %v2097, %v2098
      %s2100 = vtos %v2099
      %v2101 = vstv %s2100
      %v2102 = vmul.f32 %v2101, %v1943
      %v2103 = vsub.f32 1.0, %v2102
      %v2105 = vrot.slane %v2103, 7
      %v2107 = vmul.f32 %v2086, %v2105
      %s2108 = scalar_lea.vmem [#allocation2], 56
      %v2109 = vld [vmem:[%s2108] sm:$0xff]
      %v2110 = vstv 56
      %vm2111 = vcmp.eq.s32.totalorder %v129, %v2110
      %v2112 = vsel %vm2111, %v2107, 0.0
      %v2113 = vsel %vm968, %v2112, -inf
      %2114 = vmax.xlane.f32.xlu0 %v2113
      %v2115 = vpop.xlane.xlu0 %2114
      %v2116 = vrot.slane %v2115, 4
      %v2117 = vmax.f32 %v2115, %v2116
      %v2118 = vrot.slane %v2117, 2
      %v2119 = vmax.f32 %v2117, %v2118
      %v2120 = vrot.slane %v2119, 1
      %v2121 = vmax.f32 %v2119, %v2120
      %s2122 = vtos %v2121
      %v2123 = vstv %s2122
      %v2124 = vmul.f32 %v2123, %v2109
      %v2125 = vsub.f32 1.0, %v2124
      %v2126 = vmul.f32 %v2107, %v2125
      %s2127 = sadd.s32 56, 1
      %v2128 = vstv %s2127
      %vm2129 = vcmp.eq.s32.totalorder %v129, %v2128
      %v2130 = vsel %vm2129, %v2126, 0.0
      %v2131 = vsel %vm968, %v2130, -inf
      %2132 = vmax.xlane.f32.xlu0 %v2131
      %v2133 = vpop.xlane.xlu0 %2132
      %v2134 = vrot.slane %v2133, 4
      %v2135 = vmax.f32 %v2133, %v2134
      %v2136 = vrot.slane %v2135, 2
      %v2137 = vmax.f32 %v2135, %v2136
      %v2138 = vrot.slane %v2137, 1
      %v2139 = vmax.f32 %v2137, %v2138
      %s2140 = vtos %v2139
      %v2141 = vstv %s2140
      %v2142 = vmul.f32 %v2141, %v2109
      %v2143 = vsub.f32 1.0, %v2142
      %v2145 = vrot.slane %v2143, 1
      %v2147 = vmul.f32 %v2126, %v2145
      %s2148 = sadd.s32 56, 2
      %v2149 = vstv %s2148
      %vm2150 = vcmp.eq.s32.totalorder %v129, %v2149
      %v2151 = vsel %vm2150, %v2147, 0.0
      %v2152 = vsel %vm968, %v2151, -inf
      %2153 = vmax.xlane.f32.xlu0 %v2152
      %v2154 = vpop.xlane.xlu0 %2153
      %v2155 = vrot.slane %v2154, 4
      %v2156 = vmax.f32 %v2154, %v2155
      %v2157 = vrot.slane %v2156, 2
      %v2158 = vmax.f32 %v2156, %v2157
      %v2159 = vrot.slane %v2158, 1
      %v2160 = vmax.f32 %v2158, %v2159
      %s2161 = vtos %v2160
      %v2162 = vstv %s2161
      %v2163 = vmul.f32 %v2162, %v2109
      %v2164 = vsub.f32 1.0, %v2163
      %v2166 = vrot.slane %v2164, 2
      %v2168 = vmul.f32 %v2147, %v2166
      %s2169 = sadd.s32 56, 3
      %v2170 = vstv %s2169
      %vm2171 = vcmp.eq.s32.totalorder %v129, %v2170
      %v2172 = vsel %vm2171, %v2168, 0.0
      %v2173 = vsel %vm968, %v2172, -inf
      %2174 = vmax.xlane.f32.xlu0 %v2173
      %v2175 = vpop.xlane.xlu0 %2174
      %v2176 = vrot.slane %v2175, 4
      %v2177 = vmax.f32 %v2175, %v2176
      %v2178 = vrot.slane %v2177, 2
      %v2179 = vmax.f32 %v2177, %v2178
      %v2180 = vrot.slane %v2179, 1
      %v2181 = vmax.f32 %v2179, %v2180
      %s2182 = vtos %v2181
      %v2183 = vstv %s2182
      %v2184 = vmul.f32 %v2183, %v2109
      %v2185 = vsub.f32 1.0, %v2184
      %v2187 = vrot.slane %v2185, 3
      %v2189 = vmul.f32 %v2168, %v2187
      %s2190 = sadd.s32 56, 4
      %v2191 = vstv %s2190
      %vm2192 = vcmp.eq.s32.totalorder %v129, %v2191
      %v2193 = vsel %vm2192, %v2189, 0.0
      %v2194 = vsel %vm968, %v2193, -inf
      %2195 = vmax.xlane.f32.xlu0 %v2194
      %v2196 = vpop.xlane.xlu0 %2195
      %v2197 = vrot.slane %v2196, 4
      %v2198 = vmax.f32 %v2196, %v2197
      %v2199 = vrot.slane %v2198, 2
      %v2200 = vmax.f32 %v2198, %v2199
      %v2201 = vrot.slane %v2200, 1
      %v2202 = vmax.f32 %v2200, %v2201
      %s2203 = vtos %v2202
      %v2204 = vstv %s2203
      %v2205 = vmul.f32 %v2204, %v2109
      %v2206 = vsub.f32 1.0, %v2205
      %v2208 = vrot.slane %v2206, 4
      %v2210 = vmul.f32 %v2189, %v2208
      %s2211 = sadd.s32 56, 5
      %v2212 = vstv %s2211
      %vm2213 = vcmp.eq.s32.totalorder %v129, %v2212
      %v2214 = vsel %vm2213, %v2210, 0.0
      %v2215 = vsel %vm968, %v2214, -inf
      %2216 = vmax.xlane.f32.xlu0 %v2215
      %v2217 = vpop.xlane.xlu0 %2216
      %v2218 = vrot.slane %v2217, 4
      %v2219 = vmax.f32 %v2217, %v2218
      %v2220 = vrot.slane %v2219, 2
      %v2221 = vmax.f32 %v2219, %v2220
      %v2222 = vrot.slane %v2221, 1
      %v2223 = vmax.f32 %v2221, %v2222
      %s2224 = vtos %v2223
      %v2225 = vstv %s2224
      %v2226 = vmul.f32 %v2225, %v2109
      %v2227 = vsub.f32 1.0, %v2226
      %v2229 = vrot.slane %v2227, 5
      %v2231 = vmul.f32 %v2210, %v2229
      %s2232 = sadd.s32 56, 6
      %v2233 = vstv %s2232
      %vm2234 = vcmp.eq.s32.totalorder %v129, %v2233
      %v2235 = vsel %vm2234, %v2231, 0.0
      %v2236 = vsel %vm968, %v2235, -inf
      %2237 = vmax.xlane.f32.xlu0 %v2236
      %v2238 = vpop.xlane.xlu0 %2237
      %v2239 = vrot.slane %v2238, 4
      %v2240 = vmax.f32 %v2238, %v2239
      %v2241 = vrot.slane %v2240, 2
      %v2242 = vmax.f32 %v2240, %v2241
      %v2243 = vrot.slane %v2242, 1
      %v2244 = vmax.f32 %v2242, %v2243
      %s2245 = vtos %v2244
      %v2246 = vstv %s2245
      %v2247 = vmul.f32 %v2246, %v2109
      %v2248 = vsub.f32 1.0, %v2247
      %v2250 = vrot.slane %v2248, 6
      %v2252 = vmul.f32 %v2231, %v2250
      %s2253 = sadd.s32 56, 7
      %v2254 = vstv %s2253
      %vm2255 = vcmp.eq.s32.totalorder %v129, %v2254
      %v2256 = vsel %vm2255, %v2252, 0.0
      %v2257 = vsel %vm968, %v2256, -inf
      %2258 = vmax.xlane.f32.xlu0 %v2257
      %v2259 = vpop.xlane.xlu0 %2258
      %v2260 = vrot.slane %v2259, 4
      %v2261 = vmax.f32 %v2259, %v2260
      %v2262 = vrot.slane %v2261, 2
      %v2263 = vmax.f32 %v2261, %v2262
      %v2264 = vrot.slane %v2263, 1
      %v2265 = vmax.f32 %v2263, %v2264
      %s2266 = vtos %v2265
      %v2267 = vstv %s2266
      %v2268 = vmul.f32 %v2267, %v2109
      %v2269 = vsub.f32 1.0, %v2268
      %v2271 = vrot.slane %v2269, 7
      %v2273 = vmul.f32 %v2252, %v2271
      %s2274 = scalar_lea.vmem [#allocation2], 64
      %v2275 = vld [vmem:[%s2274] sm:$0xff]
      %v2276 = vstv 64
      %vm2277 = vcmp.eq.s32.totalorder %v129, %v2276
      %v2278 = vsel %vm2277, %v2273, 0.0
      %v2279 = vsel %vm968, %v2278, -inf
      %2280 = vmax.xlane.f32.xlu0 %v2279
      %v2281 = vpop.xlane.xlu0 %2280
      %v2282 = vrot.slane %v2281, 4
      %v2283 = vmax.f32 %v2281, %v2282
      %v2284 = vrot.slane %v2283, 2
      %v2285 = vmax.f32 %v2283, %v2284
      %v2286 = vrot.slane %v2285, 1
      %v2287 = vmax.f32 %v2285, %v2286
      %s2288 = vtos %v2287
      %v2289 = vstv %s2288
      %v2290 = vmul.f32 %v2289, %v2275
      %v2291 = vsub.f32 1.0, %v2290
      %v2292 = vmul.f32 %v2273, %v2291
      %s2293 = sadd.s32 64, 1
      %v2294 = vstv %s2293
      %vm2295 = vcmp.eq.s32.totalorder %v129, %v2294
      %v2296 = vsel %vm2295, %v2292, 0.0
      %v2297 = vsel %vm968, %v2296, -inf
      %2298 = vmax.xlane.f32.xlu0 %v2297
      %v2299 = vpop.xlane.xlu0 %2298
      %v2300 = vrot.slane %v2299, 4
      %v2301 = vmax.f32 %v2299, %v2300
      %v2302 = vrot.slane %v2301, 2
      %v2303 = vmax.f32 %v2301, %v2302
      %v2304 = vrot.slane %v2303, 1
      %v2305 = vmax.f32 %v2303, %v2304
      %s2306 = vtos %v2305
      %v2307 = vstv %s2306
      %v2308 = vmul.f32 %v2307, %v2275
      %v2309 = vsub.f32 1.0, %v2308
      %v2311 = vrot.slane %v2309, 1
      %v2313 = vmul.f32 %v2292, %v2311
      %s2314 = sadd.s32 64, 2
      %v2315 = vstv %s2314
      %vm2316 = vcmp.eq.s32.totalorder %v129, %v2315
      %v2317 = vsel %vm2316, %v2313, 0.0
      %v2318 = vsel %vm968, %v2317, -inf
      %2319 = vmax.xlane.f32.xlu0 %v2318
      %v2320 = vpop.xlane.xlu0 %2319
      %v2321 = vrot.slane %v2320, 4
      %v2322 = vmax.f32 %v2320, %v2321
      %v2323 = vrot.slane %v2322, 2
      %v2324 = vmax.f32 %v2322, %v2323
      %v2325 = vrot.slane %v2324, 1
      %v2326 = vmax.f32 %v2324, %v2325
      %s2327 = vtos %v2326
      %v2328 = vstv %s2327
      %v2329 = vmul.f32 %v2328, %v2275
      %v2330 = vsub.f32 1.0, %v2329
      %v2332 = vrot.slane %v2330, 2
      %v2334 = vmul.f32 %v2313, %v2332
      %s2335 = sadd.s32 64, 3
      %v2336 = vstv %s2335
      %vm2337 = vcmp.eq.s32.totalorder %v129, %v2336
      %v2338 = vsel %vm2337, %v2334, 0.0
      %v2339 = vsel %vm968, %v2338, -inf
      %2340 = vmax.xlane.f32.xlu0 %v2339
      %v2341 = vpop.xlane.xlu0 %2340
      %v2342 = vrot.slane %v2341, 4
      %v2343 = vmax.f32 %v2341, %v2342
      %v2344 = vrot.slane %v2343, 2
      %v2345 = vmax.f32 %v2343, %v2344
      %v2346 = vrot.slane %v2345, 1
      %v2347 = vmax.f32 %v2345, %v2346
      %s2348 = vtos %v2347
      %v2349 = vstv %s2348
      %v2350 = vmul.f32 %v2349, %v2275
      %v2351 = vsub.f32 1.0, %v2350
      %v2353 = vrot.slane %v2351, 3
      %v2355 = vmul.f32 %v2334, %v2353
      %s2356 = sadd.s32 64, 4
      %v2357 = vstv %s2356
      %vm2358 = vcmp.eq.s32.totalorder %v129, %v2357
      %v2359 = vsel %vm2358, %v2355, 0.0
      %v2360 = vsel %vm968, %v2359, -inf
      %2361 = vmax.xlane.f32.xlu0 %v2360
      %v2362 = vpop.xlane.xlu0 %2361
      %v2363 = vrot.slane %v2362, 4
      %v2364 = vmax.f32 %v2362, %v2363
      %v2365 = vrot.slane %v2364, 2
      %v2366 = vmax.f32 %v2364, %v2365
      %v2367 = vrot.slane %v2366, 1
      %v2368 = vmax.f32 %v2366, %v2367
      %s2369 = vtos %v2368
      %v2370 = vstv %s2369
      %v2371 = vmul.f32 %v2370, %v2275
      %v2372 = vsub.f32 1.0, %v2371
      %v2374 = vrot.slane %v2372, 4
      %v2376 = vmul.f32 %v2355, %v2374
      %s2377 = sadd.s32 64, 5
      %v2378 = vstv %s2377
      %vm2379 = vcmp.eq.s32.totalorder %v129, %v2378
      %v2380 = vsel %vm2379, %v2376, 0.0
      %v2381 = vsel %vm968, %v2380, -inf
      %2382 = vmax.xlane.f32.xlu0 %v2381
      %v2383 = vpop.xlane.xlu0 %2382
      %v2384 = vrot.slane %v2383, 4
      %v2385 = vmax.f32 %v2383, %v2384
      %v2386 = vrot.slane %v2385, 2
      %v2387 = vmax.f32 %v2385, %v2386
      %v2388 = vrot.slane %v2387, 1
      %v2389 = vmax.f32 %v2387, %v2388
      %s2390 = vtos %v2389
      %v2391 = vstv %s2390
      %v2392 = vmul.f32 %v2391, %v2275
      %v2393 = vsub.f32 1.0, %v2392
      %v2395 = vrot.slane %v2393, 5
      %v2397 = vmul.f32 %v2376, %v2395
      %s2398 = sadd.s32 64, 6
      %v2399 = vstv %s2398
      %vm2400 = vcmp.eq.s32.totalorder %v129, %v2399
      %v2401 = vsel %vm2400, %v2397, 0.0
      %v2402 = vsel %vm968, %v2401, -inf
      %2403 = vmax.xlane.f32.xlu0 %v2402
      %v2404 = vpop.xlane.xlu0 %2403
      %v2405 = vrot.slane %v2404, 4
      %v2406 = vmax.f32 %v2404, %v2405
      %v2407 = vrot.slane %v2406, 2
      %v2408 = vmax.f32 %v2406, %v2407
      %v2409 = vrot.slane %v2408, 1
      %v2410 = vmax.f32 %v2408, %v2409
      %s2411 = vtos %v2410
      %v2412 = vstv %s2411
      %v2413 = vmul.f32 %v2412, %v2275
      %v2414 = vsub.f32 1.0, %v2413
      %v2416 = vrot.slane %v2414, 6
      %v2418 = vmul.f32 %v2397, %v2416
      %s2419 = sadd.s32 64, 7
      %v2420 = vstv %s2419
      %vm2421 = vcmp.eq.s32.totalorder %v129, %v2420
      %v2422 = vsel %vm2421, %v2418, 0.0
      %v2423 = vsel %vm968, %v2422, -inf
      %2424 = vmax.xlane.f32.xlu0 %v2423
      %v2425 = vpop.xlane.xlu0 %2424
      %v2426 = vrot.slane %v2425, 4
      %v2427 = vmax.f32 %v2425, %v2426
      %v2428 = vrot.slane %v2427, 2
      %v2429 = vmax.f32 %v2427, %v2428
      %v2430 = vrot.slane %v2429, 1
      %v2431 = vmax.f32 %v2429, %v2430
      %s2432 = vtos %v2431
      %v2433 = vstv %s2432
      %v2434 = vmul.f32 %v2433, %v2275
      %v2435 = vsub.f32 1.0, %v2434
      %v2437 = vrot.slane %v2435, 7
      %v2439 = vmul.f32 %v2418, %v2437
      %s2440 = scalar_lea.vmem [#allocation2], 72
      %v2441 = vld [vmem:[%s2440] sm:$0xff]
      %v2442 = vstv 72
      %vm2443 = vcmp.eq.s32.totalorder %v129, %v2442
      %v2444 = vsel %vm2443, %v2439, 0.0
      %v2445 = vsel %vm968, %v2444, -inf
      %2446 = vmax.xlane.f32.xlu0 %v2445
      %v2447 = vpop.xlane.xlu0 %2446
      %v2448 = vrot.slane %v2447, 4
      %v2449 = vmax.f32 %v2447, %v2448
      %v2450 = vrot.slane %v2449, 2
      %v2451 = vmax.f32 %v2449, %v2450
      %v2452 = vrot.slane %v2451, 1
      %v2453 = vmax.f32 %v2451, %v2452
      %s2454 = vtos %v2453
      %v2455 = vstv %s2454
      %v2456 = vmul.f32 %v2455, %v2441
      %v2457 = vsub.f32 1.0, %v2456
      %v2458 = vmul.f32 %v2439, %v2457
      %s2459 = sadd.s32 72, 1
      %v2460 = vstv %s2459
      %vm2461 = vcmp.eq.s32.totalorder %v129, %v2460
      %v2462 = vsel %vm2461, %v2458, 0.0
      %v2463 = vsel %vm968, %v2462, -inf
      %2464 = vmax.xlane.f32.xlu0 %v2463
      %v2465 = vpop.xlane.xlu0 %2464
      %v2466 = vrot.slane %v2465, 4
      %v2467 = vmax.f32 %v2465, %v2466
      %v2468 = vrot.slane %v2467, 2
      %v2469 = vmax.f32 %v2467, %v2468
      %v2470 = vrot.slane %v2469, 1
      %v2471 = vmax.f32 %v2469, %v2470
      %s2472 = vtos %v2471
      %v2473 = vstv %s2472
      %v2474 = vmul.f32 %v2473, %v2441
      %v2475 = vsub.f32 1.0, %v2474
      %v2477 = vrot.slane %v2475, 1
      %v2479 = vmul.f32 %v2458, %v2477
      %s2480 = sadd.s32 72, 2
      %v2481 = vstv %s2480
      %vm2482 = vcmp.eq.s32.totalorder %v129, %v2481
      %v2483 = vsel %vm2482, %v2479, 0.0
      %v2484 = vsel %vm968, %v2483, -inf
      %2485 = vmax.xlane.f32.xlu0 %v2484
      %v2486 = vpop.xlane.xlu0 %2485
      %v2487 = vrot.slane %v2486, 4
      %v2488 = vmax.f32 %v2486, %v2487
      %v2489 = vrot.slane %v2488, 2
      %v2490 = vmax.f32 %v2488, %v2489
      %v2491 = vrot.slane %v2490, 1
      %v2492 = vmax.f32 %v2490, %v2491
      %s2493 = vtos %v2492
      %v2494 = vstv %s2493
      %v2495 = vmul.f32 %v2494, %v2441
      %v2496 = vsub.f32 1.0, %v2495
      %v2498 = vrot.slane %v2496, 2
      %v2500 = vmul.f32 %v2479, %v2498
      %s2501 = sadd.s32 72, 3
      %v2502 = vstv %s2501
      %vm2503 = vcmp.eq.s32.totalorder %v129, %v2502
      %v2504 = vsel %vm2503, %v2500, 0.0
      %v2505 = vsel %vm968, %v2504, -inf
      %2506 = vmax.xlane.f32.xlu0 %v2505
      %v2507 = vpop.xlane.xlu0 %2506
      %v2508 = vrot.slane %v2507, 4
      %v2509 = vmax.f32 %v2507, %v2508
      %v2510 = vrot.slane %v2509, 2
      %v2511 = vmax.f32 %v2509, %v2510
      %v2512 = vrot.slane %v2511, 1
      %v2513 = vmax.f32 %v2511, %v2512
      %s2514 = vtos %v2513
      %v2515 = vstv %s2514
      %v2516 = vmul.f32 %v2515, %v2441
      %v2517 = vsub.f32 1.0, %v2516
      %v2519 = vrot.slane %v2517, 3
      %v2521 = vmul.f32 %v2500, %v2519
      %s2522 = sadd.s32 72, 4
      %v2523 = vstv %s2522
      %vm2524 = vcmp.eq.s32.totalorder %v129, %v2523
      %v2525 = vsel %vm2524, %v2521, 0.0
      %v2526 = vsel %vm968, %v2525, -inf
      %2527 = vmax.xlane.f32.xlu0 %v2526
      %v2528 = vpop.xlane.xlu0 %2527
      %v2529 = vrot.slane %v2528, 4
      %v2530 = vmax.f32 %v2528, %v2529
      %v2531 = vrot.slane %v2530, 2
      %v2532 = vmax.f32 %v2530, %v2531
      %v2533 = vrot.slane %v2532, 1
      %v2534 = vmax.f32 %v2532, %v2533
      %s2535 = vtos %v2534
      %v2536 = vstv %s2535
      %v2537 = vmul.f32 %v2536, %v2441
      %v2538 = vsub.f32 1.0, %v2537
      %v2540 = vrot.slane %v2538, 4
      %v2542 = vmul.f32 %v2521, %v2540
      %s2543 = sadd.s32 72, 5
      %v2544 = vstv %s2543
      %vm2545 = vcmp.eq.s32.totalorder %v129, %v2544
      %v2546 = vsel %vm2545, %v2542, 0.0
      %v2547 = vsel %vm968, %v2546, -inf
      %2548 = vmax.xlane.f32.xlu0 %v2547
      %v2549 = vpop.xlane.xlu0 %2548
      %v2550 = vrot.slane %v2549, 4
      %v2551 = vmax.f32 %v2549, %v2550
      %v2552 = vrot.slane %v2551, 2
      %v2553 = vmax.f32 %v2551, %v2552
      %v2554 = vrot.slane %v2553, 1
      %v2555 = vmax.f32 %v2553, %v2554
      %s2556 = vtos %v2555
      %v2557 = vstv %s2556
      %v2558 = vmul.f32 %v2557, %v2441
      %v2559 = vsub.f32 1.0, %v2558
      %v2561 = vrot.slane %v2559, 5
      %v2563 = vmul.f32 %v2542, %v2561
      %s2564 = sadd.s32 72, 6
      %v2565 = vstv %s2564
      %vm2566 = vcmp.eq.s32.totalorder %v129, %v2565
      %v2567 = vsel %vm2566, %v2563, 0.0
      %v2568 = vsel %vm968, %v2567, -inf
      %2569 = vmax.xlane.f32.xlu0 %v2568
      %v2570 = vpop.xlane.xlu0 %2569
      %v2571 = vrot.slane %v2570, 4
      %v2572 = vmax.f32 %v2570, %v2571
      %v2573 = vrot.slane %v2572, 2
      %v2574 = vmax.f32 %v2572, %v2573
      %v2575 = vrot.slane %v2574, 1
      %v2576 = vmax.f32 %v2574, %v2575
      %s2577 = vtos %v2576
      %v2578 = vstv %s2577
      %v2579 = vmul.f32 %v2578, %v2441
      %v2580 = vsub.f32 1.0, %v2579
      %v2582 = vrot.slane %v2580, 6
      %v2584 = vmul.f32 %v2563, %v2582
      %s2585 = sadd.s32 72, 7
      %v2586 = vstv %s2585
      %vm2587 = vcmp.eq.s32.totalorder %v129, %v2586
      %v2588 = vsel %vm2587, %v2584, 0.0
      %v2589 = vsel %vm968, %v2588, -inf
      %2590 = vmax.xlane.f32.xlu0 %v2589
      %v2591 = vpop.xlane.xlu0 %2590
      %v2592 = vrot.slane %v2591, 4
      %v2593 = vmax.f32 %v2591, %v2592
      %v2594 = vrot.slane %v2593, 2
      %v2595 = vmax.f32 %v2593, %v2594
      %v2596 = vrot.slane %v2595, 1
      %v2597 = vmax.f32 %v2595, %v2596
      %s2598 = vtos %v2597
      %v2599 = vstv %s2598
      %v2600 = vmul.f32 %v2599, %v2441
      %v2601 = vsub.f32 1.0, %v2600
      %v2603 = vrot.slane %v2601, 7
      %v2605 = vmul.f32 %v2584, %v2603
      %s2606 = scalar_lea.vmem [#allocation2], 80
      %v2607 = vld [vmem:[%s2606] sm:$0xff]
      %v2608 = vstv 80
      %vm2609 = vcmp.eq.s32.totalorder %v129, %v2608
      %v2610 = vsel %vm2609, %v2605, 0.0
      %v2611 = vsel %vm968, %v2610, -inf
      %2612 = vmax.xlane.f32.xlu0 %v2611
      %v2613 = vpop.xlane.xlu0 %2612
      %v2614 = vrot.slane %v2613, 4
      %v2615 = vmax.f32 %v2613, %v2614
      %v2616 = vrot.slane %v2615, 2
      %v2617 = vmax.f32 %v2615, %v2616
      %v2618 = vrot.slane %v2617, 1
      %v2619 = vmax.f32 %v2617, %v2618
      %s2620 = vtos %v2619
      %v2621 = vstv %s2620
      %v2622 = vmul.f32 %v2621, %v2607
      %v2623 = vsub.f32 1.0, %v2622
      %v2624 = vmul.f32 %v2605, %v2623
      %s2625 = sadd.s32 80, 1
      %v2626 = vstv %s2625
      %vm2627 = vcmp.eq.s32.totalorder %v129, %v2626
      %v2628 = vsel %vm2627, %v2624, 0.0
      %v2629 = vsel %vm968, %v2628, -inf
      %2630 = vmax.xlane.f32.xlu0 %v2629
      %v2631 = vpop.xlane.xlu0 %2630
      %v2632 = vrot.slane %v2631, 4
      %v2633 = vmax.f32 %v2631, %v2632
      %v2634 = vrot.slane %v2633, 2
      %v2635 = vmax.f32 %v2633, %v2634
      %v2636 = vrot.slane %v2635, 1
      %v2637 = vmax.f32 %v2635, %v2636
      %s2638 = vtos %v2637
      %v2639 = vstv %s2638
      %v2640 = vmul.f32 %v2639, %v2607
      %v2641 = vsub.f32 1.0, %v2640
      %v2643 = vrot.slane %v2641, 1
      %v2645 = vmul.f32 %v2624, %v2643
      %s2646 = sadd.s32 80, 2
      %v2647 = vstv %s2646
      %vm2648 = vcmp.eq.s32.totalorder %v129, %v2647
      %v2649 = vsel %vm2648, %v2645, 0.0
      %v2650 = vsel %vm968, %v2649, -inf
      %2651 = vmax.xlane.f32.xlu0 %v2650
      %v2652 = vpop.xlane.xlu0 %2651
      %v2653 = vrot.slane %v2652, 4
      %v2654 = vmax.f32 %v2652, %v2653
      %v2655 = vrot.slane %v2654, 2
      %v2656 = vmax.f32 %v2654, %v2655
      %v2657 = vrot.slane %v2656, 1
      %v2658 = vmax.f32 %v2656, %v2657
      %s2659 = vtos %v2658
      %v2660 = vstv %s2659
      %v2661 = vmul.f32 %v2660, %v2607
      %v2662 = vsub.f32 1.0, %v2661
      %v2664 = vrot.slane %v2662, 2
      %v2666 = vmul.f32 %v2645, %v2664
      %s2667 = sadd.s32 80, 3
      %v2668 = vstv %s2667
      %vm2669 = vcmp.eq.s32.totalorder %v129, %v2668
      %v2670 = vsel %vm2669, %v2666, 0.0
      %v2671 = vsel %vm968, %v2670, -inf
      %2672 = vmax.xlane.f32.xlu0 %v2671
      %v2673 = vpop.xlane.xlu0 %2672
      %v2674 = vrot.slane %v2673, 4
      %v2675 = vmax.f32 %v2673, %v2674
      %v2676 = vrot.slane %v2675, 2
      %v2677 = vmax.f32 %v2675, %v2676
      %v2678 = vrot.slane %v2677, 1
      %v2679 = vmax.f32 %v2677, %v2678
      %s2680 = vtos %v2679
      %v2681 = vstv %s2680
      %v2682 = vmul.f32 %v2681, %v2607
      %v2683 = vsub.f32 1.0, %v2682
      %v2685 = vrot.slane %v2683, 3
      %v2687 = vmul.f32 %v2666, %v2685
      %s2688 = sadd.s32 80, 4
      %v2689 = vstv %s2688
      %vm2690 = vcmp.eq.s32.totalorder %v129, %v2689
      %v2691 = vsel %vm2690, %v2687, 0.0
      %v2692 = vsel %vm968, %v2691, -inf
      %2693 = vmax.xlane.f32.xlu0 %v2692
      %v2694 = vpop.xlane.xlu0 %2693
      %v2695 = vrot.slane %v2694, 4
      %v2696 = vmax.f32 %v2694, %v2695
      %v2697 = vrot.slane %v2696, 2
      %v2698 = vmax.f32 %v2696, %v2697
      %v2699 = vrot.slane %v2698, 1
      %v2700 = vmax.f32 %v2698, %v2699
      %s2701 = vtos %v2700
      %v2702 = vstv %s2701
      %v2703 = vmul.f32 %v2702, %v2607
      %v2704 = vsub.f32 1.0, %v2703
      %v2706 = vrot.slane %v2704, 4
      %v2708 = vmul.f32 %v2687, %v2706
      %s2709 = sadd.s32 80, 5
      %v2710 = vstv %s2709
      %vm2711 = vcmp.eq.s32.totalorder %v129, %v2710
      %v2712 = vsel %vm2711, %v2708, 0.0
      %v2713 = vsel %vm968, %v2712, -inf
      %2714 = vmax.xlane.f32.xlu0 %v2713
      %v2715 = vpop.xlane.xlu0 %2714
      %v2716 = vrot.slane %v2715, 4
      %v2717 = vmax.f32 %v2715, %v2716
      %v2718 = vrot.slane %v2717, 2
      %v2719 = vmax.f32 %v2717, %v2718
      %v2720 = vrot.slane %v2719, 1
      %v2721 = vmax.f32 %v2719, %v2720
      %s2722 = vtos %v2721
      %v2723 = vstv %s2722
      %v2724 = vmul.f32 %v2723, %v2607
      %v2725 = vsub.f32 1.0, %v2724
      %v2727 = vrot.slane %v2725, 5
      %v2729 = vmul.f32 %v2708, %v2727
      %s2730 = sadd.s32 80, 6
      %v2731 = vstv %s2730
      %vm2732 = vcmp.eq.s32.totalorder %v129, %v2731
      %v2733 = vsel %vm2732, %v2729, 0.0
      %v2734 = vsel %vm968, %v2733, -inf
      %2735 = vmax.xlane.f32.xlu0 %v2734
      %v2736 = vpop.xlane.xlu0 %2735
      %v2737 = vrot.slane %v2736, 4
      %v2738 = vmax.f32 %v2736, %v2737
      %v2739 = vrot.slane %v2738, 2
      %v2740 = vmax.f32 %v2738, %v2739
      %v2741 = vrot.slane %v2740, 1
      %v2742 = vmax.f32 %v2740, %v2741
      %s2743 = vtos %v2742
      %v2744 = vstv %s2743
      %v2745 = vmul.f32 %v2744, %v2607
      %v2746 = vsub.f32 1.0, %v2745
      %v2748 = vrot.slane %v2746, 6
      %v2750 = vmul.f32 %v2729, %v2748
      %s2751 = sadd.s32 80, 7
      %v2752 = vstv %s2751
      %vm2753 = vcmp.eq.s32.totalorder %v129, %v2752
      %v2754 = vsel %vm2753, %v2750, 0.0
      %v2755 = vsel %vm968, %v2754, -inf
      %2756 = vmax.xlane.f32.xlu0 %v2755
      %v2757 = vpop.xlane.xlu0 %2756
      %v2758 = vrot.slane %v2757, 4
      %v2759 = vmax.f32 %v2757, %v2758
      %v2760 = vrot.slane %v2759, 2
      %v2761 = vmax.f32 %v2759, %v2760
      %v2762 = vrot.slane %v2761, 1
      %v2763 = vmax.f32 %v2761, %v2762
      %s2764 = vtos %v2763
      %v2765 = vstv %s2764
      %v2766 = vmul.f32 %v2765, %v2607
      %v2767 = vsub.f32 1.0, %v2766
      %v2769 = vrot.slane %v2767, 7
      %v2771 = vmul.f32 %v2750, %v2769
      %s2772 = scalar_lea.vmem [#allocation2], 88
      %v2773 = vld [vmem:[%s2772] sm:$0xff]
      %v2774 = vstv 88
      %vm2775 = vcmp.eq.s32.totalorder %v129, %v2774
      %v2776 = vsel %vm2775, %v2771, 0.0
      %v2777 = vsel %vm968, %v2776, -inf
      %2778 = vmax.xlane.f32.xlu0 %v2777
      %v2779 = vpop.xlane.xlu0 %2778
      %v2780 = vrot.slane %v2779, 4
      %v2781 = vmax.f32 %v2779, %v2780
      %v2782 = vrot.slane %v2781, 2
      %v2783 = vmax.f32 %v2781, %v2782
      %v2784 = vrot.slane %v2783, 1
      %v2785 = vmax.f32 %v2783, %v2784
      %s2786 = vtos %v2785
      %v2787 = vstv %s2786
      %v2788 = vmul.f32 %v2787, %v2773
      %v2789 = vsub.f32 1.0, %v2788
      %v2790 = vmul.f32 %v2771, %v2789
      %s2791 = sadd.s32 88, 1
      %v2792 = vstv %s2791
      %vm2793 = vcmp.eq.s32.totalorder %v129, %v2792
      %v2794 = vsel %vm2793, %v2790, 0.0
      %v2795 = vsel %vm968, %v2794, -inf
      %2796 = vmax.xlane.f32.xlu0 %v2795
      %v2797 = vpop.xlane.xlu0 %2796
      %v2798 = vrot.slane %v2797, 4
      %v2799 = vmax.f32 %v2797, %v2798
      %v2800 = vrot.slane %v2799, 2
      %v2801 = vmax.f32 %v2799, %v2800
      %v2802 = vrot.slane %v2801, 1
      %v2803 = vmax.f32 %v2801, %v2802
      %s2804 = vtos %v2803
      %v2805 = vstv %s2804
      %v2806 = vmul.f32 %v2805, %v2773
      %v2807 = vsub.f32 1.0, %v2806
      %v2809 = vrot.slane %v2807, 1
      %v2811 = vmul.f32 %v2790, %v2809
      %s2812 = sadd.s32 88, 2
      %v2813 = vstv %s2812
      %vm2814 = vcmp.eq.s32.totalorder %v129, %v2813
      %v2815 = vsel %vm2814, %v2811, 0.0
      %v2816 = vsel %vm968, %v2815, -inf
      %2817 = vmax.xlane.f32.xlu0 %v2816
      %v2818 = vpop.xlane.xlu0 %2817
      %v2819 = vrot.slane %v2818, 4
      %v2820 = vmax.f32 %v2818, %v2819
      %v2821 = vrot.slane %v2820, 2
      %v2822 = vmax.f32 %v2820, %v2821
      %v2823 = vrot.slane %v2822, 1
      %v2824 = vmax.f32 %v2822, %v2823
      %s2825 = vtos %v2824
      %v2826 = vstv %s2825
      %v2827 = vmul.f32 %v2826, %v2773
      %v2828 = vsub.f32 1.0, %v2827
      %v2830 = vrot.slane %v2828, 2
      %v2832 = vmul.f32 %v2811, %v2830
      %s2833 = sadd.s32 88, 3
      %v2834 = vstv %s2833
      %vm2835 = vcmp.eq.s32.totalorder %v129, %v2834
      %v2836 = vsel %vm2835, %v2832, 0.0
      %v2837 = vsel %vm968, %v2836, -inf
      %2838 = vmax.xlane.f32.xlu0 %v2837
      %v2839 = vpop.xlane.xlu0 %2838
      %v2840 = vrot.slane %v2839, 4
      %v2841 = vmax.f32 %v2839, %v2840
      %v2842 = vrot.slane %v2841, 2
      %v2843 = vmax.f32 %v2841, %v2842
      %v2844 = vrot.slane %v2843, 1
      %v2845 = vmax.f32 %v2843, %v2844
      %s2846 = vtos %v2845
      %v2847 = vstv %s2846
      %v2848 = vmul.f32 %v2847, %v2773
      %v2849 = vsub.f32 1.0, %v2848
      %v2851 = vrot.slane %v2849, 3
      %v2853 = vmul.f32 %v2832, %v2851
      %s2854 = sadd.s32 88, 4
      %v2855 = vstv %s2854
      %vm2856 = vcmp.eq.s32.totalorder %v129, %v2855
      %v2857 = vsel %vm2856, %v2853, 0.0
      %v2858 = vsel %vm968, %v2857, -inf
      %2859 = vmax.xlane.f32.xlu0 %v2858
      %v2860 = vpop.xlane.xlu0 %2859
      %v2861 = vrot.slane %v2860, 4
      %v2862 = vmax.f32 %v2860, %v2861
      %v2863 = vrot.slane %v2862, 2
      %v2864 = vmax.f32 %v2862, %v2863
      %v2865 = vrot.slane %v2864, 1
      %v2866 = vmax.f32 %v2864, %v2865
      %s2867 = vtos %v2866
      %v2868 = vstv %s2867
      %v2869 = vmul.f32 %v2868, %v2773
      %v2870 = vsub.f32 1.0, %v2869
      %v2872 = vrot.slane %v2870, 4
      %v2874 = vmul.f32 %v2853, %v2872
      %s2875 = sadd.s32 88, 5
      %v2876 = vstv %s2875
      %vm2877 = vcmp.eq.s32.totalorder %v129, %v2876
      %v2878 = vsel %vm2877, %v2874, 0.0
      %v2879 = vsel %vm968, %v2878, -inf
      %2880 = vmax.xlane.f32.xlu0 %v2879
      %v2881 = vpop.xlane.xlu0 %2880
      %v2882 = vrot.slane %v2881, 4
      %v2883 = vmax.f32 %v2881, %v2882
      %v2884 = vrot.slane %v2883, 2
      %v2885 = vmax.f32 %v2883, %v2884
      %v2886 = vrot.slane %v2885, 1
      %v2887 = vmax.f32 %v2885, %v2886
      %s2888 = vtos %v2887
      %v2889 = vstv %s2888
      %v2890 = vmul.f32 %v2889, %v2773
      %v2891 = vsub.f32 1.0, %v2890
      %v2893 = vrot.slane %v2891, 5
      %v2895 = vmul.f32 %v2874, %v2893
      %s2896 = sadd.s32 88, 6
      %v2897 = vstv %s2896
      %vm2898 = vcmp.eq.s32.totalorder %v129, %v2897
      %v2899 = vsel %vm2898, %v2895, 0.0
      %v2900 = vsel %vm968, %v2899, -inf
      %2901 = vmax.xlane.f32.xlu0 %v2900
      %v2902 = vpop.xlane.xlu0 %2901
      %v2903 = vrot.slane %v2902, 4
      %v2904 = vmax.f32 %v2902, %v2903
      %v2905 = vrot.slane %v2904, 2
      %v2906 = vmax.f32 %v2904, %v2905
      %v2907 = vrot.slane %v2906, 1
      %v2908 = vmax.f32 %v2906, %v2907
      %s2909 = vtos %v2908
      %v2910 = vstv %s2909
      %v2911 = vmul.f32 %v2910, %v2773
      %v2912 = vsub.f32 1.0, %v2911
      %v2914 = vrot.slane %v2912, 6
      %v2916 = vmul.f32 %v2895, %v2914
      %s2917 = sadd.s32 88, 7
      %v2918 = vstv %s2917
      %vm2919 = vcmp.eq.s32.totalorder %v129, %v2918
      %v2920 = vsel %vm2919, %v2916, 0.0
      %v2921 = vsel %vm968, %v2920, -inf
      %2922 = vmax.xlane.f32.xlu0 %v2921
      %v2923 = vpop.xlane.xlu0 %2922
      %v2924 = vrot.slane %v2923, 4
      %v2925 = vmax.f32 %v2923, %v2924
      %v2926 = vrot.slane %v2925, 2
      %v2927 = vmax.f32 %v2925, %v2926
      %v2928 = vrot.slane %v2927, 1
      %v2929 = vmax.f32 %v2927, %v2928
      %s2930 = vtos %v2929
      %v2931 = vstv %s2930
      %v2932 = vmul.f32 %v2931, %v2773
      %v2933 = vsub.f32 1.0, %v2932
      %v2935 = vrot.slane %v2933, 7
      %v2937 = vmul.f32 %v2916, %v2935
      %s2938 = scalar_lea.vmem [#allocation2], 96
      %v2939 = vld [vmem:[%s2938] sm:$0xff]
      %v2940 = vstv 96
      %vm2941 = vcmp.eq.s32.totalorder %v129, %v2940
      %v2942 = vsel %vm2941, %v2937, 0.0
      %v2943 = vsel %vm968, %v2942, -inf
      %2944 = vmax.xlane.f32.xlu0 %v2943
      %v2945 = vpop.xlane.xlu0 %2944
      %v2946 = vrot.slane %v2945, 4
      %v2947 = vmax.f32 %v2945, %v2946
      %v2948 = vrot.slane %v2947, 2
      %v2949 = vmax.f32 %v2947, %v2948
      %v2950 = vrot.slane %v2949, 1
      %v2951 = vmax.f32 %v2949, %v2950
      %s2952 = vtos %v2951
      %v2953 = vstv %s2952
      %v2954 = vmul.f32 %v2953, %v2939
      %v2955 = vsub.f32 1.0, %v2954
      %v2956 = vmul.f32 %v2937, %v2955
      %s2957 = sadd.s32 96, 1
      %v2958 = vstv %s2957
      %vm2959 = vcmp.eq.s32.totalorder %v129, %v2958
      %v2960 = vsel %vm2959, %v2956, 0.0
      %v2961 = vsel %vm968, %v2960, -inf
      %2962 = vmax.xlane.f32.xlu0 %v2961
      %v2963 = vpop.xlane.xlu0 %2962
      %v2964 = vrot.slane %v2963, 4
      %v2965 = vmax.f32 %v2963, %v2964
      %v2966 = vrot.slane %v2965, 2
      %v2967 = vmax.f32 %v2965, %v2966
      %v2968 = vrot.slane %v2967, 1
      %v2969 = vmax.f32 %v2967, %v2968
      %s2970 = vtos %v2969
      %v2971 = vstv %s2970
      %v2972 = vmul.f32 %v2971, %v2939
      %v2973 = vsub.f32 1.0, %v2972
      %v2975 = vrot.slane %v2973, 1
      %v2977 = vmul.f32 %v2956, %v2975
      %s2978 = sadd.s32 96, 2
      %v2979 = vstv %s2978
      %vm2980 = vcmp.eq.s32.totalorder %v129, %v2979
      %v2981 = vsel %vm2980, %v2977, 0.0
      %v2982 = vsel %vm968, %v2981, -inf
      %2983 = vmax.xlane.f32.xlu0 %v2982
      %v2984 = vpop.xlane.xlu0 %2983
      %v2985 = vrot.slane %v2984, 4
      %v2986 = vmax.f32 %v2984, %v2985
      %v2987 = vrot.slane %v2986, 2
      %v2988 = vmax.f32 %v2986, %v2987
      %v2989 = vrot.slane %v2988, 1
      %v2990 = vmax.f32 %v2988, %v2989
      %s2991 = vtos %v2990
      %v2992 = vstv %s2991
      %v2993 = vmul.f32 %v2992, %v2939
      %v2994 = vsub.f32 1.0, %v2993
      %v2996 = vrot.slane %v2994, 2
      %v2998 = vmul.f32 %v2977, %v2996
      %s2999 = sadd.s32 96, 3
      %v3000 = vstv %s2999
      %vm3001 = vcmp.eq.s32.totalorder %v129, %v3000
      %v3002 = vsel %vm3001, %v2998, 0.0
      %v3003 = vsel %vm968, %v3002, -inf
      %3004 = vmax.xlane.f32.xlu0 %v3003
      %v3005 = vpop.xlane.xlu0 %3004
      %v3006 = vrot.slane %v3005, 4
      %v3007 = vmax.f32 %v3005, %v3006
      %v3008 = vrot.slane %v3007, 2
      %v3009 = vmax.f32 %v3007, %v3008
      %v3010 = vrot.slane %v3009, 1
      %v3011 = vmax.f32 %v3009, %v3010
      %s3012 = vtos %v3011
      %v3013 = vstv %s3012
      %v3014 = vmul.f32 %v3013, %v2939
      %v3015 = vsub.f32 1.0, %v3014
      %v3017 = vrot.slane %v3015, 3
      %v3019 = vmul.f32 %v2998, %v3017
      %s3020 = sadd.s32 96, 4
      %v3021 = vstv %s3020
      %vm3022 = vcmp.eq.s32.totalorder %v129, %v3021
      %v3023 = vsel %vm3022, %v3019, 0.0
      %v3024 = vsel %vm968, %v3023, -inf
      %3025 = vmax.xlane.f32.xlu0 %v3024
      %v3026 = vpop.xlane.xlu0 %3025
      %v3027 = vrot.slane %v3026, 4
      %v3028 = vmax.f32 %v3026, %v3027
      %v3029 = vrot.slane %v3028, 2
      %v3030 = vmax.f32 %v3028, %v3029
      %v3031 = vrot.slane %v3030, 1
      %v3032 = vmax.f32 %v3030, %v3031
      %s3033 = vtos %v3032
      %v3034 = vstv %s3033
      %v3035 = vmul.f32 %v3034, %v2939
      %v3036 = vsub.f32 1.0, %v3035
      %v3038 = vrot.slane %v3036, 4
      %v3040 = vmul.f32 %v3019, %v3038
      %s3041 = sadd.s32 96, 5
      %v3042 = vstv %s3041
      %vm3043 = vcmp.eq.s32.totalorder %v129, %v3042
      %v3044 = vsel %vm3043, %v3040, 0.0
      %v3045 = vsel %vm968, %v3044, -inf
      %3046 = vmax.xlane.f32.xlu0 %v3045
      %v3047 = vpop.xlane.xlu0 %3046
      %v3048 = vrot.slane %v3047, 4
      %v3049 = vmax.f32 %v3047, %v3048
      %v3050 = vrot.slane %v3049, 2
      %v3051 = vmax.f32 %v3049, %v3050
      %v3052 = vrot.slane %v3051, 1
      %v3053 = vmax.f32 %v3051, %v3052
      %s3054 = vtos %v3053
      %v3055 = vstv %s3054
      %v3056 = vmul.f32 %v3055, %v2939
      %v3057 = vsub.f32 1.0, %v3056
      %v3059 = vrot.slane %v3057, 5
      %v3061 = vmul.f32 %v3040, %v3059
      %s3062 = sadd.s32 96, 6
      %v3063 = vstv %s3062
      %vm3064 = vcmp.eq.s32.totalorder %v129, %v3063
      %v3065 = vsel %vm3064, %v3061, 0.0
      %v3066 = vsel %vm968, %v3065, -inf
      %3067 = vmax.xlane.f32.xlu0 %v3066
      %v3068 = vpop.xlane.xlu0 %3067
      %v3069 = vrot.slane %v3068, 4
      %v3070 = vmax.f32 %v3068, %v3069
      %v3071 = vrot.slane %v3070, 2
      %v3072 = vmax.f32 %v3070, %v3071
      %v3073 = vrot.slane %v3072, 1
      %v3074 = vmax.f32 %v3072, %v3073
      %s3075 = vtos %v3074
      %v3076 = vstv %s3075
      %v3077 = vmul.f32 %v3076, %v2939
      %v3078 = vsub.f32 1.0, %v3077
      %v3080 = vrot.slane %v3078, 6
      %v3082 = vmul.f32 %v3061, %v3080
      %s3083 = sadd.s32 96, 7
      %v3084 = vstv %s3083
      %vm3085 = vcmp.eq.s32.totalorder %v129, %v3084
      %v3086 = vsel %vm3085, %v3082, 0.0
      %v3087 = vsel %vm968, %v3086, -inf
      %3088 = vmax.xlane.f32.xlu0 %v3087
      %v3089 = vpop.xlane.xlu0 %3088
      %v3090 = vrot.slane %v3089, 4
      %v3091 = vmax.f32 %v3089, %v3090
      %v3092 = vrot.slane %v3091, 2
      %v3093 = vmax.f32 %v3091, %v3092
      %v3094 = vrot.slane %v3093, 1
      %v3095 = vmax.f32 %v3093, %v3094
      %s3096 = vtos %v3095
      %v3097 = vstv %s3096
      %v3098 = vmul.f32 %v3097, %v2939
      %v3099 = vsub.f32 1.0, %v3098
      %v3101 = vrot.slane %v3099, 7
      %v3103 = vmul.f32 %v3082, %v3101
      %s3104 = scalar_lea.vmem [#allocation2], 104
      %v3105 = vld [vmem:[%s3104] sm:$0xff]
      %v3106 = vstv 104
      %vm3107 = vcmp.eq.s32.totalorder %v129, %v3106
      %v3108 = vsel %vm3107, %v3103, 0.0
      %v3109 = vsel %vm968, %v3108, -inf
      %3110 = vmax.xlane.f32.xlu0 %v3109
      %v3111 = vpop.xlane.xlu0 %3110
      %v3112 = vrot.slane %v3111, 4
      %v3113 = vmax.f32 %v3111, %v3112
      %v3114 = vrot.slane %v3113, 2
      %v3115 = vmax.f32 %v3113, %v3114
      %v3116 = vrot.slane %v3115, 1
      %v3117 = vmax.f32 %v3115, %v3116
      %s3118 = vtos %v3117
      %v3119 = vstv %s3118
      %v3120 = vmul.f32 %v3119, %v3105
      %v3121 = vsub.f32 1.0, %v3120
      %v3122 = vmul.f32 %v3103, %v3121
      %s3123 = sadd.s32 104, 1
      %v3124 = vstv %s3123
      %vm3125 = vcmp.eq.s32.totalorder %v129, %v3124
      %v3126 = vsel %vm3125, %v3122, 0.0
      %v3127 = vsel %vm968, %v3126, -inf
      %3128 = vmax.xlane.f32.xlu0 %v3127
      %v3129 = vpop.xlane.xlu0 %3128
      %v3130 = vrot.slane %v3129, 4
      %v3131 = vmax.f32 %v3129, %v3130
      %v3132 = vrot.slane %v3131, 2
      %v3133 = vmax.f32 %v3131, %v3132
      %v3134 = vrot.slane %v3133, 1
      %v3135 = vmax.f32 %v3133, %v3134
      %s3136 = vtos %v3135
      %v3137 = vstv %s3136
      %v3138 = vmul.f32 %v3137, %v3105
      %v3139 = vsub.f32 1.0, %v3138
      %v3141 = vrot.slane %v3139, 1
      %v3143 = vmul.f32 %v3122, %v3141
      %s3144 = sadd.s32 104, 2
      %v3145 = vstv %s3144
      %vm3146 = vcmp.eq.s32.totalorder %v129, %v3145
      %v3147 = vsel %vm3146, %v3143, 0.0
      %v3148 = vsel %vm968, %v3147, -inf
      %3149 = vmax.xlane.f32.xlu0 %v3148
      %v3150 = vpop.xlane.xlu0 %3149
      %v3151 = vrot.slane %v3150, 4
      %v3152 = vmax.f32 %v3150, %v3151
      %v3153 = vrot.slane %v3152, 2
      %v3154 = vmax.f32 %v3152, %v3153
      %v3155 = vrot.slane %v3154, 1
      %v3156 = vmax.f32 %v3154, %v3155
      %s3157 = vtos %v3156
      %v3158 = vstv %s3157
      %v3159 = vmul.f32 %v3158, %v3105
      %v3160 = vsub.f32 1.0, %v3159
      %v3162 = vrot.slane %v3160, 2
      %v3164 = vmul.f32 %v3143, %v3162
      %s3165 = sadd.s32 104, 3
      %v3166 = vstv %s3165
      %vm3167 = vcmp.eq.s32.totalorder %v129, %v3166
      %v3168 = vsel %vm3167, %v3164, 0.0
      %v3169 = vsel %vm968, %v3168, -inf
      %3170 = vmax.xlane.f32.xlu0 %v3169
      %v3171 = vpop.xlane.xlu0 %3170
      %v3172 = vrot.slane %v3171, 4
      %v3173 = vmax.f32 %v3171, %v3172
      %v3174 = vrot.slane %v3173, 2
      %v3175 = vmax.f32 %v3173, %v3174
      %v3176 = vrot.slane %v3175, 1
      %v3177 = vmax.f32 %v3175, %v3176
      %s3178 = vtos %v3177
      %v3179 = vstv %s3178
      %v3180 = vmul.f32 %v3179, %v3105
      %v3181 = vsub.f32 1.0, %v3180
      %v3183 = vrot.slane %v3181, 3
      %v3185 = vmul.f32 %v3164, %v3183
      %s3186 = sadd.s32 104, 4
      %v3187 = vstv %s3186
      %vm3188 = vcmp.eq.s32.totalorder %v129, %v3187
      %v3189 = vsel %vm3188, %v3185, 0.0
      %v3190 = vsel %vm968, %v3189, -inf
      %3191 = vmax.xlane.f32.xlu0 %v3190
      %v3192 = vpop.xlane.xlu0 %3191
      %v3193 = vrot.slane %v3192, 4
      %v3194 = vmax.f32 %v3192, %v3193
      %v3195 = vrot.slane %v3194, 2
      %v3196 = vmax.f32 %v3194, %v3195
      %v3197 = vrot.slane %v3196, 1
      %v3198 = vmax.f32 %v3196, %v3197
      %s3199 = vtos %v3198
      %v3200 = vstv %s3199
      %v3201 = vmul.f32 %v3200, %v3105
      %v3202 = vsub.f32 1.0, %v3201
      %v3204 = vrot.slane %v3202, 4
      %v3206 = vmul.f32 %v3185, %v3204
      %s3207 = sadd.s32 104, 5
      %v3208 = vstv %s3207
      %vm3209 = vcmp.eq.s32.totalorder %v129, %v3208
      %v3210 = vsel %vm3209, %v3206, 0.0
      %v3211 = vsel %vm968, %v3210, -inf
      %3212 = vmax.xlane.f32.xlu0 %v3211
      %v3213 = vpop.xlane.xlu0 %3212
      %v3214 = vrot.slane %v3213, 4
      %v3215 = vmax.f32 %v3213, %v3214
      %v3216 = vrot.slane %v3215, 2
      %v3217 = vmax.f32 %v3215, %v3216
      %v3218 = vrot.slane %v3217, 1
      %v3219 = vmax.f32 %v3217, %v3218
      %s3220 = vtos %v3219
      %v3221 = vstv %s3220
      %v3222 = vmul.f32 %v3221, %v3105
      %v3223 = vsub.f32 1.0, %v3222
      %v3225 = vrot.slane %v3223, 5
      %v3227 = vmul.f32 %v3206, %v3225
      %s3228 = sadd.s32 104, 6
      %v3229 = vstv %s3228
      %vm3230 = vcmp.eq.s32.totalorder %v129, %v3229
      %v3231 = vsel %vm3230, %v3227, 0.0
      %v3232 = vsel %vm968, %v3231, -inf
      %3233 = vmax.xlane.f32.xlu0 %v3232
      %v3234 = vpop.xlane.xlu0 %3233
      %v3235 = vrot.slane %v3234, 4
      %v3236 = vmax.f32 %v3234, %v3235
      %v3237 = vrot.slane %v3236, 2
      %v3238 = vmax.f32 %v3236, %v3237
      %v3239 = vrot.slane %v3238, 1
      %v3240 = vmax.f32 %v3238, %v3239
      %s3241 = vtos %v3240
      %v3242 = vstv %s3241
      %v3243 = vmul.f32 %v3242, %v3105
      %v3244 = vsub.f32 1.0, %v3243
      %v3246 = vrot.slane %v3244, 6
      %v3248 = vmul.f32 %v3227, %v3246
      %s3249 = sadd.s32 104, 7
      %v3250 = vstv %s3249
      %vm3251 = vcmp.eq.s32.totalorder %v129, %v3250
      %v3252 = vsel %vm3251, %v3248, 0.0
      %v3253 = vsel %vm968, %v3252, -inf
      %3254 = vmax.xlane.f32.xlu0 %v3253
      %v3255 = vpop.xlane.xlu0 %3254
      %v3256 = vrot.slane %v3255, 4
      %v3257 = vmax.f32 %v3255, %v3256
      %v3258 = vrot.slane %v3257, 2
      %v3259 = vmax.f32 %v3257, %v3258
      %v3260 = vrot.slane %v3259, 1
      %v3261 = vmax.f32 %v3259, %v3260
      %s3262 = vtos %v3261
      %v3263 = vstv %s3262
      %v3264 = vmul.f32 %v3263, %v3105
      %v3265 = vsub.f32 1.0, %v3264
      %v3267 = vrot.slane %v3265, 7
      %v3269 = vmul.f32 %v3248, %v3267
      %s3270 = scalar_lea.vmem [#allocation2], 112
      %v3271 = vld [vmem:[%s3270] sm:$0xff]
      %v3272 = vstv 112
      %vm3273 = vcmp.eq.s32.totalorder %v129, %v3272
      %v3274 = vsel %vm3273, %v3269, 0.0
      %v3275 = vsel %vm968, %v3274, -inf
      %3276 = vmax.xlane.f32.xlu0 %v3275
      %v3277 = vpop.xlane.xlu0 %3276
      %v3278 = vrot.slane %v3277, 4
      %v3279 = vmax.f32 %v3277, %v3278
      %v3280 = vrot.slane %v3279, 2
      %v3281 = vmax.f32 %v3279, %v3280
      %v3282 = vrot.slane %v3281, 1
      %v3283 = vmax.f32 %v3281, %v3282
      %s3284 = vtos %v3283
      %v3285 = vstv %s3284
      %v3286 = vmul.f32 %v3285, %v3271
      %v3287 = vsub.f32 1.0, %v3286
      %v3288 = vmul.f32 %v3269, %v3287
      %s3289 = sadd.s32 112, 1
      %v3290 = vstv %s3289
      %vm3291 = vcmp.eq.s32.totalorder %v129, %v3290
      %v3292 = vsel %vm3291, %v3288, 0.0
      %v3293 = vsel %vm968, %v3292, -inf
      %3294 = vmax.xlane.f32.xlu0 %v3293
      %v3295 = vpop.xlane.xlu0 %3294
      %v3296 = vrot.slane %v3295, 4
      %v3297 = vmax.f32 %v3295, %v3296
      %v3298 = vrot.slane %v3297, 2
      %v3299 = vmax.f32 %v3297, %v3298
      %v3300 = vrot.slane %v3299, 1
      %v3301 = vmax.f32 %v3299, %v3300
      %s3302 = vtos %v3301
      %v3303 = vstv %s3302
      %v3304 = vmul.f32 %v3303, %v3271
      %v3305 = vsub.f32 1.0, %v3304
      %v3307 = vrot.slane %v3305, 1
      %v3309 = vmul.f32 %v3288, %v3307
      %s3310 = sadd.s32 112, 2
      %v3311 = vstv %s3310
      %vm3312 = vcmp.eq.s32.totalorder %v129, %v3311
      %v3313 = vsel %vm3312, %v3309, 0.0
      %v3314 = vsel %vm968, %v3313, -inf
      %3315 = vmax.xlane.f32.xlu0 %v3314
      %v3316 = vpop.xlane.xlu0 %3315
      %v3317 = vrot.slane %v3316, 4
      %v3318 = vmax.f32 %v3316, %v3317
      %v3319 = vrot.slane %v3318, 2
      %v3320 = vmax.f32 %v3318, %v3319
      %v3321 = vrot.slane %v3320, 1
      %v3322 = vmax.f32 %v3320, %v3321
      %s3323 = vtos %v3322
      %v3324 = vstv %s3323
      %v3325 = vmul.f32 %v3324, %v3271
      %v3326 = vsub.f32 1.0, %v3325
      %v3328 = vrot.slane %v3326, 2
      %v3330 = vmul.f32 %v3309, %v3328
      %s3331 = sadd.s32 112, 3
      %v3332 = vstv %s3331
      %vm3333 = vcmp.eq.s32.totalorder %v129, %v3332
      %v3334 = vsel %vm3333, %v3330, 0.0
      %v3335 = vsel %vm968, %v3334, -inf
      %3336 = vmax.xlane.f32.xlu0 %v3335
      %v3337 = vpop.xlane.xlu0 %3336
      %v3338 = vrot.slane %v3337, 4
      %v3339 = vmax.f32 %v3337, %v3338
      %v3340 = vrot.slane %v3339, 2
      %v3341 = vmax.f32 %v3339, %v3340
      %v3342 = vrot.slane %v3341, 1
      %v3343 = vmax.f32 %v3341, %v3342
      %s3344 = vtos %v3343
      %v3345 = vstv %s3344
      %v3346 = vmul.f32 %v3345, %v3271
      %v3347 = vsub.f32 1.0, %v3346
      %v3349 = vrot.slane %v3347, 3
      %v3351 = vmul.f32 %v3330, %v3349
      %s3352 = sadd.s32 112, 4
      %v3353 = vstv %s3352
      %vm3354 = vcmp.eq.s32.totalorder %v129, %v3353
      %v3355 = vsel %vm3354, %v3351, 0.0
      %v3356 = vsel %vm968, %v3355, -inf
      %3357 = vmax.xlane.f32.xlu0 %v3356
      %v3358 = vpop.xlane.xlu0 %3357
      %v3359 = vrot.slane %v3358, 4
      %v3360 = vmax.f32 %v3358, %v3359
      %v3361 = vrot.slane %v3360, 2
      %v3362 = vmax.f32 %v3360, %v3361
      %v3363 = vrot.slane %v3362, 1
      %v3364 = vmax.f32 %v3362, %v3363
      %s3365 = vtos %v3364
      %v3366 = vstv %s3365
      %v3367 = vmul.f32 %v3366, %v3271
      %v3368 = vsub.f32 1.0, %v3367
      %v3370 = vrot.slane %v3368, 4
      %v3372 = vmul.f32 %v3351, %v3370
      %s3373 = sadd.s32 112, 5
      %v3374 = vstv %s3373
      %vm3375 = vcmp.eq.s32.totalorder %v129, %v3374
      %v3376 = vsel %vm3375, %v3372, 0.0
      %v3377 = vsel %vm968, %v3376, -inf
      %3378 = vmax.xlane.f32.xlu0 %v3377
      %v3379 = vpop.xlane.xlu0 %3378
      %v3380 = vrot.slane %v3379, 4
      %v3381 = vmax.f32 %v3379, %v3380
      %v3382 = vrot.slane %v3381, 2
      %v3383 = vmax.f32 %v3381, %v3382
      %v3384 = vrot.slane %v3383, 1
      %v3385 = vmax.f32 %v3383, %v3384
      %s3386 = vtos %v3385
      %v3387 = vstv %s3386
      %v3388 = vmul.f32 %v3387, %v3271
      %v3389 = vsub.f32 1.0, %v3388
      %v3391 = vrot.slane %v3389, 5
      %v3393 = vmul.f32 %v3372, %v3391
      %s3394 = sadd.s32 112, 6
      %v3395 = vstv %s3394
      %vm3396 = vcmp.eq.s32.totalorder %v129, %v3395
      %v3397 = vsel %vm3396, %v3393, 0.0
      %v3398 = vsel %vm968, %v3397, -inf
      %3399 = vmax.xlane.f32.xlu0 %v3398
      %v3400 = vpop.xlane.xlu0 %3399
      %v3401 = vrot.slane %v3400, 4
      %v3402 = vmax.f32 %v3400, %v3401
      %v3403 = vrot.slane %v3402, 2
      %v3404 = vmax.f32 %v3402, %v3403
      %v3405 = vrot.slane %v3404, 1
      %v3406 = vmax.f32 %v3404, %v3405
      %s3407 = vtos %v3406
      %v3408 = vstv %s3407
      %v3409 = vmul.f32 %v3408, %v3271
      %v3410 = vsub.f32 1.0, %v3409
      %v3412 = vrot.slane %v3410, 6
      %v3414 = vmul.f32 %v3393, %v3412
      %s3415 = sadd.s32 112, 7
      %v3416 = vstv %s3415
      %vm3417 = vcmp.eq.s32.totalorder %v129, %v3416
      %v3418 = vsel %vm3417, %v3414, 0.0
      %v3419 = vsel %vm968, %v3418, -inf
      %3420 = vmax.xlane.f32.xlu0 %v3419
      %v3421 = vpop.xlane.xlu0 %3420
      %v3422 = vrot.slane %v3421, 4
      %v3423 = vmax.f32 %v3421, %v3422
      %v3424 = vrot.slane %v3423, 2
      %v3425 = vmax.f32 %v3423, %v3424
      %v3426 = vrot.slane %v3425, 1
      %v3427 = vmax.f32 %v3425, %v3426
      %s3428 = vtos %v3427
      %v3429 = vstv %s3428
      %v3430 = vmul.f32 %v3429, %v3271
      %v3431 = vsub.f32 1.0, %v3430
      %v3433 = vrot.slane %v3431, 7
      %v3435 = vmul.f32 %v3414, %v3433
      %s3436 = scalar_lea.vmem [#allocation2], 120
      %v3437 = vld [vmem:[%s3436] sm:$0xff]
      %v3438 = vstv 120
      %vm3439 = vcmp.eq.s32.totalorder %v129, %v3438
      %v3440 = vsel %vm3439, %v3435, 0.0
      %v3441 = vsel %vm968, %v3440, -inf
      %3442 = vmax.xlane.f32.xlu0 %v3441
      %v3443 = vpop.xlane.xlu0 %3442
      %v3444 = vrot.slane %v3443, 4
      %v3445 = vmax.f32 %v3443, %v3444
      %v3446 = vrot.slane %v3445, 2
      %v3447 = vmax.f32 %v3445, %v3446
      %v3448 = vrot.slane %v3447, 1
      %v3449 = vmax.f32 %v3447, %v3448
      %s3450 = vtos %v3449
      %v3451 = vstv %s3450
      %v3452 = vmul.f32 %v3451, %v3437
      %v3453 = vsub.f32 1.0, %v3452
      %v3454 = vmul.f32 %v3435, %v3453
      %s3455 = sadd.s32 120, 1
      %v3456 = vstv %s3455
      %vm3457 = vcmp.eq.s32.totalorder %v129, %v3456
      %v3458 = vsel %vm3457, %v3454, 0.0
      %v3459 = vsel %vm968, %v3458, -inf
      %3460 = vmax.xlane.f32.xlu0 %v3459
      %v3461 = vpop.xlane.xlu0 %3460
      %v3462 = vrot.slane %v3461, 4
      %v3463 = vmax.f32 %v3461, %v3462
      %v3464 = vrot.slane %v3463, 2
      %v3465 = vmax.f32 %v3463, %v3464
      %v3466 = vrot.slane %v3465, 1
      %v3467 = vmax.f32 %v3465, %v3466
      %s3468 = vtos %v3467
      %v3469 = vstv %s3468
      %v3470 = vmul.f32 %v3469, %v3437
      %v3471 = vsub.f32 1.0, %v3470
      %v3473 = vrot.slane %v3471, 1
      %v3475 = vmul.f32 %v3454, %v3473
      %s3476 = sadd.s32 120, 2
      %v3477 = vstv %s3476
      %vm3478 = vcmp.eq.s32.totalorder %v129, %v3477
      %v3479 = vsel %vm3478, %v3475, 0.0
      %v3480 = vsel %vm968, %v3479, -inf
      %3481 = vmax.xlane.f32.xlu0 %v3480
      %v3482 = vpop.xlane.xlu0 %3481
      %v3483 = vrot.slane %v3482, 4
      %v3484 = vmax.f32 %v3482, %v3483
      %v3485 = vrot.slane %v3484, 2
      %v3486 = vmax.f32 %v3484, %v3485
      %v3487 = vrot.slane %v3486, 1
      %v3488 = vmax.f32 %v3486, %v3487
      %s3489 = vtos %v3488
      %v3490 = vstv %s3489
      %v3491 = vmul.f32 %v3490, %v3437
      %v3492 = vsub.f32 1.0, %v3491
      %v3494 = vrot.slane %v3492, 2
      %v3496 = vmul.f32 %v3475, %v3494
      %s3497 = sadd.s32 120, 3
      %v3498 = vstv %s3497
      %vm3499 = vcmp.eq.s32.totalorder %v129, %v3498
      %v3500 = vsel %vm3499, %v3496, 0.0
      %v3501 = vsel %vm968, %v3500, -inf
      %3502 = vmax.xlane.f32.xlu0 %v3501
      %v3503 = vpop.xlane.xlu0 %3502
      %v3504 = vrot.slane %v3503, 4
      %v3505 = vmax.f32 %v3503, %v3504
      %v3506 = vrot.slane %v3505, 2
      %v3507 = vmax.f32 %v3505, %v3506
      %v3508 = vrot.slane %v3507, 1
      %v3509 = vmax.f32 %v3507, %v3508
      %s3510 = vtos %v3509
      %v3511 = vstv %s3510
      %v3512 = vmul.f32 %v3511, %v3437
      %v3513 = vsub.f32 1.0, %v3512
      %v3515 = vrot.slane %v3513, 3
      %v3517 = vmul.f32 %v3496, %v3515
      %s3518 = sadd.s32 120, 4
      %v3519 = vstv %s3518
      %vm3520 = vcmp.eq.s32.totalorder %v129, %v3519
      %v3521 = vsel %vm3520, %v3517, 0.0
      %v3522 = vsel %vm968, %v3521, -inf
      %3523 = vmax.xlane.f32.xlu0 %v3522
      %v3524 = vpop.xlane.xlu0 %3523
      %v3525 = vrot.slane %v3524, 4
      %v3526 = vmax.f32 %v3524, %v3525
      %v3527 = vrot.slane %v3526, 2
      %v3528 = vmax.f32 %v3526, %v3527
      %v3529 = vrot.slane %v3528, 1
      %v3530 = vmax.f32 %v3528, %v3529
      %s3531 = vtos %v3530
      %v3532 = vstv %s3531
      %v3533 = vmul.f32 %v3532, %v3437
      %v3534 = vsub.f32 1.0, %v3533
      %v3536 = vrot.slane %v3534, 4
      %v3538 = vmul.f32 %v3517, %v3536
      %s3539 = sadd.s32 120, 5
      %v3540 = vstv %s3539
      %vm3541 = vcmp.eq.s32.totalorder %v129, %v3540
      %v3542 = vsel %vm3541, %v3538, 0.0
      %v3543 = vsel %vm968, %v3542, -inf
      %3544 = vmax.xlane.f32.xlu0 %v3543
      %v3545 = vpop.xlane.xlu0 %3544
      %v3546 = vrot.slane %v3545, 4
      %v3547 = vmax.f32 %v3545, %v3546
      %v3548 = vrot.slane %v3547, 2
      %v3549 = vmax.f32 %v3547, %v3548
      %v3550 = vrot.slane %v3549, 1
      %v3551 = vmax.f32 %v3549, %v3550
      %s3552 = vtos %v3551
      %v3553 = vstv %s3552
      %v3554 = vmul.f32 %v3553, %v3437
      %v3555 = vsub.f32 1.0, %v3554
      %v3557 = vrot.slane %v3555, 5
      %v3559 = vmul.f32 %v3538, %v3557
      %s3560 = sadd.s32 120, 6
      %v3561 = vstv %s3560
      %vm3562 = vcmp.eq.s32.totalorder %v129, %v3561
      %v3563 = vsel %vm3562, %v3559, 0.0
      %v3564 = vsel %vm968, %v3563, -inf
      %3565 = vmax.xlane.f32.xlu0 %v3564
      %v3566 = vpop.xlane.xlu0 %3565
      %v3567 = vrot.slane %v3566, 4
      %v3568 = vmax.f32 %v3566, %v3567
      %v3569 = vrot.slane %v3568, 2
      %v3570 = vmax.f32 %v3568, %v3569
      %v3571 = vrot.slane %v3570, 1
      %v3572 = vmax.f32 %v3570, %v3571
      %s3573 = vtos %v3572
      %v3574 = vstv %s3573
      %v3575 = vmul.f32 %v3574, %v3437
      %v3576 = vsub.f32 1.0, %v3575
      %v3578 = vrot.slane %v3576, 6
      %v3580 = vmul.f32 %v3559, %v3578
      %s3581 = sadd.s32 120, 7
      %v3582 = vstv %s3581
      %vm3583 = vcmp.eq.s32.totalorder %v129, %v3582
      %v3584 = vsel %vm3583, %v3580, 0.0
      %v3585 = vsel %vm968, %v3584, -inf
      %3586 = vmax.xlane.f32.xlu0 %v3585
      %v3587 = vpop.xlane.xlu0 %3586
      %v3588 = vrot.slane %v3587, 4
      %v3589 = vmax.f32 %v3587, %v3588
      %v3590 = vrot.slane %v3589, 2
      %v3591 = vmax.f32 %v3589, %v3590
      %v3592 = vrot.slane %v3591, 1
      %v3593 = vmax.f32 %v3591, %v3592
      %s3594 = vtos %v3593
      %v3595 = vstv %s3594
      %v3596 = vmul.f32 %v3595, %v3437
      %v3597 = vsub.f32 1.0, %v3596
      %v3599 = vrot.slane %v3597, 7
      %v3601 = vmul.f32 %v3580, %v3599
      %vm3602 = vcmp.gt.f32.partialorder %v3601, 0.5
      %v3603 = vsel %vm3602, 1, 0
      %3604 = vst [vmem:[%s109] sm:$0x1] %v3603
      %p3605 = scmp.lt.s32.totalorder %s12, 1
      %s3606 = scalar_select %p3605, %s12, 1
      %s3607 = scalar_lea.vmem %s1, %s3606
      // Predicated region
      $region25: #{a_call__.1} parent=23 // pred_check
        %p3608 = pneg %p56
      $region26: #{a_call__.1} parent=23 // pred_check_branch
        %3610 = sbr.rel (%p3608) target = $region28
      $region27: #{a_call__.1} parent=23 // pred_region
        _
      $region28: #{a_call__.1} parent=23 // pred_fallthru
        _
    $region24: #{a_call__.1} parent=5 // pred_fallthru
      _
    %p3611 = scmp.le.s32.totalorder 2, %s7
    // Predicated region
    $region29: #{a_call__.1} parent=5 // pred_check
      %p3612 = pneg %p3611
    $region30: #{a_call__.1} parent=5 // pred_check_branch
      %3614 = sbr.rel (%p3612) target = $region32
    $region31: #{a_call__.1} parent=5 // pred_region
      %s3615 = ssub.s32 %s7, 2
      // Predicated region
      $region33: #{a_call__.1} parent=31 // pred_check
        %p3616 = pneg %p62
      $region34: #{a_call__.1} parent=31 // pred_check_branch
        %3618 = sbr.rel (%p3616) target = $region36
      $region35: #{a_call__.1} parent=31 // pred_region
        %p3619 = scmp.lt.s32.totalorder %s13, 1
        %s3620 = scalar_select %p3619, %s13, 1
        %s3621 = scalar_lea.vmem %s1, %s3620
      $region36: #{a_call__.1} parent=31 // pred_fallthru
        _
    $region32: #{a_call__.1} parent=5 // pred_fallthru
      _
  $region6: #{a_call__.1} parent=0 // loop_footer
    %s11 = sadd.s32 1, %s7
  $region7: #{a_call__.1} parent=0 // loop_footer_branch
    %6 = sbr.rel target = $region3
  $region8: #{a_call__.1} parent=0 // loop_exit
    _

</llo_original>
